<compile_context>
chip_gen: v7x
topology: tpu7x:2x2x1
jax: 0.10.0
libtpu: 0.0.40
codegen_flags: <defaults>
</compile_context>

<pallas_src>
import functools

import jax
import jax.numpy as jnp
from jax.experimental import pallas as pl
from jax.experimental.pallas import tpu as pltpu

GROWTH = 8
STEM_CH = 16
NUM_DENSE_LAYERS = 2
NUM_CLASSES = 10
BN_EPS = 1e-5

CPAD = 128          # lane-dense padded channel width of the resident features
OPAD = 128          # lane-dense padded head width (valid classes = first 10)
KCOL = 9 * CPAD     # im2col contraction depth of the dense-layer convs

_TAPS = [(di, dj) for di in range(3) for dj in range(3)]


# ----------------------------------------------------------------------------
# Fused whole-network kernel (one grid step == one image)
# ----------------------------------------------------------------------------
def _densenet_kernel(
    x_col_ref,       # (1, HW, STEM_K) bf16  host-built stem im2col (9*Cin valid)
    stem_w_ref,      # (STEM_K, CPAD)  bf16  BN scale folded into the weights
    stem_shift_ref,  # (1, CPAD)       f32
    lyr_w_ref,       # (L, KCOL, CPAD) bf16  im2col conv weights (concat-placed)
    lyr_scale_ref,   # (L, CPAD)       f32
    lyr_shift_ref,   # (L, CPAD)       f32
    fin_scale_ref,   # (1, CPAD)       f32
    fin_shift_ref,   # (1, CPAD)       f32
    head_w_ref,      # (CPAD, OPAD)    bf16
    head_b_ref,      # (1, OPAD)       f32
    o_ref,           # (1, 1, OPAD)    f32
    feat_ref,        # VMEM (H, W, CPAD)   bf16  raw concatenated features (no halo)
    z_ref,           # VMEM (HP, WP, CPAD) f32   BN-ReLU activations, zero halo
    col_ref,         # VMEM (HW, KCOL)     bf16  3x3 im2col staging buffer
    *, H, W, L,
):
    HW = H * W

    # Halo buffer for the 3x3 'same' convs.  Only the 1-pixel border actually
    # needs zeroing (the interior is fully rewritten every layer); a single
    # whole-buffer clear per image lowers to plain aligned stores and avoids
    # width-1 sublane strip stores.
    z_ref[...] = jnp.zeros_like(z_ref)

    # ---- stem: ONE im2col matmul (K = 9*Cin, zero-padded to STEM_K) --------
    # BN scale is folded into stem_w; shift + ReLU fused as the epilogue.
    y = jnp.dot(x_col_ref[0], stem_w_ref[...],
                preferred_element_type=jnp.float32)             # (HW, CPAD) f32
    y = jnp.maximum(y + stem_shift_ref[...], 0.0)
    feat_ref[...] = y.reshape(H, W, CPAD).astype(jnp.bfloat16)  # written ONCE

    # ---- dense block: per layer BN-ReLU -> 3x3 conv -> channel "concat" ----
    for li in range(L):
        # BN + ReLU on the interior only; the halo of z stays exactly zero.
        fraw = feat_ref[...].astype(jnp.float32)                # (H, W, CPAD)
        zi = jnp.maximum(fraw * lyr_scale_ref[li] + lyr_shift_ref[li], 0.0)
        z_ref[1:H + 1, 1:W + 1, :] = zi

        # Build the im2col: 9 aligned 128-lane column-block stores ...
        z = z_ref[...]                                          # (HP, WP, CPAD)
        for t, (di, dj) in enumerate(_TAPS):
            col_ref[:, t * CPAD:(t + 1) * CPAD] = (
                z[di:di + H, dj:dj + W, :]
                .reshape(HW, CPAD).astype(jnp.bfloat16))

        # ... and ONE MXU matmul over K = 9*CPAD — accumulation stays inside
        # the MXU (no spilled f32 accumulator, no per-tap load/add/store).
        new = jnp.dot(col_ref[...], lyr_w_ref[li],
                      preferred_element_type=jnp.float32)       # (HW, CPAD) f32

        # Channel "concat": the weight's only nonzero output columns are the
        # GROWTH new channels at their final concatenated lane positions, so
        # adding the conv output into the resident features IS the concat.
        feat_ref[...] = (feat_ref[...]
                         + new.reshape(H, W, CPAD).astype(jnp.bfloat16))

    # ---- final BN-ReLU + global average pool + linear head ------------------
    f = feat_ref[...].reshape(HW, CPAD).astype(jnp.float32)
    f = jnp.maximum(f * fin_scale_ref[...] + fin_shift_ref[...], 0.0)
    pooled = jnp.sum(f, axis=0, keepdims=True) * (1.0 / HW)     # (1, CPAD) f32
    logits = (jnp.dot(pooled.astype(jnp.bfloat16), head_w_ref[...],
                      preferred_element_type=jnp.float32)
              + head_b_ref[...])                                # (1, OPAD) f32
    o_ref[...] = logits.reshape(1, 1, OPAD)


# ----------------------------------------------------------------------------
# Parameter construction (BN pre-folded, im2col weight layout, bf16 for MXU)
# ----------------------------------------------------------------------------
def _bn_scale_shift(key, c):
    k1, k2, k3, k4 = jax.random.split(key, 4)
    gamma = 1.0 + 0.1 * jax.random.normal(k1, (c,), jnp.float32)
    beta = 0.05 * jax.random.normal(k2, (c,), jnp.float32)
    mean = 0.1 * jax.random.normal(k3, (c,), jnp.float32)
    var = 1.0 + 0.1 * jax.random.uniform(k4, (c,), jnp.float32)
    scale = gamma * jax.lax.rsqrt(var + BN_EPS)
    shift = beta - mean * scale
    return scale, shift


def _conv_to_im2col_weight(w_oihw, out_off):
    """PyTorch conv weight (O, I, 3, 3) -> (9*CPAD, CPAD) im2col matrix.

    Row layout matches the kernel's col buffer (tap-major, channel-minor);
    only rows t*CPAD + [0, I) and columns [out_off, out_off+O) are nonzero,
    so the zero-padded lanes never contaminate the result.
    """
    O, I, _, _ = w_oihw.shape
    taps = jnp.transpose(w_oihw, (2, 3, 1, 0)).reshape(9, I, O)
    full = jnp.zeros((9, CPAD, CPAD), jnp.float32)
    full = full.at[:, :I, out_off:out_off + O].set(taps)
    return full.reshape(9 * CPAD, CPAD)


def _stem_k_for(in_chans):
    return max(16, ((9 * in_chans + 15) // 16) * 16)


def init_params(seed=0, in_chans=1):
    key = jax.random.PRNGKey(seed)
    p = {}
    stem_k = _stem_k_for(in_chans)

    # stem: conv3x3(in_chans -> STEM_CH) + BN; BN scale folded into weights.
    key, kw, kb = jax.random.split(key, 3)
    w = jax.random.normal(kw, (STEM_CH, in_chans, 3, 3), jnp.float32) \
        * (1.0 / jnp.sqrt(9.0 * in_chans))
    scale, shift = _bn_scale_shift(kb, STEM_CH)
    taps = jnp.transpose(w, (2, 3, 1, 0)).reshape(9 * in_chans, STEM_CH)
    sw = jnp.zeros((stem_k, CPAD), jnp.float32)
    sw = sw.at[:9 * in_chans, :STEM_CH].set(taps * scale[None, :])
    p["stem_w"] = sw.astype(jnp.bfloat16)
    p["stem_shift"] = jnp.zeros((1, CPAD), jnp.float32).at[0, :STEM_CH].set(shift)

    # dense layers: BN(c_in) -> ReLU -> conv3x3 producing GROWTH new channels
    c = STEM_CH
    lw, ls, lb = [], [], []
    for _ in range(NUM_DENSE_LAYERS):
        key, kw, kb = jax.random.split(key, 3)
        scale, shift = _bn_scale_shift(kb, c)
        w = jax.random.normal(kw, (GROWTH, c, 3, 3), jnp.float32) \
            * (1.0 / jnp.sqrt(9.0 * c))
        lw.append(_conv_to_im2col_weight(w, c))   # new channels land at [c, c+G)
        ls.append(jnp.ones((CPAD,), jnp.float32).at[:c].set(scale))
        lb.append(jnp.zeros((CPAD,), jnp.float32).at[:c].set(shift))
        c += GROWTH
    p["lyr_w"] = jnp.stack(lw).astype(jnp.bfloat16)        # (L, 9*CPAD, CPAD)
    p["lyr_scale"] = jnp.stack(ls)                         # (L, CPAD)
    p["lyr_shift"] = jnp.stack(lb)                         # (L, CPAD)

    # final BN + global-avg-pool + linear head
    key, kb, khw, khb = jax.random.split(key, 4)
    scale, shift = _bn_scale_shift(kb, c)
    p["fin_scale"] = jnp.ones((1, CPAD), jnp.float32).at[0, :c].set(scale)
    p["fin_shift"] = jnp.zeros((1, CPAD), jnp.float32).at[0, :c].set(shift)
    hw_ = jax.random.normal(khw, (c, NUM_CLASSES), jnp.float32) \
        * (1.0 / jnp.sqrt(float(c)))
    hb_ = 0.01 * jax.random.normal(khb, (NUM_CLASSES,), jnp.float32)
    p["head_w"] = jnp.zeros((CPAD, OPAD), jnp.float32) \
        .at[:c, :NUM_CLASSES].set(hw_).astype(jnp.bfloat16)
    p["head_b"] = jnp.zeros((1, OPAD), jnp.float32).at[0, :NUM_CLASSES].set(hb_)
    return p


# ----------------------------------------------------------------------------
# Forward pass (RSNA24Model_Keypoint_2D.forward equivalent)
# ----------------------------------------------------------------------------
def _vmem_limit_bytes(H, W, stem_k, n_layers):
    """Honest per-core VMEM budget (buffers x double-buffering + slack)."""
    HP, WP, HW = H + 2, W + 2, H * W
    bf, f4 = 2, 4
    weights = (stem_k * CPAD * bf + CPAD * f4
               + n_layers * (KCOL * CPAD * bf + 2 * CPAD * f4)
               + 2 * CPAD * f4 + CPAD * OPAD * bf + OPAD * f4)
    io = HW * stem_k * bf + OPAD * f4
    scratch = H * W * CPAD * bf + HP * WP * CPAD * f4 + HW * KCOL * bf
    temps = 4 * HW * CPAD * f4            # f32 matmul results / BN planes
    est = 2 * (weights + io) + scratch + temps
    return int(min(64 * 2**20, max(8 * 2**20, 2 * est)))


def forward(params, x_nchw):
    """NCHW input -> (N, NUM_CLASSES) logits (like the PyTorch module)."""
    x = x_nchw.astype(jnp.float32)
    N, Cin, H, W = x.shape
    HP, WP, HW = H + 2, W + 2, H * W
    stem_k = params["stem_w"].shape[0]
    n_layers = params["lyr_w"].shape[0]

    # Host-side stem im2col: only the real input channel(s) travel HBM->VMEM
    # (9*Cin bf16 lanes per pixel instead of a 128-lane zero-padded plane).
    xp = jnp.pad(x, ((0, 0), (0, 0), (1, 1), (1, 1)))            # (N,Cin,HP,WP)
    cols = [xp[:, c, di:di + H, dj:dj + W].reshape(N, HW)
            for (di, dj) in _TAPS for c in range(Cin)]
    x_col = jnp.stack(cols, axis=-1)                              # (N, HW, 9*Cin)
    x_col = jnp.pad(x_col, ((0, 0), (0, 0), (0, stem_k - 9 * Cin)))
    x_col = x_col.astype(jnp.bfloat16)

    def bcast(shape):
        nd = len(shape)
        return pl.BlockSpec(shape, lambda n, _nd=nd: (0,) * _nd)

    kernel = functools.partial(_densenet_kernel, H=H, W=W, L=n_layers)

    out = pl.pallas_call(
        kernel,
        out_shape=jax.ShapeDtypeStruct((N, 1, OPAD), jnp.float32),
        grid=(N,),
        in_specs=[
            pl.BlockSpec((1, HW, stem_k), lambda n: (n, 0, 0)),
            bcast((stem_k, CPAD)),
            bcast((1, CPAD)),
            bcast((n_layers, KCOL, CPAD)),
            bcast((n_layers, CPAD)),
            bcast((n_layers, CPAD)),
            bcast((1, CPAD)),
            bcast((1, CPAD)),
            bcast((CPAD, OPAD)),
            bcast((1, OPAD)),
        ],
        out_specs=pl.BlockSpec((1, 1, OPAD), lambda n: (n, 0, 0)),
        scratch_shapes=[
            pltpu.VMEM((H, W, CPAD), jnp.bfloat16),      # resident features
            pltpu.VMEM((HP, WP, CPAD), jnp.float32),     # BN-ReLU halo buffer
            pltpu.VMEM((HW, KCOL), jnp.bfloat16),        # im2col staging
        ],
        compiler_params=pltpu.CompilerParams(
            dimension_semantics=("parallel",),           # both TCs on v7x
            vmem_limit_bytes=_vmem_limit_bytes(H, W, stem_k, n_layers),
        ),
    )(x_col, params["stem_w"], params["stem_shift"],
      params["lyr_w"], params["lyr_scale"], params["lyr_shift"],
      params["fin_scale"], params["fin_shift"],
      params["head_w"], params["head_b"])

    return out[:, 0, :NUM_CLASSES]


# ----------------------------------------------------------------------------
if __name__ == "__main__":
    key = jax.random.PRNGKey(0)
    # module: in_chans=1, num_classes=10 — small spatial size for the demo
    x = jax.random.normal(key, (2, 1, 16, 16), jnp.float32)   # NCHW like PyTorch

    params = init_params(seed=0, in_chans=1)
    out = jax.jit(forward)(params, x)
    out = jax.block_until_ready(out)

    assert out.shape == (2, NUM_CLASSES) and out.dtype == jnp.float32
    assert bool(jnp.all(jnp.isfinite(out)))
    print("KERNEL_OK")
</pallas_src>

<mosaic_0001>
module attributes {stable_mosaic.version = 11 : i64} {
  func.func @_densenet_kernel(%arg0: i32, %arg1: memref<1x256x16xbf16, #tpu.memory_space<vmem>>, %arg2: memref<16x128xbf16, #tpu.memory_space<vmem>>, %arg3: memref<1x128xf32, #tpu.memory_space<vmem>>, %arg4: memref<2x1152x128xbf16, #tpu.memory_space<vmem>>, %arg5: memref<2x128xf32, #tpu.memory_space<vmem>>, %arg6: memref<2x128xf32, #tpu.memory_space<vmem>>, %arg7: memref<1x128xf32, #tpu.memory_space<vmem>>, %arg8: memref<1x128xf32, #tpu.memory_space<vmem>>, %arg9: memref<128x128xbf16, #tpu.memory_space<vmem>>, %arg10: memref<1x128xf32, #tpu.memory_space<vmem>>, %arg11: memref<1x1x128xf32, #tpu.memory_space<vmem>>, %arg12: memref<16x16x128xbf16, #tpu.memory_space<vmem>>, %arg13: memref<18x18x128xf32, #tpu.memory_space<vmem>>, %arg14: memref<256x1152xbf16, #tpu.memory_space<vmem>>) attributes {dimension_semantics = [#tpu.dimension_semantics<parallel>], iteration_bounds = array<i64: 2>, scalar_prefetch = 0 : i64, scratch_operands = 3 : i64, tpu.core_type = #tpu.core_type<tc>, window_params = [{transform_indices = @transform_0, window_bounds = array<i64: 1, 256, 16>}, {pipeline_mode = #tpu.pipeline_mode<synchronous>, transform_indices = @transform_1, window_bounds = array<i64: 16, 128>}, {pipeline_mode = #tpu.pipeline_mode<synchronous>, transform_indices = @transform_2, window_bounds = array<i64: 1, 128>}, {pipeline_mode = #tpu.pipeline_mode<synchronous>, transform_indices = @transform_3, window_bounds = array<i64: 2, 1152, 128>}, {pipeline_mode = #tpu.pipeline_mode<synchronous>, transform_indices = @transform_4, window_bounds = array<i64: 2, 128>}, {pipeline_mode = #tpu.pipeline_mode<synchronous>, transform_indices = @transform_5, window_bounds = array<i64: 2, 128>}, {pipeline_mode = #tpu.pipeline_mode<synchronous>, transform_indices = @transform_6, window_bounds = array<i64: 1, 128>}, {pipeline_mode = #tpu.pipeline_mode<synchronous>, transform_indices = @transform_7, window_bounds = array<i64: 1, 128>}, {pipeline_mode = #tpu.pipeline_mode<synchronous>, transform_indices = @transform_8, window_bounds = array<i64: 128, 128>}, {pipeline_mode = #tpu.pipeline_mode<synchronous>, transform_indices = @transform_9, window_bounds = array<i64: 1, 128>}, {transform_indices = @transform_10, window_bounds = array<i64: 1, 1, 128>}]} {
    %cst = arith.constant 0.000000e+00 : f32
    %0 = vector.broadcast %cst : f32 to vector<18x18x128xf32>
    %c0 = arith.constant 0 : index
    %c0_0 = arith.constant 0 : index
    %c0_1 = arith.constant 0 : index
    %1 = vector.load %arg13[%c0, %c0_0, %c0_1] : memref<18x18x128xf32, #tpu.memory_space<vmem>>, vector<18x18x128xf32>
    tpu.vector_store %arg13[%c0, %c0_0, %c0_1], %0 {strides = array<i32>} : memref<18x18x128xf32, #tpu.memory_space<vmem>>, vector<18x18x128xf32>,
    %c0_2 = arith.constant 0 : index
    %c0_3 = arith.constant 0 : index
    %c0_4 = arith.constant 0 : index
    %2 = vector.load %arg1[%c0_2, %c0_3, %c0_4] : memref<1x256x16xbf16, #tpu.memory_space<vmem>>, vector<1x256x16xbf16>
    %3 = vector.shape_cast %2 : vector<1x256x16xbf16> to vector<256x16xbf16>
    %c0_5 = arith.constant 0 : index
    %c0_6 = arith.constant 0 : index
    %4 = vector.load %arg2[%c0_5, %c0_6] : memref<16x128xbf16, #tpu.memory_space<vmem>>, vector<16x128xbf16>
    %cst_7 = arith.constant dense<0.000000e+00> : vector<256x128xf32>
    %5 = tpu.matmul %3, %4, %cst_7 {dimension_numbers = #tpu.dot_dimension_numbers<[1], [0], [0], [1], [0, 0, 1, 1], [], []>} : vector<256x16xbf16>, vector<16x128xbf16>, vector<256x128xf32> -> vector<256x128xf32>
    %c0_8 = arith.constant 0 : index
    %c0_9 = arith.constant 0 : index
    %6 = vector.load %arg3[%c0_8, %c0_9] : memref<1x128xf32, #tpu.memory_space<vmem>>, vector<1x128xf32>
    %7 = vector.broadcast %6 : vector<1x128xf32> to vector<256x128xf32>
    %8 = arith.addf %5, %7 : vector<256x128xf32>
    %cst_10 = arith.constant 0.000000e+00 : f32
    %9 = vector.broadcast %cst_10 : f32 to vector<256x128xf32>
    %10 = arith.maximumf %8, %9 : vector<256x128xf32>
    %11 = vector.shape_cast %10 : vector<256x128xf32> to vector<16x16x128xf32>
    %12 = arith.truncf %11 : vector<16x16x128xf32> to vector<16x16x128xbf16>
    %c0_11 = arith.constant 0 : index
    %c0_12 = arith.constant 0 : index
    %c0_13 = arith.constant 0 : index
    %13 = vector.load %arg12[%c0_11, %c0_12, %c0_13] : memref<16x16x128xbf16, #tpu.memory_space<vmem>>, vector<16x16x128xbf16>
    tpu.vector_store %arg12[%c0_11, %c0_12, %c0_13], %12 {strides = array<i32>} : memref<16x16x128xbf16, #tpu.memory_space<vmem>>, vector<16x16x128xbf16>,
    %c0_14 = arith.constant 0 : index
    %c0_15 = arith.constant 0 : index
    %c0_16 = arith.constant 0 : index
    %14 = vector.load %arg12[%c0_14, %c0_15, %c0_16] : memref<16x16x128xbf16, #tpu.memory_space<vmem>>, vector<16x16x128xbf16>
    %15 = arith.extf %14 : vector<16x16x128xbf16> to vector<16x16x128xf32>
    %c0_17 = arith.constant 0 : index
    %c0_18 = arith.constant 0 : index
    %16 = vector.load %arg5[%c0_17, %c0_18] : memref<2x128xf32, #tpu.memory_space<vmem>>, vector<1x128xf32>
    %17 = vector.shape_cast %16 : vector<1x128xf32> to vector<128xf32>
    %18 = vector.shape_cast %17 : vector<128xf32> to vector<1x1x128xf32>
    %19 = vector.broadcast %18 : vector<1x1x128xf32> to vector<16x16x128xf32>
    %20 = arith.mulf %15, %19 : vector<16x16x128xf32>
    %c0_19 = arith.constant 0 : index
    %c0_20 = arith.constant 0 : index
    %21 = vector.load %arg6[%c0_19, %c0_20] : memref<2x128xf32, #tpu.memory_space<vmem>>, vector<1x128xf32>
    %22 = vector.shape_cast %21 : vector<1x128xf32> to vector<128xf32>
    %23 = vector.shape_cast %22 : vector<128xf32> to vector<1x1x128xf32>
    %24 = vector.broadcast %23 : vector<1x1x128xf32> to vector<16x16x128xf32>
    %25 = arith.addf %20, %24 : vector<16x16x128xf32>
    %cst_21 = arith.constant 0.000000e+00 : f32
    %26 = vector.broadcast %cst_21 : f32 to vector<16x16x128xf32>
    %27 = arith.maximumf %25, %26 : vector<16x16x128xf32>
    %c1 = arith.constant 1 : index
    %c1_22 = arith.constant 1 : index
    %c0_23 = arith.constant 0 : index
    %28 = vector.load %arg13[%c1, %c1_22, %c0_23] : memref<18x18x128xf32, #tpu.memory_space<vmem>>, vector<16x16x128xf32>
    tpu.vector_store %arg13[%c1, %c1_22, %c0_23], %27 {strides = array<i32>} : memref<18x18x128xf32, #tpu.memory_space<vmem>>, vector<16x16x128xf32>,
    %c0_24 = arith.constant 0 : index
    %c0_25 = arith.constant 0 : index
    %c0_26 = arith.constant 0 : index
    %29 = vector.load %arg13[%c0_24, %c0_25, %c0_26] : memref<18x18x128xf32, #tpu.memory_space<vmem>>, vector<18x18x128xf32>
    %30 = vector.extract_strided_slice %29 {offsets = [0, 0, 0], sizes = [16, 16, 128], strides = [1, 1, 1]} : vector<18x18x128xf32> to vector<16x16x128xf32>
    %31 = vector.shape_cast %30 : vector<16x16x128xf32> to vector<256x128xf32>
    %32 = arith.truncf %31 : vector<256x128xf32> to vector<256x128xbf16>
    %c0_27 = arith.constant 0 : index
    %c0_28 = arith.constant 0 : index
    %33 = vector.load %arg14[%c0_27, %c0_28] : memref<256x1152xbf16, #tpu.memory_space<vmem>>, vector<256x128xbf16>
    tpu.vector_store %arg14[%c0_27, %c0_28], %32 {strides = array<i32>} : memref<256x1152xbf16, #tpu.memory_space<vmem>>, vector<256x128xbf16>,
    %34 = vector.extract_strided_slice %29 {offsets = [0, 1, 0], sizes = [16, 16, 128], strides = [1, 1, 1]} : vector<18x18x128xf32> to vector<16x16x128xf32>
    %35 = vector.shape_cast %34 : vector<16x16x128xf32> to vector<256x128xf32>
    %36 = arith.truncf %35 : vector<256x128xf32> to vector<256x128xbf16>
    %c0_29 = arith.constant 0 : index
    %c128 = arith.constant 128 : index
    %37 = vector.load %arg14[%c0_29, %c128] : memref<256x1152xbf16, #tpu.memory_space<vmem>>, vector<256x128xbf16>
    tpu.vector_store %arg14[%c0_29, %c128], %36 {strides = array<i32>} : memref<256x1152xbf16, #tpu.memory_space<vmem>>, vector<256x128xbf16>,
    %38 = vector.extract_strided_slice %29 {offsets = [0, 2, 0], sizes = [16, 16, 128], strides = [1, 1, 1]} : vector<18x18x128xf32> to vector<16x16x128xf32>
    %39 = vector.shape_cast %38 : vector<16x16x128xf32> to vector<256x128xf32>
    %40 = arith.truncf %39 : vector<256x128xf32> to vector<256x128xbf16>
    %c0_30 = arith.constant 0 : index
    %c256 = arith.constant 256 : index
    %41 = vector.load %arg14[%c0_30, %c256] : memref<256x1152xbf16, #tpu.memory_space<vmem>>, vector<256x128xbf16>
    tpu.vector_store %arg14[%c0_30, %c256], %40 {strides = array<i32>} : memref<256x1152xbf16, #tpu.memory_space<vmem>>, vector<256x128xbf16>,
    %42 = vector.extract_strided_slice %29 {offsets = [1, 0, 0], sizes = [16, 16, 128], strides = [1, 1, 1]} : vector<18x18x128xf32> to vector<16x16x128xf32>
    %43 = vector.shape_cast %42 : vector<16x16x128xf32> to vector<256x128xf32>
    %44 = arith.truncf %43 : vector<256x128xf32> to vector<256x128xbf16>
    %c0_31 = arith.constant 0 : index
    %c384 = arith.constant 384 : index
    %45 = vector.load %arg14[%c0_31, %c384] : memref<256x1152xbf16, #tpu.memory_space<vmem>>, vector<256x128xbf16>
    tpu.vector_store %arg14[%c0_31, %c384], %44 {strides = array<i32>} : memref<256x1152xbf16, #tpu.memory_space<vmem>>, vector<256x128xbf16>,
    %46 = vector.extract_strided_slice %29 {offsets = [1, 1, 0], sizes = [16, 16, 128], strides = [1, 1, 1]} : vector<18x18x128xf32> to vector<16x16x128xf32>
    %47 = vector.shape_cast %46 : vector<16x16x128xf32> to vector<256x128xf32>
    %48 = arith.truncf %47 : vector<256x128xf32> to vector<256x128xbf16>
    %c0_32 = arith.constant 0 : index
    %c512 = arith.constant 512 : index
    %49 = vector.load %arg14[%c0_32, %c512] : memref<256x1152xbf16, #tpu.memory_space<vmem>>, vector<256x128xbf16>
    tpu.vector_store %arg14[%c0_32, %c512], %48 {strides = array<i32>} : memref<256x1152xbf16, #tpu.memory_space<vmem>>, vector<256x128xbf16>,
    %50 = vector.extract_strided_slice %29 {offsets = [1, 2, 0], sizes = [16, 16, 128], strides = [1, 1, 1]} : vector<18x18x128xf32> to vector<16x16x128xf32>
    %51 = vector.shape_cast %50 : vector<16x16x128xf32> to vector<256x128xf32>
    %52 = arith.truncf %51 : vector<256x128xf32> to vector<256x128xbf16>
    %c0_33 = arith.constant 0 : index
    %c640 = arith.constant 640 : index
    %53 = vector.load %arg14[%c0_33, %c640] : memref<256x1152xbf16, #tpu.memory_space<vmem>>, vector<256x128xbf16>
    tpu.vector_store %arg14[%c0_33, %c640], %52 {strides = array<i32>} : memref<256x1152xbf16, #tpu.memory_space<vmem>>, vector<256x128xbf16>,
    %54 = vector.extract_strided_slice %29 {offsets = [2, 0, 0], sizes = [16, 16, 128], strides = [1, 1, 1]} : vector<18x18x128xf32> to vector<16x16x128xf32>
    %55 = vector.shape_cast %54 : vector<16x16x128xf32> to vector<256x128xf32>
    %56 = arith.truncf %55 : vector<256x128xf32> to vector<256x128xbf16>
    %c0_34 = arith.constant 0 : index
    %c768 = arith.constant 768 : index
    %57 = vector.load %arg14[%c0_34, %c768] : memref<256x1152xbf16, #tpu.memory_space<vmem>>, vector<256x128xbf16>
    tpu.vector_store %arg14[%c0_34, %c768], %56 {strides = array<i32>} : memref<256x1152xbf16, #tpu.memory_space<vmem>>, vector<256x128xbf16>,
    %58 = vector.extract_strided_slice %29 {offsets = [2, 1, 0], sizes = [16, 16, 128], strides = [1, 1, 1]} : vector<18x18x128xf32> to vector<16x16x128xf32>
    %59 = vector.shape_cast %58 : vector<16x16x128xf32> to vector<256x128xf32>
    %60 = arith.truncf %59 : vector<256x128xf32> to vector<256x128xbf16>
    %c0_35 = arith.constant 0 : index
    %c896 = arith.constant 896 : index
    %61 = vector.load %arg14[%c0_35, %c896] : memref<256x1152xbf16, #tpu.memory_space<vmem>>, vector<256x128xbf16>
    tpu.vector_store %arg14[%c0_35, %c896], %60 {strides = array<i32>} : memref<256x1152xbf16, #tpu.memory_space<vmem>>, vector<256x128xbf16>,
    %62 = vector.extract_strided_slice %29 {offsets = [2, 2, 0], sizes = [16, 16, 128], strides = [1, 1, 1]} : vector<18x18x128xf32> to vector<16x16x128xf32>
    %63 = vector.shape_cast %62 : vector<16x16x128xf32> to vector<256x128xf32>
    %64 = arith.truncf %63 : vector<256x128xf32> to vector<256x128xbf16>
    %c0_36 = arith.constant 0 : index
    %c1024 = arith.constant 1024 : index
    %65 = vector.load %arg14[%c0_36, %c1024] : memref<256x1152xbf16, #tpu.memory_space<vmem>>, vector<256x128xbf16>
    tpu.vector_store %arg14[%c0_36, %c1024], %64 {strides = array<i32>} : memref<256x1152xbf16, #tpu.memory_space<vmem>>, vector<256x128xbf16>,
    %c0_37 = arith.constant 0 : index
    %c0_38 = arith.constant 0 : index
    %66 = vector.load %arg14[%c0_37, %c0_38] : memref<256x1152xbf16, #tpu.memory_space<vmem>>, vector<256x1152xbf16>
    %c0_39 = arith.constant 0 : index
    %c0_40 = arith.constant 0 : index
    %c0_41 = arith.constant 0 : index
    %67 = vector.load %arg4[%c0_39, %c0_40, %c0_41] : memref<2x1152x128xbf16, #tpu.memory_space<vmem>>, vector<1x1152x128xbf16>
    %68 = vector.shape_cast %67 : vector<1x1152x128xbf16> to vector<1152x128xbf16>
    %cst_42 = arith.constant dense<0.000000e+00> : vector<256x128xf32>
    %69 = tpu.matmul %66, %68, %cst_42 {dimension_numbers = #tpu.dot_dimension_numbers<[1], [0], [0], [1], [0, 0, 1, 1], [], []>} : vector<256x1152xbf16>, vector<1152x128xbf16>, vector<256x128xf32> -> vector<256x128xf32>
    %c0_43 = arith.constant 0 : index
    %c0_44 = arith.constant 0 : index
    %c0_45 = arith.constant 0 : index
    %70 = vector.load %arg12[%c0_43, %c0_44, %c0_45] : memref<16x16x128xbf16, #tpu.memory_space<vmem>>, vector<16x16x128xbf16>
    %71 = vector.shape_cast %69 : vector<256x128xf32> to vector<16x16x128xf32>
    %72 = arith.truncf %71 : vector<16x16x128xf32> to vector<16x16x128xbf16>
    %73 = arith.addf %70, %72 : vector<16x16x128xbf16>
    %c0_46 = arith.constant 0 : index
    %c0_47 = arith.constant 0 : index
    %c0_48 = arith.constant 0 : index
    %74 = vector.load %arg12[%c0_46, %c0_47, %c0_48] : memref<16x16x128xbf16, #tpu.memory_space<vmem>>, vector<16x16x128xbf16>
    tpu.vector_store %arg12[%c0_46, %c0_47, %c0_48], %73 {strides = array<i32>} : memref<16x16x128xbf16, #tpu.memory_space<vmem>>, vector<16x16x128xbf16>,
    %c0_49 = arith.constant 0 : index
    %c0_50 = arith.constant 0 : index
    %c0_51 = arith.constant 0 : index
    %75 = vector.load %arg12[%c0_49, %c0_50, %c0_51] : memref<16x16x128xbf16, #tpu.memory_space<vmem>>, vector<16x16x128xbf16>
    %76 = arith.extf %75 : vector<16x16x128xbf16> to vector<16x16x128xf32>
    %c1_52 = arith.constant 1 : index
    %c0_53 = arith.constant 0 : index
    %77 = vector.load %arg5[%c1_52, %c0_53] : memref<2x128xf32, #tpu.memory_space<vmem>>, vector<1x128xf32>
    %78 = vector.shape_cast %77 : vector<1x128xf32> to vector<128xf32>
    %79 = vector.shape_cast %78 : vector<128xf32> to vector<1x1x128xf32>
    %80 = vector.broadcast %79 : vector<1x1x128xf32> to vector<16x16x128xf32>
    %81 = arith.mulf %76, %80 : vector<16x16x128xf32>
    %c1_54 = arith.constant 1 : index
    %c0_55 = arith.constant 0 : index
    %82 = vector.load %arg6[%c1_54, %c0_55] : memref<2x128xf32, #tpu.memory_space<vmem>>, vector<1x128xf32>
    %83 = vector.shape_cast %82 : vector<1x128xf32> to vector<128xf32>
    %84 = vector.shape_cast %83 : vector<128xf32> to vector<1x1x128xf32>
    %85 = vector.broadcast %84 : vector<1x1x128xf32> to vector<16x16x128xf32>
    %86 = arith.addf %81, %85 : vector<16x16x128xf32>
    %cst_56 = arith.constant 0.000000e+00 : f32
    %87 = vector.broadcast %cst_56 : f32 to vector<16x16x128xf32>
    %88 = arith.maximumf %86, %87 : vector<16x16x128xf32>
    %c1_57 = arith.constant 1 : index
    %c1_58 = arith.constant 1 : index
    %c0_59 = arith.constant 0 : index
    %89 = vector.load %arg13[%c1_57, %c1_58, %c0_59] : memref<18x18x128xf32, #tpu.memory_space<vmem>>, vector<16x16x128xf32>
    tpu.vector_store %arg13[%c1_57, %c1_58, %c0_59], %88 {strides = array<i32>} : memref<18x18x128xf32, #tpu.memory_space<vmem>>, vector<16x16x128xf32>,
    %c0_60 = arith.constant 0 : index
    %c0_61 = arith.constant 0 : index
    %c0_62 = arith.constant 0 : index
    %90 = vector.load %arg13[%c0_60, %c0_61, %c0_62] : memref<18x18x128xf32, #tpu.memory_space<vmem>>, vector<18x18x128xf32>
    %91 = vector.extract_strided_slice %90 {offsets = [0, 0, 0], sizes = [16, 16, 128], strides = [1, 1, 1]} : vector<18x18x128xf32> to vector<16x16x128xf32>
    %92 = vector.shape_cast %91 : vector<16x16x128xf32> to vector<256x128xf32>
    %93 = arith.truncf %92 : vector<256x128xf32> to vector<256x128xbf16>
    %c0_63 = arith.constant 0 : index
    %c0_64 = arith.constant 0 : index
    %94 = vector.load %arg14[%c0_63, %c0_64] : memref<256x1152xbf16, #tpu.memory_space<vmem>>, vector<256x128xbf16>
    tpu.vector_store %arg14[%c0_63, %c0_64], %93 {strides = array<i32>} : memref<256x1152xbf16, #tpu.memory_space<vmem>>, vector<256x128xbf16>,
    %95 = vector.extract_strided_slice %90 {offsets = [0, 1, 0], sizes = [16, 16, 128], strides = [1, 1, 1]} : vector<18x18x128xf32> to vector<16x16x128xf32>
    %96 = vector.shape_cast %95 : vector<16x16x128xf32> to vector<256x128xf32>
    %97 = arith.truncf %96 : vector<256x128xf32> to vector<256x128xbf16>
    %c0_65 = arith.constant 0 : index
    %c128_66 = arith.constant 128 : index
    %98 = vector.load %arg14[%c0_65, %c128_66] : memref<256x1152xbf16, #tpu.memory_space<vmem>>, vector<256x128xbf16>
    tpu.vector_store %arg14[%c0_65, %c128_66], %97 {strides = array<i32>} : memref<256x1152xbf16, #tpu.memory_space<vmem>>, vector<256x128xbf16>,
    %99 = vector.extract_strided_slice %90 {offsets = [0, 2, 0], sizes = [16, 16, 128], strides = [1, 1, 1]} : vector<18x18x128xf32> to vector<16x16x128xf32>
    %100 = vector.shape_cast %99 : vector<16x16x128xf32> to vector<256x128xf32>
    %101 = arith.truncf %100 : vector<256x128xf32> to vector<256x128xbf16>
    %c0_67 = arith.constant 0 : index
    %c256_68 = arith.constant 256 : index
    %102 = vector.load %arg14[%c0_67, %c256_68] : memref<256x1152xbf16, #tpu.memory_space<vmem>>, vector<256x128xbf16>
    tpu.vector_store %arg14[%c0_67, %c256_68], %101 {strides = array<i32>} : memref<256x1152xbf16, #tpu.memory_space<vmem>>, vector<256x128xbf16>,
    %103 = vector.extract_strided_slice %90 {offsets = [1, 0, 0], sizes = [16, 16, 128], strides = [1, 1, 1]} : vector<18x18x128xf32> to vector<16x16x128xf32>
    %104 = vector.shape_cast %103 : vector<16x16x128xf32> to vector<256x128xf32>
    %105 = arith.truncf %104 : vector<256x128xf32> to vector<256x128xbf16>
    %c0_69 = arith.constant 0 : index
    %c384_70 = arith.constant 384 : index
    %106 = vector.load %arg14[%c0_69, %c384_70] : memref<256x1152xbf16, #tpu.memory_space<vmem>>, vector<256x128xbf16>
    tpu.vector_store %arg14[%c0_69, %c384_70], %105 {strides = array<i32>} : memref<256x1152xbf16, #tpu.memory_space<vmem>>, vector<256x128xbf16>,
    %107 = vector.extract_strided_slice %90 {offsets = [1, 1, 0], sizes = [16, 16, 128], strides = [1, 1, 1]} : vector<18x18x128xf32> to vector<16x16x128xf32>
    %108 = vector.shape_cast %107 : vector<16x16x128xf32> to vector<256x128xf32>
    %109 = arith.truncf %108 : vector<256x128xf32> to vector<256x128xbf16>
    %c0_71 = arith.constant 0 : index
    %c512_72 = arith.constant 512 : index
    %110 = vector.load %arg14[%c0_71, %c512_72] : memref<256x1152xbf16, #tpu.memory_space<vmem>>, vector<256x128xbf16>
    tpu.vector_store %arg14[%c0_71, %c512_72], %109 {strides = array<i32>} : memref<256x1152xbf16, #tpu.memory_space<vmem>>, vector<256x128xbf16>,
    %111 = vector.extract_strided_slice %90 {offsets = [1, 2, 0], sizes = [16, 16, 128], strides = [1, 1, 1]} : vector<18x18x128xf32> to vector<16x16x128xf32>
    %112 = vector.shape_cast %111 : vector<16x16x128xf32> to vector<256x128xf32>
    %113 = arith.truncf %112 : vector<256x128xf32> to vector<256x128xbf16>
    %c0_73 = arith.constant 0 : index
    %c640_74 = arith.constant 640 : index
    %114 = vector.load %arg14[%c0_73, %c640_74] : memref<256x1152xbf16, #tpu.memory_space<vmem>>, vector<256x128xbf16>
    tpu.vector_store %arg14[%c0_73, %c640_74], %113 {strides = array<i32>} : memref<256x1152xbf16, #tpu.memory_space<vmem>>, vector<256x128xbf16>,
    %115 = vector.extract_strided_slice %90 {offsets = [2, 0, 0], sizes = [16, 16, 128], strides = [1, 1, 1]} : vector<18x18x128xf32> to vector<16x16x128xf32>
    %116 = vector.shape_cast %115 : vector<16x16x128xf32> to vector<256x128xf32>
    %117 = arith.truncf %116 : vector<256x128xf32> to vector<256x128xbf16>
    %c0_75 = arith.constant 0 : index
    %c768_76 = arith.constant 768 : index
    %118 = vector.load %arg14[%c0_75, %c768_76] : memref<256x1152xbf16, #tpu.memory_space<vmem>>, vector<256x128xbf16>
    tpu.vector_store %arg14[%c0_75, %c768_76], %117 {strides = array<i32>} : memref<256x1152xbf16, #tpu.memory_space<vmem>>, vector<256x128xbf16>,
    %119 = vector.extract_strided_slice %90 {offsets = [2, 1, 0], sizes = [16, 16, 128], strides = [1, 1, 1]} : vector<18x18x128xf32> to vector<16x16x128xf32>
    %120 = vector.shape_cast %119 : vector<16x16x128xf32> to vector<256x128xf32>
    %121 = arith.truncf %120 : vector<256x128xf32> to vector<256x128xbf16>
    %c0_77 = arith.constant 0 : index
    %c896_78 = arith.constant 896 : index
    %122 = vector.load %arg14[%c0_77, %c896_78] : memref<256x1152xbf16, #tpu.memory_space<vmem>>, vector<256x128xbf16>
    tpu.vector_store %arg14[%c0_77, %c896_78], %121 {strides = array<i32>} : memref<256x1152xbf16, #tpu.memory_space<vmem>>, vector<256x128xbf16>,
    %123 = vector.extract_strided_slice %90 {offsets = [2, 2, 0], sizes = [16, 16, 128], strides = [1, 1, 1]} : vector<18x18x128xf32> to vector<16x16x128xf32>
    %124 = vector.shape_cast %123 : vector<16x16x128xf32> to vector<256x128xf32>
    %125 = arith.truncf %124 : vector<256x128xf32> to vector<256x128xbf16>
    %c0_79 = arith.constant 0 : index
    %c1024_80 = arith.constant 1024 : index
    %126 = vector.load %arg14[%c0_79, %c1024_80] : memref<256x1152xbf16, #tpu.memory_space<vmem>>, vector<256x128xbf16>
    tpu.vector_store %arg14[%c0_79, %c1024_80], %125 {strides = array<i32>} : memref<256x1152xbf16, #tpu.memory_space<vmem>>, vector<256x128xbf16>,
    %c0_81 = arith.constant 0 : index
    %c0_82 = arith.constant 0 : index
    %127 = vector.load %arg14[%c0_81, %c0_82] : memref<256x1152xbf16, #tpu.memory_space<vmem>>, vector<256x1152xbf16>
    %c1_83 = arith.constant 1 : index
    %c0_84 = arith.constant 0 : index
    %c0_85 = arith.constant 0 : index
    %128 = vector.load %arg4[%c1_83, %c0_84, %c0_85] : memref<2x1152x128xbf16, #tpu.memory_space<vmem>>, vector<1x1152x128xbf16>
    %129 = vector.shape_cast %128 : vector<1x1152x128xbf16> to vector<1152x128xbf16>
    %cst_86 = arith.constant dense<0.000000e+00> : vector<256x128xf32>
    %130 = tpu.matmul %127, %129, %cst_86 {dimension_numbers = #tpu.dot_dimension_numbers<[1], [0], [0], [1], [0, 0, 1, 1], [], []>} : vector<256x1152xbf16>, vector<1152x128xbf16>, vector<256x128xf32> -> vector<256x128xf32>
    %c0_87 = arith.constant 0 : index
    %c0_88 = arith.constant 0 : index
    %c0_89 = arith.constant 0 : index
    %131 = vector.load %arg12[%c0_87, %c0_88, %c0_89] : memref<16x16x128xbf16, #tpu.memory_space<vmem>>, vector<16x16x128xbf16>
    %132 = vector.shape_cast %130 : vector<256x128xf32> to vector<16x16x128xf32>
    %133 = arith.truncf %132 : vector<16x16x128xf32> to vector<16x16x128xbf16>
    %134 = arith.addf %131, %133 : vector<16x16x128xbf16>
    %c0_90 = arith.constant 0 : index
    %c0_91 = arith.constant 0 : index
    %c0_92 = arith.constant 0 : index
    %135 = vector.load %arg12[%c0_90, %c0_91, %c0_92] : memref<16x16x128xbf16, #tpu.memory_space<vmem>>, vector<16x16x128xbf16>
    tpu.vector_store %arg12[%c0_90, %c0_91, %c0_92], %134 {strides = array<i32>} : memref<16x16x128xbf16, #tpu.memory_space<vmem>>, vector<16x16x128xbf16>,
    %c0_93 = arith.constant 0 : index
    %c0_94 = arith.constant 0 : index
    %c0_95 = arith.constant 0 : index
    %136 = vector.load %arg12[%c0_93, %c0_94, %c0_95] : memref<16x16x128xbf16, #tpu.memory_space<vmem>>, vector<16x16x128xbf16>
    %137 = vector.shape_cast %136 : vector<16x16x128xbf16> to vector<256x128xbf16>
    %138 = arith.extf %137 : vector<256x128xbf16> to vector<256x128xf32>
    %c0_96 = arith.constant 0 : index
    %c0_97 = arith.constant 0 : index
    %139 = vector.load %arg7[%c0_96, %c0_97] : memref<1x128xf32, #tpu.memory_space<vmem>>, vector<1x128xf32>
    %140 = vector.broadcast %139 : vector<1x128xf32> to vector<256x128xf32>
    %141 = arith.mulf %138, %140 : vector<256x128xf32>
    %c0_98 = arith.constant 0 : index
    %c0_99 = arith.constant 0 : index
    %142 = vector.load %arg8[%c0_98, %c0_99] : memref<1x128xf32, #tpu.memory_space<vmem>>, vector<1x128xf32>
    %143 = vector.broadcast %142 : vector<1x128xf32> to vector<256x128xf32>
    %144 = arith.addf %141, %143 : vector<256x128xf32>
    %cst_100 = arith.constant 0.000000e+00 : f32
    %145 = vector.broadcast %cst_100 : f32 to vector<256x128xf32>
    %146 = arith.maximumf %144, %145 : vector<256x128xf32>
    %cst_101 = arith.constant dense<0.000000e+00> : vector<128xf32>
    %147 = vector.multi_reduction <add>, %146, %cst_101 [0] : vector<256x128xf32> to vector<128xf32>
    %148 = vector.shape_cast %147 : vector<128xf32> to vector<1x128xf32>
    %cst_102 = arith.constant 3.906250e-03 : f32
    %149 = vector.broadcast %cst_102 : f32 to vector<1x128xf32>
    %150 = arith.mulf %148, %149 : vector<1x128xf32>
    %151 = arith.truncf %150 : vector<1x128xf32> to vector<1x128xbf16>
    %c0_103 = arith.constant 0 : index
    %c0_104 = arith.constant 0 : index
    %152 = vector.load %arg9[%c0_103, %c0_104] : memref<128x128xbf16, #tpu.memory_space<vmem>>, vector<128x128xbf16>
    %cst_105 = arith.constant dense<0.000000e+00> : vector<1x128xf32>
    %153 = tpu.matmul %151, %152, %cst_105 {dimension_numbers = #tpu.dot_dimension_numbers<[1], [0], [0], [1], [0, 0, 1, 1], [], []>} : vector<1x128xbf16>, vector<128x128xbf16>, vector<1x128xf32> -> vector<1x128xf32>
    %c0_106 = arith.constant 0 : index
    %c0_107 = arith.constant 0 : index
    %154 = vector.load %arg10[%c0_106, %c0_107] : memref<1x128xf32, #tpu.memory_space<vmem>>, vector<1x128xf32>
    %155 = arith.addf %153, %154 : vector<1x128xf32>
    %156 = vector.shape_cast %155 : vector<1x128xf32> to vector<1x1x128xf32>
    %c0_108 = arith.constant 0 : index
    %c0_109 = arith.constant 0 : index
    %c0_110 = arith.constant 0 : index
    %157 = vector.load %arg11[%c0_108, %c0_109, %c0_110] : memref<1x1x128xf32, #tpu.memory_space<vmem>>, vector<1x1x128xf32>
    tpu.vector_store %arg11[%c0_108, %c0_109, %c0_110], %156 {strides = array<i32>} : memref<1x1x128xf32, #tpu.memory_space<vmem>>, vector<1x1x128xf32>,
    return
  }
  func.func @transform_0(%arg0: i32) -> (i32, i32, i32) {
    %c0_i32 = arith.constant 0 : i32
    %c0_i32_0 = arith.constant 0 : i32
    %c0_i32_1 = arith.constant 0 : i32
    return %arg0, %c0_i32, %c0_i32_0 : i32, i32, i32
  }
  func.func @transform_1(%arg0: i32) -> (i32, i32) {
    %c0_i32 = arith.constant 0 : i32
    %c0_i32_0 = arith.constant 0 : i32
    %c0_i32_1 = arith.constant 0 : i32
    return %c0_i32, %c0_i32_0 : i32, i32
  }
  func.func @transform_2(%arg0: i32) -> (i32, i32) {
    %c0_i32 = arith.constant 0 : i32
    %c0_i32_0 = arith.constant 0 : i32
    %c0_i32_1 = arith.constant 0 : i32
    return %c0_i32, %c0_i32_0 : i32, i32
  }
  func.func @transform_3(%arg0: i32) -> (i32, i32, i32) {
    %c0_i32 = arith.constant 0 : i32
    %c0_i32_0 = arith.constant 0 : i32
    %c0_i32_1 = arith.constant 0 : i32
    %c0_i32_2 = arith.constant 0 : i32
    return %c0_i32, %c0_i32_0, %c0_i32_1 : i32, i32, i32
  }
  func.func @transform_4(%arg0: i32) -> (i32, i32) {
    %c0_i32 = arith.constant 0 : i32
    %c0_i32_0 = arith.constant 0 : i32
    %c0_i32_1 = arith.constant 0 : i32
    return %c0_i32, %c0_i32_0 : i32, i32
  }
  func.func @transform_5(%arg0: i32) -> (i32, i32) {
    %c0_i32 = arith.constant 0 : i32
    %c0_i32_0 = arith.constant 0 : i32
    %c0_i32_1 = arith.constant 0 : i32
    return %c0_i32, %c0_i32_0 : i32, i32
  }
  func.func @transform_6(%arg0: i32) -> (i32, i32) {
    %c0_i32 = arith.constant 0 : i32
    %c0_i32_0 = arith.constant 0 : i32
    %c0_i32_1 = arith.constant 0 : i32
    return %c0_i32, %c0_i32_0 : i32, i32
  }
  func.func @transform_7(%arg0: i32) -> (i32, i32) {
    %c0_i32 = arith.constant 0 : i32
    %c0_i32_0 = arith.constant 0 : i32
    %c0_i32_1 = arith.constant 0 : i32
    return %c0_i32, %c0_i32_0 : i32, i32
  }
  func.func @transform_8(%arg0: i32) -> (i32, i32) {
    %c0_i32 = arith.constant 0 : i32
    %c0_i32_0 = arith.constant 0 : i32
    %c0_i32_1 = arith.constant 0 : i32
    return %c0_i32, %c0_i32_0 : i32, i32
  }
  func.func @transform_9(%arg0: i32) -> (i32, i32) {
    %c0_i32 = arith.constant 0 : i32
    %c0_i32_0 = arith.constant 0 : i32
    %c0_i32_1 = arith.constant 0 : i32
    return %c0_i32, %c0_i32_0 : i32, i32
  }
  func.func @transform_10(%arg0: i32) -> (i32, i32, i32) {
    %c0_i32 = arith.constant 0 : i32
    %c0_i32_0 = arith.constant 0 : i32
    %c0_i32_1 = arith.constant 0 : i32
    return %arg0, %c0_i32, %c0_i32_0 : i32, i32, i32
  }
}

</mosaic_0001>

<llo_original>
// kernel: squeeze.4
$region0: #{squeeze.4}
  %s0 = inlined_call_operand.vmem [shape: bf16[2,1,16,16], index: 0, kind: input, shape index: {}]
  %s1 = inlined_call_operand.vmem [shape: bf16[2,256,1], index: 1, kind: output, shape index: {}]
  $region1: #{squeeze.4} parent=0
    #allocation0 [shape = 'u8[8192]{0}', space=vmem, size = 0x2000, scoped, tag = 'scoped mem for output reshape']
    #allocation1 [shape = 'u8[16384]{0}', space=vmem, size = 0x4000, scoped, tag = 'scoped mem for input reshape']
    %s3 = smul.u32 4, 2
    %s4 = sshllo.u32 0, %s3
    %s5 = smul.addr 4, 3
    %s6 = scalar_lea.vmem %s0, %s5
    %s7 = sshrl.u32 %s4, 1
    %s8 = sor.u32 %s4, %s7
    %s9 = sand.u32 %s8, 85
    %s10 = sshrl.u32 %s9, 1
    %s11 = sor.u32 %s9, %s10
    %s12 = sand.u32 51, %s11
    %s13 = sshrl.u32 %s12, 2
    %s14 = sor.u32 %s12, %s13
    %s15 = sand.u32 15, %s14
    %v16 = vld [vmem:[%s6] sm:%s15]
    %v17 = vunpack.c.l.bf16 %v16
    %v18 = vunpack.c.h.bf16 %v16
    %s19 = scalar_lea.vmem [#allocation1], 24
    %20 = vst [vmem:[%s19] sm:%s4] %v17
    %s21 = smul.addr 4, 2
    %s22 = scalar_lea.vmem %s0, %s21
    %s23 = sshrl.u32 %s4, 1
    %s24 = sor.u32 %s4, %s23
    %s25 = sand.u32 %s24, 85
    %s26 = sshrl.u32 %s25, 1
    %s27 = sor.u32 %s25, %s26
    %s28 = sand.u32 51, %s27
    %s29 = sshrl.u32 %s28, 2
    %s30 = sor.u32 %s28, %s29
    %s31 = sand.u32 15, %s30
    %v32 = vld [vmem:[%s22] sm:%s31]
    %v33 = vunpack.c.l.bf16 %v32
    %v34 = vunpack.c.h.bf16 %v32
    %s35 = scalar_lea.vmem [#allocation1], 16
    %36 = vst [vmem:[%s35] sm:%s4] %v33
    %s37 = scalar_lea.vmem %s0, 4
    %s38 = sshrl.u32 %s4, 1
    %s39 = sor.u32 %s4, %s38
    %s40 = sand.u32 %s39, 85
    %s41 = sshrl.u32 %s40, 1
    %s42 = sor.u32 %s40, %s41
    %s43 = sand.u32 51, %s42
    %s44 = sshrl.u32 %s43, 2
    %s45 = sor.u32 %s43, %s44
    %s46 = sand.u32 15, %s45
    %v47 = vld [vmem:[%s37] sm:%s46]
    %v48 = vunpack.c.l.bf16 %v47
    %v49 = vunpack.c.h.bf16 %v47
    %s50 = scalar_lea.vmem [#allocation1], 8
    %51 = vst [vmem:[%s50] sm:%s4] %v48
    %s52 = sshrl.u32 %s4, 1
    %s53 = sor.u32 %s4, %s52
    %s54 = sand.u32 %s53, 85
    %s55 = sshrl.u32 %s54, 1
    %s56 = sor.u32 %s54, %s55
    %s57 = sand.u32 51, %s56
    %s58 = sshrl.u32 %s57, 2
    %s59 = sor.u32 %s57, %s58
    %s60 = sand.u32 15, %s59
    %v61 = vld [vmem:[%s0] sm:%s60]
    %v62 = vunpack.c.l.bf16 %v61
    %v63 = vunpack.c.h.bf16 %v61
    %64 = vst [vmem:[#allocation1] sm:%s4] %v62
    %v65 = vld [vmem:[#allocation1] ss:$8 sm:$0xf]
    %vm66 = vcmask 130048
    %67 = vst.msk [vmem:[#allocation0] ss:$8 sm:$0x3] %vm66, %v65
    %s68 = scalar_lea.vmem [#allocation0], 4294967281
    %69 = vst.msk [vmem:[%s68] ss:$8 sm:$0xc] %vm66, %v65
    %s70 = scalar_lea.vmem [#allocation1], 7
    %s71 = smov 3
    %v72 = vld [vmem:[%s70] ss:$16 sm:%s71]
    %s73 = scalar_lea.vmem [#allocation1], 4294967279
    %s74 = smov 12
    %v75 = vld [vmem:[%s73] ss:$16 sm:%s74]
    %vm76 = vcmask 1043458
    %v77 = vsel %vm76, %v75, %v72
    %78 = vrot.lane.b32.xlu0 %v77, 112
    %v79 = vpop.permute.xlu0 %78
    %vm80 = vcmask 1048448
    %81 = vst.msk [vmem:[#allocation0] sm:$0x3] %vm80, %v79
    %s82 = scalar_lea.vmem [#allocation0], 6
    %83 = vst.msk [vmem:[%s82] sm:$0xc] %vm80, %v79
    %s84 = scalar_lea.vmem [#allocation1], 6
    %s85 = smov 3
    %v86 = vld [vmem:[%s84] ss:$16 sm:%s85]
    %s87 = scalar_lea.vmem [#allocation1], 4294967278
    %s88 = smov 12
    %v89 = vld [vmem:[%s87] ss:$16 sm:%s88]
    %vm90 = vcmask 1043458
    %v91 = vsel %vm90, %v89, %v86
    %92 = vrot.lane.b32.xlu0 %v91, 96
    %v93 = vpop.permute.xlu0 %92
    %vm94 = vcmask 917248
    %95 = vst.msk [vmem:[#allocation0] sm:$0x3] %vm94, %v93
    %s96 = scalar_lea.vmem [#allocation0], 6
    %97 = vst.msk [vmem:[%s96] sm:$0xc] %vm94, %v93
    %s98 = scalar_lea.vmem [#allocation1], 5
    %s99 = smov 3
    %v100 = vld [vmem:[%s98] ss:$16 sm:%s99]
    %s101 = scalar_lea.vmem [#allocation1], 4294967277
    %s102 = smov 12
    %v103 = vld [vmem:[%s101] ss:$16 sm:%s102]
    %vm104 = vcmask 1043458
    %v105 = vsel %vm104, %v103, %v100
    %106 = vrot.lane.b32.xlu0 %v105, 80
    %v107 = vpop.permute.xlu0 %106
    %vm108 = vcmask 786048
    %109 = vst.msk [vmem:[#allocation0] sm:$0x3] %vm108, %v107
    %s110 = scalar_lea.vmem [#allocation0], 6
    %111 = vst.msk [vmem:[%s110] sm:$0xc] %vm108, %v107
    %s112 = scalar_lea.vmem [#allocation1], 4
    %s113 = smov 3
    %v114 = vld [vmem:[%s112] ss:$16 sm:%s113]
    %s115 = scalar_lea.vmem [#allocation1], 4294967276
    %s116 = smov 12
    %v117 = vld [vmem:[%s115] ss:$16 sm:%s116]
    %vm118 = vcmask 1043458
    %v119 = vsel %vm118, %v117, %v114
    %120 = vrot.lane.b32.xlu0 %v119, 64
    %v121 = vpop.permute.xlu0 %120
    %vm122 = vcmask 654848
    %123 = vst.msk [vmem:[#allocation0] sm:$0x3] %vm122, %v121
    %s124 = scalar_lea.vmem [#allocation0], 6
    %125 = vst.msk [vmem:[%s124] sm:$0xc] %vm122, %v121
    %s126 = scalar_lea.vmem [#allocation1], 3
    %s127 = smov 3
    %v128 = vld [vmem:[%s126] ss:$16 sm:%s127]
    %s129 = scalar_lea.vmem [#allocation1], 4294967275
    %s130 = smov 12
    %v131 = vld [vmem:[%s129] ss:$16 sm:%s130]
    %vm132 = vcmask 1043458
    %v133 = vsel %vm132, %v131, %v128
    %134 = vrot.lane.b32.xlu0 %v133, 48
    %v135 = vpop.permute.xlu0 %134
    %vm136 = vcmask 523648
    %137 = vst.msk [vmem:[#allocation0] sm:$0x3] %vm136, %v135
    %s138 = scalar_lea.vmem [#allocation0], 6
    %139 = vst.msk [vmem:[%s138] sm:$0xc] %vm136, %v135
    %s140 = scalar_lea.vmem [#allocation1], 2
    %s141 = smov 3
    %v142 = vld [vmem:[%s140] ss:$16 sm:%s141]
    %s143 = scalar_lea.vmem [#allocation1], 4294967274
    %s144 = smov 12
    %v145 = vld [vmem:[%s143] ss:$16 sm:%s144]
    %vm146 = vcmask 1043458
    %v147 = vsel %vm146, %v145, %v142
    %148 = vrot.lane.b32.xlu0 %v147, 32
    %v149 = vpop.permute.xlu0 %148
    %vm150 = vcmask 392448
    %151 = vst.msk [vmem:[#allocation0] sm:$0x3] %vm150, %v149
    %s152 = scalar_lea.vmem [#allocation0], 6
    %153 = vst.msk [vmem:[%s152] sm:$0xc] %vm150, %v149
    %s154 = scalar_lea.vmem [#allocation1], 1
    %s155 = smov 3
    %v156 = vld [vmem:[%s154] ss:$16 sm:%s155]
    %s157 = scalar_lea.vmem [#allocation1], 4294967273
    %s158 = smov 12
    %v159 = vld [vmem:[%s157] ss:$16 sm:%s158]
    %vm160 = vcmask 1043458
    %v161 = vsel %vm160, %v159, %v156
    %162 = vrot.lane.b32.xlu0 %v161, 16
    %v163 = vpop.permute.xlu0 %162
    %vm164 = vcmask 261248
    %165 = vst.msk [vmem:[#allocation0] sm:$0x3] %vm164, %v163
    %s166 = scalar_lea.vmem [#allocation0], 6
    %167 = vst.msk [vmem:[%s166] sm:$0xc] %vm164, %v163
    %s169 = smul.u32 1, 2
    %s170 = sshllo.u32 0, %s169
    %s171 = sshrl.u32 %s169, 1
    %v172 = vld [vmem:[#allocation0] sm:%s170]
    %v173 = vpack.c.bf16 0.0, %v172
    %s174 = sshllo.u32 0, %s171
    %175 = vst [vmem:[%s1] sm:%s174] %v173
    %s176 = scalar_lea.vmem [#allocation0], 8
    %v177 = vld [vmem:[%s176] sm:%s170]
    %v178 = vpack.c.bf16 0.0, %v177
    %s179 = sshllo.u32 0, %s171
    %s180 = scalar_lea.vmem %s1, 1
    %181 = vst [vmem:[%s180] sm:%s179] %v178

// kernel: forward.1
$region0: #{forward.1}
  #allocation0 [shape = 'u32[]', space=smem, size = 0x4, offset = 0x4, fixed_abs, tag = 'smem constant byte address 0x4 - core index']
  #allocation1 [shape = 'u32[144,128]{1,0:T(1,128)}', space=vmem, size = 0x12000, scoped, tag = 'internal scratch']
  #allocation2 [shape = 'bf16[16,16,128]{2,1,0:T(16,128)(2,1)}', space=vmem, size = 0x10000, scoped, tag = 'scratch operand']
  #allocation3 [shape = 'f32[18,18,128]{2,1,0:T(8,128)}', space=vmem, size = 0x36000, scoped, tag = 'scratch operand']
  #allocation4 [shape = 'bf16[256,1152]{1,0:T(16,128)(2,1)}', space=vmem, size = 0x90000, scoped, tag = 'scratch operand']
  %s0 = inlined_call_operand.vmem [shape: bf16[2,256,16], index: 0, kind: input, shape index: {}]
  %s1 = inlined_call_operand.vmem [shape: bf16[16,128], index: 1, kind: input, shape index: {}]
  %s2 = inlined_call_operand.vmem [shape: f32[1,128], index: 2, kind: input, shape index: {}]
  %s3 = inlined_call_operand.vmem [shape: bf16[2,1152,128], index: 3, kind: input, shape index: {}]
  %s4 = inlined_call_operand.vmem [shape: f32[2,128], index: 4, kind: input, shape index: {}]
  %s5 = inlined_call_operand.vmem [shape: f32[2,128], index: 5, kind: input, shape index: {}]
  %s6 = inlined_call_operand.vmem [shape: f32[1,128], index: 6, kind: input, shape index: {}]
  %s7 = inlined_call_operand.vmem [shape: f32[1,128], index: 7, kind: input, shape index: {}]
  %s8 = inlined_call_operand.vmem [shape: bf16[128,128], index: 8, kind: input, shape index: {}]
  %s9 = inlined_call_operand.vmem [shape: f32[1,128], index: 9, kind: input, shape index: {}]
  %s10 = inlined_call_operand.hbm [shape: f32[2,1,128], index: 10, kind: output, shape index: {}]
  %s11 = sld [smem:[#allocation0]]
  $region73: #{forward.1} parent=0
    _
  %s13 = ssub.s32 1, %s11
  %s14 = scalar_select 0, %s13, %s11
  $region1: #{forward.1} parent=0
    #allocation5 [shape = 'u8[1024]{0}', space=vmem, size = 0x400, scoped, tag = 'output window, operand 0']
    #allocation6 [shape = 's32[2]{0}', space=sflag, size = 0x8, scoped, tag = 'scoped memory for forward.1']
    %15 = vsyncpa [#allocation6], 0
    %s16 = scalar_lea.sflag [#allocation6], 1
    %17 = vsyncpa %s16, 0
    loop: start=0, step=1, limit=4
    $region2: #{forward.1} parent=1 // loop_pre_header
      _
    $region3: #{forward.1} parent=1 // loop_header
      %s19 = sphi 0, %s23
      %p20 = scmp.ge.s32.totalorder %s19, 4
      %s29 = sphi 0, %s31
      %s32 = sphi 0, %s29
      %s33 = sphi 0, %s32
      %s49 = sphi 0, %s33
      %s53 = sphi 0, %s53
      %s55 = sphi 0, %s53
      %s56 = sphi 0, %s55
      %s70 = sphi 0, %s56
      %s74 = sphi 0, %s74
      %s76 = sphi 0, %s74
      %s77 = sphi 0, %s76
      %s91 = sphi 0, %s77
      %s95 = sphi 0, %s95
      %s97 = sphi 0, %s95
      %s98 = sphi 0, %s97
      %s112 = sphi 0, %s98
      %s116 = sphi 0, %s116
      %s118 = sphi 0, %s116
      %s119 = sphi 0, %s118
      %s133 = sphi 0, %s119
      %s137 = sphi 0, %s137
      %s139 = sphi 0, %s137
      %s140 = sphi 0, %s139
      %s154 = sphi 0, %s140
      %s158 = sphi 0, %s158
      %s160 = sphi 0, %s158
      %s161 = sphi 0, %s160
      %s175 = sphi 0, %s161
      %s179 = sphi 0, %s179
      %s181 = sphi 0, %s179
      %s182 = sphi 0, %s181
      %s196 = sphi 0, %s182
      %s200 = sphi 0, %s200
      %s202 = sphi 0, %s200
      %s203 = sphi 0, %s202
      %s217 = sphi 0, %s203
      %s221 = sphi 0, %s221
      %s223 = sphi 0, %s221
      %s224 = sphi 0, %s223
      %s238 = sphi 0, %s224
      %s244 = sphi 0, %s246
      %s247 = sphi 0, %s244
      %s248 = sphi 0, %s247
      %s264 = sphi 0, %s248
    $region4: #{forward.1} parent=1 // loop_header_branch
      %22 = sbr.rel (%p20) target = $region8
    $region5: #{forward.1} parent=1 // loop_body
      %s24 = ssub.s32 %s19, 1
      %s25 = ssub.s32 %s19, 2
      %s26 = sadd.s32 %s19, 1
      %s27 = ssub.s32 %s19, %s26
      %p28 = scmp.eq.s32.totalorder %s27, 0
      %s30 = sadd.s32 %s29, 1
      %s31 = scalar_select %p28, %s29, %s30
      %p34 = pneg %p28
      %p35 = scmp.eq.s32.totalorder %s19, 1
      %p36 = por %p34, %p35
      %p37 = scmp.ne.s32.totalorder %s29, %s32
      %p38 = scmp.eq.s32.totalorder %s19, 0
      %p39 = por %p37, %p38
      %p40 = scmp.ne.s32.totalorder %s29, %s32
      %p41 = scmp.eq.s32.totalorder %s24, 1
      %p42 = por %p40, %p41
      %p43 = scmp.ne.s32.totalorder %s32, %s33
      %p44 = scmp.eq.s32.totalorder %s24, 0
      %p45 = por %p43, %p44
      %p46 = scmp.ne.s32.totalorder %s32, %s33
      %p47 = scmp.eq.s32.totalorder %s25, 1
      %p48 = por %p46, %p47
      %p50 = scmp.ne.s32.totalorder %s33, %s49
      %p51 = scmp.eq.s32.totalorder %s25, 0
      %p52 = por %p50, %p51
      %s54 = sadd.s32 %s53, 1
      %p57 = scmp.eq.s32.totalorder %s19, 1
      %p58 = scmp.ne.s32.totalorder %s53, %s55
      %p59 = scmp.eq.s32.totalorder %s19, 0
      %p60 = por %p58, %p59
      %p61 = scmp.ne.s32.totalorder %s53, %s55
      %p62 = scmp.eq.s32.totalorder %s24, 1
      %p63 = por %p61, %p62
      %p64 = scmp.ne.s32.totalorder %s55, %s56
      %p65 = scmp.eq.s32.totalorder %s24, 0
      %p66 = por %p64, %p65
      %p67 = scmp.ne.s32.totalorder %s55, %s56
      %p68 = scmp.eq.s32.totalorder %s25, 1
      %p69 = por %p67, %p68
      %p71 = scmp.ne.s32.totalorder %s56, %s70
      %p72 = scmp.eq.s32.totalorder %s25, 0
      %p73 = por %p71, %p72
      %s75 = sadd.s32 %s74, 1
      %p78 = scmp.eq.s32.totalorder %s19, 1
      %p79 = scmp.ne.s32.totalorder %s74, %s76
      %p80 = scmp.eq.s32.totalorder %s19, 0
      %p81 = por %p79, %p80
      %p82 = scmp.ne.s32.totalorder %s74, %s76
      %p83 = scmp.eq.s32.totalorder %s24, 1
      %p84 = por %p82, %p83
      %p85 = scmp.ne.s32.totalorder %s76, %s77
      %p86 = scmp.eq.s32.totalorder %s24, 0
      %p87 = por %p85, %p86
      %p88 = scmp.ne.s32.totalorder %s76, %s77
      %p89 = scmp.eq.s32.totalorder %s25, 1
      %p90 = por %p88, %p89
      %p92 = scmp.ne.s32.totalorder %s77, %s91
      %p93 = scmp.eq.s32.totalorder %s25, 0
      %p94 = por %p92, %p93
      %s96 = sadd.s32 %s95, 1
      %p99 = scmp.eq.s32.totalorder %s19, 1
      %p100 = scmp.ne.s32.totalorder %s95, %s97
      %p101 = scmp.eq.s32.totalorder %s19, 0
      %p102 = por %p100, %p101
      %p103 = scmp.ne.s32.totalorder %s95, %s97
      %p104 = scmp.eq.s32.totalorder %s24, 1
      %p105 = por %p103, %p104
      %p106 = scmp.ne.s32.totalorder %s97, %s98
      %p107 = scmp.eq.s32.totalorder %s24, 0
      %p108 = por %p106, %p107
      %p109 = scmp.ne.s32.totalorder %s97, %s98
      %p110 = scmp.eq.s32.totalorder %s25, 1
      %p111 = por %p109, %p110
      %p113 = scmp.ne.s32.totalorder %s98, %s112
      %p114 = scmp.eq.s32.totalorder %s25, 0
      %p115 = por %p113, %p114
      %s117 = sadd.s32 %s116, 1
      %p120 = scmp.eq.s32.totalorder %s19, 1
      %p121 = scmp.ne.s32.totalorder %s116, %s118
      %p122 = scmp.eq.s32.totalorder %s19, 0
      %p123 = por %p121, %p122
      %p124 = scmp.ne.s32.totalorder %s116, %s118
      %p125 = scmp.eq.s32.totalorder %s24, 1
      %p126 = por %p124, %p125
      %p127 = scmp.ne.s32.totalorder %s118, %s119
      %p128 = scmp.eq.s32.totalorder %s24, 0
      %p129 = por %p127, %p128
      %p130 = scmp.ne.s32.totalorder %s118, %s119
      %p131 = scmp.eq.s32.totalorder %s25, 1
      %p132 = por %p130, %p131
      %p134 = scmp.ne.s32.totalorder %s119, %s133
      %p135 = scmp.eq.s32.totalorder %s25, 0
      %p136 = por %p134, %p135
      %s138 = sadd.s32 %s137, 1
      %p141 = scmp.eq.s32.totalorder %s19, 1
      %p142 = scmp.ne.s32.totalorder %s137, %s139
      %p143 = scmp.eq.s32.totalorder %s19, 0
      %p144 = por %p142, %p143
      %p145 = scmp.ne.s32.totalorder %s137, %s139
      %p146 = scmp.eq.s32.totalorder %s24, 1
      %p147 = por %p145, %p146
      %p148 = scmp.ne.s32.totalorder %s139, %s140
      %p149 = scmp.eq.s32.totalorder %s24, 0
      %p150 = por %p148, %p149
      %p151 = scmp.ne.s32.totalorder %s139, %s140
      %p152 = scmp.eq.s32.totalorder %s25, 1
      %p153 = por %p151, %p152
      %p155 = scmp.ne.s32.totalorder %s140, %s154
      %p156 = scmp.eq.s32.totalorder %s25, 0
      %p157 = por %p155, %p156
      %s159 = sadd.s32 %s158, 1
      %p162 = scmp.eq.s32.totalorder %s19, 1
      %p163 = scmp.ne.s32.totalorder %s158, %s160
      %p164 = scmp.eq.s32.totalorder %s19, 0
      %p165 = por %p163, %p164
      %p166 = scmp.ne.s32.totalorder %s158, %s160
      %p167 = scmp.eq.s32.totalorder %s24, 1
      %p168 = por %p166, %p167
      %p169 = scmp.ne.s32.totalorder %s160, %s161
      %p170 = scmp.eq.s32.totalorder %s24, 0
      %p171 = por %p169, %p170
      %p172 = scmp.ne.s32.totalorder %s160, %s161
      %p173 = scmp.eq.s32.totalorder %s25, 1
      %p174 = por %p172, %p173
      %p176 = scmp.ne.s32.totalorder %s161, %s175
      %p177 = scmp.eq.s32.totalorder %s25, 0
      %p178 = por %p176, %p177
      %s180 = sadd.s32 %s179, 1
      %p183 = scmp.eq.s32.totalorder %s19, 1
      %p184 = scmp.ne.s32.totalorder %s179, %s181
      %p185 = scmp.eq.s32.totalorder %s19, 0
      %p186 = por %p184, %p185
      %p187 = scmp.ne.s32.totalorder %s179, %s181
      %p188 = scmp.eq.s32.totalorder %s24, 1
      %p189 = por %p187, %p188
      %p190 = scmp.ne.s32.totalorder %s181, %s182
      %p191 = scmp.eq.s32.totalorder %s24, 0
      %p192 = por %p190, %p191
      %p193 = scmp.ne.s32.totalorder %s181, %s182
      %p194 = scmp.eq.s32.totalorder %s25, 1
      %p195 = por %p193, %p194
      %p197 = scmp.ne.s32.totalorder %s182, %s196
      %p198 = scmp.eq.s32.totalorder %s25, 0
      %p199 = por %p197, %p198
      %s201 = sadd.s32 %s200, 1
      %p204 = scmp.eq.s32.totalorder %s19, 1
      %p205 = scmp.ne.s32.totalorder %s200, %s202
      %p206 = scmp.eq.s32.totalorder %s19, 0
      %p207 = por %p205, %p206
      %p208 = scmp.ne.s32.totalorder %s200, %s202
      %p209 = scmp.eq.s32.totalorder %s24, 1
      %p210 = por %p208, %p209
      %p211 = scmp.ne.s32.totalorder %s202, %s203
      %p212 = scmp.eq.s32.totalorder %s24, 0
      %p213 = por %p211, %p212
      %p214 = scmp.ne.s32.totalorder %s202, %s203
      %p215 = scmp.eq.s32.totalorder %s25, 1
      %p216 = por %p214, %p215
      %p218 = scmp.ne.s32.totalorder %s203, %s217
      %p219 = scmp.eq.s32.totalorder %s25, 0
      %p220 = por %p218, %p219
      %s222 = sadd.s32 %s221, 1
      %p225 = scmp.eq.s32.totalorder %s19, 1
      %p226 = scmp.ne.s32.totalorder %s221, %s223
      %p227 = scmp.eq.s32.totalorder %s19, 0
      %p228 = por %p226, %p227
      %p229 = scmp.ne.s32.totalorder %s221, %s223
      %p230 = scmp.eq.s32.totalorder %s24, 1
      %p231 = por %p229, %p230
      %p232 = scmp.ne.s32.totalorder %s223, %s224
      %p233 = scmp.eq.s32.totalorder %s24, 0
      %p234 = por %p232, %p233
      %p235 = scmp.ne.s32.totalorder %s223, %s224
      %p236 = scmp.eq.s32.totalorder %s25, 1
      %p237 = por %p235, %p236
      %p239 = scmp.ne.s32.totalorder %s224, %s238
      %p240 = scmp.eq.s32.totalorder %s25, 0
      %p241 = por %p239, %p240
      %s242 = ssub.s32 %s19, %s26
      %p243 = scmp.eq.s32.totalorder %s242, 0
      %s245 = sadd.s32 %s244, 1
      %s246 = scalar_select %p243, %s244, %s245
      %p249 = pneg %p243
      %p250 = scmp.eq.s32.totalorder %s19, 1
      %p251 = por %p249, %p250
      %p252 = scmp.ne.s32.totalorder %s244, %s247
      %p253 = scmp.eq.s32.totalorder %s19, 0
      %p254 = por %p252, %p253
      %p255 = scmp.ne.s32.totalorder %s244, %s247
      %p256 = scmp.eq.s32.totalorder %s24, 1
      %p257 = por %p255, %p256
      %p258 = scmp.ne.s32.totalorder %s247, %s248
      %p259 = scmp.eq.s32.totalorder %s24, 0
      %p260 = por %p258, %p259
      %p261 = scmp.ne.s32.totalorder %s247, %s248
      %p262 = scmp.eq.s32.totalorder %s25, 1
      %p263 = por %p261, %p262
      %p265 = scmp.ne.s32.totalorder %s248, %s264
      %p266 = scmp.eq.s32.totalorder %s25, 0
      %p267 = por %p265, %p266
      %p268 = scmp.le.s32.totalorder 1, %s19
      %p269 = scmp.lt.s32.totalorder %s19, 3
      %p270 = pnand %p268, %p269
      %p271 = pneg %p270
      // Predicated region
      $region9: #{forward.1} parent=5 // pred_check
        _
      $region10: #{forward.1} parent=5 // pred_check_branch
        %273 = sbr.rel (%p270) target = $region12
      $region11: #{forward.1} parent=5 // pred_region
        %s274 = ssub.s32 %s19, 1
        // Predicated region
        $region13: #{forward.1} parent=11 // pred_check
          %p275 = pneg %p66
        $region14: #{forward.1} parent=11 // pred_check_branch
          %277 = sbr.rel (%p275) target = $region16
        $region15: #{forward.1} parent=11 // pred_region
          _
        $region16: #{forward.1} parent=11 // pred_fallthru
          _
        // Predicated region
        $region17: #{forward.1} parent=11 // pred_check
          %p278 = pneg %p87
        $region18: #{forward.1} parent=11 // pred_check_branch
          %280 = sbr.rel (%p278) target = $region20
        $region19: #{forward.1} parent=11 // pred_region
          _
        $region20: #{forward.1} parent=11 // pred_fallthru
          _
        // Predicated region
        $region21: #{forward.1} parent=11 // pred_check
          %p281 = pneg %p108
        $region22: #{forward.1} parent=11 // pred_check_branch
          %283 = sbr.rel (%p281) target = $region24
        $region23: #{forward.1} parent=11 // pred_region
          _
        $region24: #{forward.1} parent=11 // pred_fallthru
          _
        // Predicated region
        $region25: #{forward.1} parent=11 // pred_check
          %p284 = pneg %p129
        $region26: #{forward.1} parent=11 // pred_check_branch
          %286 = sbr.rel (%p284) target = $region28
        $region27: #{forward.1} parent=11 // pred_region
          _
        $region28: #{forward.1} parent=11 // pred_fallthru
          _
        // Predicated region
        $region29: #{forward.1} parent=11 // pred_check
          %p287 = pneg %p150
        $region30: #{forward.1} parent=11 // pred_check_branch
          %289 = sbr.rel (%p287) target = $region32
        $region31: #{forward.1} parent=11 // pred_region
          _
        $region32: #{forward.1} parent=11 // pred_fallthru
          _
        // Predicated region
        $region33: #{forward.1} parent=11 // pred_check
          %p290 = pneg %p171
        $region34: #{forward.1} parent=11 // pred_check_branch
          %292 = sbr.rel (%p290) target = $region36
        $region35: #{forward.1} parent=11 // pred_region
          _
        $region36: #{forward.1} parent=11 // pred_fallthru
          _
        // Predicated region
        $region37: #{forward.1} parent=11 // pred_check
          %p293 = pneg %p192
        $region38: #{forward.1} parent=11 // pred_check_branch
          %295 = sbr.rel (%p293) target = $region40
        $region39: #{forward.1} parent=11 // pred_region
          _
        $region40: #{forward.1} parent=11 // pred_fallthru
          _
        // Predicated region
        $region41: #{forward.1} parent=11 // pred_check
          %p296 = pneg %p213
        $region42: #{forward.1} parent=11 // pred_check_branch
          %298 = sbr.rel (%p296) target = $region44
        $region43: #{forward.1} parent=11 // pred_region
          _
        $region44: #{forward.1} parent=11 // pred_fallthru
          _
        // Predicated region
        $region45: #{forward.1} parent=11 // pred_check
          %p299 = pneg %p234
        $region46: #{forward.1} parent=11 // pred_check_branch
          %301 = sbr.rel (%p299) target = $region48
        $region47: #{forward.1} parent=11 // pred_region
          _
        $region48: #{forward.1} parent=11 // pred_fallthru
          _
      $region12: #{forward.1} parent=5 // pred_fallthru
        _
      %p302 = scmp.lt.s32.totalorder %s19, 2
      // Predicated region
      $region49: #{forward.1} parent=5 // pred_check
        %p303 = pneg %p302
      $region50: #{forward.1} parent=5 // pred_check_branch
        %305 = sbr.rel (%p303) target = $region52
      $region51: #{forward.1} parent=5 // pred_region
        // Predicated region
        $region53: #{forward.1} parent=51 // pred_check
          %p306 = pneg %p39
        $region54: #{forward.1} parent=51 // pred_check_branch
          %308 = sbr.rel (%p306) target = $region56
        $region55: #{forward.1} parent=51 // pred_region
          %p309 = scmp.lt.s32.totalorder %s19, 1
          %s310 = scalar_select %p309, %s19, 1
          %s311 = smul.addr %s310, 32
          %s312 = smul.addr %s311, 4
          %s313 = scalar_lea.vmem %s0, %s312
        $region56: #{forward.1} parent=51 // pred_fallthru
          _
      $region52: #{forward.1} parent=5 // pred_fallthru
        _
      %p314 = scmp.le.s32.totalorder 1, %s19
      %p315 = scmp.lt.s32.totalorder %s19, 3
      %p316 = pnand %p314, %p315
      %p317 = pneg %p316
      // Predicated region
      $region57: #{forward.1} parent=5 // pred_check
        _
      $region58: #{forward.1} parent=5 // pred_check_branch
        %319 = sbr.rel (%p316) target = $region60
      $region59: #{forward.1} parent=5 // pred_region
        %s320 = ssub.s32 %s19, 1
        %p321 = scmp.lt.s32.totalorder %s24, 1
        %s322 = scalar_select %p321, %s24, 1
        %s323 = smul.addr %s322, 32
        %s324 = smul.addr %s323, 4
        %s325 = scalar_lea.vmem %s0, %s324
        %p326 = pneg %p45
        %p327 = pneg %p42
        %p328 = pneg %p66
        %p329 = pneg %p63
        %p330 = pneg %p87
        %p331 = pneg %p84
        %p332 = pneg %p108
        %p333 = pneg %p105
        %p334 = pneg %p129
        %p335 = pneg %p126
        %p336 = pneg %p150
        %p337 = pneg %p147
        %p338 = pneg %p171
        %p339 = pneg %p168
        %p340 = pneg %p192
        %p341 = pneg %p189
        %p342 = pneg %p213
        %p343 = pneg %p210
        %p344 = pneg %p234
        %p345 = pneg %p231
        %p346 = pneg %p260
        %p347 = pneg %p257
        %s348 = sand.u32 %s247, 1
        %s349 = scalar_lea.sflag [#allocation6], %s348
        %s350 = sand.u32 %s247, 1
        %s351 = scalar_lea.vmem [#allocation5], %s350
        %p352 = scmp.lt.s32.totalorder %s24, 1
        %s353 = scalar_select %p352, %s24, 1
        %s354 = smul.addr %s353, 32
        %s355 = smul.addr %s354, 4
        %s356 = scalar_lea.vmem %s0, %s355
        %358 = vst [vmem:[#allocation3] sm:$0xff] 0.0
        %359 = vst [vmem:[#allocation3 + $0x8] sm:$0xff] 0.0
        %360 = vst [vmem:[#allocation3 + $0x10] sm:$0x3] 0.0
        %361 = vst [vmem:[#allocation3 + $0x18] sm:$0xff] 0.0
        %362 = vst [vmem:[#allocation3 + $0x20] sm:$0xff] 0.0
        %363 = vst [vmem:[#allocation3 + $0x28] sm:$0x3] 0.0
        %364 = vst [vmem:[#allocation3 + $0x30] sm:$0xff] 0.0
        %365 = vst [vmem:[#allocation3 + $0x38] sm:$0xff] 0.0
        %366 = vst [vmem:[#allocation3 + $0x40] sm:$0x3] 0.0
        %367 = vst [vmem:[#allocation3 + $0x48] sm:$0xff] 0.0
        %368 = vst [vmem:[#allocation3 + $0x50] sm:$0xff] 0.0
        %369 = vst [vmem:[#allocation3 + $0x58] sm:$0x3] 0.0
        %370 = vst [vmem:[#allocation3 + $0x60] sm:$0xff] 0.0
        %371 = vst [vmem:[#allocation3 + $0x68] sm:$0xff] 0.0
        %372 = vst [vmem:[#allocation3 + $0x70] sm:$0x3] 0.0
        %373 = vst [vmem:[#allocation3 + $0x78] sm:$0xff] 0.0
        %374 = vst [vmem:[#allocation3 + $0x80] sm:$0xff] 0.0
        %375 = vst [vmem:[#allocation3 + $0x88] sm:$0x3] 0.0
        %376 = vst [vmem:[#allocation3 + $0x90] sm:$0xff] 0.0
        %377 = vst [vmem:[#allocation3 + $0x98] sm:$0xff] 0.0
        %378 = vst [vmem:[#allocation3 + $0xa0] sm:$0x3] 0.0
        %379 = vst [vmem:[#allocation3 + $0xa8] sm:$0xff] 0.0
        %380 = vst [vmem:[#allocation3 + $0xb0] sm:$0xff] 0.0
        %381 = vst [vmem:[#allocation3 + $0xb8] sm:$0x3] 0.0
        %382 = vst [vmem:[#allocation3 + $0xc0] sm:$0xff] 0.0
        %383 = vst [vmem:[#allocation3 + $0xc8] sm:$0xff] 0.0
        %384 = vst [vmem:[#allocation3 + $0xd0] sm:$0x3] 0.0
        %385 = vst [vmem:[#allocation3 + $0xd8] sm:$0xff] 0.0
        %386 = vst [vmem:[#allocation3 + $0xe0] sm:$0xff] 0.0
        %387 = vst [vmem:[#allocation3 + $0xe8] sm:$0x3] 0.0
        %388 = vst [vmem:[#allocation3 + $0xf0] sm:$0xff] 0.0
        %389 = vst [vmem:[#allocation3 + $0xf8] sm:$0xff] 0.0
        %390 = vst [vmem:[#allocation3 + $0x100] sm:$0x3] 0.0
        %391 = vst [vmem:[#allocation3 + $0x108] sm:$0xff] 0.0
        %392 = vst [vmem:[#allocation3 + $0x110] sm:$0xff] 0.0
        %393 = vst [vmem:[#allocation3 + $0x118] sm:$0x3] 0.0
        %394 = vst [vmem:[#allocation3 + $0x120] sm:$0xff] 0.0
        %395 = vst [vmem:[#allocation3 + $0x128] sm:$0xff] 0.0
        %396 = vst [vmem:[#allocation3 + $0x130] sm:$0x3] 0.0
        %397 = vst [vmem:[#allocation3 + $0x138] sm:$0xff] 0.0
        %398 = vst [vmem:[#allocation3 + $0x140] sm:$0xff] 0.0
        %399 = vst [vmem:[#allocation3 + $0x148] sm:$0x3] 0.0
        %400 = vst [vmem:[#allocation3 + $0x150] sm:$0xff] 0.0
        %401 = vst [vmem:[#allocation3 + $0x158] sm:$0xff] 0.0
        %402 = vst [vmem:[#allocation3 + $0x160] sm:$0x3] 0.0
        %403 = vst [vmem:[#allocation3 + $0x168] sm:$0xff] 0.0
        %404 = vst [vmem:[#allocation3 + $0x170] sm:$0xff] 0.0
        %405 = vst [vmem:[#allocation3 + $0x178] sm:$0x3] 0.0
        %406 = vst [vmem:[#allocation3 + $0x180] sm:$0xff] 0.0
        %407 = vst [vmem:[#allocation3 + $0x188] sm:$0xff] 0.0
        %408 = vst [vmem:[#allocation3 + $0x190] sm:$0x3] 0.0
        %409 = vst [vmem:[#allocation3 + $0x198] sm:$0xff] 0.0
        %410 = vst [vmem:[#allocation3 + $0x1a0] sm:$0xff] 0.0
        %411 = vst [vmem:[#allocation3 + $0x1a8] sm:$0x3] 0.0
        %v412 = vld [vmem:[%s356] sm:$0xf]
        %v413 = vld [vmem:[%s356 + $0x4] sm:$0xf]
        %v414 = vld [vmem:[%s356 + $0x8] sm:$0xf]
        %v415 = vld [vmem:[%s356 + $0xc] sm:$0xf]
        %v416 = vld [vmem:[%s356 + $0x10] sm:$0xf]
        %v417 = vld [vmem:[%s356 + $0x14] sm:$0xf]
        %v418 = vld [vmem:[%s356 + $0x18] sm:$0xf]
        %v419 = vld [vmem:[%s356 + $0x1c] sm:$0xf]
        %v420 = vld [vmem:[%s356 + $0x20] sm:$0xf]
        %v421 = vld [vmem:[%s356 + $0x24] sm:$0xf]
        %v422 = vld [vmem:[%s356 + $0x28] sm:$0xf]
        %v423 = vld [vmem:[%s356 + $0x2c] sm:$0xf]
        %v424 = vld [vmem:[%s356 + $0x30] sm:$0xf]
        %v425 = vld [vmem:[%s356 + $0x34] sm:$0xf]
        %v426 = vld [vmem:[%s356 + $0x38] sm:$0xf]
        %v427 = vld [vmem:[%s356 + $0x3c] sm:$0xf]
        %v428 = vld [vmem:[%s356 + $0x40] sm:$0xf]
        %v429 = vld [vmem:[%s356 + $0x44] sm:$0xf]
        %v430 = vld [vmem:[%s356 + $0x48] sm:$0xf]
        %v431 = vld [vmem:[%s356 + $0x4c] sm:$0xf]
        %v432 = vld [vmem:[%s356 + $0x50] sm:$0xf]
        %v433 = vld [vmem:[%s356 + $0x54] sm:$0xf]
        %v434 = vld [vmem:[%s356 + $0x58] sm:$0xf]
        %v435 = vld [vmem:[%s356 + $0x5c] sm:$0xf]
        %v436 = vld [vmem:[%s356 + $0x60] sm:$0xf]
        %v437 = vld [vmem:[%s356 + $0x64] sm:$0xf]
        %v438 = vld [vmem:[%s356 + $0x68] sm:$0xf]
        %v439 = vld [vmem:[%s356 + $0x6c] sm:$0xf]
        %v440 = vld [vmem:[%s356 + $0x70] sm:$0xf]
        %v441 = vld [vmem:[%s356 + $0x74] sm:$0xf]
        %v442 = vld [vmem:[%s356 + $0x78] sm:$0xf]
        %v443 = vld [vmem:[%s356 + $0x7c] sm:$0xf]
        %v444 = vld [vmem:[%s1] sm:$0xf]
        %v445 = vld [vmem:[%s1 + $0x4] sm:$0xf]
        %v446 = vld [vmem:[%s2] sm:$0x1]
        %v448 = vlaneseq
        %v449 = vshrl.u32 %v448, 7
        %v450 = vsub.s32 0, %v449
        %v451 = vrot.slane %v446, %v450
        %v485 = vunpack.c.l.b16 %v412
        %v486 = vunpack.c.l.b16 %v413
        %v487 = vunpack.c.l.b16 %v414
        %v488 = vunpack.c.l.b16 %v415
        %v489 = vunpack.c.l.b16 %v416
        %v490 = vunpack.c.l.b16 %v417
        %v491 = vunpack.c.l.b16 %v418
        %v492 = vunpack.c.l.b16 %v419
        %v493 = vunpack.c.l.b16 %v420
        %v494 = vunpack.c.l.b16 %v421
        %v495 = vunpack.c.l.b16 %v422
        %v496 = vunpack.c.l.b16 %v423
        %v497 = vunpack.c.l.b16 %v424
        %v498 = vunpack.c.l.b16 %v425
        %v499 = vunpack.c.l.b16 %v426
        %v500 = vunpack.c.l.b16 %v427
        %v501 = vunpack.c.l.b16 %v428
        %v502 = vunpack.c.l.b16 %v429
        %v503 = vunpack.c.l.b16 %v430
        %v504 = vunpack.c.l.b16 %v431
        %v505 = vunpack.c.l.b16 %v432
        %v506 = vunpack.c.l.b16 %v433
        %v507 = vunpack.c.l.b16 %v434
        %v508 = vunpack.c.l.b16 %v435
        %v509 = vunpack.c.l.b16 %v436
        %v510 = vunpack.c.l.b16 %v437
        %v511 = vunpack.c.l.b16 %v438
        %v512 = vunpack.c.l.b16 %v439
        %v513 = vunpack.c.l.b16 %v440
        %v514 = vunpack.c.l.b16 %v441
        %v515 = vunpack.c.l.b16 %v442
        %v516 = vunpack.c.l.b16 %v443
        %v517 = vpack.c.b16 %v486, %v485
        %v518 = vpack.c.b16 %v488, %v487
        %v519 = vpack.c.b16 %v490, %v489
        %v520 = vpack.c.b16 %v492, %v491
        %v521 = vpack.c.b16 %v494, %v493
        %v522 = vpack.c.b16 %v496, %v495
        %v523 = vpack.c.b16 %v498, %v497
        %v524 = vpack.c.b16 %v500, %v499
        %v525 = vpack.c.b16 %v502, %v501
        %v526 = vpack.c.b16 %v504, %v503
        %v527 = vpack.c.b16 %v506, %v505
        %v528 = vpack.c.b16 %v508, %v507
        %v529 = vpack.c.b16 %v510, %v509
        %v530 = vpack.c.b16 %v512, %v511
        %v531 = vpack.c.b16 %v514, %v513
        %v532 = vpack.c.b16 %v516, %v515
        %v535 = vunpack.c.l.b16 %v444
        %v536 = vunpack.c.l.b16 %v445
        %v537 = vpack.c.b16 %v536, %v535
        %vm539 = vcmask 130048
        %v541 = vsel %vm539, %v517, 0
        %v544 = vsel %vm539, %v518, 0
        %v547 = vsel %vm539, %v519, 0
        %v550 = vsel %vm539, %v520, 0
        %v553 = vsel %vm539, %v521, 0
        %v556 = vsel %vm539, %v522, 0
        %v559 = vsel %vm539, %v523, 0
        %v562 = vsel %vm539, %v524, 0
        %v565 = vsel %vm539, %v525, 0
        %v568 = vsel %vm539, %v526, 0
        %v571 = vsel %vm539, %v527, 0
        %v574 = vsel %vm539, %v528, 0
        %v577 = vsel %vm539, %v529, 0
        %v580 = vsel %vm539, %v530, 0
        %v583 = vsel %vm539, %v531, 0
        %v586 = vsel %vm539, %v532, 0
        %588 = vmatprep.subr.bf16.mxu0 0
        %589 = vmatpush1.bf16.msra.mxu0 %v537
        %590 = vmatprep.subr.bf16.mxu0 0
        %591 = vmatpush1.bf16.msra.mxu0 0
        %592 = vmatprep.subr.bf16.mxu0 0
        %593 = vmatpush1.bf16.msra.mxu0 0
        %594 = vmatprep.subr.bf16.mxu0 0
        %595 = vmatpush1.bf16.msra.mxu0 0
        %596 = vmatprep.subr.bf16.mxu0 0
        %597 = vmatpush1.bf16.msra.mxu0 0
        %598 = vmatprep.subr.bf16.mxu0 0
        %599 = vmatpush1.bf16.msra.mxu0 0
        %600 = vmatprep.subr.bf16.mxu0 0
        %601 = vmatpush1.bf16.msra.mxu0 0
        %602 = vmatprep.subr.bf16.mxu0 0
        %603 = vmatpush1.bf16.msra.mxu0 0
        %604 = vmatprep.subr.bf16.mxu0 0
        %605 = vmatpush1.bf16.msra.mxu0 0
        %606 = vmatprep.subr.bf16.mxu0 0
        %607 = vmatpush1.bf16.msra.mxu0 0
        %608 = vmatprep.subr.bf16.mxu0 0
        %609 = vmatpush1.bf16.msra.mxu0 0
        %610 = vmatprep.subr.bf16.mxu0 0
        %611 = vmatpush1.bf16.msra.mxu0 0
        %612 = vmatprep.subr.bf16.mxu0 0
        %613 = vmatpush1.bf16.msra.mxu0 0
        %614 = vmatprep.subr.bf16.mxu0 0
        %615 = vmatpush1.bf16.msra.mxu0 0
        %616 = vmatprep.subr.bf16.mxu0 0
        %617 = vmatpush1.bf16.msra.mxu0 0
        %618 = vmatprep.subr.bf16.mxu0 0
        %619 = vmatpush1.bf16.msra.mxu0 0
        %620 = vmatprep.mubr.bf16.mxu0 0
        %621 = vmatmul.mubr.bf16.gmra.mrb[0].mxu0 %v541
        %v622 = vpop.f32.mrb[0].mxu0
        %v623 = vadd.f32 %v451, %v622
        %v624 = vpop.f32.mrb[0].mxu0
        %v625 = vpop.f32.mrb[0].mxu0
        %v626 = vadd.f32 %v451, %v625
        %v627 = vpop.f32.mrb[0].mxu0
        %628 = vmatprep.mubr.bf16.mxu0 0
        %629 = vmatmul.mubr.bf16.gmra.mrb[0].mxu0 %v544
        %v630 = vpop.f32.mrb[0].mxu0
        %v631 = vadd.f32 %v451, %v630
        %v632 = vpop.f32.mrb[0].mxu0
        %v633 = vpop.f32.mrb[0].mxu0
        %v634 = vadd.f32 %v451, %v633
        %v635 = vpop.f32.mrb[0].mxu0
        %636 = vmatprep.mubr.bf16.mxu0 0
        %637 = vmatmul.mubr.bf16.gmra.mrb[0].mxu0 %v547
        %v638 = vpop.f32.mrb[0].mxu0
        %v639 = vadd.f32 %v451, %v638
        %v640 = vpop.f32.mrb[0].mxu0
        %v641 = vpop.f32.mrb[0].mxu0
        %v642 = vadd.f32 %v451, %v641
        %v643 = vpop.f32.mrb[0].mxu0
        %644 = vmatprep.mubr.bf16.mxu0 0
        %645 = vmatmul.mubr.bf16.gmra.mrb[0].mxu0 %v550
        %v646 = vpop.f32.mrb[0].mxu0
        %v647 = vadd.f32 %v451, %v646
        %v648 = vpop.f32.mrb[0].mxu0
        %v649 = vpop.f32.mrb[0].mxu0
        %v650 = vadd.f32 %v451, %v649
        %v651 = vpop.f32.mrb[0].mxu0
        %652 = vmatprep.mubr.bf16.mxu0 0
        %653 = vmatmul.mubr.bf16.gmra.mrb[0].mxu0 %v553
        %v654 = vpop.f32.mrb[0].mxu0
        %v655 = vadd.f32 %v451, %v654
        %v656 = vpop.f32.mrb[0].mxu0
        %v657 = vpop.f32.mrb[0].mxu0
        %v658 = vadd.f32 %v451, %v657
        %v659 = vpop.f32.mrb[0].mxu0
        %660 = vmatprep.mubr.bf16.mxu0 0
        %661 = vmatmul.mubr.bf16.gmra.mrb[0].mxu0 %v556
        %v662 = vpop.f32.mrb[0].mxu0
        %v663 = vadd.f32 %v451, %v662
        %v664 = vpop.f32.mrb[0].mxu0
        %v665 = vpop.f32.mrb[0].mxu0
        %v666 = vadd.f32 %v451, %v665
        %v667 = vpop.f32.mrb[0].mxu0
        %668 = vmatprep.mubr.bf16.mxu0 0
        %669 = vmatmul.mubr.bf16.gmra.mrb[0].mxu0 %v559
        %v670 = vpop.f32.mrb[0].mxu0
        %v671 = vadd.f32 %v451, %v670
        %v672 = vpop.f32.mrb[0].mxu0
        %v673 = vpop.f32.mrb[0].mxu0
        %v674 = vadd.f32 %v451, %v673
        %v675 = vpop.f32.mrb[0].mxu0
        %676 = vmatprep.mubr.bf16.mxu0 0
        %677 = vmatmul.mubr.bf16.gmra.mrb[0].mxu0 %v562
        %v678 = vpop.f32.mrb[0].mxu0
        %v679 = vadd.f32 %v451, %v678
        %v680 = vpop.f32.mrb[0].mxu0
        %v681 = vpop.f32.mrb[0].mxu0
        %v682 = vadd.f32 %v451, %v681
        %v683 = vpop.f32.mrb[0].mxu0
        %684 = vmatprep.mubr.bf16.mxu0 0
        %685 = vmatmul.mubr.bf16.gmra.mrb[0].mxu0 %v565
        %v686 = vpop.f32.mrb[0].mxu0
        %v687 = vadd.f32 %v451, %v686
        %v688 = vpop.f32.mrb[0].mxu0
        %v689 = vpop.f32.mrb[0].mxu0
        %v690 = vadd.f32 %v451, %v689
        %v691 = vpop.f32.mrb[0].mxu0
        %692 = vmatprep.mubr.bf16.mxu0 0
        %693 = vmatmul.mubr.bf16.gmra.mrb[0].mxu0 %v568
        %v694 = vpop.f32.mrb[0].mxu0
        %v695 = vadd.f32 %v451, %v694
        %v696 = vpop.f32.mrb[0].mxu0
        %v697 = vpop.f32.mrb[0].mxu0
        %v698 = vadd.f32 %v451, %v697
        %v699 = vpop.f32.mrb[0].mxu0
        %700 = vmatprep.mubr.bf16.mxu0 0
        %701 = vmatmul.mubr.bf16.gmra.mrb[0].mxu0 %v571
        %v702 = vpop.f32.mrb[0].mxu0
        %v703 = vadd.f32 %v451, %v702
        %v704 = vpop.f32.mrb[0].mxu0
        %v705 = vpop.f32.mrb[0].mxu0
        %v706 = vadd.f32 %v451, %v705
        %v707 = vpop.f32.mrb[0].mxu0
        %708 = vmatprep.mubr.bf16.mxu0 0
        %709 = vmatmul.mubr.bf16.gmra.mrb[0].mxu0 %v574
        %v710 = vpop.f32.mrb[0].mxu0
        %v711 = vadd.f32 %v451, %v710
        %v712 = vpop.f32.mrb[0].mxu0
        %v713 = vpop.f32.mrb[0].mxu0
        %v714 = vadd.f32 %v451, %v713
        %v715 = vpop.f32.mrb[0].mxu0
        %716 = vmatprep.mubr.bf16.mxu0 0
        %717 = vmatmul.mubr.bf16.gmra.mrb[0].mxu0 %v577
        %v718 = vpop.f32.mrb[0].mxu0
        %v719 = vadd.f32 %v451, %v718
        %v720 = vpop.f32.mrb[0].mxu0
        %v721 = vpop.f32.mrb[0].mxu0
        %v722 = vadd.f32 %v451, %v721
        %v723 = vpop.f32.mrb[0].mxu0
        %724 = vmatprep.mubr.bf16.mxu0 0
        %725 = vmatmul.mubr.bf16.gmra.mrb[0].mxu0 %v580
        %v726 = vpop.f32.mrb[0].mxu0
        %v727 = vadd.f32 %v451, %v726
        %v728 = vpop.f32.mrb[0].mxu0
        %v729 = vpop.f32.mrb[0].mxu0
        %v730 = vadd.f32 %v451, %v729
        %v731 = vpop.f32.mrb[0].mxu0
        %732 = vmatprep.mubr.bf16.mxu0 0
        %733 = vmatmul.mubr.bf16.gmra.mrb[0].mxu0 %v583
        %v734 = vpop.f32.mrb[0].mxu0
        %v735 = vadd.f32 %v451, %v734
        %v736 = vpop.f32.mrb[0].mxu0
        %v737 = vpop.f32.mrb[0].mxu0
        %v738 = vadd.f32 %v451, %v737
        %v739 = vpop.f32.mrb[0].mxu0
        %740 = vmatprep.mubr.bf16.mxu0 0
        %741 = vmatmul.mubr.bf16.gmra.mrb[0].mxu0 %v586
        %v742 = vpop.f32.mrb[0].mxu0
        %v743 = vadd.f32 %v451, %v742
        %v744 = vpop.f32.mrb[0].mxu0
        %v745 = vpop.f32.mrb[0].mxu0
        %v746 = vadd.f32 %v451, %v745
        %v747 = vpop.f32.mrb[0].mxu0
        %748 = vdwg.mxu0
        %v749 = vmax.f32 %v623, 0.0
        %v750 = vmax.f32 %v626, 0.0
        %v751 = vmax.f32 %v631, 0.0
        %v752 = vmax.f32 %v634, 0.0
        %v753 = vmax.f32 %v639, 0.0
        %v754 = vmax.f32 %v642, 0.0
        %v755 = vmax.f32 %v647, 0.0
        %v756 = vmax.f32 %v650, 0.0
        %v757 = vmax.f32 %v655, 0.0
        %v758 = vmax.f32 %v658, 0.0
        %v759 = vmax.f32 %v663, 0.0
        %v760 = vmax.f32 %v666, 0.0
        %v761 = vmax.f32 %v671, 0.0
        %v762 = vmax.f32 %v674, 0.0
        %v763 = vmax.f32 %v679, 0.0
        %v764 = vmax.f32 %v682, 0.0
        %v765 = vmax.f32 %v687, 0.0
        %v766 = vmax.f32 %v690, 0.0
        %v767 = vmax.f32 %v695, 0.0
        %v768 = vmax.f32 %v698, 0.0
        %v769 = vmax.f32 %v703, 0.0
        %v770 = vmax.f32 %v706, 0.0
        %v771 = vmax.f32 %v711, 0.0
        %v772 = vmax.f32 %v714, 0.0
        %v773 = vmax.f32 %v719, 0.0
        %v774 = vmax.f32 %v722, 0.0
        %v775 = vmax.f32 %v727, 0.0
        %v776 = vmax.f32 %v730, 0.0
        %v777 = vmax.f32 %v735, 0.0
        %v778 = vmax.f32 %v738, 0.0
        %v779 = vmax.f32 %v743, 0.0
        %v780 = vmax.f32 %v746, 0.0
        %v781 = vpack.c.bf16 %v750, %v749
        %v782 = vpack.c.bf16 %v752, %v751
        %v783 = vpack.c.bf16 %v754, %v753
        %v784 = vpack.c.bf16 %v756, %v755
        %v785 = vpack.c.bf16 %v758, %v757
        %v786 = vpack.c.bf16 %v760, %v759
        %v787 = vpack.c.bf16 %v762, %v761
        %v788 = vpack.c.bf16 %v764, %v763
        %v789 = vpack.c.bf16 %v766, %v765
        %v790 = vpack.c.bf16 %v768, %v767
        %v791 = vpack.c.bf16 %v770, %v769
        %v792 = vpack.c.bf16 %v772, %v771
        %v793 = vpack.c.bf16 %v774, %v773
        %v794 = vpack.c.bf16 %v776, %v775
        %v795 = vpack.c.bf16 %v778, %v777
        %v796 = vpack.c.bf16 %v780, %v779
        %797 = vst [vmem:[#allocation2] sm:$0xff] %v781
        %798 = vst [vmem:[#allocation2 + $0x8] sm:$0xff] %v782
        %799 = vst [vmem:[#allocation2 + $0x10] sm:$0xff] %v783
        %800 = vst [vmem:[#allocation2 + $0x18] sm:$0xff] %v784
        %801 = vst [vmem:[#allocation2 + $0x20] sm:$0xff] %v785
        %802 = vst [vmem:[#allocation2 + $0x28] sm:$0xff] %v786
        %803 = vst [vmem:[#allocation2 + $0x30] sm:$0xff] %v787
        %804 = vst [vmem:[#allocation2 + $0x38] sm:$0xff] %v788
        %805 = vst [vmem:[#allocation2 + $0x40] sm:$0xff] %v789
        %806 = vst [vmem:[#allocation2 + $0x48] sm:$0xff] %v790
        %807 = vst [vmem:[#allocation2 + $0x50] sm:$0xff] %v791
        %808 = vst [vmem:[#allocation2 + $0x58] sm:$0xff] %v792
        %809 = vst [vmem:[#allocation2 + $0x60] sm:$0xff] %v793
        %810 = vst [vmem:[#allocation2 + $0x68] sm:$0xff] %v794
        %811 = vst [vmem:[#allocation2 + $0x70] sm:$0xff] %v795
        %812 = vst [vmem:[#allocation2 + $0x78] sm:$0xff] %v796
        %v813 = vld [vmem:[#allocation2] sm:$0xff]
        %v814 = vld [vmem:[#allocation2 + $0x8] sm:$0xff]
        %v815 = vld [vmem:[#allocation2 + $0x10] sm:$0xff]
        %v816 = vld [vmem:[#allocation2 + $0x18] sm:$0xff]
        %v817 = vld [vmem:[#allocation2 + $0x20] sm:$0xff]
        %v818 = vld [vmem:[#allocation2 + $0x28] sm:$0xff]
        %v819 = vld [vmem:[#allocation2 + $0x30] sm:$0xff]
        %v820 = vld [vmem:[#allocation2 + $0x38] sm:$0xff]
        %v821 = vld [vmem:[#allocation2 + $0x40] sm:$0xff]
        %v822 = vld [vmem:[#allocation2 + $0x48] sm:$0xff]
        %v823 = vld [vmem:[#allocation2 + $0x50] sm:$0xff]
        %v824 = vld [vmem:[#allocation2 + $0x58] sm:$0xff]
        %v825 = vld [vmem:[#allocation2 + $0x60] sm:$0xff]
        %v826 = vld [vmem:[#allocation2 + $0x68] sm:$0xff]
        %v827 = vld [vmem:[#allocation2 + $0x70] sm:$0xff]
        %v828 = vld [vmem:[#allocation2 + $0x78] sm:$0xff]
        %v829 = vunpack.c.l.bf16 %v813
        %v830 = vunpack.c.h.bf16 %v813
        %v831 = vunpack.c.l.bf16 %v814
        %v832 = vunpack.c.h.bf16 %v814
        %v833 = vunpack.c.l.bf16 %v815
        %v834 = vunpack.c.h.bf16 %v815
        %v835 = vunpack.c.l.bf16 %v816
        %v836 = vunpack.c.h.bf16 %v816
        %v837 = vunpack.c.l.bf16 %v817
        %v838 = vunpack.c.h.bf16 %v817
        %v839 = vunpack.c.l.bf16 %v818
        %v840 = vunpack.c.h.bf16 %v818
        %v841 = vunpack.c.l.bf16 %v819
        %v842 = vunpack.c.h.bf16 %v819
        %v843 = vunpack.c.l.bf16 %v820
        %v844 = vunpack.c.h.bf16 %v820
        %v845 = vunpack.c.l.bf16 %v821
        %v846 = vunpack.c.h.bf16 %v821
        %v847 = vunpack.c.l.bf16 %v822
        %v848 = vunpack.c.h.bf16 %v822
        %v849 = vunpack.c.l.bf16 %v823
        %v850 = vunpack.c.h.bf16 %v823
        %v851 = vunpack.c.l.bf16 %v824
        %v852 = vunpack.c.h.bf16 %v824
        %v853 = vunpack.c.l.bf16 %v825
        %v854 = vunpack.c.h.bf16 %v825
        %v855 = vunpack.c.l.bf16 %v826
        %v856 = vunpack.c.h.bf16 %v826
        %v857 = vunpack.c.l.bf16 %v827
        %v858 = vunpack.c.h.bf16 %v827
        %v859 = vunpack.c.l.bf16 %v828
        %v860 = vunpack.c.h.bf16 %v828
        %v861 = vld [vmem:[%s4] sm:$0x1]
        %v862 = vlaneseq
        %v863 = vshrl.u32 %v862, 7
        %v864 = vsub.s32 0, %v863
        %v865 = vrot.slane %v861, %v864
        %v866 = vmul.f32 %v829, %v865
        %v867 = vmul.f32 %v830, %v865
        %v868 = vmul.f32 %v831, %v865
        %v869 = vmul.f32 %v832, %v865
        %v870 = vmul.f32 %v833, %v865
        %v871 = vmul.f32 %v834, %v865
        %v872 = vmul.f32 %v835, %v865
        %v873 = vmul.f32 %v836, %v865
        %v874 = vmul.f32 %v837, %v865
        %v875 = vmul.f32 %v838, %v865
        %v876 = vmul.f32 %v839, %v865
        %v877 = vmul.f32 %v840, %v865
        %v878 = vmul.f32 %v841, %v865
        %v879 = vmul.f32 %v842, %v865
        %v880 = vmul.f32 %v843, %v865
        %v881 = vmul.f32 %v844, %v865
        %v882 = vmul.f32 %v845, %v865
        %v883 = vmul.f32 %v846, %v865
        %v884 = vmul.f32 %v847, %v865
        %v885 = vmul.f32 %v848, %v865
        %v886 = vmul.f32 %v849, %v865
        %v887 = vmul.f32 %v850, %v865
        %v888 = vmul.f32 %v851, %v865
        %v889 = vmul.f32 %v852, %v865
        %v890 = vmul.f32 %v853, %v865
        %v891 = vmul.f32 %v854, %v865
        %v892 = vmul.f32 %v855, %v865
        %v893 = vmul.f32 %v856, %v865
        %v894 = vmul.f32 %v857, %v865
        %v895 = vmul.f32 %v858, %v865
        %v896 = vmul.f32 %v859, %v865
        %v897 = vmul.f32 %v860, %v865
        %v898 = vld [vmem:[%s5] sm:$0x1]
        %v899 = vlaneseq
        %v900 = vshrl.u32 %v899, 7
        %v901 = vsub.s32 0, %v900
        %v902 = vrot.slane %v898, %v901
        %v903 = vadd.f32 %v866, %v902
        %v904 = vadd.f32 %v867, %v902
        %v905 = vadd.f32 %v868, %v902
        %v906 = vadd.f32 %v869, %v902
        %v907 = vadd.f32 %v870, %v902
        %v908 = vadd.f32 %v871, %v902
        %v909 = vadd.f32 %v872, %v902
        %v910 = vadd.f32 %v873, %v902
        %v911 = vadd.f32 %v874, %v902
        %v912 = vadd.f32 %v875, %v902
        %v913 = vadd.f32 %v876, %v902
        %v914 = vadd.f32 %v877, %v902
        %v915 = vadd.f32 %v878, %v902
        %v916 = vadd.f32 %v879, %v902
        %v917 = vadd.f32 %v880, %v902
        %v918 = vadd.f32 %v881, %v902
        %v919 = vadd.f32 %v882, %v902
        %v920 = vadd.f32 %v883, %v902
        %v921 = vadd.f32 %v884, %v902
        %v922 = vadd.f32 %v885, %v902
        %v923 = vadd.f32 %v886, %v902
        %v924 = vadd.f32 %v887, %v902
        %v925 = vadd.f32 %v888, %v902
        %v926 = vadd.f32 %v889, %v902
        %v927 = vadd.f32 %v890, %v902
        %v928 = vadd.f32 %v891, %v902
        %v929 = vadd.f32 %v892, %v902
        %v930 = vadd.f32 %v893, %v902
        %v931 = vadd.f32 %v894, %v902
        %v932 = vadd.f32 %v895, %v902
        %v933 = vadd.f32 %v896, %v902
        %v934 = vadd.f32 %v897, %v902
        %v935 = vmax.f32 %v903, 0.0
        %v936 = vmax.f32 %v904, 0.0
        %v937 = vmax.f32 %v905, 0.0
        %v938 = vmax.f32 %v906, 0.0
        %v939 = vmax.f32 %v907, 0.0
        %v940 = vmax.f32 %v908, 0.0
        %v941 = vmax.f32 %v909, 0.0
        %v942 = vmax.f32 %v910, 0.0
        %v943 = vmax.f32 %v911, 0.0
        %v944 = vmax.f32 %v912, 0.0
        %v945 = vmax.f32 %v913, 0.0
        %v946 = vmax.f32 %v914, 0.0
        %v947 = vmax.f32 %v915, 0.0
        %v948 = vmax.f32 %v916, 0.0
        %v949 = vmax.f32 %v917, 0.0
        %v950 = vmax.f32 %v918, 0.0
        %v951 = vmax.f32 %v919, 0.0
        %v952 = vmax.f32 %v920, 0.0
        %v953 = vmax.f32 %v921, 0.0
        %v954 = vmax.f32 %v922, 0.0
        %v955 = vmax.f32 %v923, 0.0
        %v956 = vmax.f32 %v924, 0.0
        %v957 = vmax.f32 %v925, 0.0
        %v958 = vmax.f32 %v926, 0.0
        %v959 = vmax.f32 %v927, 0.0
        %v960 = vmax.f32 %v928, 0.0
        %v961 = vmax.f32 %v929, 0.0
        %v962 = vmax.f32 %v930, 0.0
        %v963 = vmax.f32 %v931, 0.0
        %v964 = vmax.f32 %v932, 0.0
        %v965 = vmax.f32 %v933, 0.0
        %v966 = vmax.f32 %v934, 0.0
        %s967 = scalar_lea.vmem [#allocation3], 24
        %968 = vst [vmem:[%s967 + $0x1] sm:$0xff] %v935
        %969 = vst [vmem:[%s967 + $0x9] sm:$0xff] %v936
        %970 = vst [vmem:[%s967 + $0x19] sm:$0xff] %v937
        %971 = vst [vmem:[%s967 + $0x21] sm:$0xff] %v938
        %972 = vst [vmem:[%s967 + $0x31] sm:$0xff] %v939
        %973 = vst [vmem:[%s967 + $0x39] sm:$0xff] %v940
        %974 = vst [vmem:[%s967 + $0x49] sm:$0xff] %v941
        %975 = vst [vmem:[%s967 + $0x51] sm:$0xff] %v942
        %976 = vst [vmem:[%s967 + $0x61] sm:$0xff] %v943
        %977 = vst [vmem:[%s967 + $0x69] sm:$0xff] %v944
        %978 = vst [vmem:[%s967 + $0x79] sm:$0xff] %v945
        %979 = vst [vmem:[%s967 + $0x81] sm:$0xff] %v946
        %980 = vst [vmem:[%s967 + $0x91] sm:$0xff] %v947
        %981 = vst [vmem:[%s967 + $0x99] sm:$0xff] %v948
        %982 = vst [vmem:[%s967 + $0xa9] sm:$0xff] %v949
        %983 = vst [vmem:[%s967 + $0xb1] sm:$0xff] %v950
        %984 = vst [vmem:[%s967 + $0xc1] sm:$0xff] %v951
        %985 = vst [vmem:[%s967 + $0xc9] sm:$0xff] %v952
        %986 = vst [vmem:[%s967 + $0xd9] sm:$0xff] %v953
        %987 = vst [vmem:[%s967 + $0xe1] sm:$0xff] %v954
        %988 = vst [vmem:[%s967 + $0xf1] sm:$0xff] %v955
        %989 = vst [vmem:[%s967 + $0xf9] sm:$0xff] %v956
        %990 = vst [vmem:[%s967 + $0x109] sm:$0xff] %v957
        %991 = vst [vmem:[%s967 + $0x111] sm:$0xff] %v958
        %992 = vst [vmem:[%s967 + $0x121] sm:$0xff] %v959
        %993 = vst [vmem:[%s967 + $0x129] sm:$0xff] %v960
        %994 = vst [vmem:[%s967 + $0x139] sm:$0xff] %v961
        %995 = vst [vmem:[%s967 + $0x141] sm:$0xff] %v962
        %996 = vst [vmem:[%s967 + $0x151] sm:$0xff] %v963
        %997 = vst [vmem:[%s967 + $0x159] sm:$0xff] %v964
        %998 = vst [vmem:[%s967 + $0x169] sm:$0xff] %v965
        %999 = vst [vmem:[%s967 + $0x171] sm:$0xff] %v966
        %v1000 = vld [vmem:[#allocation3] sm:$0xff]
        %v1001 = vld [vmem:[#allocation3 + $0x8] sm:$0xff]
        %v1002 = vld [vmem:[#allocation3 + $0x10] sm:$0x3]
        %v1003 = vld [vmem:[#allocation3 + $0x18] sm:$0xff]
        %v1004 = vld [vmem:[#allocation3 + $0x20] sm:$0xff]
        %v1005 = vld [vmem:[#allocation3 + $0x28] sm:$0x3]
        %v1006 = vld [vmem:[#allocation3 + $0x30] sm:$0xff]
        %v1007 = vld [vmem:[#allocation3 + $0x38] sm:$0xff]
        %v1008 = vld [vmem:[#allocation3 + $0x40] sm:$0x3]
        %v1009 = vld [vmem:[#allocation3 + $0x48] sm:$0xff]
        %v1010 = vld [vmem:[#allocation3 + $0x50] sm:$0xff]
        %v1011 = vld [vmem:[#allocation3 + $0x58] sm:$0x3]
        %v1012 = vld [vmem:[#allocation3 + $0x60] sm:$0xff]
        %v1013 = vld [vmem:[#allocation3 + $0x68] sm:$0xff]
        %v1014 = vld [vmem:[#allocation3 + $0x70] sm:$0x3]
        %v1015 = vld [vmem:[#allocation3 + $0x78] sm:$0xff]
        %v1016 = vld [vmem:[#allocation3 + $0x80] sm:$0xff]
        %v1017 = vld [vmem:[#allocation3 + $0x88] sm:$0x3]
        %v1018 = vld [vmem:[#allocation3 + $0x90] sm:$0xff]
        %v1019 = vld [vmem:[#allocation3 + $0x98] sm:$0xff]
        %v1020 = vld [vmem:[#allocation3 + $0xa0] sm:$0x3]
        %v1021 = vld [vmem:[#allocation3 + $0xa8] sm:$0xff]
        %v1022 = vld [vmem:[#allocation3 + $0xb0] sm:$0xff]
        %v1023 = vld [vmem:[#allocation3 + $0xb8] sm:$0x3]
        %v1024 = vld [vmem:[#allocation3 + $0xc0] sm:$0xff]
        %v1025 = vld [vmem:[#allocation3 + $0xc8] sm:$0xff]
        %v1026 = vld [vmem:[#allocation3 + $0xd0] sm:$0x3]
        %v1027 = vld [vmem:[#allocation3 + $0xd8] sm:$0xff]
        %v1028 = vld [vmem:[#allocation3 + $0xe0] sm:$0xff]
        %v1029 = vld [vmem:[#allocation3 + $0xe8] sm:$0x3]
        %v1030 = vld [vmem:[#allocation3 + $0xf0] sm:$0xff]
        %v1031 = vld [vmem:[#allocation3 + $0xf8] sm:$0xff]
        %v1032 = vld [vmem:[#allocation3 + $0x100] sm:$0x3]
        %v1033 = vld [vmem:[#allocation3 + $0x108] sm:$0xff]
        %v1034 = vld [vmem:[#allocation3 + $0x110] sm:$0xff]
        %v1035 = vld [vmem:[#allocation3 + $0x118] sm:$0x3]
        %v1036 = vld [vmem:[#allocation3 + $0x120] sm:$0xff]
        %v1037 = vld [vmem:[#allocation3 + $0x128] sm:$0xff]
        %v1038 = vld [vmem:[#allocation3 + $0x130] sm:$0x3]
        %v1039 = vld [vmem:[#allocation3 + $0x138] sm:$0xff]
        %v1040 = vld [vmem:[#allocation3 + $0x140] sm:$0xff]
        %v1041 = vld [vmem:[#allocation3 + $0x148] sm:$0x3]
        %v1042 = vld [vmem:[#allocation3 + $0x150] sm:$0xff]
        %v1043 = vld [vmem:[#allocation3 + $0x158] sm:$0xff]
        %v1044 = vld [vmem:[#allocation3 + $0x160] sm:$0x3]
        %v1045 = vld [vmem:[#allocation3 + $0x168] sm:$0xff]
        %v1046 = vld [vmem:[#allocation3 + $0x170] sm:$0xff]
        %v1047 = vld [vmem:[#allocation3 + $0x178] sm:$0x3]
        %v1048 = vld [vmem:[#allocation3 + $0x180] sm:$0xff]
        %v1049 = vld [vmem:[#allocation3 + $0x188] sm:$0xff]
        %v1050 = vld [vmem:[#allocation3 + $0x190] sm:$0x3]
        %v1051 = vld [vmem:[#allocation3 + $0x198] sm:$0xff]
        %v1052 = vld [vmem:[#allocation3 + $0x1a0] sm:$0xff]
        %v1053 = vld [vmem:[#allocation3 + $0x1a8] sm:$0x3]
        %v1054 = vpack.c.bf16 %v1001, %v1000
        %v1055 = vpack.c.bf16 %v1004, %v1003
        %v1056 = vpack.c.bf16 %v1007, %v1006
        %v1057 = vpack.c.bf16 %v1010, %v1009
        %v1058 = vpack.c.bf16 %v1013, %v1012
        %v1059 = vpack.c.bf16 %v1016, %v1015
        %v1060 = vpack.c.bf16 %v1019, %v1018
        %v1061 = vpack.c.bf16 %v1022, %v1021
        %v1062 = vpack.c.bf16 %v1025, %v1024
        %v1063 = vpack.c.bf16 %v1028, %v1027
        %v1064 = vpack.c.bf16 %v1031, %v1030
        %v1065 = vpack.c.bf16 %v1034, %v1033
        %v1066 = vpack.c.bf16 %v1037, %v1036
        %v1067 = vpack.c.bf16 %v1040, %v1039
        %v1068 = vpack.c.bf16 %v1043, %v1042
        %v1069 = vpack.c.bf16 %v1046, %v1045
        %1070 = vst [vmem:[#allocation4] sm:$0xff] %v1054
        %1071 = vst [vmem:[#allocation4 + $0x48] sm:$0xff] %v1055
        %1072 = vst [vmem:[#allocation4 + $0x90] sm:$0xff] %v1056
        %1073 = vst [vmem:[#allocation4 + $0xd8] sm:$0xff] %v1057
        %1074 = vst [vmem:[#allocation4 + $0x120] sm:$0xff] %v1058
        %1075 = vst [vmem:[#allocation4 + $0x168] sm:$0xff] %v1059
        %1076 = vst [vmem:[#allocation4 + $0x1b0] sm:$0xff] %v1060
        %1077 = vst [vmem:[#allocation4 + $0x1f8] sm:$0xff] %v1061
        %1078 = vst [vmem:[#allocation4 + $0x240] sm:$0xff] %v1062
        %1079 = vst [vmem:[#allocation4 + $0x288] sm:$0xff] %v1063
        %1080 = vst [vmem:[#allocation4 + $0x2d0] sm:$0xff] %v1064
        %1081 = vst [vmem:[#allocation4 + $0x318] sm:$0xff] %v1065
        %1082 = vst [vmem:[#allocation4 + $0x360] sm:$0xff] %v1066
        %1083 = vst [vmem:[#allocation4 + $0x3a8] sm:$0xff] %v1067
        %1084 = vst [vmem:[#allocation4 + $0x3f0] sm:$0xff] %v1068
        %1085 = vst [vmem:[#allocation4 + $0x438] sm:$0xff] %v1069
        %vm1134 = vcmask 1046528
        %v1135 = vrot.slane %v1000, 1
        %v1136 = vrot.slane %v1001, 1
        %v1137 = vsel %vm1134, %v1135, %v1136
        %v1138 = vrot.slane %v1002, 1
        %v1139 = vsel %vm1134, %v1136, %v1138
        %v1140 = vrot.slane %v1003, 1
        %v1141 = vrot.slane %v1004, 1
        %v1142 = vsel %vm1134, %v1140, %v1141
        %v1143 = vrot.slane %v1005, 1
        %v1144 = vsel %vm1134, %v1141, %v1143
        %v1145 = vrot.slane %v1006, 1
        %v1146 = vrot.slane %v1007, 1
        %v1147 = vsel %vm1134, %v1145, %v1146
        %v1148 = vrot.slane %v1008, 1
        %v1149 = vsel %vm1134, %v1146, %v1148
        %v1150 = vrot.slane %v1009, 1
        %v1151 = vrot.slane %v1010, 1
        %v1152 = vsel %vm1134, %v1150, %v1151
        %v1153 = vrot.slane %v1011, 1
        %v1154 = vsel %vm1134, %v1151, %v1153
        %v1155 = vrot.slane %v1012, 1
        %v1156 = vrot.slane %v1013, 1
        %v1157 = vsel %vm1134, %v1155, %v1156
        %v1158 = vrot.slane %v1014, 1
        %v1159 = vsel %vm1134, %v1156, %v1158
        %v1160 = vrot.slane %v1015, 1
        %v1161 = vrot.slane %v1016, 1
        %v1162 = vsel %vm1134, %v1160, %v1161
        %v1163 = vrot.slane %v1017, 1
        %v1164 = vsel %vm1134, %v1161, %v1163
        %v1165 = vrot.slane %v1018, 1
        %v1166 = vrot.slane %v1019, 1
        %v1167 = vsel %vm1134, %v1165, %v1166
        %v1168 = vrot.slane %v1020, 1
        %v1169 = vsel %vm1134, %v1166, %v1168
        %v1170 = vrot.slane %v1021, 1
        %v1171 = vrot.slane %v1022, 1
        %v1172 = vsel %vm1134, %v1170, %v1171
        %v1173 = vrot.slane %v1023, 1
        %v1174 = vsel %vm1134, %v1171, %v1173
        %v1175 = vrot.slane %v1024, 1
        %v1176 = vrot.slane %v1025, 1
        %v1177 = vsel %vm1134, %v1175, %v1176
        %v1178 = vrot.slane %v1026, 1
        %v1179 = vsel %vm1134, %v1176, %v1178
        %v1180 = vrot.slane %v1027, 1
        %v1181 = vrot.slane %v1028, 1
        %v1182 = vsel %vm1134, %v1180, %v1181
        %v1183 = vrot.slane %v1029, 1
        %v1184 = vsel %vm1134, %v1181, %v1183
        %v1185 = vrot.slane %v1030, 1
        %v1186 = vrot.slane %v1031, 1
        %v1187 = vsel %vm1134, %v1185, %v1186
        %v1188 = vrot.slane %v1032, 1
        %v1189 = vsel %vm1134, %v1186, %v1188
        %v1190 = vrot.slane %v1033, 1
        %v1191 = vrot.slane %v1034, 1
        %v1192 = vsel %vm1134, %v1190, %v1191
        %v1193 = vrot.slane %v1035, 1
        %v1194 = vsel %vm1134, %v1191, %v1193
        %v1195 = vrot.slane %v1036, 1
        %v1196 = vrot.slane %v1037, 1
        %v1197 = vsel %vm1134, %v1195, %v1196
        %v1198 = vrot.slane %v1038, 1
        %v1199 = vsel %vm1134, %v1196, %v1198
        %v1200 = vrot.slane %v1039, 1
        %v1201 = vrot.slane %v1040, 1
        %v1202 = vsel %vm1134, %v1200, %v1201
        %v1203 = vrot.slane %v1041, 1
        %v1204 = vsel %vm1134, %v1201, %v1203
        %v1205 = vrot.slane %v1042, 1
        %v1206 = vrot.slane %v1043, 1
        %v1207 = vsel %vm1134, %v1205, %v1206
        %v1208 = vrot.slane %v1044, 1
        %v1209 = vsel %vm1134, %v1206, %v1208
        %v1210 = vrot.slane %v1045, 1
        %v1211 = vrot.slane %v1046, 1
        %v1212 = vsel %vm1134, %v1210, %v1211
        %v1213 = vrot.slane %v1047, 1
        %v1214 = vsel %vm1134, %v1211, %v1213
        %v1247 = vpack.c.bf16 %v1139, %v1137
        %v1248 = vpack.c.bf16 %v1144, %v1142
        %v1249 = vpack.c.bf16 %v1149, %v1147
        %v1250 = vpack.c.bf16 %v1154, %v1152
        %v1251 = vpack.c.bf16 %v1159, %v1157
        %v1252 = vpack.c.bf16 %v1164, %v1162
        %v1253 = vpack.c.bf16 %v1169, %v1167
        %v1254 = vpack.c.bf16 %v1174, %v1172
        %v1255 = vpack.c.bf16 %v1179, %v1177
        %v1256 = vpack.c.bf16 %v1184, %v1182
        %v1257 = vpack.c.bf16 %v1189, %v1187
        %v1258 = vpack.c.bf16 %v1194, %v1192
        %v1259 = vpack.c.bf16 %v1199, %v1197
        %v1260 = vpack.c.bf16 %v1204, %v1202
        %v1261 = vpack.c.bf16 %v1209, %v1207
        %v1262 = vpack.c.bf16 %v1214, %v1212
        %1263 = vst [vmem:[#allocation4 + $0x8] sm:$0xff] %v1247
        %1264 = vst [vmem:[#allocation4 + $0x50] sm:$0xff] %v1248
        %1265 = vst [vmem:[#allocation4 + $0x98] sm:$0xff] %v1249
        %1266 = vst [vmem:[#allocation4 + $0xe0] sm:$0xff] %v1250
        %1267 = vst [vmem:[#allocation4 + $0x128] sm:$0xff] %v1251
        %1268 = vst [vmem:[#allocation4 + $0x170] sm:$0xff] %v1252
        %1269 = vst [vmem:[#allocation4 + $0x1b8] sm:$0xff] %v1253
        %1270 = vst [vmem:[#allocation4 + $0x200] sm:$0xff] %v1254
        %1271 = vst [vmem:[#allocation4 + $0x248] sm:$0xff] %v1255
        %1272 = vst [vmem:[#allocation4 + $0x290] sm:$0xff] %v1256
        %1273 = vst [vmem:[#allocation4 + $0x2d8] sm:$0xff] %v1257
        %1274 = vst [vmem:[#allocation4 + $0x320] sm:$0xff] %v1258
        %1275 = vst [vmem:[#allocation4 + $0x368] sm:$0xff] %v1259
        %1276 = vst [vmem:[#allocation4 + $0x3b0] sm:$0xff] %v1260
        %1277 = vst [vmem:[#allocation4 + $0x3f8] sm:$0xff] %v1261
        %1278 = vst [vmem:[#allocation4 + $0x440] sm:$0xff] %v1262
        %vm1279 = vcmask 1045504
        %v1280 = vrot.slane %v1000, 2
        %v1281 = vrot.slane %v1001, 2
        %v1282 = vsel %vm1279, %v1280, %v1281
        %v1283 = vrot.slane %v1002, 2
        %v1284 = vsel %vm1279, %v1281, %v1283
        %v1285 = vrot.slane %v1003, 2
        %v1286 = vrot.slane %v1004, 2
        %v1287 = vsel %vm1279, %v1285, %v1286
        %v1288 = vrot.slane %v1005, 2
        %v1289 = vsel %vm1279, %v1286, %v1288
        %v1290 = vrot.slane %v1006, 2
        %v1291 = vrot.slane %v1007, 2
        %v1292 = vsel %vm1279, %v1290, %v1291
        %v1293 = vrot.slane %v1008, 2
        %v1294 = vsel %vm1279, %v1291, %v1293
        %v1295 = vrot.slane %v1009, 2
        %v1296 = vrot.slane %v1010, 2
        %v1297 = vsel %vm1279, %v1295, %v1296
        %v1298 = vrot.slane %v1011, 2
        %v1299 = vsel %vm1279, %v1296, %v1298
        %v1300 = vrot.slane %v1012, 2
        %v1301 = vrot.slane %v1013, 2
        %v1302 = vsel %vm1279, %v1300, %v1301
        %v1303 = vrot.slane %v1014, 2
        %v1304 = vsel %vm1279, %v1301, %v1303
        %v1305 = vrot.slane %v1015, 2
        %v1306 = vrot.slane %v1016, 2
        %v1307 = vsel %vm1279, %v1305, %v1306
        %v1308 = vrot.slane %v1017, 2
        %v1309 = vsel %vm1279, %v1306, %v1308
        %v1310 = vrot.slane %v1018, 2
        %v1311 = vrot.slane %v1019, 2
        %v1312 = vsel %vm1279, %v1310, %v1311
        %v1313 = vrot.slane %v1020, 2
        %v1314 = vsel %vm1279, %v1311, %v1313
        %v1315 = vrot.slane %v1021, 2
        %v1316 = vrot.slane %v1022, 2
        %v1317 = vsel %vm1279, %v1315, %v1316
        %v1318 = vrot.slane %v1023, 2
        %v1319 = vsel %vm1279, %v1316, %v1318
        %v1320 = vrot.slane %v1024, 2
        %v1321 = vrot.slane %v1025, 2
        %v1322 = vsel %vm1279, %v1320, %v1321
        %v1323 = vrot.slane %v1026, 2
        %v1324 = vsel %vm1279, %v1321, %v1323
        %v1325 = vrot.slane %v1027, 2
        %v1326 = vrot.slane %v1028, 2
        %v1327 = vsel %vm1279, %v1325, %v1326
        %v1328 = vrot.slane %v1029, 2
        %v1329 = vsel %vm1279, %v1326, %v1328
        %v1330 = vrot.slane %v1030, 2
        %v1331 = vrot.slane %v1031, 2
        %v1332 = vsel %vm1279, %v1330, %v1331
        %v1333 = vrot.slane %v1032, 2
        %v1334 = vsel %vm1279, %v1331, %v1333
        %v1335 = vrot.slane %v1033, 2
        %v1336 = vrot.slane %v1034, 2
        %v1337 = vsel %vm1279, %v1335, %v1336
        %v1338 = vrot.slane %v1035, 2
        %v1339 = vsel %vm1279, %v1336, %v1338
        %v1340 = vrot.slane %v1036, 2
        %v1341 = vrot.slane %v1037, 2
        %v1342 = vsel %vm1279, %v1340, %v1341
        %v1343 = vrot.slane %v1038, 2
        %v1344 = vsel %vm1279, %v1341, %v1343
        %v1345 = vrot.slane %v1039, 2
        %v1346 = vrot.slane %v1040, 2
        %v1347 = vsel %vm1279, %v1345, %v1346
        %v1348 = vrot.slane %v1041, 2
        %v1349 = vsel %vm1279, %v1346, %v1348
        %v1350 = vrot.slane %v1042, 2
        %v1351 = vrot.slane %v1043, 2
        %v1352 = vsel %vm1279, %v1350, %v1351
        %v1353 = vrot.slane %v1044, 2
        %v1354 = vsel %vm1279, %v1351, %v1353
        %v1355 = vrot.slane %v1045, 2
        %v1356 = vrot.slane %v1046, 2
        %v1357 = vsel %vm1279, %v1355, %v1356
        %v1358 = vrot.slane %v1047, 2
        %v1359 = vsel %vm1279, %v1356, %v1358
        %v1392 = vpack.c.bf16 %v1284, %v1282
        %v1393 = vpack.c.bf16 %v1289, %v1287
        %v1394 = vpack.c.bf16 %v1294, %v1292
        %v1395 = vpack.c.bf16 %v1299, %v1297
        %v1396 = vpack.c.bf16 %v1304, %v1302
        %v1397 = vpack.c.bf16 %v1309, %v1307
        %v1398 = vpack.c.bf16 %v1314, %v1312
        %v1399 = vpack.c.bf16 %v1319, %v1317
        %v1400 = vpack.c.bf16 %v1324, %v1322
        %v1401 = vpack.c.bf16 %v1329, %v1327
        %v1402 = vpack.c.bf16 %v1334, %v1332
        %v1403 = vpack.c.bf16 %v1339, %v1337
        %v1404 = vpack.c.bf16 %v1344, %v1342
        %v1405 = vpack.c.bf16 %v1349, %v1347
        %v1406 = vpack.c.bf16 %v1354, %v1352
        %v1407 = vpack.c.bf16 %v1359, %v1357
        %1408 = vst [vmem:[#allocation4 + $0x10] sm:$0xff] %v1392
        %1409 = vst [vmem:[#allocation4 + $0x58] sm:$0xff] %v1393
        %1410 = vst [vmem:[#allocation4 + $0xa0] sm:$0xff] %v1394
        %1411 = vst [vmem:[#allocation4 + $0xe8] sm:$0xff] %v1395
        %1412 = vst [vmem:[#allocation4 + $0x130] sm:$0xff] %v1396
        %1413 = vst [vmem:[#allocation4 + $0x178] sm:$0xff] %v1397
        %1414 = vst [vmem:[#allocation4 + $0x1c0] sm:$0xff] %v1398
        %1415 = vst [vmem:[#allocation4 + $0x208] sm:$0xff] %v1399
        %1416 = vst [vmem:[#allocation4 + $0x250] sm:$0xff] %v1400
        %1417 = vst [vmem:[#allocation4 + $0x298] sm:$0xff] %v1401
        %1418 = vst [vmem:[#allocation4 + $0x2e0] sm:$0xff] %v1402
        %1419 = vst [vmem:[#allocation4 + $0x328] sm:$0xff] %v1403
        %1420 = vst [vmem:[#allocation4 + $0x370] sm:$0xff] %v1404
        %1421 = vst [vmem:[#allocation4 + $0x3b8] sm:$0xff] %v1405
        %1422 = vst [vmem:[#allocation4 + $0x400] sm:$0xff] %v1406
        %1423 = vst [vmem:[#allocation4 + $0x448] sm:$0xff] %v1407
        %v1424 = vpack.c.bf16 %v1049, %v1048
        %1425 = vst [vmem:[#allocation4 + $0x18] sm:$0xff] %v1055
        %1426 = vst [vmem:[#allocation4 + $0x60] sm:$0xff] %v1056
        %1427 = vst [vmem:[#allocation4 + $0xa8] sm:$0xff] %v1057
        %1428 = vst [vmem:[#allocation4 + $0xf0] sm:$0xff] %v1058
        %1429 = vst [vmem:[#allocation4 + $0x138] sm:$0xff] %v1059
        %1430 = vst [vmem:[#allocation4 + $0x180] sm:$0xff] %v1060
        %1431 = vst [vmem:[#allocation4 + $0x1c8] sm:$0xff] %v1061
        %1432 = vst [vmem:[#allocation4 + $0x210] sm:$0xff] %v1062
        %1433 = vst [vmem:[#allocation4 + $0x258] sm:$0xff] %v1063
        %1434 = vst [vmem:[#allocation4 + $0x2a0] sm:$0xff] %v1064
        %1435 = vst [vmem:[#allocation4 + $0x2e8] sm:$0xff] %v1065
        %1436 = vst [vmem:[#allocation4 + $0x330] sm:$0xff] %v1066
        %1437 = vst [vmem:[#allocation4 + $0x378] sm:$0xff] %v1067
        %1438 = vst [vmem:[#allocation4 + $0x3c0] sm:$0xff] %v1068
        %1439 = vst [vmem:[#allocation4 + $0x408] sm:$0xff] %v1069
        %1440 = vst [vmem:[#allocation4 + $0x450] sm:$0xff] %v1424
        %v1444 = vrot.slane %v1048, 1
        %v1445 = vrot.slane %v1049, 1
        %v1446 = vsel %vm1134, %v1444, %v1445
        %v1447 = vrot.slane %v1050, 1
        %v1448 = vsel %vm1134, %v1445, %v1447
        %v1451 = vpack.c.bf16 %v1448, %v1446
        %1452 = vst [vmem:[#allocation4 + $0x20] sm:$0xff] %v1248
        %1453 = vst [vmem:[#allocation4 + $0x68] sm:$0xff] %v1249
        %1454 = vst [vmem:[#allocation4 + $0xb0] sm:$0xff] %v1250
        %1455 = vst [vmem:[#allocation4 + $0xf8] sm:$0xff] %v1251
        %1456 = vst [vmem:[#allocation4 + $0x140] sm:$0xff] %v1252
        %1457 = vst [vmem:[#allocation4 + $0x188] sm:$0xff] %v1253
        %1458 = vst [vmem:[#allocation4 + $0x1d0] sm:$0xff] %v1254
        %1459 = vst [vmem:[#allocation4 + $0x218] sm:$0xff] %v1255
        %1460 = vst [vmem:[#allocation4 + $0x260] sm:$0xff] %v1256
        %1461 = vst [vmem:[#allocation4 + $0x2a8] sm:$0xff] %v1257
        %1462 = vst [vmem:[#allocation4 + $0x2f0] sm:$0xff] %v1258
        %1463 = vst [vmem:[#allocation4 + $0x338] sm:$0xff] %v1259
        %1464 = vst [vmem:[#allocation4 + $0x380] sm:$0xff] %v1260
        %1465 = vst [vmem:[#allocation4 + $0x3c8] sm:$0xff] %v1261
        %1466 = vst [vmem:[#allocation4 + $0x410] sm:$0xff] %v1262
        %1467 = vst [vmem:[#allocation4 + $0x458] sm:$0xff] %v1451
        %v1468 = vrot.slane %v1048, 2
        %v1469 = vrot.slane %v1049, 2
        %v1470 = vsel %vm1279, %v1468, %v1469
        %v1471 = vrot.slane %v1050, 2
        %v1472 = vsel %vm1279, %v1469, %v1471
        %v1475 = vpack.c.bf16 %v1472, %v1470
        %1476 = vst [vmem:[#allocation4 + $0x28] sm:$0xff] %v1393
        %1477 = vst [vmem:[#allocation4 + $0x70] sm:$0xff] %v1394
        %1478 = vst [vmem:[#allocation4 + $0xb8] sm:$0xff] %v1395
        %1479 = vst [vmem:[#allocation4 + $0x100] sm:$0xff] %v1396
        %1480 = vst [vmem:[#allocation4 + $0x148] sm:$0xff] %v1397
        %1481 = vst [vmem:[#allocation4 + $0x190] sm:$0xff] %v1398
        %1482 = vst [vmem:[#allocation4 + $0x1d8] sm:$0xff] %v1399
        %1483 = vst [vmem:[#allocation4 + $0x220] sm:$0xff] %v1400
        %1484 = vst [vmem:[#allocation4 + $0x268] sm:$0xff] %v1401
        %1485 = vst [vmem:[#allocation4 + $0x2b0] sm:$0xff] %v1402
        %1486 = vst [vmem:[#allocation4 + $0x2f8] sm:$0xff] %v1403
        %1487 = vst [vmem:[#allocation4 + $0x340] sm:$0xff] %v1404
        %1488 = vst [vmem:[#allocation4 + $0x388] sm:$0xff] %v1405
        %1489 = vst [vmem:[#allocation4 + $0x3d0] sm:$0xff] %v1406
        %1490 = vst [vmem:[#allocation4 + $0x418] sm:$0xff] %v1407
        %1491 = vst [vmem:[#allocation4 + $0x460] sm:$0xff] %v1475
        %v1492 = vpack.c.bf16 %v1052, %v1051
        %1493 = vst [vmem:[#allocation4 + $0x30] sm:$0xff] %v1056
        %1494 = vst [vmem:[#allocation4 + $0x78] sm:$0xff] %v1057
        %1495 = vst [vmem:[#allocation4 + $0xc0] sm:$0xff] %v1058
        %1496 = vst [vmem:[#allocation4 + $0x108] sm:$0xff] %v1059
        %1497 = vst [vmem:[#allocation4 + $0x150] sm:$0xff] %v1060
        %1498 = vst [vmem:[#allocation4 + $0x198] sm:$0xff] %v1061
        %1499 = vst [vmem:[#allocation4 + $0x1e0] sm:$0xff] %v1062
        %1500 = vst [vmem:[#allocation4 + $0x228] sm:$0xff] %v1063
        %1501 = vst [vmem:[#allocation4 + $0x270] sm:$0xff] %v1064
        %1502 = vst [vmem:[#allocation4 + $0x2b8] sm:$0xff] %v1065
        %1503 = vst [vmem:[#allocation4 + $0x300] sm:$0xff] %v1066
        %1504 = vst [vmem:[#allocation4 + $0x348] sm:$0xff] %v1067
        %1505 = vst [vmem:[#allocation4 + $0x390] sm:$0xff] %v1068
        %1506 = vst [vmem:[#allocation4 + $0x3d8] sm:$0xff] %v1069
        %1507 = vst [vmem:[#allocation4 + $0x420] sm:$0xff] %v1424
        %1508 = vst [vmem:[#allocation4 + $0x468] sm:$0xff] %v1492
        %v1512 = vrot.slane %v1051, 1
        %v1513 = vrot.slane %v1052, 1
        %v1514 = vsel %vm1134, %v1512, %v1513
        %v1515 = vrot.slane %v1053, 1
        %v1516 = vsel %vm1134, %v1513, %v1515
        %v1519 = vpack.c.bf16 %v1516, %v1514
        %1520 = vst [vmem:[#allocation4 + $0x38] sm:$0xff] %v1249
        %1521 = vst [vmem:[#allocation4 + $0x80] sm:$0xff] %v1250
        %1522 = vst [vmem:[#allocation4 + $0xc8] sm:$0xff] %v1251
        %1523 = vst [vmem:[#allocation4 + $0x110] sm:$0xff] %v1252
        %1524 = vst [vmem:[#allocation4 + $0x158] sm:$0xff] %v1253
        %1525 = vst [vmem:[#allocation4 + $0x1a0] sm:$0xff] %v1254
        %1526 = vst [vmem:[#allocation4 + $0x1e8] sm:$0xff] %v1255
        %1527 = vst [vmem:[#allocation4 + $0x230] sm:$0xff] %v1256
        %1528 = vst [vmem:[#allocation4 + $0x278] sm:$0xff] %v1257
        %1529 = vst [vmem:[#allocation4 + $0x2c0] sm:$0xff] %v1258
        %1530 = vst [vmem:[#allocation4 + $0x308] sm:$0xff] %v1259
        %1531 = vst [vmem:[#allocation4 + $0x350] sm:$0xff] %v1260
        %1532 = vst [vmem:[#allocation4 + $0x398] sm:$0xff] %v1261
        %1533 = vst [vmem:[#allocation4 + $0x3e0] sm:$0xff] %v1262
        %1534 = vst [vmem:[#allocation4 + $0x428] sm:$0xff] %v1451
        %1535 = vst [vmem:[#allocation4 + $0x470] sm:$0xff] %v1519
        %v1536 = vrot.slane %v1051, 2
        %v1537 = vrot.slane %v1052, 2
        %v1538 = vsel %vm1279, %v1536, %v1537
        %v1539 = vrot.slane %v1053, 2
        %v1540 = vsel %vm1279, %v1537, %v1539
        %v1543 = vpack.c.bf16 %v1540, %v1538
        %1544 = vst [vmem:[#allocation4 + $0x40] sm:$0xff] %v1394
        %1545 = vst [vmem:[#allocation4 + $0x88] sm:$0xff] %v1395
        %1546 = vst [vmem:[#allocation4 + $0xd0] sm:$0xff] %v1396
        %1547 = vst [vmem:[#allocation4 + $0x118] sm:$0xff] %v1397
        %1548 = vst [vmem:[#allocation4 + $0x160] sm:$0xff] %v1398
        %1549 = vst [vmem:[#allocation4 + $0x1a8] sm:$0xff] %v1399
        %1550 = vst [vmem:[#allocation4 + $0x1f0] sm:$0xff] %v1400
        %1551 = vst [vmem:[#allocation4 + $0x238] sm:$0xff] %v1401
        %1552 = vst [vmem:[#allocation4 + $0x280] sm:$0xff] %v1402
        %1553 = vst [vmem:[#allocation4 + $0x2c8] sm:$0xff] %v1403
        %1554 = vst [vmem:[#allocation4 + $0x310] sm:$0xff] %v1404
        %1555 = vst [vmem:[#allocation4 + $0x358] sm:$0xff] %v1405
        %1556 = vst [vmem:[#allocation4 + $0x3a0] sm:$0xff] %v1406
        %1557 = vst [vmem:[#allocation4 + $0x3e8] sm:$0xff] %v1407
        %1558 = vst [vmem:[#allocation4 + $0x430] sm:$0xff] %v1475
        %1559 = vst [vmem:[#allocation4 + $0x478] sm:$0xff] %v1543
        %v1560 = vld [vmem:[#allocation4] sm:$0xff]
        %v1561 = vld [vmem:[#allocation4 + $0x8] sm:$0xff]
        %v1562 = vld [vmem:[#allocation4 + $0x10] sm:$0xff]
        %v1563 = vld [vmem:[#allocation4 + $0x18] sm:$0xff]
        %v1564 = vld [vmem:[#allocation4 + $0x20] sm:$0xff]
        %v1565 = vld [vmem:[#allocation4 + $0x28] sm:$0xff]
        %v1566 = vld [vmem:[#allocation4 + $0x30] sm:$0xff]
        %v1567 = vld [vmem:[#allocation4 + $0x38] sm:$0xff]
        %v1568 = vld [vmem:[#allocation4 + $0x40] sm:$0xff]
        %v1569 = vld [vmem:[#allocation4 + $0x48] sm:$0xff]
        %v1570 = vld [vmem:[#allocation4 + $0x50] sm:$0xff]
        %v1571 = vld [vmem:[#allocation4 + $0x58] sm:$0xff]
        %v1572 = vld [vmem:[#allocation4 + $0x60] sm:$0xff]
        %v1573 = vld [vmem:[#allocation4 + $0x68] sm:$0xff]
        %v1574 = vld [vmem:[#allocation4 + $0x70] sm:$0xff]
        %v1575 = vld [vmem:[#allocation4 + $0x78] sm:$0xff]
        %v1576 = vld [vmem:[#allocation4 + $0x80] sm:$0xff]
        %v1577 = vld [vmem:[#allocation4 + $0x88] sm:$0xff]
        %v1578 = vld [vmem:[#allocation4 + $0x90] sm:$0xff]
        %v1579 = vld [vmem:[#allocation4 + $0x98] sm:$0xff]
        %v1580 = vld [vmem:[#allocation4 + $0xa0] sm:$0xff]
        %v1581 = vld [vmem:[#allocation4 + $0xa8] sm:$0xff]
        %v1582 = vld [vmem:[#allocation4 + $0xb0] sm:$0xff]
        %v1583 = vld [vmem:[#allocation4 + $0xb8] sm:$0xff]
        %v1584 = vld [vmem:[#allocation4 + $0xc0] sm:$0xff]
        %v1585 = vld [vmem:[#allocation4 + $0xc8] sm:$0xff]
        %v1586 = vld [vmem:[#allocation4 + $0xd0] sm:$0xff]
        %v1587 = vld [vmem:[#allocation4 + $0xd8] sm:$0xff]
        %v1588 = vld [vmem:[#allocation4 + $0xe0] sm:$0xff]
        %v1589 = vld [vmem:[#allocation4 + $0xe8] sm:$0xff]
        %v1590 = vld [vmem:[#allocation4 + $0xf0] sm:$0xff]
        %v1591 = vld [vmem:[#allocation4 + $0xf8] sm:$0xff]
        %v1592 = vld [vmem:[#allocation4 + $0x100] sm:$0xff]
        %v1593 = vld [vmem:[#allocation4 + $0x108] sm:$0xff]
        %v1594 = vld [vmem:[#allocation4 + $0x110] sm:$0xff]
        %v1595 = vld [vmem:[#allocation4 + $0x118] sm:$0xff]
        %v1596 = vld [vmem:[#allocation4 + $0x120] sm:$0xff]
        %v1597 = vld [vmem:[#allocation4 + $0x128] sm:$0xff]
        %v1598 = vld [vmem:[#allocation4 + $0x130] sm:$0xff]
        %v1599 = vld [vmem:[#allocation4 + $0x138] sm:$0xff]
        %v1600 = vld [vmem:[#allocation4 + $0x140] sm:$0xff]
        %v1601 = vld [vmem:[#allocation4 + $0x148] sm:$0xff]
        %v1602 = vld [vmem:[#allocation4 + $0x150] sm:$0xff]
        %v1603 = vld [vmem:[#allocation4 + $0x158] sm:$0xff]
        %v1604 = vld [vmem:[#allocation4 + $0x160] sm:$0xff]
        %v1605 = vld [vmem:[#allocation4 + $0x168] sm:$0xff]
        %v1606 = vld [vmem:[#allocation4 + $0x170] sm:$0xff]
        %v1607 = vld [vmem:[#allocation4 + $0x178] sm:$0xff]
        %v1608 = vld [vmem:[#allocation4 + $0x180] sm:$0xff]
        %v1609 = vld [vmem:[#allocation4 + $0x188] sm:$0xff]
        %v1610 = vld [vmem:[#allocation4 + $0x190] sm:$0xff]
        %v1611 = vld [vmem:[#allocation4 + $0x198] sm:$0xff]
        %v1612 = vld [vmem:[#allocation4 + $0x1a0] sm:$0xff]
        %v1613 = vld [vmem:[#allocation4 + $0x1a8] sm:$0xff]
        %v1614 = vld [vmem:[#allocation4 + $0x1b0] sm:$0xff]
        %v1615 = vld [vmem:[#allocation4 + $0x1b8] sm:$0xff]
        %v1616 = vld [vmem:[#allocation4 + $0x1c0] sm:$0xff]
        %v1617 = vld [vmem:[#allocation4 + $0x1c8] sm:$0xff]
        %v1618 = vld [vmem:[#allocation4 + $0x1d0] sm:$0xff]
        %v1619 = vld [vmem:[#allocation4 + $0x1d8] sm:$0xff]
        %v1620 = vld [vmem:[#allocation4 + $0x1e0] sm:$0xff]
        %v1621 = vld [vmem:[#allocation4 + $0x1e8] sm:$0xff]
        %v1622 = vld [vmem:[#allocation4 + $0x1f0] sm:$0xff]
        %v1623 = vld [vmem:[#allocation4 + $0x1f8] sm:$0xff]
        %v1624 = vld [vmem:[#allocation4 + $0x200] sm:$0xff]
        %v1625 = vld [vmem:[#allocation4 + $0x208] sm:$0xff]
        %v1626 = vld [vmem:[#allocation4 + $0x210] sm:$0xff]
        %v1627 = vld [vmem:[#allocation4 + $0x218] sm:$0xff]
        %v1628 = vld [vmem:[#allocation4 + $0x220] sm:$0xff]
        %v1629 = vld [vmem:[#allocation4 + $0x228] sm:$0xff]
        %v1630 = vld [vmem:[#allocation4 + $0x230] sm:$0xff]
        %v1631 = vld [vmem:[#allocation4 + $0x238] sm:$0xff]
        %v1632 = vld [vmem:[#allocation4 + $0x240] sm:$0xff]
        %v1633 = vld [vmem:[#allocation4 + $0x248] sm:$0xff]
        %v1634 = vld [vmem:[#allocation4 + $0x250] sm:$0xff]
        %v1635 = vld [vmem:[#allocation4 + $0x258] sm:$0xff]
        %v1636 = vld [vmem:[#allocation4 + $0x260] sm:$0xff]
        %v1637 = vld [vmem:[#allocation4 + $0x268] sm:$0xff]
        %v1638 = vld [vmem:[#allocation4 + $0x270] sm:$0xff]
        %v1639 = vld [vmem:[#allocation4 + $0x278] sm:$0xff]
        %v1640 = vld [vmem:[#allocation4 + $0x280] sm:$0xff]
        %v1641 = vld [vmem:[#allocation4 + $0x288] sm:$0xff]
        %v1642 = vld [vmem:[#allocation4 + $0x290] sm:$0xff]
        %v1643 = vld [vmem:[#allocation4 + $0x298] sm:$0xff]
        %v1644 = vld [vmem:[#allocation4 + $0x2a0] sm:$0xff]
        %v1645 = vld [vmem:[#allocation4 + $0x2a8] sm:$0xff]
        %v1646 = vld [vmem:[#allocation4 + $0x2b0] sm:$0xff]
        %v1647 = vld [vmem:[#allocation4 + $0x2b8] sm:$0xff]
        %v1648 = vld [vmem:[#allocation4 + $0x2c0] sm:$0xff]
        %v1649 = vld [vmem:[#allocation4 + $0x2c8] sm:$0xff]
        %v1650 = vld [vmem:[#allocation4 + $0x2d0] sm:$0xff]
        %v1651 = vld [vmem:[#allocation4 + $0x2d8] sm:$0xff]
        %v1652 = vld [vmem:[#allocation4 + $0x2e0] sm:$0xff]
        %v1653 = vld [vmem:[#allocation4 + $0x2e8] sm:$0xff]
        %v1654 = vld [vmem:[#allocation4 + $0x2f0] sm:$0xff]
        %v1655 = vld [vmem:[#allocation4 + $0x2f8] sm:$0xff]
        %v1656 = vld [vmem:[#allocation4 + $0x300] sm:$0xff]
        %v1657 = vld [vmem:[#allocation4 + $0x308] sm:$0xff]
        %v1658 = vld [vmem:[#allocation4 + $0x310] sm:$0xff]
        %v1659 = vld [vmem:[#allocation4 + $0x318] sm:$0xff]
        %v1660 = vld [vmem:[#allocation4 + $0x320] sm:$0xff]
        %v1661 = vld [vmem:[#allocation4 + $0x328] sm:$0xff]
        %v1662 = vld [vmem:[#allocation4 + $0x330] sm:$0xff]
        %v1663 = vld [vmem:[#allocation4 + $0x338] sm:$0xff]
        %v1664 = vld [vmem:[#allocation4 + $0x340] sm:$0xff]
        %v1665 = vld [vmem:[#allocation4 + $0x348] sm:$0xff]
        %v1666 = vld [vmem:[#allocation4 + $0x350] sm:$0xff]
        %v1667 = vld [vmem:[#allocation4 + $0x358] sm:$0xff]
        %v1668 = vld [vmem:[#allocation4 + $0x360] sm:$0xff]
        %v1669 = vld [vmem:[#allocation4 + $0x368] sm:$0xff]
        %v1670 = vld [vmem:[#allocation4 + $0x370] sm:$0xff]
        %v1671 = vld [vmem:[#allocation4 + $0x378] sm:$0xff]
        %v1672 = vld [vmem:[#allocation4 + $0x380] sm:$0xff]
        %v1673 = vld [vmem:[#allocation4 + $0x388] sm:$0xff]
        %v1674 = vld [vmem:[#allocation4 + $0x390] sm:$0xff]
        %v1675 = vld [vmem:[#allocation4 + $0x398] sm:$0xff]
        %v1676 = vld [vmem:[#allocation4 + $0x3a0] sm:$0xff]
        %v1677 = vld [vmem:[#allocation4 + $0x3a8] sm:$0xff]
        %v1678 = vld [vmem:[#allocation4 + $0x3b0] sm:$0xff]
        %v1679 = vld [vmem:[#allocation4 + $0x3b8] sm:$0xff]
        %v1680 = vld [vmem:[#allocation4 + $0x3c0] sm:$0xff]
        %v1681 = vld [vmem:[#allocation4 + $0x3c8] sm:$0xff]
        %v1682 = vld [vmem:[#allocation4 + $0x3d0] sm:$0xff]
        %v1683 = vld [vmem:[#allocation4 + $0x3d8] sm:$0xff]
        %v1684 = vld [vmem:[#allocation4 + $0x3e0] sm:$0xff]
        %v1685 = vld [vmem:[#allocation4 + $0x3e8] sm:$0xff]
        %v1686 = vld [vmem:[#allocation4 + $0x3f0] sm:$0xff]
        %v1687 = vld [vmem:[#allocation4 + $0x3f8] sm:$0xff]
        %v1688 = vld [vmem:[#allocation4 + $0x400] sm:$0xff]
        %v1689 = vld [vmem:[#allocation4 + $0x408] sm:$0xff]
        %v1690 = vld [vmem:[#allocation4 + $0x410] sm:$0xff]
        %v1691 = vld [vmem:[#allocation4 + $0x418] sm:$0xff]
        %v1692 = vld [vmem:[#allocation4 + $0x420] sm:$0xff]
        %v1693 = vld [vmem:[#allocation4 + $0x428] sm:$0xff]
        %v1694 = vld [vmem:[#allocation4 + $0x430] sm:$0xff]
        %v1695 = vld [vmem:[#allocation4 + $0x438] sm:$0xff]
        %v1696 = vld [vmem:[#allocation4 + $0x440] sm:$0xff]
        %v1697 = vld [vmem:[#allocation4 + $0x448] sm:$0xff]
        %v1698 = vld [vmem:[#allocation4 + $0x450] sm:$0xff]
        %v1699 = vld [vmem:[#allocation4 + $0x458] sm:$0xff]
        %v1700 = vld [vmem:[#allocation4 + $0x460] sm:$0xff]
        %v1701 = vld [vmem:[#allocation4 + $0x468] sm:$0xff]
        %v1702 = vld [vmem:[#allocation4 + $0x470] sm:$0xff]
        %v1703 = vld [vmem:[#allocation4 + $0x478] sm:$0xff]
        %v1704 = vld [vmem:[%s3] sm:$0xf]
        %v1705 = vld [vmem:[%s3 + $0x4] sm:$0xf]
        %v1706 = vld [vmem:[%s3 + $0x8] sm:$0xf]
        %v1707 = vld [vmem:[%s3 + $0xc] sm:$0xf]
        %v1708 = vld [vmem:[%s3 + $0x10] sm:$0xf]
        %v1709 = vld [vmem:[%s3 + $0x14] sm:$0xf]
        %v1710 = vld [vmem:[%s3 + $0x18] sm:$0xf]
        %v1711 = vld [vmem:[%s3 + $0x1c] sm:$0xf]
        %v1712 = vld [vmem:[%s3 + $0x20] sm:$0xf]
        %v1713 = vld [vmem:[%s3 + $0x24] sm:$0xf]
        %v1714 = vld [vmem:[%s3 + $0x28] sm:$0xf]
        %v1715 = vld [vmem:[%s3 + $0x2c] sm:$0xf]
        %v1716 = vld [vmem:[%s3 + $0x30] sm:$0xf]
        %v1717 = vld [vmem:[%s3 + $0x34] sm:$0xf]
        %v1718 = vld [vmem:[%s3 + $0x38] sm:$0xf]
        %v1719 = vld [vmem:[%s3 + $0x3c] sm:$0xf]
        %v1720 = vld [vmem:[%s3 + $0x40] sm:$0xf]
        %v1721 = vld [vmem:[%s3 + $0x44] sm:$0xf]
        %v1722 = vld [vmem:[%s3 + $0x48] sm:$0xf]
        %v1723 = vld [vmem:[%s3 + $0x4c] sm:$0xf]
        %v1724 = vld [vmem:[%s3 + $0x50] sm:$0xf]
        %v1725 = vld [vmem:[%s3 + $0x54] sm:$0xf]
        %v1726 = vld [vmem:[%s3 + $0x58] sm:$0xf]
        %v1727 = vld [vmem:[%s3 + $0x5c] sm:$0xf]
        %v1728 = vld [vmem:[%s3 + $0x60] sm:$0xf]
        %v1729 = vld [vmem:[%s3 + $0x64] sm:$0xf]
        %v1730 = vld [vmem:[%s3 + $0x68] sm:$0xf]
        %v1731 = vld [vmem:[%s3 + $0x6c] sm:$0xf]
        %v1732 = vld [vmem:[%s3 + $0x70] sm:$0xf]
        %v1733 = vld [vmem:[%s3 + $0x74] sm:$0xf]
        %v1734 = vld [vmem:[%s3 + $0x78] sm:$0xf]
        %v1735 = vld [vmem:[%s3 + $0x7c] sm:$0xf]
        %v1736 = vld [vmem:[%s3 + $0x80] sm:$0xf]
        %v1737 = vld [vmem:[%s3 + $0x84] sm:$0xf]
        %v1738 = vld [vmem:[%s3 + $0x88] sm:$0xf]
        %v1739 = vld [vmem:[%s3 + $0x8c] sm:$0xf]
        %v1740 = vld [vmem:[%s3 + $0x90] sm:$0xf]
        %v1741 = vld [vmem:[%s3 + $0x94] sm:$0xf]
        %v1742 = vld [vmem:[%s3 + $0x98] sm:$0xf]
        %v1743 = vld [vmem:[%s3 + $0x9c] sm:$0xf]
        %v1744 = vld [vmem:[%s3 + $0xa0] sm:$0xf]
        %v1745 = vld [vmem:[%s3 + $0xa4] sm:$0xf]
        %v1746 = vld [vmem:[%s3 + $0xa8] sm:$0xf]
        %v1747 = vld [vmem:[%s3 + $0xac] sm:$0xf]
        %v1748 = vld [vmem:[%s3 + $0xb0] sm:$0xf]
        %v1749 = vld [vmem:[%s3 + $0xb4] sm:$0xf]
        %v1750 = vld [vmem:[%s3 + $0xb8] sm:$0xf]
        %v1751 = vld [vmem:[%s3 + $0xbc] sm:$0xf]
        %v1752 = vld [vmem:[%s3 + $0xc0] sm:$0xf]
        %v1753 = vld [vmem:[%s3 + $0xc4] sm:$0xf]
        %v1754 = vld [vmem:[%s3 + $0xc8] sm:$0xf]
        %v1755 = vld [vmem:[%s3 + $0xcc] sm:$0xf]
        %v1756 = vld [vmem:[%s3 + $0xd0] sm:$0xf]
        %v1757 = vld [vmem:[%s3 + $0xd4] sm:$0xf]
        %v1758 = vld [vmem:[%s3 + $0xd8] sm:$0xf]
        %v1759 = vld [vmem:[%s3 + $0xdc] sm:$0xf]
        %v1760 = vld [vmem:[%s3 + $0xe0] sm:$0xf]
        %v1761 = vld [vmem:[%s3 + $0xe4] sm:$0xf]
        %v1762 = vld [vmem:[%s3 + $0xe8] sm:$0xf]
        %v1763 = vld [vmem:[%s3 + $0xec] sm:$0xf]
        %v1764 = vld [vmem:[%s3 + $0xf0] sm:$0xf]
        %v1765 = vld [vmem:[%s3 + $0xf4] sm:$0xf]
        %v1766 = vld [vmem:[%s3 + $0xf8] sm:$0xf]
        %v1767 = vld [vmem:[%s3 + $0xfc] sm:$0xf]
        %v1768 = vld [vmem:[%s3 + $0x100] sm:$0xf]
        %v1769 = vld [vmem:[%s3 + $0x104] sm:$0xf]
        %v1770 = vld [vmem:[%s3 + $0x108] sm:$0xf]
        %v1771 = vld [vmem:[%s3 + $0x10c] sm:$0xf]
        %v1772 = vld [vmem:[%s3 + $0x110] sm:$0xf]
        %v1773 = vld [vmem:[%s3 + $0x114] sm:$0xf]
        %v1774 = vld [vmem:[%s3 + $0x118] sm:$0xf]
        %v1775 = vld [vmem:[%s3 + $0x11c] sm:$0xf]
        %v1776 = vld [vmem:[%s3 + $0x120] sm:$0xf]
        %v1777 = vld [vmem:[%s3 + $0x124] sm:$0xf]
        %v1778 = vld [vmem:[%s3 + $0x128] sm:$0xf]
        %v1779 = vld [vmem:[%s3 + $0x12c] sm:$0xf]
        %v1780 = vld [vmem:[%s3 + $0x130] sm:$0xf]
        %v1781 = vld [vmem:[%s3 + $0x134] sm:$0xf]
        %v1782 = vld [vmem:[%s3 + $0x138] sm:$0xf]
        %v1783 = vld [vmem:[%s3 + $0x13c] sm:$0xf]
        %v1784 = vld [vmem:[%s3 + $0x140] sm:$0xf]
        %v1785 = vld [vmem:[%s3 + $0x144] sm:$0xf]
        %v1786 = vld [vmem:[%s3 + $0x148] sm:$0xf]
        %v1787 = vld [vmem:[%s3 + $0x14c] sm:$0xf]
        %v1788 = vld [vmem:[%s3 + $0x150] sm:$0xf]
        %v1789 = vld [vmem:[%s3 + $0x154] sm:$0xf]
        %v1790 = vld [vmem:[%s3 + $0x158] sm:$0xf]
        %v1791 = vld [vmem:[%s3 + $0x15c] sm:$0xf]
        %v1792 = vld [vmem:[%s3 + $0x160] sm:$0xf]
        %v1793 = vld [vmem:[%s3 + $0x164] sm:$0xf]
        %v1794 = vld [vmem:[%s3 + $0x168] sm:$0xf]
        %v1795 = vld [vmem:[%s3 + $0x16c] sm:$0xf]
        %v1796 = vld [vmem:[%s3 + $0x170] sm:$0xf]
        %v1797 = vld [vmem:[%s3 + $0x174] sm:$0xf]
        %v1798 = vld [vmem:[%s3 + $0x178] sm:$0xf]
        %v1799 = vld [vmem:[%s3 + $0x17c] sm:$0xf]
        %v1800 = vld [vmem:[%s3 + $0x180] sm:$0xf]
        %v1801 = vld [vmem:[%s3 + $0x184] sm:$0xf]
        %v1802 = vld [vmem:[%s3 + $0x188] sm:$0xf]
        %v1803 = vld [vmem:[%s3 + $0x18c] sm:$0xf]
        %v1804 = vld [vmem:[%s3 + $0x190] sm:$0xf]
        %v1805 = vld [vmem:[%s3 + $0x194] sm:$0xf]
        %v1806 = vld [vmem:[%s3 + $0x198] sm:$0xf]
        %v1807 = vld [vmem:[%s3 + $0x19c] sm:$0xf]
        %v1808 = vld [vmem:[%s3 + $0x1a0] sm:$0xf]
        %v1809 = vld [vmem:[%s3 + $0x1a4] sm:$0xf]
        %v1810 = vld [vmem:[%s3 + $0x1a8] sm:$0xf]
        %v1811 = vld [vmem:[%s3 + $0x1ac] sm:$0xf]
        %v1812 = vld [vmem:[%s3 + $0x1b0] sm:$0xf]
        %v1813 = vld [vmem:[%s3 + $0x1b4] sm:$0xf]
        %v1814 = vld [vmem:[%s3 + $0x1b8] sm:$0xf]
        %v1815 = vld [vmem:[%s3 + $0x1bc] sm:$0xf]
        %v1816 = vld [vmem:[%s3 + $0x1c0] sm:$0xf]
        %v1817 = vld [vmem:[%s3 + $0x1c4] sm:$0xf]
        %v1818 = vld [vmem:[%s3 + $0x1c8] sm:$0xf]
        %v1819 = vld [vmem:[%s3 + $0x1cc] sm:$0xf]
        %v1820 = vld [vmem:[%s3 + $0x1d0] sm:$0xf]
        %v1821 = vld [vmem:[%s3 + $0x1d4] sm:$0xf]
        %v1822 = vld [vmem:[%s3 + $0x1d8] sm:$0xf]
        %v1823 = vld [vmem:[%s3 + $0x1dc] sm:$0xf]
        %v1824 = vld [vmem:[%s3 + $0x1e0] sm:$0xf]
        %v1825 = vld [vmem:[%s3 + $0x1e4] sm:$0xf]
        %v1826 = vld [vmem:[%s3 + $0x1e8] sm:$0xf]
        %v1827 = vld [vmem:[%s3 + $0x1ec] sm:$0xf]
        %v1828 = vld [vmem:[%s3 + $0x1f0] sm:$0xf]
        %v1829 = vld [vmem:[%s3 + $0x1f4] sm:$0xf]
        %v1830 = vld [vmem:[%s3 + $0x1f8] sm:$0xf]
        %v1831 = vld [vmem:[%s3 + $0x1fc] sm:$0xf]
        %v1832 = vld [vmem:[%s3 + $0x200] sm:$0xf]
        %v1833 = vld [vmem:[%s3 + $0x204] sm:$0xf]
        %v1834 = vld [vmem:[%s3 + $0x208] sm:$0xf]
        %v1835 = vld [vmem:[%s3 + $0x20c] sm:$0xf]
        %v1836 = vld [vmem:[%s3 + $0x210] sm:$0xf]
        %v1837 = vld [vmem:[%s3 + $0x214] sm:$0xf]
        %v1838 = vld [vmem:[%s3 + $0x218] sm:$0xf]
        %v1839 = vld [vmem:[%s3 + $0x21c] sm:$0xf]
        %v1840 = vld [vmem:[%s3 + $0x220] sm:$0xf]
        %v1841 = vld [vmem:[%s3 + $0x224] sm:$0xf]
        %v1842 = vld [vmem:[%s3 + $0x228] sm:$0xf]
        %v1843 = vld [vmem:[%s3 + $0x22c] sm:$0xf]
        %v1844 = vld [vmem:[%s3 + $0x230] sm:$0xf]
        %v1845 = vld [vmem:[%s3 + $0x234] sm:$0xf]
        %v1846 = vld [vmem:[%s3 + $0x238] sm:$0xf]
        %v1847 = vld [vmem:[%s3 + $0x23c] sm:$0xf]
        %v1992 = vunpack.c.l.b16 %v1704
        %v1993 = vunpack.c.l.b16 %v1705
        %v1994 = vunpack.c.l.b16 %v1706
        %v1995 = vunpack.c.l.b16 %v1707
        %v1996 = vunpack.c.l.b16 %v1708
        %v1997 = vunpack.c.l.b16 %v1709
        %v1998 = vunpack.c.l.b16 %v1710
        %v1999 = vunpack.c.l.b16 %v1711
        %v2000 = vunpack.c.l.b16 %v1712
        %v2001 = vunpack.c.l.b16 %v1713
        %v2002 = vunpack.c.l.b16 %v1714
        %v2003 = vunpack.c.l.b16 %v1715
        %v2004 = vunpack.c.l.b16 %v1716
        %v2005 = vunpack.c.l.b16 %v1717
        %v2006 = vunpack.c.l.b16 %v1718
        %v2007 = vunpack.c.l.b16 %v1719
        %v2008 = vunpack.c.l.b16 %v1720
        %v2009 = vunpack.c.l.b16 %v1721
        %v2010 = vunpack.c.l.b16 %v1722
        %v2011 = vunpack.c.l.b16 %v1723
        %v2012 = vunpack.c.l.b16 %v1724
        %v2013 = vunpack.c.l.b16 %v1725
        %v2014 = vunpack.c.l.b16 %v1726
        %v2015 = vunpack.c.l.b16 %v1727
        %v2016 = vunpack.c.l.b16 %v1728
        %v2017 = vunpack.c.l.b16 %v1729
        %v2018 = vunpack.c.l.b16 %v1730
        %v2019 = vunpack.c.l.b16 %v1731
        %v2020 = vunpack.c.l.b16 %v1732
        %v2021 = vunpack.c.l.b16 %v1733
        %v2022 = vunpack.c.l.b16 %v1734
        %v2023 = vunpack.c.l.b16 %v1735
        %v2024 = vunpack.c.l.b16 %v1736
        %v2025 = vunpack.c.l.b16 %v1737
        %v2026 = vunpack.c.l.b16 %v1738
        %v2027 = vunpack.c.l.b16 %v1739
        %v2028 = vunpack.c.l.b16 %v1740
        %v2029 = vunpack.c.l.b16 %v1741
        %v2030 = vunpack.c.l.b16 %v1742
        %v2031 = vunpack.c.l.b16 %v1743
        %v2032 = vunpack.c.l.b16 %v1744
        %v2033 = vunpack.c.l.b16 %v1745
        %v2034 = vunpack.c.l.b16 %v1746
        %v2035 = vunpack.c.l.b16 %v1747
        %v2036 = vunpack.c.l.b16 %v1748
        %v2037 = vunpack.c.l.b16 %v1749
        %v2038 = vunpack.c.l.b16 %v1750
        %v2039 = vunpack.c.l.b16 %v1751
        %v2040 = vunpack.c.l.b16 %v1752
        %v2041 = vunpack.c.l.b16 %v1753
        %v2042 = vunpack.c.l.b16 %v1754
        %v2043 = vunpack.c.l.b16 %v1755
        %v2044 = vunpack.c.l.b16 %v1756
        %v2045 = vunpack.c.l.b16 %v1757
        %v2046 = vunpack.c.l.b16 %v1758
        %v2047 = vunpack.c.l.b16 %v1759
        %v2048 = vunpack.c.l.b16 %v1760
        %v2049 = vunpack.c.l.b16 %v1761
        %v2050 = vunpack.c.l.b16 %v1762
        %v2051 = vunpack.c.l.b16 %v1763
        %v2052 = vunpack.c.l.b16 %v1764
        %v2053 = vunpack.c.l.b16 %v1765
        %v2054 = vunpack.c.l.b16 %v1766
        %v2055 = vunpack.c.l.b16 %v1767
        %v2056 = vunpack.c.l.b16 %v1768
        %v2057 = vunpack.c.l.b16 %v1769
        %v2058 = vunpack.c.l.b16 %v1770
        %v2059 = vunpack.c.l.b16 %v1771
        %v2060 = vunpack.c.l.b16 %v1772
        %v2061 = vunpack.c.l.b16 %v1773
        %v2062 = vunpack.c.l.b16 %v1774
        %v2063 = vunpack.c.l.b16 %v1775
        %v2064 = vunpack.c.l.b16 %v1776
        %v2065 = vunpack.c.l.b16 %v1777
        %v2066 = vunpack.c.l.b16 %v1778
        %v2067 = vunpack.c.l.b16 %v1779
        %v2068 = vunpack.c.l.b16 %v1780
        %v2069 = vunpack.c.l.b16 %v1781
        %v2070 = vunpack.c.l.b16 %v1782
        %v2071 = vunpack.c.l.b16 %v1783
        %v2072 = vunpack.c.l.b16 %v1784
        %v2073 = vunpack.c.l.b16 %v1785
        %v2074 = vunpack.c.l.b16 %v1786
        %v2075 = vunpack.c.l.b16 %v1787
        %v2076 = vunpack.c.l.b16 %v1788
        %v2077 = vunpack.c.l.b16 %v1789
        %v2078 = vunpack.c.l.b16 %v1790
        %v2079 = vunpack.c.l.b16 %v1791
        %v2080 = vunpack.c.l.b16 %v1792
        %v2081 = vunpack.c.l.b16 %v1793
        %v2082 = vunpack.c.l.b16 %v1794
        %v2083 = vunpack.c.l.b16 %v1795
        %v2084 = vunpack.c.l.b16 %v1796
        %v2085 = vunpack.c.l.b16 %v1797
        %v2086 = vunpack.c.l.b16 %v1798
        %v2087 = vunpack.c.l.b16 %v1799
        %v2088 = vunpack.c.l.b16 %v1800
        %v2089 = vunpack.c.l.b16 %v1801
        %v2090 = vunpack.c.l.b16 %v1802
        %v2091 = vunpack.c.l.b16 %v1803
        %v2092 = vunpack.c.l.b16 %v1804
        %v2093 = vunpack.c.l.b16 %v1805
        %v2094 = vunpack.c.l.b16 %v1806
        %v2095 = vunpack.c.l.b16 %v1807
        %v2096 = vunpack.c.l.b16 %v1808
        %v2097 = vunpack.c.l.b16 %v1809
        %v2098 = vunpack.c.l.b16 %v1810
        %v2099 = vunpack.c.l.b16 %v1811
        %v2100 = vunpack.c.l.b16 %v1812
        %v2101 = vunpack.c.l.b16 %v1813
        %v2102 = vunpack.c.l.b16 %v1814
        %v2103 = vunpack.c.l.b16 %v1815
        %v2104 = vunpack.c.l.b16 %v1816
        %v2105 = vunpack.c.l.b16 %v1817
        %v2106 = vunpack.c.l.b16 %v1818
        %v2107 = vunpack.c.l.b16 %v1819
        %v2108 = vunpack.c.l.b16 %v1820
        %v2109 = vunpack.c.l.b16 %v1821
        %v2110 = vunpack.c.l.b16 %v1822
        %v2111 = vunpack.c.l.b16 %v1823
        %v2112 = vunpack.c.l.b16 %v1824
        %v2113 = vunpack.c.l.b16 %v1825
        %v2114 = vunpack.c.l.b16 %v1826
        %v2115 = vunpack.c.l.b16 %v1827
        %v2116 = vunpack.c.l.b16 %v1828
        %v2117 = vunpack.c.l.b16 %v1829
        %v2118 = vunpack.c.l.b16 %v1830
        %v2119 = vunpack.c.l.b16 %v1831
        %v2120 = vunpack.c.l.b16 %v1832
        %v2121 = vunpack.c.l.b16 %v1833
        %v2122 = vunpack.c.l.b16 %v1834
        %v2123 = vunpack.c.l.b16 %v1835
        %v2124 = vunpack.c.l.b16 %v1836
        %v2125 = vunpack.c.l.b16 %v1837
        %v2126 = vunpack.c.l.b16 %v1838
        %v2127 = vunpack.c.l.b16 %v1839
        %v2128 = vunpack.c.l.b16 %v1840
        %v2129 = vunpack.c.l.b16 %v1841
        %v2130 = vunpack.c.l.b16 %v1842
        %v2131 = vunpack.c.l.b16 %v1843
        %v2132 = vunpack.c.l.b16 %v1844
        %v2133 = vunpack.c.l.b16 %v1845
        %v2134 = vunpack.c.l.b16 %v1846
        %v2135 = vunpack.c.l.b16 %v1847
        %v2136 = vpack.c.b16 %v1993, %v1992
        %v2137 = vpack.c.b16 %v1995, %v1994
        %v2138 = vpack.c.b16 %v1997, %v1996
        %v2139 = vpack.c.b16 %v1999, %v1998
        %v2140 = vpack.c.b16 %v2001, %v2000
        %v2141 = vpack.c.b16 %v2003, %v2002
        %v2142 = vpack.c.b16 %v2005, %v2004
        %v2143 = vpack.c.b16 %v2007, %v2006
        %v2144 = vpack.c.b16 %v2009, %v2008
        %v2145 = vpack.c.b16 %v2011, %v2010
        %v2146 = vpack.c.b16 %v2013, %v2012
        %v2147 = vpack.c.b16 %v2015, %v2014
        %v2148 = vpack.c.b16 %v2017, %v2016
        %v2149 = vpack.c.b16 %v2019, %v2018
        %v2150 = vpack.c.b16 %v2021, %v2020
        %v2151 = vpack.c.b16 %v2023, %v2022
        %v2152 = vpack.c.b16 %v2025, %v2024
        %v2153 = vpack.c.b16 %v2027, %v2026
        %v2154 = vpack.c.b16 %v2029, %v2028
        %v2155 = vpack.c.b16 %v2031, %v2030
        %v2156 = vpack.c.b16 %v2033, %v2032
        %v2157 = vpack.c.b16 %v2035, %v2034
        %v2158 = vpack.c.b16 %v2037, %v2036
        %v2159 = vpack.c.b16 %v2039, %v2038
        %v2160 = vpack.c.b16 %v2041, %v2040
        %v2161 = vpack.c.b16 %v2043, %v2042
        %v2162 = vpack.c.b16 %v2045, %v2044
        %v2163 = vpack.c.b16 %v2047, %v2046
        %v2164 = vpack.c.b16 %v2049, %v2048
        %v2165 = vpack.c.b16 %v2051, %v2050
        %v2166 = vpack.c.b16 %v2053, %v2052
        %v2167 = vpack.c.b16 %v2055, %v2054
        %v2168 = vpack.c.b16 %v2057, %v2056
        %v2169 = vpack.c.b16 %v2059, %v2058
        %v2170 = vpack.c.b16 %v2061, %v2060
        %v2171 = vpack.c.b16 %v2063, %v2062
        %v2172 = vpack.c.b16 %v2065, %v2064
        %v2173 = vpack.c.b16 %v2067, %v2066
        %v2174 = vpack.c.b16 %v2069, %v2068
        %v2175 = vpack.c.b16 %v2071, %v2070
        %v2176 = vpack.c.b16 %v2073, %v2072
        %v2177 = vpack.c.b16 %v2075, %v2074
        %v2178 = vpack.c.b16 %v2077, %v2076
        %v2179 = vpack.c.b16 %v2079, %v2078
        %v2180 = vpack.c.b16 %v2081, %v2080
        %v2181 = vpack.c.b16 %v2083, %v2082
        %v2182 = vpack.c.b16 %v2085, %v2084
        %v2183 = vpack.c.b16 %v2087, %v2086
        %v2184 = vpack.c.b16 %v2089, %v2088
        %v2185 = vpack.c.b16 %v2091, %v2090
        %v2186 = vpack.c.b16 %v2093, %v2092
        %v2187 = vpack.c.b16 %v2095, %v2094
        %v2188 = vpack.c.b16 %v2097, %v2096
        %v2189 = vpack.c.b16 %v2099, %v2098
        %v2190 = vpack.c.b16 %v2101, %v2100
        %v2191 = vpack.c.b16 %v2103, %v2102
        %v2192 = vpack.c.b16 %v2105, %v2104
        %v2193 = vpack.c.b16 %v2107, %v2106
        %v2194 = vpack.c.b16 %v2109, %v2108
        %v2195 = vpack.c.b16 %v2111, %v2110
        %v2196 = vpack.c.b16 %v2113, %v2112
        %v2197 = vpack.c.b16 %v2115, %v2114
        %v2198 = vpack.c.b16 %v2117, %v2116
        %v2199 = vpack.c.b16 %v2119, %v2118
        %v2200 = vpack.c.b16 %v2121, %v2120
        %v2201 = vpack.c.b16 %v2123, %v2122
        %v2202 = vpack.c.b16 %v2125, %v2124
        %v2203 = vpack.c.b16 %v2127, %v2126
        %v2204 = vpack.c.b16 %v2129, %v2128
        %v2205 = vpack.c.b16 %v2131, %v2130
        %v2206 = vpack.c.b16 %v2133, %v2132
        %v2207 = vpack.c.b16 %v2135, %v2134
        %2280 = vmatprep.subr.bf16.mxu0 0
        %2281 = vmatpush1.bf16.msra.mxu0 %v2136
        %2282 = vmatprep.subr.bf16.mxu0 0
        %2283 = vmatpush1.bf16.msra.mxu0 %v2137
        %2284 = vmatprep.subr.bf16.mxu0 0
        %2285 = vmatpush1.bf16.msra.mxu0 %v2138
        %2286 = vmatprep.subr.bf16.mxu0 0
        %2287 = vmatpush1.bf16.msra.mxu0 %v2139
        %2288 = vmatprep.subr.bf16.mxu0 0
        %2289 = vmatpush1.bf16.msra.mxu0 %v2140
        %2290 = vmatprep.subr.bf16.mxu0 0
        %2291 = vmatpush1.bf16.msra.mxu0 %v2141
        %2292 = vmatprep.subr.bf16.mxu0 0
        %2293 = vmatpush1.bf16.msra.mxu0 %v2142
        %2294 = vmatprep.subr.bf16.mxu0 0
        %2295 = vmatpush1.bf16.msra.mxu0 %v2143
        %2296 = vmatprep.subr.bf16.mxu0 0
        %2297 = vmatpush1.bf16.msra.mxu0 %v2144
        %2298 = vmatprep.subr.bf16.mxu0 0
        %2299 = vmatpush1.bf16.msra.mxu0 %v2145
        %2300 = vmatprep.subr.bf16.mxu0 0
        %2301 = vmatpush1.bf16.msra.mxu0 %v2146
        %2302 = vmatprep.subr.bf16.mxu0 0
        %2303 = vmatpush1.bf16.msra.mxu0 %v2147
        %2304 = vmatprep.subr.bf16.mxu0 0
        %2305 = vmatpush1.bf16.msra.mxu0 %v2148
        %2306 = vmatprep.subr.bf16.mxu0 0
        %2307 = vmatpush1.bf16.msra.mxu0 %v2149
        %2308 = vmatprep.subr.bf16.mxu0 0
        %2309 = vmatpush1.bf16.msra.mxu0 %v2150
        %2310 = vmatprep.subr.bf16.mxu0 0
        %2311 = vmatpush1.bf16.msra.mxu0 %v2151
        %2312 = vmatprep.mubr.bf16.mxu0 %v1561
        %2313 = vmatmul.mubr.bf16.gmra.mrb[0].mxu0 %v1560
        %v2314 = vpop.f32.mrb[0].mxu0
        %v2315 = vadd.f32 0.0, %v2314
        %v2316 = vpop.f32.mrb[0].mxu0
        %v2317 = vpop.f32.mrb[0].mxu0
        %v2318 = vadd.f32 0.0, %v2317
        %v2319 = vpop.f32.mrb[0].mxu0
        %2320 = vmatprep.mubr.bf16.mxu0 %v1570
        %2321 = vmatmul.mubr.bf16.gmra.mrb[0].mxu0 %v1569
        %v2322 = vpop.f32.mrb[0].mxu0
        %v2323 = vadd.f32 0.0, %v2322
        %v2324 = vpop.f32.mrb[0].mxu0
        %v2325 = vpop.f32.mrb[0].mxu0
        %v2326 = vadd.f32 0.0, %v2325
        %v2327 = vpop.f32.mrb[0].mxu0
        %2328 = vmatprep.mubr.bf16.mxu0 %v1579
        %2329 = vmatmul.mubr.bf16.gmra.mrb[0].mxu0 %v1578
        %v2330 = vpop.f32.mrb[0].mxu0
        %v2331 = vadd.f32 0.0, %v2330
        %v2332 = vpop.f32.mrb[0].mxu0
        %v2333 = vpop.f32.mrb[0].mxu0
        %v2334 = vadd.f32 0.0, %v2333
        %v2335 = vpop.f32.mrb[0].mxu0
        %2336 = vmatprep.mubr.bf16.mxu0 %v1588
        %2337 = vmatmul.mubr.bf16.gmra.mrb[0].mxu0 %v1587
        %v2338 = vpop.f32.mrb[0].mxu0
        %v2339 = vadd.f32 0.0, %v2338
        %v2340 = vpop.f32.mrb[0].mxu0
        %v2341 = vpop.f32.mrb[0].mxu0
        %v2342 = vadd.f32 0.0, %v2341
        %v2343 = vpop.f32.mrb[0].mxu0
        %2344 = vmatprep.mubr.bf16.mxu0 %v1597
        %2345 = vmatmul.mubr.bf16.gmra.mrb[0].mxu0 %v1596
        %v2346 = vpop.f32.mrb[0].mxu0
        %v2347 = vadd.f32 0.0, %v2346
        %v2348 = vpop.f32.mrb[0].mxu0
        %v2349 = vpop.f32.mrb[0].mxu0
        %v2350 = vadd.f32 0.0, %v2349
        %v2351 = vpop.f32.mrb[0].mxu0
        %2352 = vmatprep.mubr.bf16.mxu0 %v1606
        %2353 = vmatmul.mubr.bf16.gmra.mrb[0].mxu0 %v1605
        %v2354 = vpop.f32.mrb[0].mxu0
        %v2355 = vadd.f32 0.0, %v2354
        %v2356 = vpop.f32.mrb[0].mxu0
        %v2357 = vpop.f32.mrb[0].mxu0
        %v2358 = vadd.f32 0.0, %v2357
        %v2359 = vpop.f32.mrb[0].mxu0
        %2360 = vmatprep.mubr.bf16.mxu0 %v1615
        %2361 = vmatmul.mubr.bf16.gmra.mrb[0].mxu0 %v1614
        %v2362 = vpop.f32.mrb[0].mxu0
        %v2363 = vadd.f32 0.0, %v2362
        %v2364 = vpop.f32.mrb[0].mxu0
        %v2365 = vpop.f32.mrb[0].mxu0
        %v2366 = vadd.f32 0.0, %v2365
        %v2367 = vpop.f32.mrb[0].mxu0
        %2368 = vmatprep.mubr.bf16.mxu0 %v1624
        %2369 = vmatmul.mubr.bf16.gmra.mrb[0].mxu0 %v1623
        %v2370 = vpop.f32.mrb[0].mxu0
        %v2371 = vadd.f32 0.0, %v2370
        %v2372 = vpop.f32.mrb[0].mxu0
        %v2373 = vpop.f32.mrb[0].mxu0
        %v2374 = vadd.f32 0.0, %v2373
        %v2375 = vpop.f32.mrb[0].mxu0
        %2376 = vmatprep.mubr.bf16.mxu0 %v1633
        %2377 = vmatmul.mubr.bf16.gmra.mrb[0].mxu0 %v1632
        %v2378 = vpop.f32.mrb[0].mxu0
        %v2379 = vadd.f32 0.0, %v2378
        %v2380 = vpop.f32.mrb[0].mxu0
        %v2381 = vpop.f32.mrb[0].mxu0
        %v2382 = vadd.f32 0.0, %v2381
        %v2383 = vpop.f32.mrb[0].mxu0
        %2384 = vmatprep.mubr.bf16.mxu0 %v1642
        %2385 = vmatmul.mubr.bf16.gmra.mrb[0].mxu0 %v1641
        %v2386 = vpop.f32.mrb[0].mxu0
        %v2387 = vadd.f32 0.0, %v2386
        %v2388 = vpop.f32.mrb[0].mxu0
        %v2389 = vpop.f32.mrb[0].mxu0
        %v2390 = vadd.f32 0.0, %v2389
        %v2391 = vpop.f32.mrb[0].mxu0
        %2392 = vmatprep.mubr.bf16.mxu0 %v1651
        %2393 = vmatmul.mubr.bf16.gmra.mrb[0].mxu0 %v1650
        %v2394 = vpop.f32.mrb[0].mxu0
        %v2395 = vadd.f32 0.0, %v2394
        %v2396 = vpop.f32.mrb[0].mxu0
        %v2397 = vpop.f32.mrb[0].mxu0
        %v2398 = vadd.f32 0.0, %v2397
        %v2399 = vpop.f32.mrb[0].mxu0
        %2400 = vmatprep.mubr.bf16.mxu0 %v1660
        %2401 = vmatmul.mubr.bf16.gmra.mrb[0].mxu0 %v1659
        %v2402 = vpop.f32.mrb[0].mxu0
        %v2403 = vadd.f32 0.0, %v2402
        %v2404 = vpop.f32.mrb[0].mxu0
        %v2405 = vpop.f32.mrb[0].mxu0
        %v2406 = vadd.f32 0.0, %v2405
        %v2407 = vpop.f32.mrb[0].mxu0
        %2408 = vmatprep.mubr.bf16.mxu0 %v1669
        %2409 = vmatmul.mubr.bf16.gmra.mrb[0].mxu0 %v1668
        %v2410 = vpop.f32.mrb[0].mxu0
        %v2411 = vadd.f32 0.0, %v2410
        %v2412 = vpop.f32.mrb[0].mxu0
        %v2413 = vpop.f32.mrb[0].mxu0
        %v2414 = vadd.f32 0.0, %v2413
        %v2415 = vpop.f32.mrb[0].mxu0
        %2416 = vmatprep.mubr.bf16.mxu0 %v1678
        %2417 = vmatmul.mubr.bf16.gmra.mrb[0].mxu0 %v1677
        %v2418 = vpop.f32.mrb[0].mxu0
        %v2419 = vadd.f32 0.0, %v2418
        %v2420 = vpop.f32.mrb[0].mxu0
        %v2421 = vpop.f32.mrb[0].mxu0
        %v2422 = vadd.f32 0.0, %v2421
        %v2423 = vpop.f32.mrb[0].mxu0
        %2424 = vmatprep.mubr.bf16.mxu0 %v1687
        %2425 = vmatmul.mubr.bf16.gmra.mrb[0].mxu0 %v1686
        %v2426 = vpop.f32.mrb[0].mxu0
        %v2427 = vadd.f32 0.0, %v2426
        %v2428 = vpop.f32.mrb[0].mxu0
        %v2429 = vpop.f32.mrb[0].mxu0
        %v2430 = vadd.f32 0.0, %v2429
        %v2431 = vpop.f32.mrb[0].mxu0
        %2432 = vmatprep.mubr.bf16.mxu0 %v1696
        %2433 = vmatmul.mubr.bf16.gmra.mrb[0].mxu0 %v1695
        %v2434 = vpop.f32.mrb[0].mxu0
        %v2435 = vadd.f32 0.0, %v2434
        %v2436 = vpop.f32.mrb[0].mxu0
        %v2437 = vpop.f32.mrb[0].mxu0
        %v2438 = vadd.f32 0.0, %v2437
        %v2439 = vpop.f32.mrb[0].mxu0
        %2440 = vdwg.mxu0
        %2441 = vmatprep.subr.bf16.mxu0 0
        %2442 = vmatpush1.bf16.msra.mxu0 %v2152
        %2443 = vmatprep.subr.bf16.mxu0 0
        %2444 = vmatpush1.bf16.msra.mxu0 %v2153
        %2445 = vmatprep.subr.bf16.mxu0 0
        %2446 = vmatpush1.bf16.msra.mxu0 %v2154
        %2447 = vmatprep.subr.bf16.mxu0 0
        %2448 = vmatpush1.bf16.msra.mxu0 %v2155
        %2449 = vmatprep.subr.bf16.mxu0 0
        %2450 = vmatpush1.bf16.msra.mxu0 %v2156
        %2451 = vmatprep.subr.bf16.mxu0 0
        %2452 = vmatpush1.bf16.msra.mxu0 %v2157
        %2453 = vmatprep.subr.bf16.mxu0 0
        %2454 = vmatpush1.bf16.msra.mxu0 %v2158
        %2455 = vmatprep.subr.bf16.mxu0 0
        %2456 = vmatpush1.bf16.msra.mxu0 %v2159
        %2457 = vmatprep.subr.bf16.mxu0 0
        %2458 = vmatpush1.bf16.msra.mxu0 %v2160
        %2459 = vmatprep.subr.bf16.mxu0 0
        %2460 = vmatpush1.bf16.msra.mxu0 %v2161
        %2461 = vmatprep.subr.bf16.mxu0 0
        %2462 = vmatpush1.bf16.msra.mxu0 %v2162
        %2463 = vmatprep.subr.bf16.mxu0 0
        %2464 = vmatpush1.bf16.msra.mxu0 %v2163
        %2465 = vmatprep.subr.bf16.mxu0 0
        %2466 = vmatpush1.bf16.msra.mxu0 %v2164
        %2467 = vmatprep.subr.bf16.mxu0 0
        %2468 = vmatpush1.bf16.msra.mxu0 %v2165
        %2469 = vmatprep.subr.bf16.mxu0 0
        %2470 = vmatpush1.bf16.msra.mxu0 %v2166
        %2471 = vmatprep.subr.bf16.mxu0 0
        %2472 = vmatpush1.bf16.msra.mxu0 %v2167
        %2473 = vmatprep.mubr.bf16.mxu0 %v1563
        %2474 = vmatmul.mubr.bf16.gmra.mrb[0].mxu0 %v1562
        %v2475 = vpop.f32.mrb[0].mxu0
        %v2476 = vadd.f32 %v2315, %v2475
        %v2477 = vpop.f32.mrb[0].mxu0
        %v2478 = vpop.f32.mrb[0].mxu0
        %v2479 = vadd.f32 %v2318, %v2478
        %v2480 = vpop.f32.mrb[0].mxu0
        %2481 = vmatprep.mubr.bf16.mxu0 %v1572
        %2482 = vmatmul.mubr.bf16.gmra.mrb[0].mxu0 %v1571
        %v2483 = vpop.f32.mrb[0].mxu0
        %v2484 = vadd.f32 %v2323, %v2483
        %v2485 = vpop.f32.mrb[0].mxu0
        %v2486 = vpop.f32.mrb[0].mxu0
        %v2487 = vadd.f32 %v2326, %v2486
        %v2488 = vpop.f32.mrb[0].mxu0
        %2489 = vmatprep.mubr.bf16.mxu0 %v1581
        %2490 = vmatmul.mubr.bf16.gmra.mrb[0].mxu0 %v1580
        %v2491 = vpop.f32.mrb[0].mxu0
        %v2492 = vadd.f32 %v2331, %v2491
        %v2493 = vpop.f32.mrb[0].mxu0
        %v2494 = vpop.f32.mrb[0].mxu0
        %v2495 = vadd.f32 %v2334, %v2494
        %v2496 = vpop.f32.mrb[0].mxu0
        %2497 = vmatprep.mubr.bf16.mxu0 %v1590
        %2498 = vmatmul.mubr.bf16.gmra.mrb[0].mxu0 %v1589
        %v2499 = vpop.f32.mrb[0].mxu0
        %v2500 = vadd.f32 %v2339, %v2499
        %v2501 = vpop.f32.mrb[0].mxu0
        %v2502 = vpop.f32.mrb[0].mxu0
        %v2503 = vadd.f32 %v2342, %v2502
        %v2504 = vpop.f32.mrb[0].mxu0
        %2505 = vmatprep.mubr.bf16.mxu0 %v1599
        %2506 = vmatmul.mubr.bf16.gmra.mrb[0].mxu0 %v1598
        %v2507 = vpop.f32.mrb[0].mxu0
        %v2508 = vadd.f32 %v2347, %v2507
        %v2509 = vpop.f32.mrb[0].mxu0
        %v2510 = vpop.f32.mrb[0].mxu0
        %v2511 = vadd.f32 %v2350, %v2510
        %v2512 = vpop.f32.mrb[0].mxu0
        %2513 = vmatprep.mubr.bf16.mxu0 %v1608
        %2514 = vmatmul.mubr.bf16.gmra.mrb[0].mxu0 %v1607
        %v2515 = vpop.f32.mrb[0].mxu0
        %v2516 = vadd.f32 %v2355, %v2515
        %v2517 = vpop.f32.mrb[0].mxu0
        %v2518 = vpop.f32.mrb[0].mxu0
        %v2519 = vadd.f32 %v2358, %v2518
        %v2520 = vpop.f32.mrb[0].mxu0
        %2521 = vmatprep.mubr.bf16.mxu0 %v1617
        %2522 = vmatmul.mubr.bf16.gmra.mrb[0].mxu0 %v1616
        %v2523 = vpop.f32.mrb[0].mxu0
        %v2524 = vadd.f32 %v2363, %v2523
        %v2525 = vpop.f32.mrb[0].mxu0
        %v2526 = vpop.f32.mrb[0].mxu0
        %v2527 = vadd.f32 %v2366, %v2526
        %v2528 = vpop.f32.mrb[0].mxu0
        %2529 = vmatprep.mubr.bf16.mxu0 %v1626
        %2530 = vmatmul.mubr.bf16.gmra.mrb[0].mxu0 %v1625
        %v2531 = vpop.f32.mrb[0].mxu0
        %v2532 = vadd.f32 %v2371, %v2531
        %v2533 = vpop.f32.mrb[0].mxu0
        %v2534 = vpop.f32.mrb[0].mxu0
        %v2535 = vadd.f32 %v2374, %v2534
        %v2536 = vpop.f32.mrb[0].mxu0
        %2537 = vmatprep.mubr.bf16.mxu0 %v1635
        %2538 = vmatmul.mubr.bf16.gmra.mrb[0].mxu0 %v1634
        %v2539 = vpop.f32.mrb[0].mxu0
        %v2540 = vadd.f32 %v2379, %v2539
        %v2541 = vpop.f32.mrb[0].mxu0
        %v2542 = vpop.f32.mrb[0].mxu0
        %v2543 = vadd.f32 %v2382, %v2542
        %v2544 = vpop.f32.mrb[0].mxu0
        %2545 = vmatprep.mubr.bf16.mxu0 %v1644
        %2546 = vmatmul.mubr.bf16.gmra.mrb[0].mxu0 %v1643
        %v2547 = vpop.f32.mrb[0].mxu0
        %v2548 = vadd.f32 %v2387, %v2547
        %v2549 = vpop.f32.mrb[0].mxu0
        %v2550 = vpop.f32.mrb[0].mxu0
        %v2551 = vadd.f32 %v2390, %v2550
        %v2552 = vpop.f32.mrb[0].mxu0
        %2553 = vmatprep.mubr.bf16.mxu0 %v1653
        %2554 = vmatmul.mubr.bf16.gmra.mrb[0].mxu0 %v1652
        %v2555 = vpop.f32.mrb[0].mxu0
        %v2556 = vadd.f32 %v2395, %v2555
        %v2557 = vpop.f32.mrb[0].mxu0
        %v2558 = vpop.f32.mrb[0].mxu0
        %v2559 = vadd.f32 %v2398, %v2558
        %v2560 = vpop.f32.mrb[0].mxu0
        %2561 = vmatprep.mubr.bf16.mxu0 %v1662
        %2562 = vmatmul.mubr.bf16.gmra.mrb[0].mxu0 %v1661
        %v2563 = vpop.f32.mrb[0].mxu0
        %v2564 = vadd.f32 %v2403, %v2563
        %v2565 = vpop.f32.mrb[0].mxu0
        %v2566 = vpop.f32.mrb[0].mxu0
        %v2567 = vadd.f32 %v2406, %v2566
        %v2568 = vpop.f32.mrb[0].mxu0
        %2569 = vmatprep.mubr.bf16.mxu0 %v1671
        %2570 = vmatmul.mubr.bf16.gmra.mrb[0].mxu0 %v1670
        %v2571 = vpop.f32.mrb[0].mxu0
        %v2572 = vadd.f32 %v2411, %v2571
        %v2573 = vpop.f32.mrb[0].mxu0
        %v2574 = vpop.f32.mrb[0].mxu0
        %v2575 = vadd.f32 %v2414, %v2574
        %v2576 = vpop.f32.mrb[0].mxu0
        %2577 = vmatprep.mubr.bf16.mxu0 %v1680
        %2578 = vmatmul.mubr.bf16.gmra.mrb[0].mxu0 %v1679
        %v2579 = vpop.f32.mrb[0].mxu0
        %v2580 = vadd.f32 %v2419, %v2579
        %v2581 = vpop.f32.mrb[0].mxu0
        %v2582 = vpop.f32.mrb[0].mxu0
        %v2583 = vadd.f32 %v2422, %v2582
        %v2584 = vpop.f32.mrb[0].mxu0
        %2585 = vmatprep.mubr.bf16.mxu0 %v1689
        %2586 = vmatmul.mubr.bf16.gmra.mrb[0].mxu0 %v1688
        %v2587 = vpop.f32.mrb[0].mxu0
        %v2588 = vadd.f32 %v2427, %v2587
        %v2589 = vpop.f32.mrb[0].mxu0
        %v2590 = vpop.f32.mrb[0].mxu0
        %v2591 = vadd.f32 %v2430, %v2590
        %v2592 = vpop.f32.mrb[0].mxu0
        %2593 = vmatprep.mubr.bf16.mxu0 %v1698
        %2594 = vmatmul.mubr.bf16.gmra.mrb[0].mxu0 %v1697
        %v2595 = vpop.f32.mrb[0].mxu0
        %v2596 = vadd.f32 %v2435, %v2595
        %v2597 = vpop.f32.mrb[0].mxu0
        %v2598 = vpop.f32.mrb[0].mxu0
        %v2599 = vadd.f32 %v2438, %v2598
        %v2600 = vpop.f32.mrb[0].mxu0
        %2601 = vdwg.mxu0
        %2602 = vmatprep.subr.bf16.mxu0 0
        %2603 = vmatpush1.bf16.msra.mxu0 %v2168
        %2604 = vmatprep.subr.bf16.mxu0 0
        %2605 = vmatpush1.bf16.msra.mxu0 %v2169
        %2606 = vmatprep.subr.bf16.mxu0 0
        %2607 = vmatpush1.bf16.msra.mxu0 %v2170
        %2608 = vmatprep.subr.bf16.mxu0 0
        %2609 = vmatpush1.bf16.msra.mxu0 %v2171
        %2610 = vmatprep.subr.bf16.mxu0 0
        %2611 = vmatpush1.bf16.msra.mxu0 %v2172
        %2612 = vmatprep.subr.bf16.mxu0 0
        %2613 = vmatpush1.bf16.msra.mxu0 %v2173
        %2614 = vmatprep.subr.bf16.mxu0 0
        %2615 = vmatpush1.bf16.msra.mxu0 %v2174
        %2616 = vmatprep.subr.bf16.mxu0 0
        %2617 = vmatpush1.bf16.msra.mxu0 %v2175
        %2618 = vmatprep.subr.bf16.mxu0 0
        %2619 = vmatpush1.bf16.msra.mxu0 %v2176
        %2620 = vmatprep.subr.bf16.mxu0 0
        %2621 = vmatpush1.bf16.msra.mxu0 %v2177
        %2622 = vmatprep.subr.bf16.mxu0 0
        %2623 = vmatpush1.bf16.msra.mxu0 %v2178
        %2624 = vmatprep.subr.bf16.mxu0 0
        %2625 = vmatpush1.bf16.msra.mxu0 %v2179
        %2626 = vmatprep.subr.bf16.mxu0 0
        %2627 = vmatpush1.bf16.msra.mxu0 %v2180
        %2628 = vmatprep.subr.bf16.mxu0 0
        %2629 = vmatpush1.bf16.msra.mxu0 %v2181
        %2630 = vmatprep.subr.bf16.mxu0 0
        %2631 = vmatpush1.bf16.msra.mxu0 %v2182
        %2632 = vmatprep.subr.bf16.mxu0 0
        %2633 = vmatpush1.bf16.msra.mxu0 %v2183
        %2634 = vmatprep.mubr.bf16.mxu0 %v1565
        %2635 = vmatmul.mubr.bf16.gmra.mrb[0].mxu0 %v1564
        %v2636 = vpop.f32.mrb[0].mxu0
        %v2637 = vadd.f32 %v2476, %v2636
        %v2638 = vpop.f32.mrb[0].mxu0
        %v2639 = vpop.f32.mrb[0].mxu0
        %v2640 = vadd.f32 %v2479, %v2639
        %v2641 = vpop.f32.mrb[0].mxu0
        %2642 = vmatprep.mubr.bf16.mxu0 %v1574
        %2643 = vmatmul.mubr.bf16.gmra.mrb[0].mxu0 %v1573
        %v2644 = vpop.f32.mrb[0].mxu0
        %v2645 = vadd.f32 %v2484, %v2644
        %v2646 = vpop.f32.mrb[0].mxu0
        %v2647 = vpop.f32.mrb[0].mxu0
        %v2648 = vadd.f32 %v2487, %v2647
        %v2649 = vpop.f32.mrb[0].mxu0
        %2650 = vmatprep.mubr.bf16.mxu0 %v1583
        %2651 = vmatmul.mubr.bf16.gmra.mrb[0].mxu0 %v1582
        %v2652 = vpop.f32.mrb[0].mxu0
        %v2653 = vadd.f32 %v2492, %v2652
        %v2654 = vpop.f32.mrb[0].mxu0
        %v2655 = vpop.f32.mrb[0].mxu0
        %v2656 = vadd.f32 %v2495, %v2655
        %v2657 = vpop.f32.mrb[0].mxu0
        %2658 = vmatprep.mubr.bf16.mxu0 %v1592
        %2659 = vmatmul.mubr.bf16.gmra.mrb[0].mxu0 %v1591
        %v2660 = vpop.f32.mrb[0].mxu0
        %v2661 = vadd.f32 %v2500, %v2660
        %v2662 = vpop.f32.mrb[0].mxu0
        %v2663 = vpop.f32.mrb[0].mxu0
        %v2664 = vadd.f32 %v2503, %v2663
        %v2665 = vpop.f32.mrb[0].mxu0
        %2666 = vmatprep.mubr.bf16.mxu0 %v1601
        %2667 = vmatmul.mubr.bf16.gmra.mrb[0].mxu0 %v1600
        %v2668 = vpop.f32.mrb[0].mxu0
        %v2669 = vadd.f32 %v2508, %v2668
        %v2670 = vpop.f32.mrb[0].mxu0
        %v2671 = vpop.f32.mrb[0].mxu0
        %v2672 = vadd.f32 %v2511, %v2671
        %v2673 = vpop.f32.mrb[0].mxu0
        %2674 = vmatprep.mubr.bf16.mxu0 %v1610
        %2675 = vmatmul.mubr.bf16.gmra.mrb[0].mxu0 %v1609
        %v2676 = vpop.f32.mrb[0].mxu0
        %v2677 = vadd.f32 %v2516, %v2676
        %v2678 = vpop.f32.mrb[0].mxu0
        %v2679 = vpop.f32.mrb[0].mxu0
        %v2680 = vadd.f32 %v2519, %v2679
        %v2681 = vpop.f32.mrb[0].mxu0
        %2682 = vmatprep.mubr.bf16.mxu0 %v1619
        %2683 = vmatmul.mubr.bf16.gmra.mrb[0].mxu0 %v1618
        %v2684 = vpop.f32.mrb[0].mxu0
        %v2685 = vadd.f32 %v2524, %v2684
        %v2686 = vpop.f32.mrb[0].mxu0
        %v2687 = vpop.f32.mrb[0].mxu0
        %v2688 = vadd.f32 %v2527, %v2687
        %v2689 = vpop.f32.mrb[0].mxu0
        %2690 = vmatprep.mubr.bf16.mxu0 %v1628
        %2691 = vmatmul.mubr.bf16.gmra.mrb[0].mxu0 %v1627
        %v2692 = vpop.f32.mrb[0].mxu0
        %v2693 = vadd.f32 %v2532, %v2692
        %v2694 = vpop.f32.mrb[0].mxu0
        %v2695 = vpop.f32.mrb[0].mxu0
        %v2696 = vadd.f32 %v2535, %v2695
        %v2697 = vpop.f32.mrb[0].mxu0
        %2698 = vmatprep.mubr.bf16.mxu0 %v1637
        %2699 = vmatmul.mubr.bf16.gmra.mrb[0].mxu0 %v1636
        %v2700 = vpop.f32.mrb[0].mxu0
        %v2701 = vadd.f32 %v2540, %v2700
        %v2702 = vpop.f32.mrb[0].mxu0
        %v2703 = vpop.f32.mrb[0].mxu0
        %v2704 = vadd.f32 %v2543, %v2703
        %v2705 = vpop.f32.mrb[0].mxu0
        %2706 = vmatprep.mubr.bf16.mxu0 %v1646
        %2707 = vmatmul.mubr.bf16.gmra.mrb[0].mxu0 %v1645
        %v2708 = vpop.f32.mrb[0].mxu0
        %v2709 = vadd.f32 %v2548, %v2708
        %v2710 = vpop.f32.mrb[0].mxu0
        %v2711 = vpop.f32.mrb[0].mxu0
        %v2712 = vadd.f32 %v2551, %v2711
        %v2713 = vpop.f32.mrb[0].mxu0
        %2714 = vmatprep.mubr.bf16.mxu0 %v1655
        %2715 = vmatmul.mubr.bf16.gmra.mrb[0].mxu0 %v1654
        %v2716 = vpop.f32.mrb[0].mxu0
        %v2717 = vadd.f32 %v2556, %v2716
        %v2718 = vpop.f32.mrb[0].mxu0
        %v2719 = vpop.f32.mrb[0].mxu0
        %v2720 = vadd.f32 %v2559, %v2719
        %v2721 = vpop.f32.mrb[0].mxu0
        %2722 = vmatprep.mubr.bf16.mxu0 %v1664
        %2723 = vmatmul.mubr.bf16.gmra.mrb[0].mxu0 %v1663
        %v2724 = vpop.f32.mrb[0].mxu0
        %v2725 = vadd.f32 %v2564, %v2724
        %v2726 = vpop.f32.mrb[0].mxu0
        %v2727 = vpop.f32.mrb[0].mxu0
        %v2728 = vadd.f32 %v2567, %v2727
        %v2729 = vpop.f32.mrb[0].mxu0
        %2730 = vmatprep.mubr.bf16.mxu0 %v1673
        %2731 = vmatmul.mubr.bf16.gmra.mrb[0].mxu0 %v1672
        %v2732 = vpop.f32.mrb[0].mxu0
        %v2733 = vadd.f32 %v2572, %v2732
        %v2734 = vpop.f32.mrb[0].mxu0
        %v2735 = vpop.f32.mrb[0].mxu0
        %v2736 = vadd.f32 %v2575, %v2735
        %v2737 = vpop.f32.mrb[0].mxu0
        %2738 = vmatprep.mubr.bf16.mxu0 %v1682
        %2739 = vmatmul.mubr.bf16.gmra.mrb[0].mxu0 %v1681
        %v2740 = vpop.f32.mrb[0].mxu0
        %v2741 = vadd.f32 %v2580, %v2740
        %v2742 = vpop.f32.mrb[0].mxu0
        %v2743 = vpop.f32.mrb[0].mxu0
        %v2744 = vadd.f32 %v2583, %v2743
        %v2745 = vpop.f32.mrb[0].mxu0
        %2746 = vmatprep.mubr.bf16.mxu0 %v1691
        %2747 = vmatmul.mubr.bf16.gmra.mrb[0].mxu0 %v1690
        %v2748 = vpop.f32.mrb[0].mxu0
        %v2749 = vadd.f32 %v2588, %v2748
        %v2750 = vpop.f32.mrb[0].mxu0
        %v2751 = vpop.f32.mrb[0].mxu0
        %v2752 = vadd.f32 %v2591, %v2751
        %v2753 = vpop.f32.mrb[0].mxu0
        %2754 = vmatprep.mubr.bf16.mxu0 %v1700
        %2755 = vmatmul.mubr.bf16.gmra.mrb[0].mxu0 %v1699
        %v2756 = vpop.f32.mrb[0].mxu0
        %v2757 = vadd.f32 %v2596, %v2756
        %v2758 = vpop.f32.mrb[0].mxu0
        %v2759 = vpop.f32.mrb[0].mxu0
        %v2760 = vadd.f32 %v2599, %v2759
        %v2761 = vpop.f32.mrb[0].mxu0
        %2762 = vdwg.mxu0
        %2763 = vmatprep.subr.bf16.mxu0 0
        %2764 = vmatpush1.bf16.msra.mxu0 %v2184
        %2765 = vmatprep.subr.bf16.mxu0 0
        %2766 = vmatpush1.bf16.msra.mxu0 %v2185
        %2767 = vmatprep.subr.bf16.mxu0 0
        %2768 = vmatpush1.bf16.msra.mxu0 %v2186
        %2769 = vmatprep.subr.bf16.mxu0 0
        %2770 = vmatpush1.bf16.msra.mxu0 %v2187
        %2771 = vmatprep.subr.bf16.mxu0 0
        %2772 = vmatpush1.bf16.msra.mxu0 %v2188
        %2773 = vmatprep.subr.bf16.mxu0 0
        %2774 = vmatpush1.bf16.msra.mxu0 %v2189
        %2775 = vmatprep.subr.bf16.mxu0 0
        %2776 = vmatpush1.bf16.msra.mxu0 %v2190
        %2777 = vmatprep.subr.bf16.mxu0 0
        %2778 = vmatpush1.bf16.msra.mxu0 %v2191
        %2779 = vmatprep.subr.bf16.mxu0 0
        %2780 = vmatpush1.bf16.msra.mxu0 %v2192
        %2781 = vmatprep.subr.bf16.mxu0 0
        %2782 = vmatpush1.bf16.msra.mxu0 %v2193
        %2783 = vmatprep.subr.bf16.mxu0 0
        %2784 = vmatpush1.bf16.msra.mxu0 %v2194
        %2785 = vmatprep.subr.bf16.mxu0 0
        %2786 = vmatpush1.bf16.msra.mxu0 %v2195
        %2787 = vmatprep.subr.bf16.mxu0 0
        %2788 = vmatpush1.bf16.msra.mxu0 %v2196
        %2789 = vmatprep.subr.bf16.mxu0 0
        %2790 = vmatpush1.bf16.msra.mxu0 %v2197
        %2791 = vmatprep.subr.bf16.mxu0 0
        %2792 = vmatpush1.bf16.msra.mxu0 %v2198
        %2793 = vmatprep.subr.bf16.mxu0 0
        %2794 = vmatpush1.bf16.msra.mxu0 %v2199
        %2795 = vmatprep.mubr.bf16.mxu0 %v1567
        %2796 = vmatmul.mubr.bf16.gmra.mrb[0].mxu0 %v1566
        %v2797 = vpop.f32.mrb[0].mxu0
        %v2798 = vadd.f32 %v2637, %v2797
        %v2799 = vpop.f32.mrb[0].mxu0
        %v2800 = vpop.f32.mrb[0].mxu0
        %v2801 = vadd.f32 %v2640, %v2800
        %v2802 = vpop.f32.mrb[0].mxu0
        %2803 = vmatprep.mubr.bf16.mxu0 %v1576
        %2804 = vmatmul.mubr.bf16.gmra.mrb[0].mxu0 %v1575
        %v2805 = vpop.f32.mrb[0].mxu0
        %v2806 = vadd.f32 %v2645, %v2805
        %v2807 = vpop.f32.mrb[0].mxu0
        %v2808 = vpop.f32.mrb[0].mxu0
        %v2809 = vadd.f32 %v2648, %v2808
        %v2810 = vpop.f32.mrb[0].mxu0
        %2811 = vmatprep.mubr.bf16.mxu0 %v1585
        %2812 = vmatmul.mubr.bf16.gmra.mrb[0].mxu0 %v1584
        %v2813 = vpop.f32.mrb[0].mxu0
        %v2814 = vadd.f32 %v2653, %v2813
        %v2815 = vpop.f32.mrb[0].mxu0
        %v2816 = vpop.f32.mrb[0].mxu0
        %v2817 = vadd.f32 %v2656, %v2816
        %v2818 = vpop.f32.mrb[0].mxu0
        %2819 = vmatprep.mubr.bf16.mxu0 %v1594
        %2820 = vmatmul.mubr.bf16.gmra.mrb[0].mxu0 %v1593
        %v2821 = vpop.f32.mrb[0].mxu0
        %v2822 = vadd.f32 %v2661, %v2821
        %v2823 = vpop.f32.mrb[0].mxu0
        %v2824 = vpop.f32.mrb[0].mxu0
        %v2825 = vadd.f32 %v2664, %v2824
        %v2826 = vpop.f32.mrb[0].mxu0
        %2827 = vmatprep.mubr.bf16.mxu0 %v1603
        %2828 = vmatmul.mubr.bf16.gmra.mrb[0].mxu0 %v1602
        %v2829 = vpop.f32.mrb[0].mxu0
        %v2830 = vadd.f32 %v2669, %v2829
        %v2831 = vpop.f32.mrb[0].mxu0
        %v2832 = vpop.f32.mrb[0].mxu0
        %v2833 = vadd.f32 %v2672, %v2832
        %v2834 = vpop.f32.mrb[0].mxu0
        %2835 = vmatprep.mubr.bf16.mxu0 %v1612
        %2836 = vmatmul.mubr.bf16.gmra.mrb[0].mxu0 %v1611
        %v2837 = vpop.f32.mrb[0].mxu0
        %v2838 = vadd.f32 %v2677, %v2837
        %v2839 = vpop.f32.mrb[0].mxu0
        %v2840 = vpop.f32.mrb[0].mxu0
        %v2841 = vadd.f32 %v2680, %v2840
        %v2842 = vpop.f32.mrb[0].mxu0
        %2843 = vmatprep.mubr.bf16.mxu0 %v1621
        %2844 = vmatmul.mubr.bf16.gmra.mrb[0].mxu0 %v1620
        %v2845 = vpop.f32.mrb[0].mxu0
        %v2846 = vadd.f32 %v2685, %v2845
        %v2847 = vpop.f32.mrb[0].mxu0
        %v2848 = vpop.f32.mrb[0].mxu0
        %v2849 = vadd.f32 %v2688, %v2848
        %v2850 = vpop.f32.mrb[0].mxu0
        %2851 = vmatprep.mubr.bf16.mxu0 %v1630
        %2852 = vmatmul.mubr.bf16.gmra.mrb[0].mxu0 %v1629
        %v2853 = vpop.f32.mrb[0].mxu0
        %v2854 = vadd.f32 %v2693, %v2853
        %v2855 = vpop.f32.mrb[0].mxu0
        %v2856 = vpop.f32.mrb[0].mxu0
        %v2857 = vadd.f32 %v2696, %v2856
        %v2858 = vpop.f32.mrb[0].mxu0
        %2859 = vmatprep.mubr.bf16.mxu0 %v1639
        %2860 = vmatmul.mubr.bf16.gmra.mrb[0].mxu0 %v1638
        %v2861 = vpop.f32.mrb[0].mxu0
        %v2862 = vadd.f32 %v2701, %v2861
        %v2863 = vpop.f32.mrb[0].mxu0
        %v2864 = vpop.f32.mrb[0].mxu0
        %v2865 = vadd.f32 %v2704, %v2864
        %v2866 = vpop.f32.mrb[0].mxu0
        %2867 = vmatprep.mubr.bf16.mxu0 %v1648
        %2868 = vmatmul.mubr.bf16.gmra.mrb[0].mxu0 %v1647
        %v2869 = vpop.f32.mrb[0].mxu0
        %v2870 = vadd.f32 %v2709, %v2869
        %v2871 = vpop.f32.mrb[0].mxu0
        %v2872 = vpop.f32.mrb[0].mxu0
        %v2873 = vadd.f32 %v2712, %v2872
        %v2874 = vpop.f32.mrb[0].mxu0
        %2875 = vmatprep.mubr.bf16.mxu0 %v1657
        %2876 = vmatmul.mubr.bf16.gmra.mrb[0].mxu0 %v1656
        %v2877 = vpop.f32.mrb[0].mxu0
        %v2878 = vadd.f32 %v2717, %v2877
        %v2879 = vpop.f32.mrb[0].mxu0
        %v2880 = vpop.f32.mrb[0].mxu0
        %v2881 = vadd.f32 %v2720, %v2880
        %v2882 = vpop.f32.mrb[0].mxu0
        %2883 = vmatprep.mubr.bf16.mxu0 %v1666
        %2884 = vmatmul.mubr.bf16.gmra.mrb[0].mxu0 %v1665
        %v2885 = vpop.f32.mrb[0].mxu0
        %v2886 = vadd.f32 %v2725, %v2885
        %v2887 = vpop.f32.mrb[0].mxu0
        %v2888 = vpop.f32.mrb[0].mxu0
        %v2889 = vadd.f32 %v2728, %v2888
        %v2890 = vpop.f32.mrb[0].mxu0
        %2891 = vmatprep.mubr.bf16.mxu0 %v1675
        %2892 = vmatmul.mubr.bf16.gmra.mrb[0].mxu0 %v1674
        %v2893 = vpop.f32.mrb[0].mxu0
        %v2894 = vadd.f32 %v2733, %v2893
        %v2895 = vpop.f32.mrb[0].mxu0
        %v2896 = vpop.f32.mrb[0].mxu0
        %v2897 = vadd.f32 %v2736, %v2896
        %v2898 = vpop.f32.mrb[0].mxu0
        %2899 = vmatprep.mubr.bf16.mxu0 %v1684
        %2900 = vmatmul.mubr.bf16.gmra.mrb[0].mxu0 %v1683
        %v2901 = vpop.f32.mrb[0].mxu0
        %v2902 = vadd.f32 %v2741, %v2901
        %v2903 = vpop.f32.mrb[0].mxu0
        %v2904 = vpop.f32.mrb[0].mxu0
        %v2905 = vadd.f32 %v2744, %v2904
        %v2906 = vpop.f32.mrb[0].mxu0
        %2907 = vmatprep.mubr.bf16.mxu0 %v1693
        %2908 = vmatmul.mubr.bf16.gmra.mrb[0].mxu0 %v1692
        %v2909 = vpop.f32.mrb[0].mxu0
        %v2910 = vadd.f32 %v2749, %v2909
        %v2911 = vpop.f32.mrb[0].mxu0
        %v2912 = vpop.f32.mrb[0].mxu0
        %v2913 = vadd.f32 %v2752, %v2912
        %v2914 = vpop.f32.mrb[0].mxu0
        %2915 = vmatprep.mubr.bf16.mxu0 %v1702
        %2916 = vmatmul.mubr.bf16.gmra.mrb[0].mxu0 %v1701
        %v2917 = vpop.f32.mrb[0].mxu0
        %v2918 = vadd.f32 %v2757, %v2917
        %v2919 = vpop.f32.mrb[0].mxu0
        %v2920 = vpop.f32.mrb[0].mxu0
        %v2921 = vadd.f32 %v2760, %v2920
        %v2922 = vpop.f32.mrb[0].mxu0
        %2923 = vdwg.mxu0
        %2924 = vmatprep.subr.bf16.mxu0 0
        %2925 = vmatpush1.bf16.msra.mxu0 %v2200
        %2926 = vmatprep.subr.bf16.mxu0 0
        %2927 = vmatpush1.bf16.msra.mxu0 %v2201
        %2928 = vmatprep.subr.bf16.mxu0 0
        %2929 = vmatpush1.bf16.msra.mxu0 %v2202
        %2930 = vmatprep.subr.bf16.mxu0 0
        %2931 = vmatpush1.bf16.msra.mxu0 %v2203
        %2932 = vmatprep.subr.bf16.mxu0 0
        %2933 = vmatpush1.bf16.msra.mxu0 %v2204
        %2934 = vmatprep.subr.bf16.mxu0 0
        %2935 = vmatpush1.bf16.msra.mxu0 %v2205
        %2936 = vmatprep.subr.bf16.mxu0 0
        %2937 = vmatpush1.bf16.msra.mxu0 %v2206
        %2938 = vmatprep.subr.bf16.mxu0 0
        %2939 = vmatpush1.bf16.msra.mxu0 %v2207
        %2940 = vmatprep.subr.bf16.mxu0 0
        %2941 = vmatpush1.bf16.msra.mxu0 0
        %2942 = vmatprep.subr.bf16.mxu0 0
        %2943 = vmatpush1.bf16.msra.mxu0 0
        %2944 = vmatprep.subr.bf16.mxu0 0
        %2945 = vmatpush1.bf16.msra.mxu0 0
        %2946 = vmatprep.subr.bf16.mxu0 0
        %2947 = vmatpush1.bf16.msra.mxu0 0
        %2948 = vmatprep.subr.bf16.mxu0 0
        %2949 = vmatpush1.bf16.msra.mxu0 0
        %2950 = vmatprep.subr.bf16.mxu0 0
        %2951 = vmatpush1.bf16.msra.mxu0 0
        %2952 = vmatprep.subr.bf16.mxu0 0
        %2953 = vmatpush1.bf16.msra.mxu0 0
        %2954 = vmatprep.subr.bf16.mxu0 0
        %2955 = vmatpush1.bf16.msra.mxu0 0
        %2956 = vmatprep.mubr.bf16.mxu0 0
        %2957 = vmatmul.mubr.bf16.gmra.mrb[0].mxu0 %v1568
        %v2958 = vpop.f32.mrb[0].mxu0
        %v2959 = vadd.f32 %v2798, %v2958
        %v2960 = vpop.f32.mrb[0].mxu0
        %v2961 = vpop.f32.mrb[0].mxu0
        %v2962 = vadd.f32 %v2801, %v2961
        %v2963 = vpop.f32.mrb[0].mxu0
        %2964 = vmatprep.mubr.bf16.mxu0 0
        %2965 = vmatmul.mubr.bf16.gmra.mrb[0].mxu0 %v1577
        %v2966 = vpop.f32.mrb[0].mxu0
        %v2967 = vadd.f32 %v2806, %v2966
        %v2968 = vpop.f32.mrb[0].mxu0
        %v2969 = vpop.f32.mrb[0].mxu0
        %v2970 = vadd.f32 %v2809, %v2969
        %v2971 = vpop.f32.mrb[0].mxu0
        %2972 = vmatprep.mubr.bf16.mxu0 0
        %2973 = vmatmul.mubr.bf16.gmra.mrb[0].mxu0 %v1586
        %v2974 = vpop.f32.mrb[0].mxu0
        %v2975 = vadd.f32 %v2814, %v2974
        %v2976 = vpop.f32.mrb[0].mxu0
        %v2977 = vpop.f32.mrb[0].mxu0
        %v2978 = vadd.f32 %v2817, %v2977
        %v2979 = vpop.f32.mrb[0].mxu0
        %2980 = vmatprep.mubr.bf16.mxu0 0
        %2981 = vmatmul.mubr.bf16.gmra.mrb[0].mxu0 %v1595
        %v2982 = vpop.f32.mrb[0].mxu0
        %v2983 = vadd.f32 %v2822, %v2982
        %v2984 = vpop.f32.mrb[0].mxu0
        %v2985 = vpop.f32.mrb[0].mxu0
        %v2986 = vadd.f32 %v2825, %v2985
        %v2987 = vpop.f32.mrb[0].mxu0
        %2988 = vmatprep.mubr.bf16.mxu0 0
        %2989 = vmatmul.mubr.bf16.gmra.mrb[0].mxu0 %v1604
        %v2990 = vpop.f32.mrb[0].mxu0
        %v2991 = vadd.f32 %v2830, %v2990
        %v2992 = vpop.f32.mrb[0].mxu0
        %v2993 = vpop.f32.mrb[0].mxu0
        %v2994 = vadd.f32 %v2833, %v2993
        %v2995 = vpop.f32.mrb[0].mxu0
        %2996 = vmatprep.mubr.bf16.mxu0 0
        %2997 = vmatmul.mubr.bf16.gmra.mrb[0].mxu0 %v1613
        %v2998 = vpop.f32.mrb[0].mxu0
        %v2999 = vadd.f32 %v2838, %v2998
        %v3000 = vpop.f32.mrb[0].mxu0
        %v3001 = vpop.f32.mrb[0].mxu0
        %v3002 = vadd.f32 %v2841, %v3001
        %v3003 = vpop.f32.mrb[0].mxu0
        %3004 = vmatprep.mubr.bf16.mxu0 0
        %3005 = vmatmul.mubr.bf16.gmra.mrb[0].mxu0 %v1622
        %v3006 = vpop.f32.mrb[0].mxu0
        %v3007 = vadd.f32 %v2846, %v3006
        %v3008 = vpop.f32.mrb[0].mxu0
        %v3009 = vpop.f32.mrb[0].mxu0
        %v3010 = vadd.f32 %v2849, %v3009
        %v3011 = vpop.f32.mrb[0].mxu0
        %3012 = vmatprep.mubr.bf16.mxu0 0
        %3013 = vmatmul.mubr.bf16.gmra.mrb[0].mxu0 %v1631
        %v3014 = vpop.f32.mrb[0].mxu0
        %v3015 = vadd.f32 %v2854, %v3014
        %v3016 = vpop.f32.mrb[0].mxu0
        %v3017 = vpop.f32.mrb[0].mxu0
        %v3018 = vadd.f32 %v2857, %v3017
        %v3019 = vpop.f32.mrb[0].mxu0
        %3020 = vmatprep.mubr.bf16.mxu0 0
        %3021 = vmatmul.mubr.bf16.gmra.mrb[0].mxu0 %v1640
        %v3022 = vpop.f32.mrb[0].mxu0
        %v3023 = vadd.f32 %v2862, %v3022
        %v3024 = vpop.f32.mrb[0].mxu0
        %v3025 = vpop.f32.mrb[0].mxu0
        %v3026 = vadd.f32 %v2865, %v3025
        %v3027 = vpop.f32.mrb[0].mxu0
        %3028 = vmatprep.mubr.bf16.mxu0 0
        %3029 = vmatmul.mubr.bf16.gmra.mrb[0].mxu0 %v1649
        %v3030 = vpop.f32.mrb[0].mxu0
        %v3031 = vadd.f32 %v2870, %v3030
        %v3032 = vpop.f32.mrb[0].mxu0
        %v3033 = vpop.f32.mrb[0].mxu0
        %v3034 = vadd.f32 %v2873, %v3033
        %v3035 = vpop.f32.mrb[0].mxu0
        %3036 = vmatprep.mubr.bf16.mxu0 0
        %3037 = vmatmul.mubr.bf16.gmra.mrb[0].mxu0 %v1658
        %v3038 = vpop.f32.mrb[0].mxu0
        %v3039 = vadd.f32 %v2878, %v3038
        %v3040 = vpop.f32.mrb[0].mxu0
        %v3041 = vpop.f32.mrb[0].mxu0
        %v3042 = vadd.f32 %v2881, %v3041
        %v3043 = vpop.f32.mrb[0].mxu0
        %3044 = vmatprep.mubr.bf16.mxu0 0
        %3045 = vmatmul.mubr.bf16.gmra.mrb[0].mxu0 %v1667
        %v3046 = vpop.f32.mrb[0].mxu0
        %v3047 = vadd.f32 %v2886, %v3046
        %v3048 = vpop.f32.mrb[0].mxu0
        %v3049 = vpop.f32.mrb[0].mxu0
        %v3050 = vadd.f32 %v2889, %v3049
        %v3051 = vpop.f32.mrb[0].mxu0
        %3052 = vmatprep.mubr.bf16.mxu0 0
        %3053 = vmatmul.mubr.bf16.gmra.mrb[0].mxu0 %v1676
        %v3054 = vpop.f32.mrb[0].mxu0
        %v3055 = vadd.f32 %v2894, %v3054
        %v3056 = vpop.f32.mrb[0].mxu0
        %v3057 = vpop.f32.mrb[0].mxu0
        %v3058 = vadd.f32 %v2897, %v3057
        %v3059 = vpop.f32.mrb[0].mxu0
        %3060 = vmatprep.mubr.bf16.mxu0 0
        %3061 = vmatmul.mubr.bf16.gmra.mrb[0].mxu0 %v1685
        %v3062 = vpop.f32.mrb[0].mxu0
        %v3063 = vadd.f32 %v2902, %v3062
        %v3064 = vpop.f32.mrb[0].mxu0
        %v3065 = vpop.f32.mrb[0].mxu0
        %v3066 = vadd.f32 %v2905, %v3065
        %v3067 = vpop.f32.mrb[0].mxu0
        %3068 = vmatprep.mubr.bf16.mxu0 0
        %3069 = vmatmul.mubr.bf16.gmra.mrb[0].mxu0 %v1694
        %v3070 = vpop.f32.mrb[0].mxu0
        %v3071 = vadd.f32 %v2910, %v3070
        %v3072 = vpop.f32.mrb[0].mxu0
        %v3073 = vpop.f32.mrb[0].mxu0
        %v3074 = vadd.f32 %v2913, %v3073
        %v3075 = vpop.f32.mrb[0].mxu0
        %3076 = vmatprep.mubr.bf16.mxu0 0
        %3077 = vmatmul.mubr.bf16.gmra.mrb[0].mxu0 %v1703
        %v3078 = vpop.f32.mrb[0].mxu0
        %v3079 = vadd.f32 %v2918, %v3078
        %v3080 = vpop.f32.mrb[0].mxu0
        %v3081 = vpop.f32.mrb[0].mxu0
        %v3082 = vadd.f32 %v2921, %v3081
        %v3083 = vpop.f32.mrb[0].mxu0
        %3084 = vdwg.mxu0
        %v3085 = vld [vmem:[#allocation2] sm:$0xff]
        %v3086 = vld [vmem:[#allocation2 + $0x8] sm:$0xff]
        %v3087 = vld [vmem:[#allocation2 + $0x10] sm:$0xff]
        %v3088 = vld [vmem:[#allocation2 + $0x18] sm:$0xff]
        %v3089 = vld [vmem:[#allocation2 + $0x20] sm:$0xff]
        %v3090 = vld [vmem:[#allocation2 + $0x28] sm:$0xff]
        %v3091 = vld [vmem:[#allocation2 + $0x30] sm:$0xff]
        %v3092 = vld [vmem:[#allocation2 + $0x38] sm:$0xff]
        %v3093 = vld [vmem:[#allocation2 + $0x40] sm:$0xff]
        %v3094 = vld [vmem:[#allocation2 + $0x48] sm:$0xff]
        %v3095 = vld [vmem:[#allocation2 + $0x50] sm:$0xff]
        %v3096 = vld [vmem:[#allocation2 + $0x58] sm:$0xff]
        %v3097 = vld [vmem:[#allocation2 + $0x60] sm:$0xff]
        %v3098 = vld [vmem:[#allocation2 + $0x68] sm:$0xff]
        %v3099 = vld [vmem:[#allocation2 + $0x70] sm:$0xff]
        %v3100 = vld [vmem:[#allocation2 + $0x78] sm:$0xff]
        %v3101 = vpack.c.bf16 %v2962, %v2959
        %v3102 = vpack.c.bf16 %v2970, %v2967
        %v3103 = vpack.c.bf16 %v2978, %v2975
        %v3104 = vpack.c.bf16 %v2986, %v2983
        %v3105 = vpack.c.bf16 %v2994, %v2991
        %v3106 = vpack.c.bf16 %v3002, %v2999
        %v3107 = vpack.c.bf16 %v3010, %v3007
        %v3108 = vpack.c.bf16 %v3018, %v3015
        %v3109 = vpack.c.bf16 %v3026, %v3023
        %v3110 = vpack.c.bf16 %v3034, %v3031
        %v3111 = vpack.c.bf16 %v3042, %v3039
        %v3112 = vpack.c.bf16 %v3050, %v3047
        %v3113 = vpack.c.bf16 %v3058, %v3055
        %v3114 = vpack.c.bf16 %v3066, %v3063
        %v3115 = vpack.c.bf16 %v3074, %v3071
        %v3116 = vpack.c.bf16 %v3082, %v3079
        %v3117 = vadd.bf16 %v3085, %v3101
        %v3118 = vadd.bf16 %v3086, %v3102
        %v3119 = vadd.bf16 %v3087, %v3103
        %v3120 = vadd.bf16 %v3088, %v3104
        %v3121 = vadd.bf16 %v3089, %v3105
        %v3122 = vadd.bf16 %v3090, %v3106
        %v3123 = vadd.bf16 %v3091, %v3107
        %v3124 = vadd.bf16 %v3092, %v3108
        %v3125 = vadd.bf16 %v3093, %v3109
        %v3126 = vadd.bf16 %v3094, %v3110
        %v3127 = vadd.bf16 %v3095, %v3111
        %v3128 = vadd.bf16 %v3096, %v3112
        %v3129 = vadd.bf16 %v3097, %v3113
        %v3130 = vadd.bf16 %v3098, %v3114
        %v3131 = vadd.bf16 %v3099, %v3115
        %v3132 = vadd.bf16 %v3100, %v3116
        %3133 = vst [vmem:[#allocation2] sm:$0xff] %v3117
        %3134 = vst [vmem:[#allocation2 + $0x8] sm:$0xff] %v3118
        %3135 = vst [vmem:[#allocation2 + $0x10] sm:$0xff] %v3119
        %3136 = vst [vmem:[#allocation2 + $0x18] sm:$0xff] %v3120
        %3137 = vst [vmem:[#allocation2 + $0x20] sm:$0xff] %v3121
        %3138 = vst [vmem:[#allocation2 + $0x28] sm:$0xff] %v3122
        %3139 = vst [vmem:[#allocation2 + $0x30] sm:$0xff] %v3123
        %3140 = vst [vmem:[#allocation2 + $0x38] sm:$0xff] %v3124
        %3141 = vst [vmem:[#allocation2 + $0x40] sm:$0xff] %v3125
        %3142 = vst [vmem:[#allocation2 + $0x48] sm:$0xff] %v3126
        %3143 = vst [vmem:[#allocation2 + $0x50] sm:$0xff] %v3127
        %3144 = vst [vmem:[#allocation2 + $0x58] sm:$0xff] %v3128
        %3145 = vst [vmem:[#allocation2 + $0x60] sm:$0xff] %v3129
        %3146 = vst [vmem:[#allocation2 + $0x68] sm:$0xff] %v3130
        %3147 = vst [vmem:[#allocation2 + $0x70] sm:$0xff] %v3131
        %3148 = vst [vmem:[#allocation2 + $0x78] sm:$0xff] %v3132
        %v3149 = vld [vmem:[#allocation2] sm:$0xff]
        %v3150 = vld [vmem:[#allocation2 + $0x8] sm:$0xff]
        %v3151 = vld [vmem:[#allocation2 + $0x10] sm:$0xff]
        %v3152 = vld [vmem:[#allocation2 + $0x18] sm:$0xff]
        %v3153 = vld [vmem:[#allocation2 + $0x20] sm:$0xff]
        %v3154 = vld [vmem:[#allocation2 + $0x28] sm:$0xff]
        %v3155 = vld [vmem:[#allocation2 + $0x30] sm:$0xff]
        %v3156 = vld [vmem:[#allocation2 + $0x38] sm:$0xff]
        %v3157 = vld [vmem:[#allocation2 + $0x40] sm:$0xff]
        %v3158 = vld [vmem:[#allocation2 + $0x48] sm:$0xff]
        %v3159 = vld [vmem:[#allocation2 + $0x50] sm:$0xff]
        %v3160 = vld [vmem:[#allocation2 + $0x58] sm:$0xff]
        %v3161 = vld [vmem:[#allocation2 + $0x60] sm:$0xff]
        %v3162 = vld [vmem:[#allocation2 + $0x68] sm:$0xff]
        %v3163 = vld [vmem:[#allocation2 + $0x70] sm:$0xff]
        %v3164 = vld [vmem:[#allocation2 + $0x78] sm:$0xff]
        %v3165 = vunpack.c.l.bf16 %v3149
        %v3166 = vunpack.c.h.bf16 %v3149
        %v3167 = vunpack.c.l.bf16 %v3150
        %v3168 = vunpack.c.h.bf16 %v3150
        %v3169 = vunpack.c.l.bf16 %v3151
        %v3170 = vunpack.c.h.bf16 %v3151
        %v3171 = vunpack.c.l.bf16 %v3152
        %v3172 = vunpack.c.h.bf16 %v3152
        %v3173 = vunpack.c.l.bf16 %v3153
        %v3174 = vunpack.c.h.bf16 %v3153
        %v3175 = vunpack.c.l.bf16 %v3154
        %v3176 = vunpack.c.h.bf16 %v3154
        %v3177 = vunpack.c.l.bf16 %v3155
        %v3178 = vunpack.c.h.bf16 %v3155
        %v3179 = vunpack.c.l.bf16 %v3156
        %v3180 = vunpack.c.h.bf16 %v3156
        %v3181 = vunpack.c.l.bf16 %v3157
        %v3182 = vunpack.c.h.bf16 %v3157
        %v3183 = vunpack.c.l.bf16 %v3158
        %v3184 = vunpack.c.h.bf16 %v3158
        %v3185 = vunpack.c.l.bf16 %v3159
        %v3186 = vunpack.c.h.bf16 %v3159
        %v3187 = vunpack.c.l.bf16 %v3160
        %v3188 = vunpack.c.h.bf16 %v3160
        %v3189 = vunpack.c.l.bf16 %v3161
        %v3190 = vunpack.c.h.bf16 %v3161
        %v3191 = vunpack.c.l.bf16 %v3162
        %v3192 = vunpack.c.h.bf16 %v3162
        %v3193 = vunpack.c.l.bf16 %v3163
        %v3194 = vunpack.c.h.bf16 %v3163
        %v3195 = vunpack.c.l.bf16 %v3164
        %v3196 = vunpack.c.h.bf16 %v3164
        %v3197 = vld [vmem:[%s4 + $0x1] sm:$0x1]
        %v3198 = vlaneseq
        %v3199 = vshrl.u32 %v3198, 7
        %v3200 = vsub.s32 0, %v3199
        %v3201 = vrot.slane %v3197, %v3200
        %v3202 = vmul.f32 %v3165, %v3201
        %v3203 = vmul.f32 %v3166, %v3201
        %v3204 = vmul.f32 %v3167, %v3201
        %v3205 = vmul.f32 %v3168, %v3201
        %v3206 = vmul.f32 %v3169, %v3201
        %v3207 = vmul.f32 %v3170, %v3201
        %v3208 = vmul.f32 %v3171, %v3201
        %v3209 = vmul.f32 %v3172, %v3201
        %v3210 = vmul.f32 %v3173, %v3201
        %v3211 = vmul.f32 %v3174, %v3201
        %v3212 = vmul.f32 %v3175, %v3201
        %v3213 = vmul.f32 %v3176, %v3201
        %v3214 = vmul.f32 %v3177, %v3201
        %v3215 = vmul.f32 %v3178, %v3201
        %v3216 = vmul.f32 %v3179, %v3201
        %v3217 = vmul.f32 %v3180, %v3201
        %v3218 = vmul.f32 %v3181, %v3201
        %v3219 = vmul.f32 %v3182, %v3201
        %v3220 = vmul.f32 %v3183, %v3201
        %v3221 = vmul.f32 %v3184, %v3201
        %v3222 = vmul.f32 %v3185, %v3201
        %v3223 = vmul.f32 %v3186, %v3201
        %v3224 = vmul.f32 %v3187, %v3201
        %v3225 = vmul.f32 %v3188, %v3201
        %v3226 = vmul.f32 %v3189, %v3201
        %v3227 = vmul.f32 %v3190, %v3201
        %v3228 = vmul.f32 %v3191, %v3201
        %v3229 = vmul.f32 %v3192, %v3201
        %v3230 = vmul.f32 %v3193, %v3201
        %v3231 = vmul.f32 %v3194, %v3201
        %v3232 = vmul.f32 %v3195, %v3201
        %v3233 = vmul.f32 %v3196, %v3201
        %v3234 = vld [vmem:[%s5 + $0x1] sm:$0x1]
        %v3235 = vlaneseq
        %v3236 = vshrl.u32 %v3235, 7
        %v3237 = vsub.s32 0, %v3236
        %v3238 = vrot.slane %v3234, %v3237
        %v3239 = vadd.f32 %v3202, %v3238
        %v3240 = vadd.f32 %v3203, %v3238
        %v3241 = vadd.f32 %v3204, %v3238
        %v3242 = vadd.f32 %v3205, %v3238
        %v3243 = vadd.f32 %v3206, %v3238
        %v3244 = vadd.f32 %v3207, %v3238
        %v3245 = vadd.f32 %v3208, %v3238
        %v3246 = vadd.f32 %v3209, %v3238
        %v3247 = vadd.f32 %v3210, %v3238
        %v3248 = vadd.f32 %v3211, %v3238
        %v3249 = vadd.f32 %v3212, %v3238
        %v3250 = vadd.f32 %v3213, %v3238
        %v3251 = vadd.f32 %v3214, %v3238
        %v3252 = vadd.f32 %v3215, %v3238
        %v3253 = vadd.f32 %v3216, %v3238
        %v3254 = vadd.f32 %v3217, %v3238
        %v3255 = vadd.f32 %v3218, %v3238
        %v3256 = vadd.f32 %v3219, %v3238
        %v3257 = vadd.f32 %v3220, %v3238
        %v3258 = vadd.f32 %v3221, %v3238
        %v3259 = vadd.f32 %v3222, %v3238
        %v3260 = vadd.f32 %v3223, %v3238
        %v3261 = vadd.f32 %v3224, %v3238
        %v3262 = vadd.f32 %v3225, %v3238
        %v3263 = vadd.f32 %v3226, %v3238
        %v3264 = vadd.f32 %v3227, %v3238
        %v3265 = vadd.f32 %v3228, %v3238
        %v3266 = vadd.f32 %v3229, %v3238
        %v3267 = vadd.f32 %v3230, %v3238
        %v3268 = vadd.f32 %v3231, %v3238
        %v3269 = vadd.f32 %v3232, %v3238
        %v3270 = vadd.f32 %v3233, %v3238
        %v3271 = vmax.f32 %v3239, 0.0
        %v3272 = vmax.f32 %v3240, 0.0
        %v3273 = vmax.f32 %v3241, 0.0
        %v3274 = vmax.f32 %v3242, 0.0
        %v3275 = vmax.f32 %v3243, 0.0
        %v3276 = vmax.f32 %v3244, 0.0
        %v3277 = vmax.f32 %v3245, 0.0
        %v3278 = vmax.f32 %v3246, 0.0
        %v3279 = vmax.f32 %v3247, 0.0
        %v3280 = vmax.f32 %v3248, 0.0
        %v3281 = vmax.f32 %v3249, 0.0
        %v3282 = vmax.f32 %v3250, 0.0
        %v3283 = vmax.f32 %v3251, 0.0
        %v3284 = vmax.f32 %v3252, 0.0
        %v3285 = vmax.f32 %v3253, 0.0
        %v3286 = vmax.f32 %v3254, 0.0
        %v3287 = vmax.f32 %v3255, 0.0
        %v3288 = vmax.f32 %v3256, 0.0
        %v3289 = vmax.f32 %v3257, 0.0
        %v3290 = vmax.f32 %v3258, 0.0
        %v3291 = vmax.f32 %v3259, 0.0
        %v3292 = vmax.f32 %v3260, 0.0
        %v3293 = vmax.f32 %v3261, 0.0
        %v3294 = vmax.f32 %v3262, 0.0
        %v3295 = vmax.f32 %v3263, 0.0
        %v3296 = vmax.f32 %v3264, 0.0
        %v3297 = vmax.f32 %v3265, 0.0
        %v3298 = vmax.f32 %v3266, 0.0
        %v3299 = vmax.f32 %v3267, 0.0
        %v3300 = vmax.f32 %v3268, 0.0
        %v3301 = vmax.f32 %v3269, 0.0
        %v3302 = vmax.f32 %v3270, 0.0
        %3303 = vst [vmem:[%s967 + $0x1] sm:$0xff] %v3271
        %3304 = vst [vmem:[%s967 + $0x9] sm:$0xff] %v3272
        %3305 = vst [vmem:[%s967 + $0x19] sm:$0xff] %v3273
        %3306 = vst [vmem:[%s967 + $0x21] sm:$0xff] %v3274
        %3307 = vst [vmem:[%s967 + $0x31] sm:$0xff] %v3275
        %3308 = vst [vmem:[%s967 + $0x39] sm:$0xff] %v3276
        %3309 = vst [vmem:[%s967 + $0x49] sm:$0xff] %v3277
        %3310 = vst [vmem:[%s967 + $0x51] sm:$0xff] %v3278
        %3311 = vst [vmem:[%s967 + $0x61] sm:$0xff] %v3279
        %3312 = vst [vmem:[%s967 + $0x69] sm:$0xff] %v3280
        %3313 = vst [vmem:[%s967 + $0x79] sm:$0xff] %v3281
        %3314 = vst [vmem:[%s967 + $0x81] sm:$0xff] %v3282
        %3315 = vst [vmem:[%s967 + $0x91] sm:$0xff] %v3283
        %3316 = vst [vmem:[%s967 + $0x99] sm:$0xff] %v3284
        %3317 = vst [vmem:[%s967 + $0xa9] sm:$0xff] %v3285
        %3318 = vst [vmem:[%s967 + $0xb1] sm:$0xff] %v3286
        %3319 = vst [vmem:[%s967 + $0xc1] sm:$0xff] %v3287
        %3320 = vst [vmem:[%s967 + $0xc9] sm:$0xff] %v3288
        %3321 = vst [vmem:[%s967 + $0xd9] sm:$0xff] %v3289
        %3322 = vst [vmem:[%s967 + $0xe1] sm:$0xff] %v3290
        %3323 = vst [vmem:[%s967 + $0xf1] sm:$0xff] %v3291
        %3324 = vst [vmem:[%s967 + $0xf9] sm:$0xff] %v3292
        %3325 = vst [vmem:[%s967 + $0x109] sm:$0xff] %v3293
        %3326 = vst [vmem:[%s967 + $0x111] sm:$0xff] %v3294
        %3327 = vst [vmem:[%s967 + $0x121] sm:$0xff] %v3295
        %3328 = vst [vmem:[%s967 + $0x129] sm:$0xff] %v3296
        %3329 = vst [vmem:[%s967 + $0x139] sm:$0xff] %v3297
        %3330 = vst [vmem:[%s967 + $0x141] sm:$0xff] %v3298
        %3331 = vst [vmem:[%s967 + $0x151] sm:$0xff] %v3299
        %3332 = vst [vmem:[%s967 + $0x159] sm:$0xff] %v3300
        %3333 = vst [vmem:[%s967 + $0x169] sm:$0xff] %v3301
        %3334 = vst [vmem:[%s967 + $0x171] sm:$0xff] %v3302
        %v3335 = vld [vmem:[#allocation3] sm:$0xff]
        %v3336 = vld [vmem:[#allocation3 + $0x8] sm:$0xff]
        %v3337 = vld [vmem:[#allocation3 + $0x10] sm:$0x3]
        %v3338 = vld [vmem:[#allocation3 + $0x18] sm:$0xff]
        %v3339 = vld [vmem:[#allocation3 + $0x20] sm:$0xff]
        %v3340 = vld [vmem:[#allocation3 + $0x28] sm:$0x3]
        %v3341 = vld [vmem:[#allocation3 + $0x30] sm:$0xff]
        %v3342 = vld [vmem:[#allocation3 + $0x38] sm:$0xff]
        %v3343 = vld [vmem:[#allocation3 + $0x40] sm:$0x3]
        %v3344 = vld [vmem:[#allocation3 + $0x48] sm:$0xff]
        %v3345 = vld [vmem:[#allocation3 + $0x50] sm:$0xff]
        %v3346 = vld [vmem:[#allocation3 + $0x58] sm:$0x3]
        %v3347 = vld [vmem:[#allocation3 + $0x60] sm:$0xff]
        %v3348 = vld [vmem:[#allocation3 + $0x68] sm:$0xff]
        %v3349 = vld [vmem:[#allocation3 + $0x70] sm:$0x3]
        %v3350 = vld [vmem:[#allocation3 + $0x78] sm:$0xff]
        %v3351 = vld [vmem:[#allocation3 + $0x80] sm:$0xff]
        %v3352 = vld [vmem:[#allocation3 + $0x88] sm:$0x3]
        %v3353 = vld [vmem:[#allocation3 + $0x90] sm:$0xff]
        %v3354 = vld [vmem:[#allocation3 + $0x98] sm:$0xff]
        %v3355 = vld [vmem:[#allocation3 + $0xa0] sm:$0x3]
        %v3356 = vld [vmem:[#allocation3 + $0xa8] sm:$0xff]
        %v3357 = vld [vmem:[#allocation3 + $0xb0] sm:$0xff]
        %v3358 = vld [vmem:[#allocation3 + $0xb8] sm:$0x3]
        %v3359 = vld [vmem:[#allocation3 + $0xc0] sm:$0xff]
        %v3360 = vld [vmem:[#allocation3 + $0xc8] sm:$0xff]
        %v3361 = vld [vmem:[#allocation3 + $0xd0] sm:$0x3]
        %v3362 = vld [vmem:[#allocation3 + $0xd8] sm:$0xff]
        %v3363 = vld [vmem:[#allocation3 + $0xe0] sm:$0xff]
        %v3364 = vld [vmem:[#allocation3 + $0xe8] sm:$0x3]
        %v3365 = vld [vmem:[#allocation3 + $0xf0] sm:$0xff]
        %v3366 = vld [vmem:[#allocation3 + $0xf8] sm:$0xff]
        %v3367 = vld [vmem:[#allocation3 + $0x100] sm:$0x3]
        %v3368 = vld [vmem:[#allocation3 + $0x108] sm:$0xff]
        %v3369 = vld [vmem:[#allocation3 + $0x110] sm:$0xff]
        %v3370 = vld [vmem:[#allocation3 + $0x118] sm:$0x3]
        %v3371 = vld [vmem:[#allocation3 + $0x120] sm:$0xff]
        %v3372 = vld [vmem:[#allocation3 + $0x128] sm:$0xff]
        %v3373 = vld [vmem:[#allocation3 + $0x130] sm:$0x3]
        %v3374 = vld [vmem:[#allocation3 + $0x138] sm:$0xff]
        %v3375 = vld [vmem:[#allocation3 + $0x140] sm:$0xff]
        %v3376 = vld [vmem:[#allocation3 + $0x148] sm:$0x3]
        %v3377 = vld [vmem:[#allocation3 + $0x150] sm:$0xff]
        %v3378 = vld [vmem:[#allocation3 + $0x158] sm:$0xff]
        %v3379 = vld [vmem:[#allocation3 + $0x160] sm:$0x3]
        %v3380 = vld [vmem:[#allocation3 + $0x168] sm:$0xff]
        %v3381 = vld [vmem:[#allocation3 + $0x170] sm:$0xff]
        %v3382 = vld [vmem:[#allocation3 + $0x178] sm:$0x3]
        %v3383 = vld [vmem:[#allocation3 + $0x180] sm:$0xff]
        %v3384 = vld [vmem:[#allocation3 + $0x188] sm:$0xff]
        %v3385 = vld [vmem:[#allocation3 + $0x190] sm:$0x3]
        %v3386 = vld [vmem:[#allocation3 + $0x198] sm:$0xff]
        %v3387 = vld [vmem:[#allocation3 + $0x1a0] sm:$0xff]
        %v3388 = vld [vmem:[#allocation3 + $0x1a8] sm:$0x3]
        %v3389 = vpack.c.bf16 %v3336, %v3335
        %v3390 = vpack.c.bf16 %v3339, %v3338
        %v3391 = vpack.c.bf16 %v3342, %v3341
        %v3392 = vpack.c.bf16 %v3345, %v3344
        %v3393 = vpack.c.bf16 %v3348, %v3347
        %v3394 = vpack.c.bf16 %v3351, %v3350
        %v3395 = vpack.c.bf16 %v3354, %v3353
        %v3396 = vpack.c.bf16 %v3357, %v3356
        %v3397 = vpack.c.bf16 %v3360, %v3359
        %v3398 = vpack.c.bf16 %v3363, %v3362
        %v3399 = vpack.c.bf16 %v3366, %v3365
        %v3400 = vpack.c.bf16 %v3369, %v3368
        %v3401 = vpack.c.bf16 %v3372, %v3371
        %v3402 = vpack.c.bf16 %v3375, %v3374
        %v3403 = vpack.c.bf16 %v3378, %v3377
        %v3404 = vpack.c.bf16 %v3381, %v3380
        %3405 = vst [vmem:[#allocation4] sm:$0xff] %v3389
        %3406 = vst [vmem:[#allocation4 + $0x48] sm:$0xff] %v3390
        %3407 = vst [vmem:[#allocation4 + $0x90] sm:$0xff] %v3391
        %3408 = vst [vmem:[#allocation4 + $0xd8] sm:$0xff] %v3392
        %3409 = vst [vmem:[#allocation4 + $0x120] sm:$0xff] %v3393
        %3410 = vst [vmem:[#allocation4 + $0x168] sm:$0xff] %v3394
        %3411 = vst [vmem:[#allocation4 + $0x1b0] sm:$0xff] %v3395
        %3412 = vst [vmem:[#allocation4 + $0x1f8] sm:$0xff] %v3396
        %3413 = vst [vmem:[#allocation4 + $0x240] sm:$0xff] %v3397
        %3414 = vst [vmem:[#allocation4 + $0x288] sm:$0xff] %v3398
        %3415 = vst [vmem:[#allocation4 + $0x2d0] sm:$0xff] %v3399
        %3416 = vst [vmem:[#allocation4 + $0x318] sm:$0xff] %v3400
        %3417 = vst [vmem:[#allocation4 + $0x360] sm:$0xff] %v3401
        %3418 = vst [vmem:[#allocation4 + $0x3a8] sm:$0xff] %v3402
        %3419 = vst [vmem:[#allocation4 + $0x3f0] sm:$0xff] %v3403
        %3420 = vst [vmem:[#allocation4 + $0x438] sm:$0xff] %v3404
        %v3469 = vrot.slane %v3335, 1
        %v3470 = vrot.slane %v3336, 1
        %v3471 = vsel %vm1134, %v3469, %v3470
        %v3472 = vrot.slane %v3337, 1
        %v3473 = vsel %vm1134, %v3470, %v3472
        %v3474 = vrot.slane %v3338, 1
        %v3475 = vrot.slane %v3339, 1
        %v3476 = vsel %vm1134, %v3474, %v3475
        %v3477 = vrot.slane %v3340, 1
        %v3478 = vsel %vm1134, %v3475, %v3477
        %v3479 = vrot.slane %v3341, 1
        %v3480 = vrot.slane %v3342, 1
        %v3481 = vsel %vm1134, %v3479, %v3480
        %v3482 = vrot.slane %v3343, 1
        %v3483 = vsel %vm1134, %v3480, %v3482
        %v3484 = vrot.slane %v3344, 1
        %v3485 = vrot.slane %v3345, 1
        %v3486 = vsel %vm1134, %v3484, %v3485
        %v3487 = vrot.slane %v3346, 1
        %v3488 = vsel %vm1134, %v3485, %v3487
        %v3489 = vrot.slane %v3347, 1
        %v3490 = vrot.slane %v3348, 1
        %v3491 = vsel %vm1134, %v3489, %v3490
        %v3492 = vrot.slane %v3349, 1
        %v3493 = vsel %vm1134, %v3490, %v3492
        %v3494 = vrot.slane %v3350, 1
        %v3495 = vrot.slane %v3351, 1
        %v3496 = vsel %vm1134, %v3494, %v3495
        %v3497 = vrot.slane %v3352, 1
        %v3498 = vsel %vm1134, %v3495, %v3497
        %v3499 = vrot.slane %v3353, 1
        %v3500 = vrot.slane %v3354, 1
        %v3501 = vsel %vm1134, %v3499, %v3500
        %v3502 = vrot.slane %v3355, 1
        %v3503 = vsel %vm1134, %v3500, %v3502
        %v3504 = vrot.slane %v3356, 1
        %v3505 = vrot.slane %v3357, 1
        %v3506 = vsel %vm1134, %v3504, %v3505
        %v3507 = vrot.slane %v3358, 1
        %v3508 = vsel %vm1134, %v3505, %v3507
        %v3509 = vrot.slane %v3359, 1
        %v3510 = vrot.slane %v3360, 1
        %v3511 = vsel %vm1134, %v3509, %v3510
        %v3512 = vrot.slane %v3361, 1
        %v3513 = vsel %vm1134, %v3510, %v3512
        %v3514 = vrot.slane %v3362, 1
        %v3515 = vrot.slane %v3363, 1
        %v3516 = vsel %vm1134, %v3514, %v3515
        %v3517 = vrot.slane %v3364, 1
        %v3518 = vsel %vm1134, %v3515, %v3517
        %v3519 = vrot.slane %v3365, 1
        %v3520 = vrot.slane %v3366, 1
        %v3521 = vsel %vm1134, %v3519, %v3520
        %v3522 = vrot.slane %v3367, 1
        %v3523 = vsel %vm1134, %v3520, %v3522
        %v3524 = vrot.slane %v3368, 1
        %v3525 = vrot.slane %v3369, 1
        %v3526 = vsel %vm1134, %v3524, %v3525
        %v3527 = vrot.slane %v3370, 1
        %v3528 = vsel %vm1134, %v3525, %v3527
        %v3529 = vrot.slane %v3371, 1
        %v3530 = vrot.slane %v3372, 1
        %v3531 = vsel %vm1134, %v3529, %v3530
        %v3532 = vrot.slane %v3373, 1
        %v3533 = vsel %vm1134, %v3530, %v3532
        %v3534 = vrot.slane %v3374, 1
        %v3535 = vrot.slane %v3375, 1
        %v3536 = vsel %vm1134, %v3534, %v3535
        %v3537 = vrot.slane %v3376, 1
        %v3538 = vsel %vm1134, %v3535, %v3537
        %v3539 = vrot.slane %v3377, 1
        %v3540 = vrot.slane %v3378, 1
        %v3541 = vsel %vm1134, %v3539, %v3540
        %v3542 = vrot.slane %v3379, 1
        %v3543 = vsel %vm1134, %v3540, %v3542
        %v3544 = vrot.slane %v3380, 1
        %v3545 = vrot.slane %v3381, 1
        %v3546 = vsel %vm1134, %v3544, %v3545
        %v3547 = vrot.slane %v3382, 1
        %v3548 = vsel %vm1134, %v3545, %v3547
        %v3581 = vpack.c.bf16 %v3473, %v3471
        %v3582 = vpack.c.bf16 %v3478, %v3476
        %v3583 = vpack.c.bf16 %v3483, %v3481
        %v3584 = vpack.c.bf16 %v3488, %v3486
        %v3585 = vpack.c.bf16 %v3493, %v3491
        %v3586 = vpack.c.bf16 %v3498, %v3496
        %v3587 = vpack.c.bf16 %v3503, %v3501
        %v3588 = vpack.c.bf16 %v3508, %v3506
        %v3589 = vpack.c.bf16 %v3513, %v3511
        %v3590 = vpack.c.bf16 %v3518, %v3516
        %v3591 = vpack.c.bf16 %v3523, %v3521
        %v3592 = vpack.c.bf16 %v3528, %v3526
        %v3593 = vpack.c.bf16 %v3533, %v3531
        %v3594 = vpack.c.bf16 %v3538, %v3536
        %v3595 = vpack.c.bf16 %v3543, %v3541
        %v3596 = vpack.c.bf16 %v3548, %v3546
        %3597 = vst [vmem:[#allocation4 + $0x8] sm:$0xff] %v3581
        %3598 = vst [vmem:[#allocation4 + $0x50] sm:$0xff] %v3582
        %3599 = vst [vmem:[#allocation4 + $0x98] sm:$0xff] %v3583
        %3600 = vst [vmem:[#allocation4 + $0xe0] sm:$0xff] %v3584
        %3601 = vst [vmem:[#allocation4 + $0x128] sm:$0xff] %v3585
        %3602 = vst [vmem:[#allocation4 + $0x170] sm:$0xff] %v3586
        %3603 = vst [vmem:[#allocation4 + $0x1b8] sm:$0xff] %v3587
        %3604 = vst [vmem:[#allocation4 + $0x200] sm:$0xff] %v3588
        %3605 = vst [vmem:[#allocation4 + $0x248] sm:$0xff] %v3589
        %3606 = vst [vmem:[#allocation4 + $0x290] sm:$0xff] %v3590
        %3607 = vst [vmem:[#allocation4 + $0x2d8] sm:$0xff] %v3591
        %3608 = vst [vmem:[#allocation4 + $0x320] sm:$0xff] %v3592
        %3609 = vst [vmem:[#allocation4 + $0x368] sm:$0xff] %v3593
        %3610 = vst [vmem:[#allocation4 + $0x3b0] sm:$0xff] %v3594
        %3611 = vst [vmem:[#allocation4 + $0x3f8] sm:$0xff] %v3595
        %3612 = vst [vmem:[#allocation4 + $0x440] sm:$0xff] %v3596
        %v3613 = vrot.slane %v3335, 2
        %v3614 = vrot.slane %v3336, 2
        %v3615 = vsel %vm1279, %v3613, %v3614
        %v3616 = vrot.slane %v3337, 2
        %v3617 = vsel %vm1279, %v3614, %v3616
        %v3618 = vrot.slane %v3338, 2
        %v3619 = vrot.slane %v3339, 2
        %v3620 = vsel %vm1279, %v3618, %v3619
        %v3621 = vrot.slane %v3340, 2
        %v3622 = vsel %vm1279, %v3619, %v3621
        %v3623 = vrot.slane %v3341, 2
        %v3624 = vrot.slane %v3342, 2
        %v3625 = vsel %vm1279, %v3623, %v3624
        %v3626 = vrot.slane %v3343, 2
        %v3627 = vsel %vm1279, %v3624, %v3626
        %v3628 = vrot.slane %v3344, 2
        %v3629 = vrot.slane %v3345, 2
        %v3630 = vsel %vm1279, %v3628, %v3629
        %v3631 = vrot.slane %v3346, 2
        %v3632 = vsel %vm1279, %v3629, %v3631
        %v3633 = vrot.slane %v3347, 2
        %v3634 = vrot.slane %v3348, 2
        %v3635 = vsel %vm1279, %v3633, %v3634
        %v3636 = vrot.slane %v3349, 2
        %v3637 = vsel %vm1279, %v3634, %v3636
        %v3638 = vrot.slane %v3350, 2
        %v3639 = vrot.slane %v3351, 2
        %v3640 = vsel %vm1279, %v3638, %v3639
        %v3641 = vrot.slane %v3352, 2
        %v3642 = vsel %vm1279, %v3639, %v3641
        %v3643 = vrot.slane %v3353, 2
        %v3644 = vrot.slane %v3354, 2
        %v3645 = vsel %vm1279, %v3643, %v3644
        %v3646 = vrot.slane %v3355, 2
        %v3647 = vsel %vm1279, %v3644, %v3646
        %v3648 = vrot.slane %v3356, 2
        %v3649 = vrot.slane %v3357, 2
        %v3650 = vsel %vm1279, %v3648, %v3649
        %v3651 = vrot.slane %v3358, 2
        %v3652 = vsel %vm1279, %v3649, %v3651
        %v3653 = vrot.slane %v3359, 2
        %v3654 = vrot.slane %v3360, 2
        %v3655 = vsel %vm1279, %v3653, %v3654
        %v3656 = vrot.slane %v3361, 2
        %v3657 = vsel %vm1279, %v3654, %v3656
        %v3658 = vrot.slane %v3362, 2
        %v3659 = vrot.slane %v3363, 2
        %v3660 = vsel %vm1279, %v3658, %v3659
        %v3661 = vrot.slane %v3364, 2
        %v3662 = vsel %vm1279, %v3659, %v3661
        %v3663 = vrot.slane %v3365, 2
        %v3664 = vrot.slane %v3366, 2
        %v3665 = vsel %vm1279, %v3663, %v3664
        %v3666 = vrot.slane %v3367, 2
        %v3667 = vsel %vm1279, %v3664, %v3666
        %v3668 = vrot.slane %v3368, 2
        %v3669 = vrot.slane %v3369, 2
        %v3670 = vsel %vm1279, %v3668, %v3669
        %v3671 = vrot.slane %v3370, 2
        %v3672 = vsel %vm1279, %v3669, %v3671
        %v3673 = vrot.slane %v3371, 2
        %v3674 = vrot.slane %v3372, 2
        %v3675 = vsel %vm1279, %v3673, %v3674
        %v3676 = vrot.slane %v3373, 2
        %v3677 = vsel %vm1279, %v3674, %v3676
        %v3678 = vrot.slane %v3374, 2
        %v3679 = vrot.slane %v3375, 2
        %v3680 = vsel %vm1279, %v3678, %v3679
        %v3681 = vrot.slane %v3376, 2
        %v3682 = vsel %vm1279, %v3679, %v3681
        %v3683 = vrot.slane %v3377, 2
        %v3684 = vrot.slane %v3378, 2
        %v3685 = vsel %vm1279, %v3683, %v3684
        %v3686 = vrot.slane %v3379, 2
        %v3687 = vsel %vm1279, %v3684, %v3686
        %v3688 = vrot.slane %v3380, 2
        %v3689 = vrot.slane %v3381, 2
        %v3690 = vsel %vm1279, %v3688, %v3689
        %v3691 = vrot.slane %v3382, 2
        %v3692 = vsel %vm1279, %v3689, %v3691
        %v3725 = vpack.c.bf16 %v3617, %v3615
        %v3726 = vpack.c.bf16 %v3622, %v3620
        %v3727 = vpack.c.bf16 %v3627, %v3625
        %v3728 = vpack.c.bf16 %v3632, %v3630
        %v3729 = vpack.c.bf16 %v3637, %v3635
        %v3730 = vpack.c.bf16 %v3642, %v3640
        %v3731 = vpack.c.bf16 %v3647, %v3645
        %v3732 = vpack.c.bf16 %v3652, %v3650
        %v3733 = vpack.c.bf16 %v3657, %v3655
        %v3734 = vpack.c.bf16 %v3662, %v3660
        %v3735 = vpack.c.bf16 %v3667, %v3665
        %v3736 = vpack.c.bf16 %v3672, %v3670
        %v3737 = vpack.c.bf16 %v3677, %v3675
        %v3738 = vpack.c.bf16 %v3682, %v3680
        %v3739 = vpack.c.bf16 %v3687, %v3685
        %v3740 = vpack.c.bf16 %v3692, %v3690
        %3741 = vst [vmem:[#allocation4 + $0x10] sm:$0xff] %v3725
        %3742 = vst [vmem:[#allocation4 + $0x58] sm:$0xff] %v3726
        %3743 = vst [vmem:[#allocation4 + $0xa0] sm:$0xff] %v3727
        %3744 = vst [vmem:[#allocation4 + $0xe8] sm:$0xff] %v3728
        %3745 = vst [vmem:[#allocation4 + $0x130] sm:$0xff] %v3729
        %3746 = vst [vmem:[#allocation4 + $0x178] sm:$0xff] %v3730
        %3747 = vst [vmem:[#allocation4 + $0x1c0] sm:$0xff] %v3731
        %3748 = vst [vmem:[#allocation4 + $0x208] sm:$0xff] %v3732
        %3749 = vst [vmem:[#allocation4 + $0x250] sm:$0xff] %v3733
        %3750 = vst [vmem:[#allocation4 + $0x298] sm:$0xff] %v3734
        %3751 = vst [vmem:[#allocation4 + $0x2e0] sm:$0xff] %v3735
        %3752 = vst [vmem:[#allocation4 + $0x328] sm:$0xff] %v3736
        %3753 = vst [vmem:[#allocation4 + $0x370] sm:$0xff] %v3737
        %3754 = vst [vmem:[#allocation4 + $0x3b8] sm:$0xff] %v3738
        %3755 = vst [vmem:[#allocation4 + $0x400] sm:$0xff] %v3739
        %3756 = vst [vmem:[#allocation4 + $0x448] sm:$0xff] %v3740
        %v3757 = vpack.c.bf16 %v3384, %v3383
        %3758 = vst [vmem:[#allocation4 + $0x18] sm:$0xff] %v3390
        %3759 = vst [vmem:[#allocation4 + $0x60] sm:$0xff] %v3391
        %3760 = vst [vmem:[#allocation4 + $0xa8] sm:$0xff] %v3392
        %3761 = vst [vmem:[#allocation4 + $0xf0] sm:$0xff] %v3393
        %3762 = vst [vmem:[#allocation4 + $0x138] sm:$0xff] %v3394
        %3763 = vst [vmem:[#allocation4 + $0x180] sm:$0xff] %v3395
        %3764 = vst [vmem:[#allocation4 + $0x1c8] sm:$0xff] %v3396
        %3765 = vst [vmem:[#allocation4 + $0x210] sm:$0xff] %v3397
        %3766 = vst [vmem:[#allocation4 + $0x258] sm:$0xff] %v3398
        %3767 = vst [vmem:[#allocation4 + $0x2a0] sm:$0xff] %v3399
        %3768 = vst [vmem:[#allocation4 + $0x2e8] sm:$0xff] %v3400
        %3769 = vst [vmem:[#allocation4 + $0x330] sm:$0xff] %v3401
        %3770 = vst [vmem:[#allocation4 + $0x378] sm:$0xff] %v3402
        %3771 = vst [vmem:[#allocation4 + $0x3c0] sm:$0xff] %v3403
        %3772 = vst [vmem:[#allocation4 + $0x408] sm:$0xff] %v3404
        %3773 = vst [vmem:[#allocation4 + $0x450] sm:$0xff] %v3757
        %v3777 = vrot.slane %v3383, 1
        %v3778 = vrot.slane %v3384, 1
        %v3779 = vsel %vm1134, %v3777, %v3778
        %v3780 = vrot.slane %v3385, 1
        %v3781 = vsel %vm1134, %v3778, %v3780
        %v3784 = vpack.c.bf16 %v3781, %v3779
        %3785 = vst [vmem:[#allocation4 + $0x20] sm:$0xff] %v3582
        %3786 = vst [vmem:[#allocation4 + $0x68] sm:$0xff] %v3583
        %3787 = vst [vmem:[#allocation4 + $0xb0] sm:$0xff] %v3584
        %3788 = vst [vmem:[#allocation4 + $0xf8] sm:$0xff] %v3585
        %3789 = vst [vmem:[#allocation4 + $0x140] sm:$0xff] %v3586
        %3790 = vst [vmem:[#allocation4 + $0x188] sm:$0xff] %v3587
        %3791 = vst [vmem:[#allocation4 + $0x1d0] sm:$0xff] %v3588
        %3792 = vst [vmem:[#allocation4 + $0x218] sm:$0xff] %v3589
        %3793 = vst [vmem:[#allocation4 + $0x260] sm:$0xff] %v3590
        %3794 = vst [vmem:[#allocation4 + $0x2a8] sm:$0xff] %v3591
        %3795 = vst [vmem:[#allocation4 + $0x2f0] sm:$0xff] %v3592
        %3796 = vst [vmem:[#allocation4 + $0x338] sm:$0xff] %v3593
        %3797 = vst [vmem:[#allocation4 + $0x380] sm:$0xff] %v3594
        %3798 = vst [vmem:[#allocation4 + $0x3c8] sm:$0xff] %v3595
        %3799 = vst [vmem:[#allocation4 + $0x410] sm:$0xff] %v3596
        %3800 = vst [vmem:[#allocation4 + $0x458] sm:$0xff] %v3784
        %v3801 = vrot.slane %v3383, 2
        %v3802 = vrot.slane %v3384, 2
        %v3803 = vsel %vm1279, %v3801, %v3802
        %v3804 = vrot.slane %v3385, 2
        %v3805 = vsel %vm1279, %v3802, %v3804
        %v3808 = vpack.c.bf16 %v3805, %v3803
        %3809 = vst [vmem:[#allocation4 + $0x28] sm:$0xff] %v3726
        %3810 = vst [vmem:[#allocation4 + $0x70] sm:$0xff] %v3727
        %3811 = vst [vmem:[#allocation4 + $0xb8] sm:$0xff] %v3728
        %3812 = vst [vmem:[#allocation4 + $0x100] sm:$0xff] %v3729
        %3813 = vst [vmem:[#allocation4 + $0x148] sm:$0xff] %v3730
        %3814 = vst [vmem:[#allocation4 + $0x190] sm:$0xff] %v3731
        %3815 = vst [vmem:[#allocation4 + $0x1d8] sm:$0xff] %v3732
        %3816 = vst [vmem:[#allocation4 + $0x220] sm:$0xff] %v3733
        %3817 = vst [vmem:[#allocation4 + $0x268] sm:$0xff] %v3734
        %3818 = vst [vmem:[#allocation4 + $0x2b0] sm:$0xff] %v3735
        %3819 = vst [vmem:[#allocation4 + $0x2f8] sm:$0xff] %v3736
        %3820 = vst [vmem:[#allocation4 + $0x340] sm:$0xff] %v3737
        %3821 = vst [vmem:[#allocation4 + $0x388] sm:$0xff] %v3738
        %3822 = vst [vmem:[#allocation4 + $0x3d0] sm:$0xff] %v3739
        %3823 = vst [vmem:[#allocation4 + $0x418] sm:$0xff] %v3740
        %3824 = vst [vmem:[#allocation4 + $0x460] sm:$0xff] %v3808
        %v3825 = vpack.c.bf16 %v3387, %v3386
        %3826 = vst [vmem:[#allocation4 + $0x30] sm:$0xff] %v3391
        %3827 = vst [vmem:[#allocation4 + $0x78] sm:$0xff] %v3392
        %3828 = vst [vmem:[#allocation4 + $0xc0] sm:$0xff] %v3393
        %3829 = vst [vmem:[#allocation4 + $0x108] sm:$0xff] %v3394
        %3830 = vst [vmem:[#allocation4 + $0x150] sm:$0xff] %v3395
        %3831 = vst [vmem:[#allocation4 + $0x198] sm:$0xff] %v3396
        %3832 = vst [vmem:[#allocation4 + $0x1e0] sm:$0xff] %v3397
        %3833 = vst [vmem:[#allocation4 + $0x228] sm:$0xff] %v3398
        %3834 = vst [vmem:[#allocation4 + $0x270] sm:$0xff] %v3399
        %3835 = vst [vmem:[#allocation4 + $0x2b8] sm:$0xff] %v3400
        %3836 = vst [vmem:[#allocation4 + $0x300] sm:$0xff] %v3401
        %3837 = vst [vmem:[#allocation4 + $0x348] sm:$0xff] %v3402
        %3838 = vst [vmem:[#allocation4 + $0x390] sm:$0xff] %v3403
        %3839 = vst [vmem:[#allocation4 + $0x3d8] sm:$0xff] %v3404
        %3840 = vst [vmem:[#allocation4 + $0x420] sm:$0xff] %v3757
        %3841 = vst [vmem:[#allocation4 + $0x468] sm:$0xff] %v3825
        %v3845 = vrot.slane %v3386, 1
        %v3846 = vrot.slane %v3387, 1
        %v3847 = vsel %vm1134, %v3845, %v3846
        %v3848 = vrot.slane %v3388, 1
        %v3849 = vsel %vm1134, %v3846, %v3848
        %v3852 = vpack.c.bf16 %v3849, %v3847
        %3853 = vst [vmem:[#allocation4 + $0x38] sm:$0xff] %v3583
        %3854 = vst [vmem:[#allocation4 + $0x80] sm:$0xff] %v3584
        %3855 = vst [vmem:[#allocation4 + $0xc8] sm:$0xff] %v3585
        %3856 = vst [vmem:[#allocation4 + $0x110] sm:$0xff] %v3586
        %3857 = vst [vmem:[#allocation4 + $0x158] sm:$0xff] %v3587
        %3858 = vst [vmem:[#allocation4 + $0x1a0] sm:$0xff] %v3588
        %3859 = vst [vmem:[#allocation4 + $0x1e8] sm:$0xff] %v3589
        %3860 = vst [vmem:[#allocation4 + $0x230] sm:$0xff] %v3590
        %3861 = vst [vmem:[#allocation4 + $0x278] sm:$0xff] %v3591
        %3862 = vst [vmem:[#allocation4 + $0x2c0] sm:$0xff] %v3592
        %3863 = vst [vmem:[#allocation4 + $0x308] sm:$0xff] %v3593
        %3864 = vst [vmem:[#allocation4 + $0x350] sm:$0xff] %v3594
        %3865 = vst [vmem:[#allocation4 + $0x398] sm:$0xff] %v3595
        %3866 = vst [vmem:[#allocation4 + $0x3e0] sm:$0xff] %v3596
        %3867 = vst [vmem:[#allocation4 + $0x428] sm:$0xff] %v3784
        %3868 = vst [vmem:[#allocation4 + $0x470] sm:$0xff] %v3852
        %v3869 = vrot.slane %v3386, 2
        %v3870 = vrot.slane %v3387, 2
        %v3871 = vsel %vm1279, %v3869, %v3870
        %v3872 = vrot.slane %v3388, 2
        %v3873 = vsel %vm1279, %v3870, %v3872
        %v3876 = vpack.c.bf16 %v3873, %v3871
        %3877 = vst [vmem:[#allocation4 + $0x40] sm:$0xff] %v3727
        %3878 = vst [vmem:[#allocation4 + $0x88] sm:$0xff] %v3728
        %3879 = vst [vmem:[#allocation4 + $0xd0] sm:$0xff] %v3729
        %3880 = vst [vmem:[#allocation4 + $0x118] sm:$0xff] %v3730
        %3881 = vst [vmem:[#allocation4 + $0x160] sm:$0xff] %v3731
        %3882 = vst [vmem:[#allocation4 + $0x1a8] sm:$0xff] %v3732
        %3883 = vst [vmem:[#allocation4 + $0x1f0] sm:$0xff] %v3733
        %3884 = vst [vmem:[#allocation4 + $0x238] sm:$0xff] %v3734
        %3885 = vst [vmem:[#allocation4 + $0x280] sm:$0xff] %v3735
        %3886 = vst [vmem:[#allocation4 + $0x2c8] sm:$0xff] %v3736
        %3887 = vst [vmem:[#allocation4 + $0x310] sm:$0xff] %v3737
        %3888 = vst [vmem:[#allocation4 + $0x358] sm:$0xff] %v3738
        %3889 = vst [vmem:[#allocation4 + $0x3a0] sm:$0xff] %v3739
        %3890 = vst [vmem:[#allocation4 + $0x3e8] sm:$0xff] %v3740
        %3891 = vst [vmem:[#allocation4 + $0x430] sm:$0xff] %v3808
        %3892 = vst [vmem:[#allocation4 + $0x478] sm:$0xff] %v3876
        %v3893 = vld [vmem:[#allocation4] sm:$0xff]
        %v3894 = vld [vmem:[#allocation4 + $0x8] sm:$0xff]
        %v3895 = vld [vmem:[#allocation4 + $0x10] sm:$0xff]
        %v3896 = vld [vmem:[#allocation4 + $0x18] sm:$0xff]
        %v3897 = vld [vmem:[#allocation4 + $0x20] sm:$0xff]
        %v3898 = vld [vmem:[#allocation4 + $0x28] sm:$0xff]
        %v3899 = vld [vmem:[#allocation4 + $0x30] sm:$0xff]
        %v3900 = vld [vmem:[#allocation4 + $0x38] sm:$0xff]
        %v3901 = vld [vmem:[#allocation4 + $0x40] sm:$0xff]
        %v3902 = vld [vmem:[#allocation4 + $0x48] sm:$0xff]
        %v3903 = vld [vmem:[#allocation4 + $0x50] sm:$0xff]
        %v3904 = vld [vmem:[#allocation4 + $0x58] sm:$0xff]
        %v3905 = vld [vmem:[#allocation4 + $0x60] sm:$0xff]
        %v3906 = vld [vmem:[#allocation4 + $0x68] sm:$0xff]
        %v3907 = vld [vmem:[#allocation4 + $0x70] sm:$0xff]
        %v3908 = vld [vmem:[#allocation4 + $0x78] sm:$0xff]
        %v3909 = vld [vmem:[#allocation4 + $0x80] sm:$0xff]
        %v3910 = vld [vmem:[#allocation4 + $0x88] sm:$0xff]
        %v3911 = vld [vmem:[#allocation4 + $0x90] sm:$0xff]
        %v3912 = vld [vmem:[#allocation4 + $0x98] sm:$0xff]
        %v3913 = vld [vmem:[#allocation4 + $0xa0] sm:$0xff]
        %v3914 = vld [vmem:[#allocation4 + $0xa8] sm:$0xff]
        %v3915 = vld [vmem:[#allocation4 + $0xb0] sm:$0xff]
        %v3916 = vld [vmem:[#allocation4 + $0xb8] sm:$0xff]
        %v3917 = vld [vmem:[#allocation4 + $0xc0] sm:$0xff]
        %v3918 = vld [vmem:[#allocation4 + $0xc8] sm:$0xff]
        %v3919 = vld [vmem:[#allocation4 + $0xd0] sm:$0xff]
        %v3920 = vld [vmem:[#allocation4 + $0xd8] sm:$0xff]
        %v3921 = vld [vmem:[#allocation4 + $0xe0] sm:$0xff]
        %v3922 = vld [vmem:[#allocation4 + $0xe8] sm:$0xff]
        %v3923 = vld [vmem:[#allocation4 + $0xf0] sm:$0xff]
        %v3924 = vld [vmem:[#allocation4 + $0xf8] sm:$0xff]
        %v3925 = vld [vmem:[#allocation4 + $0x100] sm:$0xff]
        %v3926 = vld [vmem:[#allocation4 + $0x108] sm:$0xff]
        %v3927 = vld [vmem:[#allocation4 + $0x110] sm:$0xff]
        %v3928 = vld [vmem:[#allocation4 + $0x118] sm:$0xff]
        %v3929 = vld [vmem:[#allocation4 + $0x120] sm:$0xff]
        %v3930 = vld [vmem:[#allocation4 + $0x128] sm:$0xff]
        %v3931 = vld [vmem:[#allocation4 + $0x130] sm:$0xff]
        %v3932 = vld [vmem:[#allocation4 + $0x138] sm:$0xff]
        %v3933 = vld [vmem:[#allocation4 + $0x140] sm:$0xff]
        %v3934 = vld [vmem:[#allocation4 + $0x148] sm:$0xff]
        %v3935 = vld [vmem:[#allocation4 + $0x150] sm:$0xff]
        %v3936 = vld [vmem:[#allocation4 + $0x158] sm:$0xff]
        %v3937 = vld [vmem:[#allocation4 + $0x160] sm:$0xff]
        %v3938 = vld [vmem:[#allocation4 + $0x168] sm:$0xff]
        %v3939 = vld [vmem:[#allocation4 + $0x170] sm:$0xff]
        %v3940 = vld [vmem:[#allocation4 + $0x178] sm:$0xff]
        %v3941 = vld [vmem:[#allocation4 + $0x180] sm:$0xff]
        %v3942 = vld [vmem:[#allocation4 + $0x188] sm:$0xff]
        %v3943 = vld [vmem:[#allocation4 + $0x190] sm:$0xff]
        %v3944 = vld [vmem:[#allocation4 + $0x198] sm:$0xff]
        %v3945 = vld [vmem:[#allocation4 + $0x1a0] sm:$0xff]
        %v3946 = vld [vmem:[#allocation4 + $0x1a8] sm:$0xff]
        %v3947 = vld [vmem:[#allocation4 + $0x1b0] sm:$0xff]
        %v3948 = vld [vmem:[#allocation4 + $0x1b8] sm:$0xff]
        %v3949 = vld [vmem:[#allocation4 + $0x1c0] sm:$0xff]
        %v3950 = vld [vmem:[#allocation4 + $0x1c8] sm:$0xff]
        %v3951 = vld [vmem:[#allocation4 + $0x1d0] sm:$0xff]
        %v3952 = vld [vmem:[#allocation4 + $0x1d8] sm:$0xff]
        %v3953 = vld [vmem:[#allocation4 + $0x1e0] sm:$0xff]
        %v3954 = vld [vmem:[#allocation4 + $0x1e8] sm:$0xff]
        %v3955 = vld [vmem:[#allocation4 + $0x1f0] sm:$0xff]
        %v3956 = vld [vmem:[#allocation4 + $0x1f8] sm:$0xff]
        %v3957 = vld [vmem:[#allocation4 + $0x200] sm:$0xff]
        %v3958 = vld [vmem:[#allocation4 + $0x208] sm:$0xff]
        %v3959 = vld [vmem:[#allocation4 + $0x210] sm:$0xff]
        %v3960 = vld [vmem:[#allocation4 + $0x218] sm:$0xff]
        %v3961 = vld [vmem:[#allocation4 + $0x220] sm:$0xff]
        %v3962 = vld [vmem:[#allocation4 + $0x228] sm:$0xff]
        %v3963 = vld [vmem:[#allocation4 + $0x230] sm:$0xff]
        %v3964 = vld [vmem:[#allocation4 + $0x238] sm:$0xff]
        %v3965 = vld [vmem:[#allocation4 + $0x240] sm:$0xff]
        %v3966 = vld [vmem:[#allocation4 + $0x248] sm:$0xff]
        %v3967 = vld [vmem:[#allocation4 + $0x250] sm:$0xff]
        %v3968 = vld [vmem:[#allocation4 + $0x258] sm:$0xff]
        %v3969 = vld [vmem:[#allocation4 + $0x260] sm:$0xff]
        %v3970 = vld [vmem:[#allocation4 + $0x268] sm:$0xff]
        %v3971 = vld [vmem:[#allocation4 + $0x270] sm:$0xff]
        %v3972 = vld [vmem:[#allocation4 + $0x278] sm:$0xff]
        %v3973 = vld [vmem:[#allocation4 + $0x280] sm:$0xff]
        %v3974 = vld [vmem:[#allocation4 + $0x288] sm:$0xff]
        %v3975 = vld [vmem:[#allocation4 + $0x290] sm:$0xff]
        %v3976 = vld [vmem:[#allocation4 + $0x298] sm:$0xff]
        %v3977 = vld [vmem:[#allocation4 + $0x2a0] sm:$0xff]
        %v3978 = vld [vmem:[#allocation4 + $0x2a8] sm:$0xff]
        %v3979 = vld [vmem:[#allocation4 + $0x2b0] sm:$0xff]
        %v3980 = vld [vmem:[#allocation4 + $0x2b8] sm:$0xff]
        %v3981 = vld [vmem:[#allocation4 + $0x2c0] sm:$0xff]
        %v3982 = vld [vmem:[#allocation4 + $0x2c8] sm:$0xff]
        %v3983 = vld [vmem:[#allocation4 + $0x2d0] sm:$0xff]
        %v3984 = vld [vmem:[#allocation4 + $0x2d8] sm:$0xff]
        %v3985 = vld [vmem:[#allocation4 + $0x2e0] sm:$0xff]
        %v3986 = vld [vmem:[#allocation4 + $0x2e8] sm:$0xff]
        %v3987 = vld [vmem:[#allocation4 + $0x2f0] sm:$0xff]
        %v3988 = vld [vmem:[#allocation4 + $0x2f8] sm:$0xff]
        %v3989 = vld [vmem:[#allocation4 + $0x300] sm:$0xff]
        %v3990 = vld [vmem:[#allocation4 + $0x308] sm:$0xff]
        %v3991 = vld [vmem:[#allocation4 + $0x310] sm:$0xff]
        %v3992 = vld [vmem:[#allocation4 + $0x318] sm:$0xff]
        %v3993 = vld [vmem:[#allocation4 + $0x320] sm:$0xff]
        %v3994 = vld [vmem:[#allocation4 + $0x328] sm:$0xff]
        %v3995 = vld [vmem:[#allocation4 + $0x330] sm:$0xff]
        %v3996 = vld [vmem:[#allocation4 + $0x338] sm:$0xff]
        %v3997 = vld [vmem:[#allocation4 + $0x340] sm:$0xff]
        %v3998 = vld [vmem:[#allocation4 + $0x348] sm:$0xff]
        %v3999 = vld [vmem:[#allocation4 + $0x350] sm:$0xff]
        %v4000 = vld [vmem:[#allocation4 + $0x358] sm:$0xff]
        %v4001 = vld [vmem:[#allocation4 + $0x360] sm:$0xff]
        %v4002 = vld [vmem:[#allocation4 + $0x368] sm:$0xff]
        %v4003 = vld [vmem:[#allocation4 + $0x370] sm:$0xff]
        %v4004 = vld [vmem:[#allocation4 + $0x378] sm:$0xff]
        %v4005 = vld [vmem:[#allocation4 + $0x380] sm:$0xff]
        %v4006 = vld [vmem:[#allocation4 + $0x388] sm:$0xff]
        %v4007 = vld [vmem:[#allocation4 + $0x390] sm:$0xff]
        %v4008 = vld [vmem:[#allocation4 + $0x398] sm:$0xff]
        %v4009 = vld [vmem:[#allocation4 + $0x3a0] sm:$0xff]
        %v4010 = vld [vmem:[#allocation4 + $0x3a8] sm:$0xff]
        %v4011 = vld [vmem:[#allocation4 + $0x3b0] sm:$0xff]
        %v4012 = vld [vmem:[#allocation4 + $0x3b8] sm:$0xff]
        %v4013 = vld [vmem:[#allocation4 + $0x3c0] sm:$0xff]
        %v4014 = vld [vmem:[#allocation4 + $0x3c8] sm:$0xff]
        %v4015 = vld [vmem:[#allocation4 + $0x3d0] sm:$0xff]
        %v4016 = vld [vmem:[#allocation4 + $0x3d8] sm:$0xff]
        %v4017 = vld [vmem:[#allocation4 + $0x3e0] sm:$0xff]
        %v4018 = vld [vmem:[#allocation4 + $0x3e8] sm:$0xff]
        %v4019 = vld [vmem:[#allocation4 + $0x3f0] sm:$0xff]
        %v4020 = vld [vmem:[#allocation4 + $0x3f8] sm:$0xff]
        %v4021 = vld [vmem:[#allocation4 + $0x400] sm:$0xff]
        %v4022 = vld [vmem:[#allocation4 + $0x408] sm:$0xff]
        %v4023 = vld [vmem:[#allocation4 + $0x410] sm:$0xff]
        %v4024 = vld [vmem:[#allocation4 + $0x418] sm:$0xff]
        %v4025 = vld [vmem:[#allocation4 + $0x420] sm:$0xff]
        %v4026 = vld [vmem:[#allocation4 + $0x428] sm:$0xff]
        %v4027 = vld [vmem:[#allocation4 + $0x430] sm:$0xff]
        %v4028 = vld [vmem:[#allocation4 + $0x438] sm:$0xff]
        %v4029 = vld [vmem:[#allocation4 + $0x440] sm:$0xff]
        %v4030 = vld [vmem:[#allocation4 + $0x448] sm:$0xff]
        %v4031 = vld [vmem:[#allocation4 + $0x450] sm:$0xff]
        %v4032 = vld [vmem:[#allocation4 + $0x458] sm:$0xff]
        %v4033 = vld [vmem:[#allocation4 + $0x460] sm:$0xff]
        %v4034 = vld [vmem:[#allocation4 + $0x468] sm:$0xff]
        %v4035 = vld [vmem:[#allocation4 + $0x470] sm:$0xff]
        %v4036 = vld [vmem:[#allocation4 + $0x478] sm:$0xff]
        %s4037 = scalar_lea.vmem %s3, 576
        %v4038 = vld [vmem:[%s4037] sm:$0xf]
        %v4039 = vld [vmem:[%s4037 + $0x4] sm:$0xf]
        %v4040 = vld [vmem:[%s4037 + $0x8] sm:$0xf]
        %v4041 = vld [vmem:[%s4037 + $0xc] sm:$0xf]
        %v4042 = vld [vmem:[%s4037 + $0x10] sm:$0xf]
        %v4043 = vld [vmem:[%s4037 + $0x14] sm:$0xf]
        %v4044 = vld [vmem:[%s4037 + $0x18] sm:$0xf]
        %v4045 = vld [vmem:[%s4037 + $0x1c] sm:$0xf]
        %v4046 = vld [vmem:[%s4037 + $0x20] sm:$0xf]
        %v4047 = vld [vmem:[%s4037 + $0x24] sm:$0xf]
        %v4048 = vld [vmem:[%s4037 + $0x28] sm:$0xf]
        %v4049 = vld [vmem:[%s4037 + $0x2c] sm:$0xf]
        %v4050 = vld [vmem:[%s4037 + $0x30] sm:$0xf]
        %v4051 = vld [vmem:[%s4037 + $0x34] sm:$0xf]
        %v4052 = vld [vmem:[%s4037 + $0x38] sm:$0xf]
        %v4053 = vld [vmem:[%s4037 + $0x3c] sm:$0xf]
        %v4054 = vld [vmem:[%s4037 + $0x40] sm:$0xf]
        %v4055 = vld [vmem:[%s4037 + $0x44] sm:$0xf]
        %v4056 = vld [vmem:[%s4037 + $0x48] sm:$0xf]
        %v4057 = vld [vmem:[%s4037 + $0x4c] sm:$0xf]
        %v4058 = vld [vmem:[%s4037 + $0x50] sm:$0xf]
        %v4059 = vld [vmem:[%s4037 + $0x54] sm:$0xf]
        %v4060 = vld [vmem:[%s4037 + $0x58] sm:$0xf]
        %v4061 = vld [vmem:[%s4037 + $0x5c] sm:$0xf]
        %v4062 = vld [vmem:[%s4037 + $0x60] sm:$0xf]
        %v4063 = vld [vmem:[%s4037 + $0x64] sm:$0xf]
        %v4064 = vld [vmem:[%s4037 + $0x68] sm:$0xf]
        %v4065 = vld [vmem:[%s4037 + $0x6c] sm:$0xf]
        %v4066 = vld [vmem:[%s4037 + $0x70] sm:$0xf]
        %v4067 = vld [vmem:[%s4037 + $0x74] sm:$0xf]
        %v4068 = vld [vmem:[%s4037 + $0x78] sm:$0xf]
        %v4069 = vld [vmem:[%s4037 + $0x7c] sm:$0xf]
        %v4070 = vld [vmem:[%s4037 + $0x80] sm:$0xf]
        %v4071 = vld [vmem:[%s4037 + $0x84] sm:$0xf]
        %v4072 = vld [vmem:[%s4037 + $0x88] sm:$0xf]
        %v4073 = vld [vmem:[%s4037 + $0x8c] sm:$0xf]
        %v4074 = vld [vmem:[%s4037 + $0x90] sm:$0xf]
        %v4075 = vld [vmem:[%s4037 + $0x94] sm:$0xf]
        %v4076 = vld [vmem:[%s4037 + $0x98] sm:$0xf]
        %v4077 = vld [vmem:[%s4037 + $0x9c] sm:$0xf]
        %v4078 = vld [vmem:[%s4037 + $0xa0] sm:$0xf]
        %v4079 = vld [vmem:[%s4037 + $0xa4] sm:$0xf]
        %v4080 = vld [vmem:[%s4037 + $0xa8] sm:$0xf]
        %v4081 = vld [vmem:[%s4037 + $0xac] sm:$0xf]
        %v4082 = vld [vmem:[%s4037 + $0xb0] sm:$0xf]
        %v4083 = vld [vmem:[%s4037 + $0xb4] sm:$0xf]
        %v4084 = vld [vmem:[%s4037 + $0xb8] sm:$0xf]
        %v4085 = vld [vmem:[%s4037 + $0xbc] sm:$0xf]
        %v4086 = vld [vmem:[%s4037 + $0xc0] sm:$0xf]
        %v4087 = vld [vmem:[%s4037 + $0xc4] sm:$0xf]
        %v4088 = vld [vmem:[%s4037 + $0xc8] sm:$0xf]
        %v4089 = vld [vmem:[%s4037 + $0xcc] sm:$0xf]
        %v4090 = vld [vmem:[%s4037 + $0xd0] sm:$0xf]
        %v4091 = vld [vmem:[%s4037 + $0xd4] sm:$0xf]
        %v4092 = vld [vmem:[%s4037 + $0xd8] sm:$0xf]
        %v4093 = vld [vmem:[%s4037 + $0xdc] sm:$0xf]
        %v4094 = vld [vmem:[%s4037 + $0xe0] sm:$0xf]
        %v4095 = vld [vmem:[%s4037 + $0xe4] sm:$0xf]
        %v4096 = vld [vmem:[%s4037 + $0xe8] sm:$0xf]
        %v4097 = vld [vmem:[%s4037 + $0xec] sm:$0xf]
        %v4098 = vld [vmem:[%s4037 + $0xf0] sm:$0xf]
        %v4099 = vld [vmem:[%s4037 + $0xf4] sm:$0xf]
        %v4100 = vld [vmem:[%s4037 + $0xf8] sm:$0xf]
        %v4101 = vld [vmem:[%s4037 + $0xfc] sm:$0xf]
        %v4102 = vld [vmem:[%s4037 + $0x100] sm:$0xf]
        %v4103 = vld [vmem:[%s4037 + $0x104] sm:$0xf]
        %v4104 = vld [vmem:[%s4037 + $0x108] sm:$0xf]
        %v4105 = vld [vmem:[%s4037 + $0x10c] sm:$0xf]
        %v4106 = vld [vmem:[%s4037 + $0x110] sm:$0xf]
        %v4107 = vld [vmem:[%s4037 + $0x114] sm:$0xf]
        %v4108 = vld [vmem:[%s4037 + $0x118] sm:$0xf]
        %v4109 = vld [vmem:[%s4037 + $0x11c] sm:$0xf]
        %v4110 = vld [vmem:[%s4037 + $0x120] sm:$0xf]
        %v4111 = vld [vmem:[%s4037 + $0x124] sm:$0xf]
        %v4112 = vld [vmem:[%s4037 + $0x128] sm:$0xf]
        %v4113 = vld [vmem:[%s4037 + $0x12c] sm:$0xf]
        %v4114 = vld [vmem:[%s4037 + $0x130] sm:$0xf]
        %v4115 = vld [vmem:[%s4037 + $0x134] sm:$0xf]
        %v4116 = vld [vmem:[%s4037 + $0x138] sm:$0xf]
        %v4117 = vld [vmem:[%s4037 + $0x13c] sm:$0xf]
        %v4118 = vld [vmem:[%s4037 + $0x140] sm:$0xf]
        %v4119 = vld [vmem:[%s4037 + $0x144] sm:$0xf]
        %v4120 = vld [vmem:[%s4037 + $0x148] sm:$0xf]
        %v4121 = vld [vmem:[%s4037 + $0x14c] sm:$0xf]
        %v4122 = vld [vmem:[%s4037 + $0x150] sm:$0xf]
        %v4123 = vld [vmem:[%s4037 + $0x154] sm:$0xf]
        %v4124 = vld [vmem:[%s4037 + $0x158] sm:$0xf]
        %v4125 = vld [vmem:[%s4037 + $0x15c] sm:$0xf]
        %v4126 = vld [vmem:[%s4037 + $0x160] sm:$0xf]
        %v4127 = vld [vmem:[%s4037 + $0x164] sm:$0xf]
        %v4128 = vld [vmem:[%s4037 + $0x168] sm:$0xf]
        %v4129 = vld [vmem:[%s4037 + $0x16c] sm:$0xf]
        %v4130 = vld [vmem:[%s4037 + $0x170] sm:$0xf]
        %v4131 = vld [vmem:[%s4037 + $0x174] sm:$0xf]
        %v4132 = vld [vmem:[%s4037 + $0x178] sm:$0xf]
        %v4133 = vld [vmem:[%s4037 + $0x17c] sm:$0xf]
        %v4134 = vld [vmem:[%s4037 + $0x180] sm:$0xf]
        %v4135 = vld [vmem:[%s4037 + $0x184] sm:$0xf]
        %v4136 = vld [vmem:[%s4037 + $0x188] sm:$0xf]
        %v4137 = vld [vmem:[%s4037 + $0x18c] sm:$0xf]
        %v4138 = vld [vmem:[%s4037 + $0x190] sm:$0xf]
        %v4139 = vld [vmem:[%s4037 + $0x194] sm:$0xf]
        %v4140 = vld [vmem:[%s4037 + $0x198] sm:$0xf]
        %v4141 = vld [vmem:[%s4037 + $0x19c] sm:$0xf]
        %v4142 = vld [vmem:[%s4037 + $0x1a0] sm:$0xf]
        %v4143 = vld [vmem:[%s4037 + $0x1a4] sm:$0xf]
        %v4144 = vld [vmem:[%s4037 + $0x1a8] sm:$0xf]
        %v4145 = vld [vmem:[%s4037 + $0x1ac] sm:$0xf]
        %v4146 = vld [vmem:[%s4037 + $0x1b0] sm:$0xf]
        %v4147 = vld [vmem:[%s4037 + $0x1b4] sm:$0xf]
        %v4148 = vld [vmem:[%s4037 + $0x1b8] sm:$0xf]
        %v4149 = vld [vmem:[%s4037 + $0x1bc] sm:$0xf]
        %v4150 = vld [vmem:[%s4037 + $0x1c0] sm:$0xf]
        %v4151 = vld [vmem:[%s4037 + $0x1c4] sm:$0xf]
        %v4152 = vld [vmem:[%s4037 + $0x1c8] sm:$0xf]
        %v4153 = vld [vmem:[%s4037 + $0x1cc] sm:$0xf]
        %v4154 = vld [vmem:[%s4037 + $0x1d0] sm:$0xf]
        %v4155 = vld [vmem:[%s4037 + $0x1d4] sm:$0xf]
        %v4156 = vld [vmem:[%s4037 + $0x1d8] sm:$0xf]
        %v4157 = vld [vmem:[%s4037 + $0x1dc] sm:$0xf]
        %v4158 = vld [vmem:[%s4037 + $0x1e0] sm:$0xf]
        %v4159 = vld [vmem:[%s4037 + $0x1e4] sm:$0xf]
        %v4160 = vld [vmem:[%s4037 + $0x1e8] sm:$0xf]
        %v4161 = vld [vmem:[%s4037 + $0x1ec] sm:$0xf]
        %v4162 = vld [vmem:[%s4037 + $0x1f0] sm:$0xf]
        %v4163 = vld [vmem:[%s4037 + $0x1f4] sm:$0xf]
        %v4164 = vld [vmem:[%s4037 + $0x1f8] sm:$0xf]
        %v4165 = vld [vmem:[%s4037 + $0x1fc] sm:$0xf]
        %v4166 = vld [vmem:[%s4037 + $0x200] sm:$0xf]
        %v4167 = vld [vmem:[%s4037 + $0x204] sm:$0xf]
        %v4168 = vld [vmem:[%s4037 + $0x208] sm:$0xf]
        %v4169 = vld [vmem:[%s4037 + $0x20c] sm:$0xf]
        %v4170 = vld [vmem:[%s4037 + $0x210] sm:$0xf]
        %v4171 = vld [vmem:[%s4037 + $0x214] sm:$0xf]
        %v4172 = vld [vmem:[%s4037 + $0x218] sm:$0xf]
        %v4173 = vld [vmem:[%s4037 + $0x21c] sm:$0xf]
        %v4174 = vld [vmem:[%s4037 + $0x220] sm:$0xf]
        %v4175 = vld [vmem:[%s4037 + $0x224] sm:$0xf]
        %v4176 = vld [vmem:[%s4037 + $0x228] sm:$0xf]
        %v4177 = vld [vmem:[%s4037 + $0x22c] sm:$0xf]
        %v4178 = vld [vmem:[%s4037 + $0x230] sm:$0xf]
        %v4179 = vld [vmem:[%s4037 + $0x234] sm:$0xf]
        %v4180 = vld [vmem:[%s4037 + $0x238] sm:$0xf]
        %v4181 = vld [vmem:[%s4037 + $0x23c] sm:$0xf]
        %v4326 = vunpack.c.l.b16 %v4038
        %v4327 = vunpack.c.l.b16 %v4039
        %v4328 = vunpack.c.l.b16 %v4040
        %v4329 = vunpack.c.l.b16 %v4041
        %v4330 = vunpack.c.l.b16 %v4042
        %v4331 = vunpack.c.l.b16 %v4043
        %v4332 = vunpack.c.l.b16 %v4044
        %v4333 = vunpack.c.l.b16 %v4045
        %v4334 = vunpack.c.l.b16 %v4046
        %v4335 = vunpack.c.l.b16 %v4047
        %v4336 = vunpack.c.l.b16 %v4048
        %v4337 = vunpack.c.l.b16 %v4049
        %v4338 = vunpack.c.l.b16 %v4050
        %v4339 = vunpack.c.l.b16 %v4051
        %v4340 = vunpack.c.l.b16 %v4052
        %v4341 = vunpack.c.l.b16 %v4053
        %v4342 = vunpack.c.l.b16 %v4054
        %v4343 = vunpack.c.l.b16 %v4055
        %v4344 = vunpack.c.l.b16 %v4056
        %v4345 = vunpack.c.l.b16 %v4057
        %v4346 = vunpack.c.l.b16 %v4058
        %v4347 = vunpack.c.l.b16 %v4059
        %v4348 = vunpack.c.l.b16 %v4060
        %v4349 = vunpack.c.l.b16 %v4061
        %v4350 = vunpack.c.l.b16 %v4062
        %v4351 = vunpack.c.l.b16 %v4063
        %v4352 = vunpack.c.l.b16 %v4064
        %v4353 = vunpack.c.l.b16 %v4065
        %v4354 = vunpack.c.l.b16 %v4066
        %v4355 = vunpack.c.l.b16 %v4067
        %v4356 = vunpack.c.l.b16 %v4068
        %v4357 = vunpack.c.l.b16 %v4069
        %v4358 = vunpack.c.l.b16 %v4070
        %v4359 = vunpack.c.l.b16 %v4071
        %v4360 = vunpack.c.l.b16 %v4072
        %v4361 = vunpack.c.l.b16 %v4073
        %v4362 = vunpack.c.l.b16 %v4074
        %v4363 = vunpack.c.l.b16 %v4075
        %v4364 = vunpack.c.l.b16 %v4076
        %v4365 = vunpack.c.l.b16 %v4077
        %v4366 = vunpack.c.l.b16 %v4078
        %v4367 = vunpack.c.l.b16 %v4079
        %v4368 = vunpack.c.l.b16 %v4080
        %v4369 = vunpack.c.l.b16 %v4081
        %v4370 = vunpack.c.l.b16 %v4082
        %v4371 = vunpack.c.l.b16 %v4083
        %v4372 = vunpack.c.l.b16 %v4084
        %v4373 = vunpack.c.l.b16 %v4085
        %v4374 = vunpack.c.l.b16 %v4086
        %v4375 = vunpack.c.l.b16 %v4087
        %v4376 = vunpack.c.l.b16 %v4088
        %v4377 = vunpack.c.l.b16 %v4089
        %v4378 = vunpack.c.l.b16 %v4090
        %v4379 = vunpack.c.l.b16 %v4091
        %v4380 = vunpack.c.l.b16 %v4092
        %v4381 = vunpack.c.l.b16 %v4093
        %v4382 = vunpack.c.l.b16 %v4094
        %v4383 = vunpack.c.l.b16 %v4095
        %v4384 = vunpack.c.l.b16 %v4096
        %v4385 = vunpack.c.l.b16 %v4097
        %v4386 = vunpack.c.l.b16 %v4098
        %v4387 = vunpack.c.l.b16 %v4099
        %v4388 = vunpack.c.l.b16 %v4100
        %v4389 = vunpack.c.l.b16 %v4101
        %v4390 = vunpack.c.l.b16 %v4102
        %v4391 = vunpack.c.l.b16 %v4103
        %v4392 = vunpack.c.l.b16 %v4104
        %v4393 = vunpack.c.l.b16 %v4105
        %v4394 = vunpack.c.l.b16 %v4106
        %v4395 = vunpack.c.l.b16 %v4107
        %v4396 = vunpack.c.l.b16 %v4108
        %v4397 = vunpack.c.l.b16 %v4109
        %v4398 = vunpack.c.l.b16 %v4110
        %v4399 = vunpack.c.l.b16 %v4111
        %v4400 = vunpack.c.l.b16 %v4112
        %v4401 = vunpack.c.l.b16 %v4113
        %v4402 = vunpack.c.l.b16 %v4114
        %v4403 = vunpack.c.l.b16 %v4115
        %v4404 = vunpack.c.l.b16 %v4116
        %v4405 = vunpack.c.l.b16 %v4117
        %v4406 = vunpack.c.l.b16 %v4118
        %v4407 = vunpack.c.l.b16 %v4119
        %v4408 = vunpack.c.l.b16 %v4120
        %v4409 = vunpack.c.l.b16 %v4121
        %v4410 = vunpack.c.l.b16 %v4122
        %v4411 = vunpack.c.l.b16 %v4123
        %v4412 = vunpack.c.l.b16 %v4124
        %v4413 = vunpack.c.l.b16 %v4125
        %v4414 = vunpack.c.l.b16 %v4126
        %v4415 = vunpack.c.l.b16 %v4127
        %v4416 = vunpack.c.l.b16 %v4128
        %v4417 = vunpack.c.l.b16 %v4129
        %v4418 = vunpack.c.l.b16 %v4130
        %v4419 = vunpack.c.l.b16 %v4131
        %v4420 = vunpack.c.l.b16 %v4132
        %v4421 = vunpack.c.l.b16 %v4133
        %v4422 = vunpack.c.l.b16 %v4134
        %v4423 = vunpack.c.l.b16 %v4135
        %v4424 = vunpack.c.l.b16 %v4136
        %v4425 = vunpack.c.l.b16 %v4137
        %v4426 = vunpack.c.l.b16 %v4138
        %v4427 = vunpack.c.l.b16 %v4139
        %v4428 = vunpack.c.l.b16 %v4140
        %v4429 = vunpack.c.l.b16 %v4141
        %v4430 = vunpack.c.l.b16 %v4142
        %v4431 = vunpack.c.l.b16 %v4143
        %v4432 = vunpack.c.l.b16 %v4144
        %v4433 = vunpack.c.l.b16 %v4145
        %v4434 = vunpack.c.l.b16 %v4146
        %v4435 = vunpack.c.l.b16 %v4147
        %v4436 = vunpack.c.l.b16 %v4148
        %v4437 = vunpack.c.l.b16 %v4149
        %v4438 = vunpack.c.l.b16 %v4150
        %v4439 = vunpack.c.l.b16 %v4151
        %v4440 = vunpack.c.l.b16 %v4152
        %v4441 = vunpack.c.l.b16 %v4153
        %v4442 = vunpack.c.l.b16 %v4154
        %v4443 = vunpack.c.l.b16 %v4155
        %v4444 = vunpack.c.l.b16 %v4156
        %v4445 = vunpack.c.l.b16 %v4157
        %v4446 = vunpack.c.l.b16 %v4158
        %v4447 = vunpack.c.l.b16 %v4159
        %v4448 = vunpack.c.l.b16 %v4160
        %v4449 = vunpack.c.l.b16 %v4161
        %v4450 = vunpack.c.l.b16 %v4162
        %v4451 = vunpack.c.l.b16 %v4163
        %v4452 = vunpack.c.l.b16 %v4164
        %v4453 = vunpack.c.l.b16 %v4165
        %v4454 = vunpack.c.l.b16 %v4166
        %v4455 = vunpack.c.l.b16 %v4167
        %v4456 = vunpack.c.l.b16 %v4168
        %v4457 = vunpack.c.l.b16 %v4169
        %v4458 = vunpack.c.l.b16 %v4170
        %v4459 = vunpack.c.l.b16 %v4171
        %v4460 = vunpack.c.l.b16 %v4172
        %v4461 = vunpack.c.l.b16 %v4173
        %v4462 = vunpack.c.l.b16 %v4174
        %v4463 = vunpack.c.l.b16 %v4175
        %v4464 = vunpack.c.l.b16 %v4176
        %v4465 = vunpack.c.l.b16 %v4177
        %v4466 = vunpack.c.l.b16 %v4178
        %v4467 = vunpack.c.l.b16 %v4179
        %v4468 = vunpack.c.l.b16 %v4180
        %v4469 = vunpack.c.l.b16 %v4181
        %v4470 = vpack.c.b16 %v4327, %v4326
        %v4471 = vpack.c.b16 %v4329, %v4328
        %v4472 = vpack.c.b16 %v4331, %v4330
        %v4473 = vpack.c.b16 %v4333, %v4332
        %v4474 = vpack.c.b16 %v4335, %v4334
        %v4475 = vpack.c.b16 %v4337, %v4336
        %v4476 = vpack.c.b16 %v4339, %v4338
        %v4477 = vpack.c.b16 %v4341, %v4340
        %v4478 = vpack.c.b16 %v4343, %v4342
        %v4479 = vpack.c.b16 %v4345, %v4344
        %v4480 = vpack.c.b16 %v4347, %v4346
        %v4481 = vpack.c.b16 %v4349, %v4348
        %v4482 = vpack.c.b16 %v4351, %v4350
        %v4483 = vpack.c.b16 %v4353, %v4352
        %v4484 = vpack.c.b16 %v4355, %v4354
        %v4485 = vpack.c.b16 %v4357, %v4356
        %v4486 = vpack.c.b16 %v4359, %v4358
        %v4487 = vpack.c.b16 %v4361, %v4360
        %v4488 = vpack.c.b16 %v4363, %v4362
        %v4489 = vpack.c.b16 %v4365, %v4364
        %v4490 = vpack.c.b16 %v4367, %v4366
        %v4491 = vpack.c.b16 %v4369, %v4368
        %v4492 = vpack.c.b16 %v4371, %v4370
        %v4493 = vpack.c.b16 %v4373, %v4372
        %v4494 = vpack.c.b16 %v4375, %v4374
        %v4495 = vpack.c.b16 %v4377, %v4376
        %v4496 = vpack.c.b16 %v4379, %v4378
        %v4497 = vpack.c.b16 %v4381, %v4380
        %v4498 = vpack.c.b16 %v4383, %v4382
        %v4499 = vpack.c.b16 %v4385, %v4384
        %v4500 = vpack.c.b16 %v4387, %v4386
        %v4501 = vpack.c.b16 %v4389, %v4388
        %v4502 = vpack.c.b16 %v4391, %v4390
        %v4503 = vpack.c.b16 %v4393, %v4392
        %v4504 = vpack.c.b16 %v4395, %v4394
        %v4505 = vpack.c.b16 %v4397, %v4396
        %v4506 = vpack.c.b16 %v4399, %v4398
        %v4507 = vpack.c.b16 %v4401, %v4400
        %v4508 = vpack.c.b16 %v4403, %v4402
        %v4509 = vpack.c.b16 %v4405, %v4404
        %v4510 = vpack.c.b16 %v4407, %v4406
        %v4511 = vpack.c.b16 %v4409, %v4408
        %v4512 = vpack.c.b16 %v4411, %v4410
        %v4513 = vpack.c.b16 %v4413, %v4412
        %v4514 = vpack.c.b16 %v4415, %v4414
        %v4515 = vpack.c.b16 %v4417, %v4416
        %v4516 = vpack.c.b16 %v4419, %v4418
        %v4517 = vpack.c.b16 %v4421, %v4420
        %v4518 = vpack.c.b16 %v4423, %v4422
        %v4519 = vpack.c.b16 %v4425, %v4424
        %v4520 = vpack.c.b16 %v4427, %v4426
        %v4521 = vpack.c.b16 %v4429, %v4428
        %v4522 = vpack.c.b16 %v4431, %v4430
        %v4523 = vpack.c.b16 %v4433, %v4432
        %v4524 = vpack.c.b16 %v4435, %v4434
        %v4525 = vpack.c.b16 %v4437, %v4436
        %v4526 = vpack.c.b16 %v4439, %v4438
        %v4527 = vpack.c.b16 %v4441, %v4440
        %v4528 = vpack.c.b16 %v4443, %v4442
        %v4529 = vpack.c.b16 %v4445, %v4444
        %v4530 = vpack.c.b16 %v4447, %v4446
        %v4531 = vpack.c.b16 %v4449, %v4448
        %v4532 = vpack.c.b16 %v4451, %v4450
        %v4533 = vpack.c.b16 %v4453, %v4452
        %v4534 = vpack.c.b16 %v4455, %v4454
        %v4535 = vpack.c.b16 %v4457, %v4456
        %v4536 = vpack.c.b16 %v4459, %v4458
        %v4537 = vpack.c.b16 %v4461, %v4460
        %v4538 = vpack.c.b16 %v4463, %v4462
        %v4539 = vpack.c.b16 %v4465, %v4464
        %v4540 = vpack.c.b16 %v4467, %v4466
        %v4541 = vpack.c.b16 %v4469, %v4468
        %4614 = vmatprep.subr.bf16.mxu0 0
        %4615 = vmatpush1.bf16.msra.mxu0 %v4470
        %4616 = vmatprep.subr.bf16.mxu0 0
        %4617 = vmatpush1.bf16.msra.mxu0 %v4471
        %4618 = vmatprep.subr.bf16.mxu0 0
        %4619 = vmatpush1.bf16.msra.mxu0 %v4472
        %4620 = vmatprep.subr.bf16.mxu0 0
        %4621 = vmatpush1.bf16.msra.mxu0 %v4473
        %4622 = vmatprep.subr.bf16.mxu0 0
        %4623 = vmatpush1.bf16.msra.mxu0 %v4474
        %4624 = vmatprep.subr.bf16.mxu0 0
        %4625 = vmatpush1.bf16.msra.mxu0 %v4475
        %4626 = vmatprep.subr.bf16.mxu0 0
        %4627 = vmatpush1.bf16.msra.mxu0 %v4476
        %4628 = vmatprep.subr.bf16.mxu0 0
        %4629 = vmatpush1.bf16.msra.mxu0 %v4477
        %4630 = vmatprep.subr.bf16.mxu0 0
        %4631 = vmatpush1.bf16.msra.mxu0 %v4478
        %4632 = vmatprep.subr.bf16.mxu0 0
        %4633 = vmatpush1.bf16.msra.mxu0 %v4479
        %4634 = vmatprep.subr.bf16.mxu0 0
        %4635 = vmatpush1.bf16.msra.mxu0 %v4480
        %4636 = vmatprep.subr.bf16.mxu0 0
        %4637 = vmatpush1.bf16.msra.mxu0 %v4481
        %4638 = vmatprep.subr.bf16.mxu0 0
        %4639 = vmatpush1.bf16.msra.mxu0 %v4482
        %4640 = vmatprep.subr.bf16.mxu0 0
        %4641 = vmatpush1.bf16.msra.mxu0 %v4483
        %4642 = vmatprep.subr.bf16.mxu0 0
        %4643 = vmatpush1.bf16.msra.mxu0 %v4484
        %4644 = vmatprep.subr.bf16.mxu0 0
        %4645 = vmatpush1.bf16.msra.mxu0 %v4485
        %4646 = vmatprep.mubr.bf16.mxu0 %v3894
        %4647 = vmatmul.mubr.bf16.gmra.mrb[0].mxu0 %v3893
        %v4648 = vpop.f32.mrb[0].mxu0
        %v4649 = vadd.f32 0.0, %v4648
        %v4650 = vpop.f32.mrb[0].mxu0
        %v4651 = vpop.f32.mrb[0].mxu0
        %v4652 = vadd.f32 0.0, %v4651
        %v4653 = vpop.f32.mrb[0].mxu0
        %4654 = vmatprep.mubr.bf16.mxu0 %v3903
        %4655 = vmatmul.mubr.bf16.gmra.mrb[0].mxu0 %v3902
        %v4656 = vpop.f32.mrb[0].mxu0
        %v4657 = vadd.f32 0.0, %v4656
        %v4658 = vpop.f32.mrb[0].mxu0
        %v4659 = vpop.f32.mrb[0].mxu0
        %v4660 = vadd.f32 0.0, %v4659
        %v4661 = vpop.f32.mrb[0].mxu0
        %4662 = vmatprep.mubr.bf16.mxu0 %v3912
        %4663 = vmatmul.mubr.bf16.gmra.mrb[0].mxu0 %v3911
        %v4664 = vpop.f32.mrb[0].mxu0
        %v4665 = vadd.f32 0.0, %v4664
        %v4666 = vpop.f32.mrb[0].mxu0
        %v4667 = vpop.f32.mrb[0].mxu0
        %v4668 = vadd.f32 0.0, %v4667
        %v4669 = vpop.f32.mrb[0].mxu0
        %4670 = vmatprep.mubr.bf16.mxu0 %v3921
        %4671 = vmatmul.mubr.bf16.gmra.mrb[0].mxu0 %v3920
        %v4672 = vpop.f32.mrb[0].mxu0
        %v4673 = vadd.f32 0.0, %v4672
        %v4674 = vpop.f32.mrb[0].mxu0
        %v4675 = vpop.f32.mrb[0].mxu0
        %v4676 = vadd.f32 0.0, %v4675
        %v4677 = vpop.f32.mrb[0].mxu0
        %4678 = vmatprep.mubr.bf16.mxu0 %v3930
        %4679 = vmatmul.mubr.bf16.gmra.mrb[0].mxu0 %v3929
        %v4680 = vpop.f32.mrb[0].mxu0
        %v4681 = vadd.f32 0.0, %v4680
        %v4682 = vpop.f32.mrb[0].mxu0
        %v4683 = vpop.f32.mrb[0].mxu0
        %v4684 = vadd.f32 0.0, %v4683
        %v4685 = vpop.f32.mrb[0].mxu0
        %4686 = vmatprep.mubr.bf16.mxu0 %v3939
        %4687 = vmatmul.mubr.bf16.gmra.mrb[0].mxu0 %v3938
        %v4688 = vpop.f32.mrb[0].mxu0
        %v4689 = vadd.f32 0.0, %v4688
        %v4690 = vpop.f32.mrb[0].mxu0
        %v4691 = vpop.f32.mrb[0].mxu0
        %v4692 = vadd.f32 0.0, %v4691
        %v4693 = vpop.f32.mrb[0].mxu0
        %4694 = vmatprep.mubr.bf16.mxu0 %v3948
        %4695 = vmatmul.mubr.bf16.gmra.mrb[0].mxu0 %v3947
        %v4696 = vpop.f32.mrb[0].mxu0
        %v4697 = vadd.f32 0.0, %v4696
        %v4698 = vpop.f32.mrb[0].mxu0
        %v4699 = vpop.f32.mrb[0].mxu0
        %v4700 = vadd.f32 0.0, %v4699
        %v4701 = vpop.f32.mrb[0].mxu0
        %4702 = vmatprep.mubr.bf16.mxu0 %v3957
        %4703 = vmatmul.mubr.bf16.gmra.mrb[0].mxu0 %v3956
        %v4704 = vpop.f32.mrb[0].mxu0
        %v4705 = vadd.f32 0.0, %v4704
        %v4706 = vpop.f32.mrb[0].mxu0
        %v4707 = vpop.f32.mrb[0].mxu0
        %v4708 = vadd.f32 0.0, %v4707
        %v4709 = vpop.f32.mrb[0].mxu0
        %4710 = vmatprep.mubr.bf16.mxu0 %v3966
        %4711 = vmatmul.mubr.bf16.gmra.mrb[0].mxu0 %v3965
        %v4712 = vpop.f32.mrb[0].mxu0
        %v4713 = vadd.f32 0.0, %v4712
        %v4714 = vpop.f32.mrb[0].mxu0
        %v4715 = vpop.f32.mrb[0].mxu0
        %v4716 = vadd.f32 0.0, %v4715
        %v4717 = vpop.f32.mrb[0].mxu0
        %4718 = vmatprep.mubr.bf16.mxu0 %v3975
        %4719 = vmatmul.mubr.bf16.gmra.mrb[0].mxu0 %v3974
        %v4720 = vpop.f32.mrb[0].mxu0
        %v4721 = vadd.f32 0.0, %v4720
        %v4722 = vpop.f32.mrb[0].mxu0
        %v4723 = vpop.f32.mrb[0].mxu0
        %v4724 = vadd.f32 0.0, %v4723
        %v4725 = vpop.f32.mrb[0].mxu0
        %4726 = vmatprep.mubr.bf16.mxu0 %v3984
        %4727 = vmatmul.mubr.bf16.gmra.mrb[0].mxu0 %v3983
        %v4728 = vpop.f32.mrb[0].mxu0
        %v4729 = vadd.f32 0.0, %v4728
        %v4730 = vpop.f32.mrb[0].mxu0
        %v4731 = vpop.f32.mrb[0].mxu0
        %v4732 = vadd.f32 0.0, %v4731
        %v4733 = vpop.f32.mrb[0].mxu0
        %4734 = vmatprep.mubr.bf16.mxu0 %v3993
        %4735 = vmatmul.mubr.bf16.gmra.mrb[0].mxu0 %v3992
        %v4736 = vpop.f32.mrb[0].mxu0
        %v4737 = vadd.f32 0.0, %v4736
        %v4738 = vpop.f32.mrb[0].mxu0
        %v4739 = vpop.f32.mrb[0].mxu0
        %v4740 = vadd.f32 0.0, %v4739
        %v4741 = vpop.f32.mrb[0].mxu0
        %4742 = vmatprep.mubr.bf16.mxu0 %v4002
        %4743 = vmatmul.mubr.bf16.gmra.mrb[0].mxu0 %v4001
        %v4744 = vpop.f32.mrb[0].mxu0
        %v4745 = vadd.f32 0.0, %v4744
        %v4746 = vpop.f32.mrb[0].mxu0
        %v4747 = vpop.f32.mrb[0].mxu0
        %v4748 = vadd.f32 0.0, %v4747
        %v4749 = vpop.f32.mrb[0].mxu0
        %4750 = vmatprep.mubr.bf16.mxu0 %v4011
        %4751 = vmatmul.mubr.bf16.gmra.mrb[0].mxu0 %v4010
        %v4752 = vpop.f32.mrb[0].mxu0
        %v4753 = vadd.f32 0.0, %v4752
        %v4754 = vpop.f32.mrb[0].mxu0
        %v4755 = vpop.f32.mrb[0].mxu0
        %v4756 = vadd.f32 0.0, %v4755
        %v4757 = vpop.f32.mrb[0].mxu0
        %4758 = vmatprep.mubr.bf16.mxu0 %v4020
        %4759 = vmatmul.mubr.bf16.gmra.mrb[0].mxu0 %v4019
        %v4760 = vpop.f32.mrb[0].mxu0
        %v4761 = vadd.f32 0.0, %v4760
        %v4762 = vpop.f32.mrb[0].mxu0
        %v4763 = vpop.f32.mrb[0].mxu0
        %v4764 = vadd.f32 0.0, %v4763
        %v4765 = vpop.f32.mrb[0].mxu0
        %4766 = vmatprep.mubr.bf16.mxu0 %v4029
        %4767 = vmatmul.mubr.bf16.gmra.mrb[0].mxu0 %v4028
        %v4768 = vpop.f32.mrb[0].mxu0
        %v4769 = vadd.f32 0.0, %v4768
        %v4770 = vpop.f32.mrb[0].mxu0
        %v4771 = vpop.f32.mrb[0].mxu0
        %v4772 = vadd.f32 0.0, %v4771
        %v4773 = vpop.f32.mrb[0].mxu0
        %4774 = vdwg.mxu0
        %4775 = vmatprep.subr.bf16.mxu0 0
        %4776 = vmatpush1.bf16.msra.mxu0 %v4486
        %4777 = vmatprep.subr.bf16.mxu0 0
        %4778 = vmatpush1.bf16.msra.mxu0 %v4487
        %4779 = vmatprep.subr.bf16.mxu0 0
        %4780 = vmatpush1.bf16.msra.mxu0 %v4488
        %4781 = vmatprep.subr.bf16.mxu0 0
        %4782 = vmatpush1.bf16.msra.mxu0 %v4489
        %4783 = vmatprep.subr.bf16.mxu0 0
        %4784 = vmatpush1.bf16.msra.mxu0 %v4490
        %4785 = vmatprep.subr.bf16.mxu0 0
        %4786 = vmatpush1.bf16.msra.mxu0 %v4491
        %4787 = vmatprep.subr.bf16.mxu0 0
        %4788 = vmatpush1.bf16.msra.mxu0 %v4492
        %4789 = vmatprep.subr.bf16.mxu0 0
        %4790 = vmatpush1.bf16.msra.mxu0 %v4493
        %4791 = vmatprep.subr.bf16.mxu0 0
        %4792 = vmatpush1.bf16.msra.mxu0 %v4494
        %4793 = vmatprep.subr.bf16.mxu0 0
        %4794 = vmatpush1.bf16.msra.mxu0 %v4495
        %4795 = vmatprep.subr.bf16.mxu0 0
        %4796 = vmatpush1.bf16.msra.mxu0 %v4496
        %4797 = vmatprep.subr.bf16.mxu0 0
        %4798 = vmatpush1.bf16.msra.mxu0 %v4497
        %4799 = vmatprep.subr.bf16.mxu0 0
        %4800 = vmatpush1.bf16.msra.mxu0 %v4498
        %4801 = vmatprep.subr.bf16.mxu0 0
        %4802 = vmatpush1.bf16.msra.mxu0 %v4499
        %4803 = vmatprep.subr.bf16.mxu0 0
        %4804 = vmatpush1.bf16.msra.mxu0 %v4500
        %4805 = vmatprep.subr.bf16.mxu0 0
        %4806 = vmatpush1.bf16.msra.mxu0 %v4501
        %4807 = vmatprep.mubr.bf16.mxu0 %v3896
        %4808 = vmatmul.mubr.bf16.gmra.mrb[0].mxu0 %v3895
        %v4809 = vpop.f32.mrb[0].mxu0
        %v4810 = vadd.f32 %v4649, %v4809
        %v4811 = vpop.f32.mrb[0].mxu0
        %v4812 = vpop.f32.mrb[0].mxu0
        %v4813 = vadd.f32 %v4652, %v4812
        %v4814 = vpop.f32.mrb[0].mxu0
        %4815 = vmatprep.mubr.bf16.mxu0 %v3905
        %4816 = vmatmul.mubr.bf16.gmra.mrb[0].mxu0 %v3904
        %v4817 = vpop.f32.mrb[0].mxu0
        %v4818 = vadd.f32 %v4657, %v4817
        %v4819 = vpop.f32.mrb[0].mxu0
        %v4820 = vpop.f32.mrb[0].mxu0
        %v4821 = vadd.f32 %v4660, %v4820
        %v4822 = vpop.f32.mrb[0].mxu0
        %4823 = vmatprep.mubr.bf16.mxu0 %v3914
        %4824 = vmatmul.mubr.bf16.gmra.mrb[0].mxu0 %v3913
        %v4825 = vpop.f32.mrb[0].mxu0
        %v4826 = vadd.f32 %v4665, %v4825
        %v4827 = vpop.f32.mrb[0].mxu0
        %v4828 = vpop.f32.mrb[0].mxu0
        %v4829 = vadd.f32 %v4668, %v4828
        %v4830 = vpop.f32.mrb[0].mxu0
        %4831 = vmatprep.mubr.bf16.mxu0 %v3923
        %4832 = vmatmul.mubr.bf16.gmra.mrb[0].mxu0 %v3922
        %v4833 = vpop.f32.mrb[0].mxu0
        %v4834 = vadd.f32 %v4673, %v4833
        %v4835 = vpop.f32.mrb[0].mxu0
        %v4836 = vpop.f32.mrb[0].mxu0
        %v4837 = vadd.f32 %v4676, %v4836
        %v4838 = vpop.f32.mrb[0].mxu0
        %4839 = vmatprep.mubr.bf16.mxu0 %v3932
        %4840 = vmatmul.mubr.bf16.gmra.mrb[0].mxu0 %v3931
        %v4841 = vpop.f32.mrb[0].mxu0
        %v4842 = vadd.f32 %v4681, %v4841
        %v4843 = vpop.f32.mrb[0].mxu0
        %v4844 = vpop.f32.mrb[0].mxu0
        %v4845 = vadd.f32 %v4684, %v4844
        %v4846 = vpop.f32.mrb[0].mxu0
        %4847 = vmatprep.mubr.bf16.mxu0 %v3941
        %4848 = vmatmul.mubr.bf16.gmra.mrb[0].mxu0 %v3940
        %v4849 = vpop.f32.mrb[0].mxu0
        %v4850 = vadd.f32 %v4689, %v4849
        %v4851 = vpop.f32.mrb[0].mxu0
        %v4852 = vpop.f32.mrb[0].mxu0
        %v4853 = vadd.f32 %v4692, %v4852
        %v4854 = vpop.f32.mrb[0].mxu0
        %4855 = vmatprep.mubr.bf16.mxu0 %v3950
        %4856 = vmatmul.mubr.bf16.gmra.mrb[0].mxu0 %v3949
        %v4857 = vpop.f32.mrb[0].mxu0
        %v4858 = vadd.f32 %v4697, %v4857
        %v4859 = vpop.f32.mrb[0].mxu0
        %v4860 = vpop.f32.mrb[0].mxu0
        %v4861 = vadd.f32 %v4700, %v4860
        %v4862 = vpop.f32.mrb[0].mxu0
        %4863 = vmatprep.mubr.bf16.mxu0 %v3959
        %4864 = vmatmul.mubr.bf16.gmra.mrb[0].mxu0 %v3958
        %v4865 = vpop.f32.mrb[0].mxu0
        %v4866 = vadd.f32 %v4705, %v4865
        %v4867 = vpop.f32.mrb[0].mxu0
        %v4868 = vpop.f32.mrb[0].mxu0
        %v4869 = vadd.f32 %v4708, %v4868
        %v4870 = vpop.f32.mrb[0].mxu0
        %4871 = vmatprep.mubr.bf16.mxu0 %v3968
        %4872 = vmatmul.mubr.bf16.gmra.mrb[0].mxu0 %v3967
        %v4873 = vpop.f32.mrb[0].mxu0
        %v4874 = vadd.f32 %v4713, %v4873
        %v4875 = vpop.f32.mrb[0].mxu0
        %v4876 = vpop.f32.mrb[0].mxu0
        %v4877 = vadd.f32 %v4716, %v4876
        %v4878 = vpop.f32.mrb[0].mxu0
        %4879 = vmatprep.mubr.bf16.mxu0 %v3977
        %4880 = vmatmul.mubr.bf16.gmra.mrb[0].mxu0 %v3976
        %v4881 = vpop.f32.mrb[0].mxu0
        %v4882 = vadd.f32 %v4721, %v4881
        %v4883 = vpop.f32.mrb[0].mxu0
        %v4884 = vpop.f32.mrb[0].mxu0
        %v4885 = vadd.f32 %v4724, %v4884
        %v4886 = vpop.f32.mrb[0].mxu0
        %4887 = vmatprep.mubr.bf16.mxu0 %v3986
        %4888 = vmatmul.mubr.bf16.gmra.mrb[0].mxu0 %v3985
        %v4889 = vpop.f32.mrb[0].mxu0
        %v4890 = vadd.f32 %v4729, %v4889
        %v4891 = vpop.f32.mrb[0].mxu0
        %v4892 = vpop.f32.mrb[0].mxu0
        %v4893 = vadd.f32 %v4732, %v4892
        %v4894 = vpop.f32.mrb[0].mxu0
        %4895 = vmatprep.mubr.bf16.mxu0 %v3995
        %4896 = vmatmul.mubr.bf16.gmra.mrb[0].mxu0 %v3994
        %v4897 = vpop.f32.mrb[0].mxu0
        %v4898 = vadd.f32 %v4737, %v4897
        %v4899 = vpop.f32.mrb[0].mxu0
        %v4900 = vpop.f32.mrb[0].mxu0
        %v4901 = vadd.f32 %v4740, %v4900
        %v4902 = vpop.f32.mrb[0].mxu0
        %4903 = vmatprep.mubr.bf16.mxu0 %v4004
        %4904 = vmatmul.mubr.bf16.gmra.mrb[0].mxu0 %v4003
        %v4905 = vpop.f32.mrb[0].mxu0
        %v4906 = vadd.f32 %v4745, %v4905
        %v4907 = vpop.f32.mrb[0].mxu0
        %v4908 = vpop.f32.mrb[0].mxu0
        %v4909 = vadd.f32 %v4748, %v4908
        %v4910 = vpop.f32.mrb[0].mxu0
        %4911 = vmatprep.mubr.bf16.mxu0 %v4013
        %4912 = vmatmul.mubr.bf16.gmra.mrb[0].mxu0 %v4012
        %v4913 = vpop.f32.mrb[0].mxu0
        %v4914 = vadd.f32 %v4753, %v4913
        %v4915 = vpop.f32.mrb[0].mxu0
        %v4916 = vpop.f32.mrb[0].mxu0
        %v4917 = vadd.f32 %v4756, %v4916
        %v4918 = vpop.f32.mrb[0].mxu0
        %4919 = vmatprep.mubr.bf16.mxu0 %v4022
        %4920 = vmatmul.mubr.bf16.gmra.mrb[0].mxu0 %v4021
        %v4921 = vpop.f32.mrb[0].mxu0
        %v4922 = vadd.f32 %v4761, %v4921
        %v4923 = vpop.f32.mrb[0].mxu0
        %v4924 = vpop.f32.mrb[0].mxu0
        %v4925 = vadd.f32 %v4764, %v4924
        %v4926 = vpop.f32.mrb[0].mxu0
        %4927 = vmatprep.mubr.bf16.mxu0 %v4031
        %4928 = vmatmul.mubr.bf16.gmra.mrb[0].mxu0 %v4030
        %v4929 = vpop.f32.mrb[0].mxu0
        %v4930 = vadd.f32 %v4769, %v4929
        %v4931 = vpop.f32.mrb[0].mxu0
        %v4932 = vpop.f32.mrb[0].mxu0
        %v4933 = vadd.f32 %v4772, %v4932
        %v4934 = vpop.f32.mrb[0].mxu0
        %4935 = vdwg.mxu0
        %4936 = vmatprep.subr.bf16.mxu0 0
        %4937 = vmatpush1.bf16.msra.mxu0 %v4502
        %4938 = vmatprep.subr.bf16.mxu0 0
        %4939 = vmatpush1.bf16.msra.mxu0 %v4503
        %4940 = vmatprep.subr.bf16.mxu0 0
        %4941 = vmatpush1.bf16.msra.mxu0 %v4504
        %4942 = vmatprep.subr.bf16.mxu0 0
        %4943 = vmatpush1.bf16.msra.mxu0 %v4505
        %4944 = vmatprep.subr.bf16.mxu0 0
        %4945 = vmatpush1.bf16.msra.mxu0 %v4506
        %4946 = vmatprep.subr.bf16.mxu0 0
        %4947 = vmatpush1.bf16.msra.mxu0 %v4507
        %4948 = vmatprep.subr.bf16.mxu0 0
        %4949 = vmatpush1.bf16.msra.mxu0 %v4508
        %4950 = vmatprep.subr.bf16.mxu0 0
        %4951 = vmatpush1.bf16.msra.mxu0 %v4509
        %4952 = vmatprep.subr.bf16.mxu0 0
        %4953 = vmatpush1.bf16.msra.mxu0 %v4510
        %4954 = vmatprep.subr.bf16.mxu0 0
        %4955 = vmatpush1.bf16.msra.mxu0 %v4511
        %4956 = vmatprep.subr.bf16.mxu0 0
        %4957 = vmatpush1.bf16.msra.mxu0 %v4512
        %4958 = vmatprep.subr.bf16.mxu0 0
        %4959 = vmatpush1.bf16.msra.mxu0 %v4513
        %4960 = vmatprep.subr.bf16.mxu0 0
        %4961 = vmatpush1.bf16.msra.mxu0 %v4514
        %4962 = vmatprep.subr.bf16.mxu0 0
        %4963 = vmatpush1.bf16.msra.mxu0 %v4515
        %4964 = vmatprep.subr.bf16.mxu0 0
        %4965 = vmatpush1.bf16.msra.mxu0 %v4516
        %4966 = vmatprep.subr.bf16.mxu0 0
        %4967 = vmatpush1.bf16.msra.mxu0 %v4517
        %4968 = vmatprep.mubr.bf16.mxu0 %v3898
        %4969 = vmatmul.mubr.bf16.gmra.mrb[0].mxu0 %v3897
        %v4970 = vpop.f32.mrb[0].mxu0
        %v4971 = vadd.f32 %v4810, %v4970
        %v4972 = vpop.f32.mrb[0].mxu0
        %v4973 = vpop.f32.mrb[0].mxu0
        %v4974 = vadd.f32 %v4813, %v4973
        %v4975 = vpop.f32.mrb[0].mxu0
        %4976 = vmatprep.mubr.bf16.mxu0 %v3907
        %4977 = vmatmul.mubr.bf16.gmra.mrb[0].mxu0 %v3906
        %v4978 = vpop.f32.mrb[0].mxu0
        %v4979 = vadd.f32 %v4818, %v4978
        %v4980 = vpop.f32.mrb[0].mxu0
        %v4981 = vpop.f32.mrb[0].mxu0
        %v4982 = vadd.f32 %v4821, %v4981
        %v4983 = vpop.f32.mrb[0].mxu0
        %4984 = vmatprep.mubr.bf16.mxu0 %v3916
        %4985 = vmatmul.mubr.bf16.gmra.mrb[0].mxu0 %v3915
        %v4986 = vpop.f32.mrb[0].mxu0
        %v4987 = vadd.f32 %v4826, %v4986
        %v4988 = vpop.f32.mrb[0].mxu0
        %v4989 = vpop.f32.mrb[0].mxu0
        %v4990 = vadd.f32 %v4829, %v4989
        %v4991 = vpop.f32.mrb[0].mxu0
        %4992 = vmatprep.mubr.bf16.mxu0 %v3925
        %4993 = vmatmul.mubr.bf16.gmra.mrb[0].mxu0 %v3924
        %v4994 = vpop.f32.mrb[0].mxu0
        %v4995 = vadd.f32 %v4834, %v4994
        %v4996 = vpop.f32.mrb[0].mxu0
        %v4997 = vpop.f32.mrb[0].mxu0
        %v4998 = vadd.f32 %v4837, %v4997
        %v4999 = vpop.f32.mrb[0].mxu0
        %5000 = vmatprep.mubr.bf16.mxu0 %v3934
        %5001 = vmatmul.mubr.bf16.gmra.mrb[0].mxu0 %v3933
        %v5002 = vpop.f32.mrb[0].mxu0
        %v5003 = vadd.f32 %v4842, %v5002
        %v5004 = vpop.f32.mrb[0].mxu0
        %v5005 = vpop.f32.mrb[0].mxu0
        %v5006 = vadd.f32 %v4845, %v5005
        %v5007 = vpop.f32.mrb[0].mxu0
        %5008 = vmatprep.mubr.bf16.mxu0 %v3943
        %5009 = vmatmul.mubr.bf16.gmra.mrb[0].mxu0 %v3942
        %v5010 = vpop.f32.mrb[0].mxu0
        %v5011 = vadd.f32 %v4850, %v5010
        %v5012 = vpop.f32.mrb[0].mxu0
        %v5013 = vpop.f32.mrb[0].mxu0
        %v5014 = vadd.f32 %v4853, %v5013
        %v5015 = vpop.f32.mrb[0].mxu0
        %5016 = vmatprep.mubr.bf16.mxu0 %v3952
        %5017 = vmatmul.mubr.bf16.gmra.mrb[0].mxu0 %v3951
        %v5018 = vpop.f32.mrb[0].mxu0
        %v5019 = vadd.f32 %v4858, %v5018
        %v5020 = vpop.f32.mrb[0].mxu0
        %v5021 = vpop.f32.mrb[0].mxu0
        %v5022 = vadd.f32 %v4861, %v5021
        %v5023 = vpop.f32.mrb[0].mxu0
        %5024 = vmatprep.mubr.bf16.mxu0 %v3961
        %5025 = vmatmul.mubr.bf16.gmra.mrb[0].mxu0 %v3960
        %v5026 = vpop.f32.mrb[0].mxu0
        %v5027 = vadd.f32 %v4866, %v5026
        %v5028 = vpop.f32.mrb[0].mxu0
        %v5029 = vpop.f32.mrb[0].mxu0
        %v5030 = vadd.f32 %v4869, %v5029
        %v5031 = vpop.f32.mrb[0].mxu0
        %5032 = vmatprep.mubr.bf16.mxu0 %v3970
        %5033 = vmatmul.mubr.bf16.gmra.mrb[0].mxu0 %v3969
        %v5034 = vpop.f32.mrb[0].mxu0
        %v5035 = vadd.f32 %v4874, %v5034
        %v5036 = vpop.f32.mrb[0].mxu0
        %v5037 = vpop.f32.mrb[0].mxu0
        %v5038 = vadd.f32 %v4877, %v5037
        %v5039 = vpop.f32.mrb[0].mxu0
        %5040 = vmatprep.mubr.bf16.mxu0 %v3979
        %5041 = vmatmul.mubr.bf16.gmra.mrb[0].mxu0 %v3978
        %v5042 = vpop.f32.mrb[0].mxu0
        %v5043 = vadd.f32 %v4882, %v5042
        %v5044 = vpop.f32.mrb[0].mxu0
        %v5045 = vpop.f32.mrb[0].mxu0
        %v5046 = vadd.f32 %v4885, %v5045
        %v5047 = vpop.f32.mrb[0].mxu0
        %5048 = vmatprep.mubr.bf16.mxu0 %v3988
        %5049 = vmatmul.mubr.bf16.gmra.mrb[0].mxu0 %v3987
        %v5050 = vpop.f32.mrb[0].mxu0
        %v5051 = vadd.f32 %v4890, %v5050
        %v5052 = vpop.f32.mrb[0].mxu0
        %v5053 = vpop.f32.mrb[0].mxu0
        %v5054 = vadd.f32 %v4893, %v5053
        %v5055 = vpop.f32.mrb[0].mxu0
        %5056 = vmatprep.mubr.bf16.mxu0 %v3997
        %5057 = vmatmul.mubr.bf16.gmra.mrb[0].mxu0 %v3996
        %v5058 = vpop.f32.mrb[0].mxu0
        %v5059 = vadd.f32 %v4898, %v5058
        %v5060 = vpop.f32.mrb[0].mxu0
        %v5061 = vpop.f32.mrb[0].mxu0
        %v5062 = vadd.f32 %v4901, %v5061
        %v5063 = vpop.f32.mrb[0].mxu0
        %5064 = vmatprep.mubr.bf16.mxu0 %v4006
        %5065 = vmatmul.mubr.bf16.gmra.mrb[0].mxu0 %v4005
        %v5066 = vpop.f32.mrb[0].mxu0
        %v5067 = vadd.f32 %v4906, %v5066
        %v5068 = vpop.f32.mrb[0].mxu0
        %v5069 = vpop.f32.mrb[0].mxu0
        %v5070 = vadd.f32 %v4909, %v5069
        %v5071 = vpop.f32.mrb[0].mxu0
        %5072 = vmatprep.mubr.bf16.mxu0 %v4015
        %5073 = vmatmul.mubr.bf16.gmra.mrb[0].mxu0 %v4014
        %v5074 = vpop.f32.mrb[0].mxu0
        %v5075 = vadd.f32 %v4914, %v5074
        %v5076 = vpop.f32.mrb[0].mxu0
        %v5077 = vpop.f32.mrb[0].mxu0
        %v5078 = vadd.f32 %v4917, %v5077
        %v5079 = vpop.f32.mrb[0].mxu0
        %5080 = vmatprep.mubr.bf16.mxu0 %v4024
        %5081 = vmatmul.mubr.bf16.gmra.mrb[0].mxu0 %v4023
        %v5082 = vpop.f32.mrb[0].mxu0
        %v5083 = vadd.f32 %v4922, %v5082
        %v5084 = vpop.f32.mrb[0].mxu0
        %v5085 = vpop.f32.mrb[0].mxu0
        %v5086 = vadd.f32 %v4925, %v5085
        %v5087 = vpop.f32.mrb[0].mxu0
        %5088 = vmatprep.mubr.bf16.mxu0 %v4033
        %5089 = vmatmul.mubr.bf16.gmra.mrb[0].mxu0 %v4032
        %v5090 = vpop.f32.mrb[0].mxu0
        %v5091 = vadd.f32 %v4930, %v5090
        %v5092 = vpop.f32.mrb[0].mxu0
        %v5093 = vpop.f32.mrb[0].mxu0
        %v5094 = vadd.f32 %v4933, %v5093
        %v5095 = vpop.f32.mrb[0].mxu0
        %5096 = vdwg.mxu0
        %5097 = vmatprep.subr.bf16.mxu0 0
        %5098 = vmatpush1.bf16.msra.mxu0 %v4518
        %5099 = vmatprep.subr.bf16.mxu0 0
        %5100 = vmatpush1.bf16.msra.mxu0 %v4519
        %5101 = vmatprep.subr.bf16.mxu0 0
        %5102 = vmatpush1.bf16.msra.mxu0 %v4520
        %5103 = vmatprep.subr.bf16.mxu0 0
        %5104 = vmatpush1.bf16.msra.mxu0 %v4521
        %5105 = vmatprep.subr.bf16.mxu0 0
        %5106 = vmatpush1.bf16.msra.mxu0 %v4522
        %5107 = vmatprep.subr.bf16.mxu0 0
        %5108 = vmatpush1.bf16.msra.mxu0 %v4523
        %5109 = vmatprep.subr.bf16.mxu0 0
        %5110 = vmatpush1.bf16.msra.mxu0 %v4524
        %5111 = vmatprep.subr.bf16.mxu0 0
        %5112 = vmatpush1.bf16.msra.mxu0 %v4525
        %5113 = vmatprep.subr.bf16.mxu0 0
        %5114 = vmatpush1.bf16.msra.mxu0 %v4526
        %5115 = vmatprep.subr.bf16.mxu0 0
        %5116 = vmatpush1.bf16.msra.mxu0 %v4527
        %5117 = vmatprep.subr.bf16.mxu0 0
        %5118 = vmatpush1.bf16.msra.mxu0 %v4528
        %5119 = vmatprep.subr.bf16.mxu0 0
        %5120 = vmatpush1.bf16.msra.mxu0 %v4529
        %5121 = vmatprep.subr.bf16.mxu0 0
        %5122 = vmatpush1.bf16.msra.mxu0 %v4530
        %5123 = vmatprep.subr.bf16.mxu0 0
        %5124 = vmatpush1.bf16.msra.mxu0 %v4531
        %5125 = vmatprep.subr.bf16.mxu0 0
        %5126 = vmatpush1.bf16.msra.mxu0 %v4532
        %5127 = vmatprep.subr.bf16.mxu0 0
        %5128 = vmatpush1.bf16.msra.mxu0 %v4533
        %5129 = vmatprep.mubr.bf16.mxu0 %v3900
        %5130 = vmatmul.mubr.bf16.gmra.mrb[0].mxu0 %v3899
        %v5131 = vpop.f32.mrb[0].mxu0
        %v5132 = vadd.f32 %v4971, %v5131
        %v5133 = vpop.f32.mrb[0].mxu0
        %v5134 = vpop.f32.mrb[0].mxu0
        %v5135 = vadd.f32 %v4974, %v5134
        %v5136 = vpop.f32.mrb[0].mxu0
        %5137 = vmatprep.mubr.bf16.mxu0 %v3909
        %5138 = vmatmul.mubr.bf16.gmra.mrb[0].mxu0 %v3908
        %v5139 = vpop.f32.mrb[0].mxu0
        %v5140 = vadd.f32 %v4979, %v5139
        %v5141 = vpop.f32.mrb[0].mxu0
        %v5142 = vpop.f32.mrb[0].mxu0
        %v5143 = vadd.f32 %v4982, %v5142
        %v5144 = vpop.f32.mrb[0].mxu0
        %5145 = vmatprep.mubr.bf16.mxu0 %v3918
        %5146 = vmatmul.mubr.bf16.gmra.mrb[0].mxu0 %v3917
        %v5147 = vpop.f32.mrb[0].mxu0
        %v5148 = vadd.f32 %v4987, %v5147
        %v5149 = vpop.f32.mrb[0].mxu0
        %v5150 = vpop.f32.mrb[0].mxu0
        %v5151 = vadd.f32 %v4990, %v5150
        %v5152 = vpop.f32.mrb[0].mxu0
        %5153 = vmatprep.mubr.bf16.mxu0 %v3927
        %5154 = vmatmul.mubr.bf16.gmra.mrb[0].mxu0 %v3926
        %v5155 = vpop.f32.mrb[0].mxu0
        %v5156 = vadd.f32 %v4995, %v5155
        %v5157 = vpop.f32.mrb[0].mxu0
        %v5158 = vpop.f32.mrb[0].mxu0
        %v5159 = vadd.f32 %v4998, %v5158
        %v5160 = vpop.f32.mrb[0].mxu0
        %5161 = vmatprep.mubr.bf16.mxu0 %v3936
        %5162 = vmatmul.mubr.bf16.gmra.mrb[0].mxu0 %v3935
        %v5163 = vpop.f32.mrb[0].mxu0
        %v5164 = vadd.f32 %v5003, %v5163
        %v5165 = vpop.f32.mrb[0].mxu0
        %v5166 = vpop.f32.mrb[0].mxu0
        %v5167 = vadd.f32 %v5006, %v5166
        %v5168 = vpop.f32.mrb[0].mxu0
        %5169 = vmatprep.mubr.bf16.mxu0 %v3945
        %5170 = vmatmul.mubr.bf16.gmra.mrb[0].mxu0 %v3944
        %v5171 = vpop.f32.mrb[0].mxu0
        %v5172 = vadd.f32 %v5011, %v5171
        %v5173 = vpop.f32.mrb[0].mxu0
        %v5174 = vpop.f32.mrb[0].mxu0
        %v5175 = vadd.f32 %v5014, %v5174
        %v5176 = vpop.f32.mrb[0].mxu0
        %5177 = vmatprep.mubr.bf16.mxu0 %v3954
        %5178 = vmatmul.mubr.bf16.gmra.mrb[0].mxu0 %v3953
        %v5179 = vpop.f32.mrb[0].mxu0
        %v5180 = vadd.f32 %v5019, %v5179
        %v5181 = vpop.f32.mrb[0].mxu0
        %v5182 = vpop.f32.mrb[0].mxu0
        %v5183 = vadd.f32 %v5022, %v5182
        %v5184 = vpop.f32.mrb[0].mxu0
        %5185 = vmatprep.mubr.bf16.mxu0 %v3963
        %5186 = vmatmul.mubr.bf16.gmra.mrb[0].mxu0 %v3962
        %v5187 = vpop.f32.mrb[0].mxu0
        %v5188 = vadd.f32 %v5027, %v5187
        %v5189 = vpop.f32.mrb[0].mxu0
        %v5190 = vpop.f32.mrb[0].mxu0
        %v5191 = vadd.f32 %v5030, %v5190
        %v5192 = vpop.f32.mrb[0].mxu0
        %5193 = vmatprep.mubr.bf16.mxu0 %v3972
        %5194 = vmatmul.mubr.bf16.gmra.mrb[0].mxu0 %v3971
        %v5195 = vpop.f32.mrb[0].mxu0
        %v5196 = vadd.f32 %v5035, %v5195
        %v5197 = vpop.f32.mrb[0].mxu0
        %v5198 = vpop.f32.mrb[0].mxu0
        %v5199 = vadd.f32 %v5038, %v5198
        %v5200 = vpop.f32.mrb[0].mxu0
        %5201 = vmatprep.mubr.bf16.mxu0 %v3981
        %5202 = vmatmul.mubr.bf16.gmra.mrb[0].mxu0 %v3980
        %v5203 = vpop.f32.mrb[0].mxu0
        %v5204 = vadd.f32 %v5043, %v5203
        %v5205 = vpop.f32.mrb[0].mxu0
        %v5206 = vpop.f32.mrb[0].mxu0
        %v5207 = vadd.f32 %v5046, %v5206
        %v5208 = vpop.f32.mrb[0].mxu0
        %5209 = vmatprep.mubr.bf16.mxu0 %v3990
        %5210 = vmatmul.mubr.bf16.gmra.mrb[0].mxu0 %v3989
        %v5211 = vpop.f32.mrb[0].mxu0
        %v5212 = vadd.f32 %v5051, %v5211
        %v5213 = vpop.f32.mrb[0].mxu0
        %v5214 = vpop.f32.mrb[0].mxu0
        %v5215 = vadd.f32 %v5054, %v5214
        %v5216 = vpop.f32.mrb[0].mxu0
        %5217 = vmatprep.mubr.bf16.mxu0 %v3999
        %5218 = vmatmul.mubr.bf16.gmra.mrb[0].mxu0 %v3998
        %v5219 = vpop.f32.mrb[0].mxu0
        %v5220 = vadd.f32 %v5059, %v5219
        %v5221 = vpop.f32.mrb[0].mxu0
        %v5222 = vpop.f32.mrb[0].mxu0
        %v5223 = vadd.f32 %v5062, %v5222
        %v5224 = vpop.f32.mrb[0].mxu0
        %5225 = vmatprep.mubr.bf16.mxu0 %v4008
        %5226 = vmatmul.mubr.bf16.gmra.mrb[0].mxu0 %v4007
        %v5227 = vpop.f32.mrb[0].mxu0
        %v5228 = vadd.f32 %v5067, %v5227
        %v5229 = vpop.f32.mrb[0].mxu0
        %v5230 = vpop.f32.mrb[0].mxu0
        %v5231 = vadd.f32 %v5070, %v5230
        %v5232 = vpop.f32.mrb[0].mxu0
        %5233 = vmatprep.mubr.bf16.mxu0 %v4017
        %5234 = vmatmul.mubr.bf16.gmra.mrb[0].mxu0 %v4016
        %v5235 = vpop.f32.mrb[0].mxu0
        %v5236 = vadd.f32 %v5075, %v5235
        %v5237 = vpop.f32.mrb[0].mxu0
        %v5238 = vpop.f32.mrb[0].mxu0
        %v5239 = vadd.f32 %v5078, %v5238
        %v5240 = vpop.f32.mrb[0].mxu0
        %5241 = vmatprep.mubr.bf16.mxu0 %v4026
        %5242 = vmatmul.mubr.bf16.gmra.mrb[0].mxu0 %v4025
        %v5243 = vpop.f32.mrb[0].mxu0
        %v5244 = vadd.f32 %v5083, %v5243
        %v5245 = vpop.f32.mrb[0].mxu0
        %v5246 = vpop.f32.mrb[0].mxu0
        %v5247 = vadd.f32 %v5086, %v5246
        %v5248 = vpop.f32.mrb[0].mxu0
        %5249 = vmatprep.mubr.bf16.mxu0 %v4035
        %5250 = vmatmul.mubr.bf16.gmra.mrb[0].mxu0 %v4034
        %v5251 = vpop.f32.mrb[0].mxu0
        %v5252 = vadd.f32 %v5091, %v5251
        %v5253 = vpop.f32.mrb[0].mxu0
        %v5254 = vpop.f32.mrb[0].mxu0
        %v5255 = vadd.f32 %v5094, %v5254
        %v5256 = vpop.f32.mrb[0].mxu0
        %5257 = vdwg.mxu0
        %5258 = vmatprep.subr.bf16.mxu0 0
        %5259 = vmatpush1.bf16.msra.mxu0 %v4534
        %5260 = vmatprep.subr.bf16.mxu0 0
        %5261 = vmatpush1.bf16.msra.mxu0 %v4535
        %5262 = vmatprep.subr.bf16.mxu0 0
        %5263 = vmatpush1.bf16.msra.mxu0 %v4536
        %5264 = vmatprep.subr.bf16.mxu0 0
        %5265 = vmatpush1.bf16.msra.mxu0 %v4537
        %5266 = vmatprep.subr.bf16.mxu0 0
        %5267 = vmatpush1.bf16.msra.mxu0 %v4538
        %5268 = vmatprep.subr.bf16.mxu0 0
        %5269 = vmatpush1.bf16.msra.mxu0 %v4539
        %5270 = vmatprep.subr.bf16.mxu0 0
        %5271 = vmatpush1.bf16.msra.mxu0 %v4540
        %5272 = vmatprep.subr.bf16.mxu0 0
        %5273 = vmatpush1.bf16.msra.mxu0 %v4541
        %5274 = vmatprep.subr.bf16.mxu0 0
        %5275 = vmatpush1.bf16.msra.mxu0 0
        %5276 = vmatprep.subr.bf16.mxu0 0
        %5277 = vmatpush1.bf16.msra.mxu0 0
        %5278 = vmatprep.subr.bf16.mxu0 0
        %5279 = vmatpush1.bf16.msra.mxu0 0
        %5280 = vmatprep.subr.bf16.mxu0 0
        %5281 = vmatpush1.bf16.msra.mxu0 0
        %5282 = vmatprep.subr.bf16.mxu0 0
        %5283 = vmatpush1.bf16.msra.mxu0 0
        %5284 = vmatprep.subr.bf16.mxu0 0
        %5285 = vmatpush1.bf16.msra.mxu0 0
        %5286 = vmatprep.subr.bf16.mxu0 0
        %5287 = vmatpush1.bf16.msra.mxu0 0
        %5288 = vmatprep.subr.bf16.mxu0 0
        %5289 = vmatpush1.bf16.msra.mxu0 0
        %5290 = vmatprep.mubr.bf16.mxu0 0
        %5291 = vmatmul.mubr.bf16.gmra.mrb[0].mxu0 %v3901
        %v5292 = vpop.f32.mrb[0].mxu0
        %v5293 = vadd.f32 %v5132, %v5292
        %v5294 = vpop.f32.mrb[0].mxu0
        %v5295 = vpop.f32.mrb[0].mxu0
        %v5296 = vadd.f32 %v5135, %v5295
        %v5297 = vpop.f32.mrb[0].mxu0
        %5298 = vmatprep.mubr.bf16.mxu0 0
        %5299 = vmatmul.mubr.bf16.gmra.mrb[0].mxu0 %v3910
        %v5300 = vpop.f32.mrb[0].mxu0
        %v5301 = vadd.f32 %v5140, %v5300
        %v5302 = vpop.f32.mrb[0].mxu0
        %v5303 = vpop.f32.mrb[0].mxu0
        %v5304 = vadd.f32 %v5143, %v5303
        %v5305 = vpop.f32.mrb[0].mxu0
        %5306 = vmatprep.mubr.bf16.mxu0 0
        %5307 = vmatmul.mubr.bf16.gmra.mrb[0].mxu0 %v3919
        %v5308 = vpop.f32.mrb[0].mxu0
        %v5309 = vadd.f32 %v5148, %v5308
        %v5310 = vpop.f32.mrb[0].mxu0
        %v5311 = vpop.f32.mrb[0].mxu0
        %v5312 = vadd.f32 %v5151, %v5311
        %v5313 = vpop.f32.mrb[0].mxu0
        %5314 = vmatprep.mubr.bf16.mxu0 0
        %5315 = vmatmul.mubr.bf16.gmra.mrb[0].mxu0 %v3928
        %v5316 = vpop.f32.mrb[0].mxu0
        %v5317 = vadd.f32 %v5156, %v5316
        %v5318 = vpop.f32.mrb[0].mxu0
        %v5319 = vpop.f32.mrb[0].mxu0
        %v5320 = vadd.f32 %v5159, %v5319
        %v5321 = vpop.f32.mrb[0].mxu0
        %5322 = vmatprep.mubr.bf16.mxu0 0
        %5323 = vmatmul.mubr.bf16.gmra.mrb[0].mxu0 %v3937
        %v5324 = vpop.f32.mrb[0].mxu0
        %v5325 = vadd.f32 %v5164, %v5324
        %v5326 = vpop.f32.mrb[0].mxu0
        %v5327 = vpop.f32.mrb[0].mxu0
        %v5328 = vadd.f32 %v5167, %v5327
        %v5329 = vpop.f32.mrb[0].mxu0
        %5330 = vmatprep.mubr.bf16.mxu0 0
        %5331 = vmatmul.mubr.bf16.gmra.mrb[0].mxu0 %v3946
        %v5332 = vpop.f32.mrb[0].mxu0
        %v5333 = vadd.f32 %v5172, %v5332
        %v5334 = vpop.f32.mrb[0].mxu0
        %v5335 = vpop.f32.mrb[0].mxu0
        %v5336 = vadd.f32 %v5175, %v5335
        %v5337 = vpop.f32.mrb[0].mxu0
        %5338 = vmatprep.mubr.bf16.mxu0 0
        %5339 = vmatmul.mubr.bf16.gmra.mrb[0].mxu0 %v3955
        %v5340 = vpop.f32.mrb[0].mxu0
        %v5341 = vadd.f32 %v5180, %v5340
        %v5342 = vpop.f32.mrb[0].mxu0
        %v5343 = vpop.f32.mrb[0].mxu0
        %v5344 = vadd.f32 %v5183, %v5343
        %v5345 = vpop.f32.mrb[0].mxu0
        %5346 = vmatprep.mubr.bf16.mxu0 0
        %5347 = vmatmul.mubr.bf16.gmra.mrb[0].mxu0 %v3964
        %v5348 = vpop.f32.mrb[0].mxu0
        %v5349 = vadd.f32 %v5188, %v5348
        %v5350 = vpop.f32.mrb[0].mxu0
        %v5351 = vpop.f32.mrb[0].mxu0
        %v5352 = vadd.f32 %v5191, %v5351
        %v5353 = vpop.f32.mrb[0].mxu0
        %5354 = vmatprep.mubr.bf16.mxu0 0
        %5355 = vmatmul.mubr.bf16.gmra.mrb[0].mxu0 %v3973
        %v5356 = vpop.f32.mrb[0].mxu0
        %v5357 = vadd.f32 %v5196, %v5356
        %v5358 = vpop.f32.mrb[0].mxu0
        %v5359 = vpop.f32.mrb[0].mxu0
        %v5360 = vadd.f32 %v5199, %v5359
        %v5361 = vpop.f32.mrb[0].mxu0
        %5362 = vmatprep.mubr.bf16.mxu0 0
        %5363 = vmatmul.mubr.bf16.gmra.mrb[0].mxu0 %v3982
        %v5364 = vpop.f32.mrb[0].mxu0
        %v5365 = vadd.f32 %v5204, %v5364
        %v5366 = vpop.f32.mrb[0].mxu0
        %v5367 = vpop.f32.mrb[0].mxu0
        %v5368 = vadd.f32 %v5207, %v5367
        %v5369 = vpop.f32.mrb[0].mxu0
        %5370 = vmatprep.mubr.bf16.mxu0 0
        %5371 = vmatmul.mubr.bf16.gmra.mrb[0].mxu0 %v3991
        %v5372 = vpop.f32.mrb[0].mxu0
        %v5373 = vadd.f32 %v5212, %v5372
        %v5374 = vpop.f32.mrb[0].mxu0
        %v5375 = vpop.f32.mrb[0].mxu0
        %v5376 = vadd.f32 %v5215, %v5375
        %v5377 = vpop.f32.mrb[0].mxu0
        %5378 = vmatprep.mubr.bf16.mxu0 0
        %5379 = vmatmul.mubr.bf16.gmra.mrb[0].mxu0 %v4000
        %v5380 = vpop.f32.mrb[0].mxu0
        %v5381 = vadd.f32 %v5220, %v5380
        %v5382 = vpop.f32.mrb[0].mxu0
        %v5383 = vpop.f32.mrb[0].mxu0
        %v5384 = vadd.f32 %v5223, %v5383
        %v5385 = vpop.f32.mrb[0].mxu0
        %5386 = vmatprep.mubr.bf16.mxu0 0
        %5387 = vmatmul.mubr.bf16.gmra.mrb[0].mxu0 %v4009
        %v5388 = vpop.f32.mrb[0].mxu0
        %v5389 = vadd.f32 %v5228, %v5388
        %v5390 = vpop.f32.mrb[0].mxu0
        %v5391 = vpop.f32.mrb[0].mxu0
        %v5392 = vadd.f32 %v5231, %v5391
        %v5393 = vpop.f32.mrb[0].mxu0
        %5394 = vmatprep.mubr.bf16.mxu0 0
        %5395 = vmatmul.mubr.bf16.gmra.mrb[0].mxu0 %v4018
        %v5396 = vpop.f32.mrb[0].mxu0
        %v5397 = vadd.f32 %v5236, %v5396
        %v5398 = vpop.f32.mrb[0].mxu0
        %v5399 = vpop.f32.mrb[0].mxu0
        %v5400 = vadd.f32 %v5239, %v5399
        %v5401 = vpop.f32.mrb[0].mxu0
        %5402 = vmatprep.mubr.bf16.mxu0 0
        %5403 = vmatmul.mubr.bf16.gmra.mrb[0].mxu0 %v4027
        %v5404 = vpop.f32.mrb[0].mxu0
        %v5405 = vadd.f32 %v5244, %v5404
        %v5406 = vpop.f32.mrb[0].mxu0
        %v5407 = vpop.f32.mrb[0].mxu0
        %v5408 = vadd.f32 %v5247, %v5407
        %v5409 = vpop.f32.mrb[0].mxu0
        %5410 = vmatprep.mubr.bf16.mxu0 0
        %5411 = vmatmul.mubr.bf16.gmra.mrb[0].mxu0 %v4036
        %v5412 = vpop.f32.mrb[0].mxu0
        %v5413 = vadd.f32 %v5252, %v5412
        %v5414 = vpop.f32.mrb[0].mxu0
        %v5415 = vpop.f32.mrb[0].mxu0
        %v5416 = vadd.f32 %v5255, %v5415
        %v5417 = vpop.f32.mrb[0].mxu0
        %5418 = vdwg.mxu0
        %v5419 = vld [vmem:[#allocation2] sm:$0xff]
        %v5420 = vld [vmem:[#allocation2 + $0x8] sm:$0xff]
        %v5421 = vld [vmem:[#allocation2 + $0x10] sm:$0xff]
        %v5422 = vld [vmem:[#allocation2 + $0x18] sm:$0xff]
        %v5423 = vld [vmem:[#allocation2 + $0x20] sm:$0xff]
        %v5424 = vld [vmem:[#allocation2 + $0x28] sm:$0xff]
        %v5425 = vld [vmem:[#allocation2 + $0x30] sm:$0xff]
        %v5426 = vld [vmem:[#allocation2 + $0x38] sm:$0xff]
        %v5427 = vld [vmem:[#allocation2 + $0x40] sm:$0xff]
        %v5428 = vld [vmem:[#allocation2 + $0x48] sm:$0xff]
        %v5429 = vld [vmem:[#allocation2 + $0x50] sm:$0xff]
        %v5430 = vld [vmem:[#allocation2 + $0x58] sm:$0xff]
        %v5431 = vld [vmem:[#allocation2 + $0x60] sm:$0xff]
        %v5432 = vld [vmem:[#allocation2 + $0x68] sm:$0xff]
        %v5433 = vld [vmem:[#allocation2 + $0x70] sm:$0xff]
        %v5434 = vld [vmem:[#allocation2 + $0x78] sm:$0xff]
        %v5435 = vpack.c.bf16 %v5296, %v5293
        %v5436 = vpack.c.bf16 %v5304, %v5301
        %v5437 = vpack.c.bf16 %v5312, %v5309
        %v5438 = vpack.c.bf16 %v5320, %v5317
        %v5439 = vpack.c.bf16 %v5328, %v5325
        %v5440 = vpack.c.bf16 %v5336, %v5333
        %v5441 = vpack.c.bf16 %v5344, %v5341
        %v5442 = vpack.c.bf16 %v5352, %v5349
        %v5443 = vpack.c.bf16 %v5360, %v5357
        %v5444 = vpack.c.bf16 %v5368, %v5365
        %v5445 = vpack.c.bf16 %v5376, %v5373
        %v5446 = vpack.c.bf16 %v5384, %v5381
        %v5447 = vpack.c.bf16 %v5392, %v5389
        %v5448 = vpack.c.bf16 %v5400, %v5397
        %v5449 = vpack.c.bf16 %v5408, %v5405
        %v5450 = vpack.c.bf16 %v5416, %v5413
        %v5451 = vadd.bf16 %v5419, %v5435
        %v5452 = vadd.bf16 %v5420, %v5436
        %v5453 = vadd.bf16 %v5421, %v5437
        %v5454 = vadd.bf16 %v5422, %v5438
        %v5455 = vadd.bf16 %v5423, %v5439
        %v5456 = vadd.bf16 %v5424, %v5440
        %v5457 = vadd.bf16 %v5425, %v5441
        %v5458 = vadd.bf16 %v5426, %v5442
        %v5459 = vadd.bf16 %v5427, %v5443
        %v5460 = vadd.bf16 %v5428, %v5444
        %v5461 = vadd.bf16 %v5429, %v5445
        %v5462 = vadd.bf16 %v5430, %v5446
        %v5463 = vadd.bf16 %v5431, %v5447
        %v5464 = vadd.bf16 %v5432, %v5448
        %v5465 = vadd.bf16 %v5433, %v5449
        %v5466 = vadd.bf16 %v5434, %v5450
        %5467 = vst [vmem:[#allocation2] sm:$0xff] %v5451
        %5468 = vst [vmem:[#allocation2 + $0x8] sm:$0xff] %v5452
        %5469 = vst [vmem:[#allocation2 + $0x10] sm:$0xff] %v5453
        %5470 = vst [vmem:[#allocation2 + $0x18] sm:$0xff] %v5454
        %5471 = vst [vmem:[#allocation2 + $0x20] sm:$0xff] %v5455
        %5472 = vst [vmem:[#allocation2 + $0x28] sm:$0xff] %v5456
        %5473 = vst [vmem:[#allocation2 + $0x30] sm:$0xff] %v5457
        %5474 = vst [vmem:[#allocation2 + $0x38] sm:$0xff] %v5458
        %5475 = vst [vmem:[#allocation2 + $0x40] sm:$0xff] %v5459
        %5476 = vst [vmem:[#allocation2 + $0x48] sm:$0xff] %v5460
        %5477 = vst [vmem:[#allocation2 + $0x50] sm:$0xff] %v5461
        %5478 = vst [vmem:[#allocation2 + $0x58] sm:$0xff] %v5462
        %5479 = vst [vmem:[#allocation2 + $0x60] sm:$0xff] %v5463
        %5480 = vst [vmem:[#allocation2 + $0x68] sm:$0xff] %v5464
        %5481 = vst [vmem:[#allocation2 + $0x70] sm:$0xff] %v5465
        %5482 = vst [vmem:[#allocation2 + $0x78] sm:$0xff] %v5466
        %v5483 = vld [vmem:[#allocation2] sm:$0xff]
        %v5484 = vld [vmem:[#allocation2 + $0x8] sm:$0xff]
        %v5485 = vld [vmem:[#allocation2 + $0x10] sm:$0xff]
        %v5486 = vld [vmem:[#allocation2 + $0x18] sm:$0xff]
        %v5487 = vld [vmem:[#allocation2 + $0x20] sm:$0xff]
        %v5488 = vld [vmem:[#allocation2 + $0x28] sm:$0xff]
        %v5489 = vld [vmem:[#allocation2 + $0x30] sm:$0xff]
        %v5490 = vld [vmem:[#allocation2 + $0x38] sm:$0xff]
        %v5491 = vld [vmem:[#allocation2 + $0x40] sm:$0xff]
        %v5492 = vld [vmem:[#allocation2 + $0x48] sm:$0xff]
        %v5493 = vld [vmem:[#allocation2 + $0x50] sm:$0xff]
        %v5494 = vld [vmem:[#allocation2 + $0x58] sm:$0xff]
        %v5495 = vld [vmem:[#allocation2 + $0x60] sm:$0xff]
        %v5496 = vld [vmem:[#allocation2 + $0x68] sm:$0xff]
        %v5497 = vld [vmem:[#allocation2 + $0x70] sm:$0xff]
        %v5498 = vld [vmem:[#allocation2 + $0x78] sm:$0xff]
        %v5499 = vunpack.c.l.bf16 %v5483
        %v5500 = vunpack.c.h.bf16 %v5483
        %v5501 = vunpack.c.l.bf16 %v5484
        %v5502 = vunpack.c.h.bf16 %v5484
        %v5503 = vunpack.c.l.bf16 %v5485
        %v5504 = vunpack.c.h.bf16 %v5485
        %v5505 = vunpack.c.l.bf16 %v5486
        %v5506 = vunpack.c.h.bf16 %v5486
        %v5507 = vunpack.c.l.bf16 %v5487
        %v5508 = vunpack.c.h.bf16 %v5487
        %v5509 = vunpack.c.l.bf16 %v5488
        %v5510 = vunpack.c.h.bf16 %v5488
        %v5511 = vunpack.c.l.bf16 %v5489
        %v5512 = vunpack.c.h.bf16 %v5489
        %v5513 = vunpack.c.l.bf16 %v5490
        %v5514 = vunpack.c.h.bf16 %v5490
        %v5515 = vunpack.c.l.bf16 %v5491
        %v5516 = vunpack.c.h.bf16 %v5491
        %v5517 = vunpack.c.l.bf16 %v5492
        %v5518 = vunpack.c.h.bf16 %v5492
        %v5519 = vunpack.c.l.bf16 %v5493
        %v5520 = vunpack.c.h.bf16 %v5493
        %v5521 = vunpack.c.l.bf16 %v5494
        %v5522 = vunpack.c.h.bf16 %v5494
        %v5523 = vunpack.c.l.bf16 %v5495
        %v5524 = vunpack.c.h.bf16 %v5495
        %v5525 = vunpack.c.l.bf16 %v5496
        %v5526 = vunpack.c.h.bf16 %v5496
        %v5527 = vunpack.c.l.bf16 %v5497
        %v5528 = vunpack.c.h.bf16 %v5497
        %v5529 = vunpack.c.l.bf16 %v5498
        %v5530 = vunpack.c.h.bf16 %v5498
        %v5531 = vld [vmem:[%s6] sm:$0x1]
        %v5533 = vlaneseq
        %v5534 = vshrl.u32 %v5533, 7
        %v5535 = vsub.s32 0, %v5534
        %v5536 = vrot.slane %v5531, %v5535
        %v5538 = vmul.f32 %v5499, %v5536
        %v5539 = vmul.f32 %v5500, %v5536
        %v5540 = vmul.f32 %v5501, %v5536
        %v5541 = vmul.f32 %v5502, %v5536
        %v5542 = vmul.f32 %v5503, %v5536
        %v5543 = vmul.f32 %v5504, %v5536
        %v5544 = vmul.f32 %v5505, %v5536
        %v5545 = vmul.f32 %v5506, %v5536
        %v5546 = vmul.f32 %v5507, %v5536
        %v5547 = vmul.f32 %v5508, %v5536
        %v5548 = vmul.f32 %v5509, %v5536
        %v5549 = vmul.f32 %v5510, %v5536
        %v5550 = vmul.f32 %v5511, %v5536
        %v5551 = vmul.f32 %v5512, %v5536
        %v5552 = vmul.f32 %v5513, %v5536
        %v5553 = vmul.f32 %v5514, %v5536
        %v5554 = vmul.f32 %v5515, %v5536
        %v5555 = vmul.f32 %v5516, %v5536
        %v5556 = vmul.f32 %v5517, %v5536
        %v5557 = vmul.f32 %v5518, %v5536
        %v5558 = vmul.f32 %v5519, %v5536
        %v5559 = vmul.f32 %v5520, %v5536
        %v5560 = vmul.f32 %v5521, %v5536
        %v5561 = vmul.f32 %v5522, %v5536
        %v5562 = vmul.f32 %v5523, %v5536
        %v5563 = vmul.f32 %v5524, %v5536
        %v5564 = vmul.f32 %v5525, %v5536
        %v5565 = vmul.f32 %v5526, %v5536
        %v5566 = vmul.f32 %v5527, %v5536
        %v5567 = vmul.f32 %v5528, %v5536
        %v5568 = vmul.f32 %v5529, %v5536
        %v5569 = vmul.f32 %v5530, %v5536
        %v5570 = vld [vmem:[%s7] sm:$0x1]
        %v5572 = vlaneseq
        %v5573 = vshrl.u32 %v5572, 7
        %v5574 = vsub.s32 0, %v5573
        %v5575 = vrot.slane %v5570, %v5574
        %v5577 = vadd.f32 %v5538, %v5575
        %v5578 = vadd.f32 %v5539, %v5575
        %v5579 = vadd.f32 %v5540, %v5575
        %v5580 = vadd.f32 %v5541, %v5575
        %v5581 = vadd.f32 %v5542, %v5575
        %v5582 = vadd.f32 %v5543, %v5575
        %v5583 = vadd.f32 %v5544, %v5575
        %v5584 = vadd.f32 %v5545, %v5575
        %v5585 = vadd.f32 %v5546, %v5575
        %v5586 = vadd.f32 %v5547, %v5575
        %v5587 = vadd.f32 %v5548, %v5575
        %v5588 = vadd.f32 %v5549, %v5575
        %v5589 = vadd.f32 %v5550, %v5575
        %v5590 = vadd.f32 %v5551, %v5575
        %v5591 = vadd.f32 %v5552, %v5575
        %v5592 = vadd.f32 %v5553, %v5575
        %v5593 = vadd.f32 %v5554, %v5575
        %v5594 = vadd.f32 %v5555, %v5575
        %v5595 = vadd.f32 %v5556, %v5575
        %v5596 = vadd.f32 %v5557, %v5575
        %v5597 = vadd.f32 %v5558, %v5575
        %v5598 = vadd.f32 %v5559, %v5575
        %v5599 = vadd.f32 %v5560, %v5575
        %v5600 = vadd.f32 %v5561, %v5575
        %v5601 = vadd.f32 %v5562, %v5575
        %v5602 = vadd.f32 %v5563, %v5575
        %v5603 = vadd.f32 %v5564, %v5575
        %v5604 = vadd.f32 %v5565, %v5575
        %v5605 = vadd.f32 %v5566, %v5575
        %v5606 = vadd.f32 %v5567, %v5575
        %v5607 = vadd.f32 %v5568, %v5575
        %v5608 = vadd.f32 %v5569, %v5575
        %v5609 = vmax.f32 %v5577, 0.0
        %v5610 = vmax.f32 %v5578, 0.0
        %v5611 = vmax.f32 %v5579, 0.0
        %v5612 = vmax.f32 %v5580, 0.0
        %v5613 = vmax.f32 %v5581, 0.0
        %v5614 = vmax.f32 %v5582, 0.0
        %v5615 = vmax.f32 %v5583, 0.0
        %v5616 = vmax.f32 %v5584, 0.0
        %v5617 = vmax.f32 %v5585, 0.0
        %v5618 = vmax.f32 %v5586, 0.0
        %v5619 = vmax.f32 %v5587, 0.0
        %v5620 = vmax.f32 %v5588, 0.0
        %v5621 = vmax.f32 %v5589, 0.0
        %v5622 = vmax.f32 %v5590, 0.0
        %v5623 = vmax.f32 %v5591, 0.0
        %v5624 = vmax.f32 %v5592, 0.0
        %v5625 = vmax.f32 %v5593, 0.0
        %v5626 = vmax.f32 %v5594, 0.0
        %v5627 = vmax.f32 %v5595, 0.0
        %v5628 = vmax.f32 %v5596, 0.0
        %v5629 = vmax.f32 %v5597, 0.0
        %v5630 = vmax.f32 %v5598, 0.0
        %v5631 = vmax.f32 %v5599, 0.0
        %v5632 = vmax.f32 %v5600, 0.0
        %v5633 = vmax.f32 %v5601, 0.0
        %v5634 = vmax.f32 %v5602, 0.0
        %v5635 = vmax.f32 %v5603, 0.0
        %v5636 = vmax.f32 %v5604, 0.0
        %v5637 = vmax.f32 %v5605, 0.0
        %v5638 = vmax.f32 %v5606, 0.0
        %v5639 = vmax.f32 %v5607, 0.0
        %v5640 = vmax.f32 %v5608, 0.0
        %v5641 = vadd.f32 %v5609, %v5610
        %v5642 = vadd.f32 %v5641, %v5611
        %v5643 = vadd.f32 %v5642, %v5612
        %v5644 = vadd.f32 %v5643, %v5613
        %v5645 = vadd.f32 %v5644, %v5614
        %v5646 = vadd.f32 %v5645, %v5615
        %v5647 = vadd.f32 %v5646, %v5616
        %v5648 = vadd.f32 %v5647, %v5617
        %v5649 = vadd.f32 %v5648, %v5618
        %v5650 = vadd.f32 %v5649, %v5619
        %v5651 = vadd.f32 %v5650, %v5620
        %v5652 = vadd.f32 %v5651, %v5621
        %v5653 = vadd.f32 %v5652, %v5622
        %v5654 = vadd.f32 %v5653, %v5623
        %v5655 = vadd.f32 %v5654, %v5624
        %v5656 = vadd.f32 %v5655, %v5625
        %v5657 = vadd.f32 %v5656, %v5626
        %v5658 = vadd.f32 %v5657, %v5627
        %v5659 = vadd.f32 %v5658, %v5628
        %v5660 = vadd.f32 %v5659, %v5629
        %v5661 = vadd.f32 %v5660, %v5630
        %v5662 = vadd.f32 %v5661, %v5631
        %v5663 = vadd.f32 %v5662, %v5632
        %v5664 = vadd.f32 %v5663, %v5633
        %v5665 = vadd.f32 %v5664, %v5634
        %v5666 = vadd.f32 %v5665, %v5635
        %v5667 = vadd.f32 %v5666, %v5636
        %v5668 = vadd.f32 %v5667, %v5637
        %v5669 = vadd.f32 %v5668, %v5638
        %v5670 = vadd.f32 %v5669, %v5639
        %v5671 = vadd.f32 %v5670, %v5640
        %v5672 = vrot.slane %v5671, 4
        %v5673 = vadd.f32 %v5671, %v5672
        %v5674 = vrot.slane %v5673, 2
        %v5675 = vadd.f32 %v5673, %v5674
        %v5676 = vrot.slane %v5675, 1
        %v5677 = vadd.f32 %v5675, %v5676
        %v5678 = vmul.f32 %v5677, 0.00390625
        %v5679 = vpack.c.bf16 %v5678, %v5678
        %v5680 = vld [vmem:[%s8] sm:$0xf]
        %v5681 = vld [vmem:[%s8 + $0x4] sm:$0xf]
        %v5682 = vld [vmem:[%s8 + $0x8] sm:$0xf]
        %v5683 = vld [vmem:[%s8 + $0xc] sm:$0xf]
        %v5684 = vld [vmem:[%s8 + $0x10] sm:$0xf]
        %v5685 = vld [vmem:[%s8 + $0x14] sm:$0xf]
        %v5686 = vld [vmem:[%s8 + $0x18] sm:$0xf]
        %v5687 = vld [vmem:[%s8 + $0x1c] sm:$0xf]
        %v5688 = vld [vmem:[%s8 + $0x20] sm:$0xf]
        %v5689 = vld [vmem:[%s8 + $0x24] sm:$0xf]
        %v5690 = vld [vmem:[%s8 + $0x28] sm:$0xf]
        %v5691 = vld [vmem:[%s8 + $0x2c] sm:$0xf]
        %v5692 = vld [vmem:[%s8 + $0x30] sm:$0xf]
        %v5693 = vld [vmem:[%s8 + $0x34] sm:$0xf]
        %v5694 = vld [vmem:[%s8 + $0x38] sm:$0xf]
        %v5695 = vld [vmem:[%s8 + $0x3c] sm:$0xf]
        %v5696 = vld [vmem:[%s9] sm:$0x1]
        %v5713 = vunpack.c.l.b16 %v5680
        %v5714 = vunpack.c.l.b16 %v5681
        %v5715 = vunpack.c.l.b16 %v5682
        %v5716 = vunpack.c.l.b16 %v5683
        %v5717 = vunpack.c.l.b16 %v5684
        %v5718 = vunpack.c.l.b16 %v5685
        %v5719 = vunpack.c.l.b16 %v5686
        %v5720 = vunpack.c.l.b16 %v5687
        %v5721 = vunpack.c.l.b16 %v5688
        %v5722 = vunpack.c.l.b16 %v5689
        %v5723 = vunpack.c.l.b16 %v5690
        %v5724 = vunpack.c.l.b16 %v5691
        %v5725 = vunpack.c.l.b16 %v5692
        %v5726 = vunpack.c.l.b16 %v5693
        %v5727 = vunpack.c.l.b16 %v5694
        %v5728 = vunpack.c.l.b16 %v5695
        %v5729 = vpack.c.b16 %v5714, %v5713
        %v5730 = vpack.c.b16 %v5716, %v5715
        %v5731 = vpack.c.b16 %v5718, %v5717
        %v5732 = vpack.c.b16 %v5720, %v5719
        %v5733 = vpack.c.b16 %v5722, %v5721
        %v5734 = vpack.c.b16 %v5724, %v5723
        %v5735 = vpack.c.b16 %v5726, %v5725
        %v5736 = vpack.c.b16 %v5728, %v5727
        %5745 = vmatprep.subr.bf16.mxu0 0
        %5746 = vmatpush1.bf16.msra.mxu0 %v5729
        %5747 = vmatprep.subr.bf16.mxu0 0
        %5748 = vmatpush1.bf16.msra.mxu0 %v5730
        %5749 = vmatprep.subr.bf16.mxu0 0
        %5750 = vmatpush1.bf16.msra.mxu0 %v5731
        %5751 = vmatprep.subr.bf16.mxu0 0
        %5752 = vmatpush1.bf16.msra.mxu0 %v5732
        %5753 = vmatprep.subr.bf16.mxu0 0
        %5754 = vmatpush1.bf16.msra.mxu0 %v5733
        %5755 = vmatprep.subr.bf16.mxu0 0
        %5756 = vmatpush1.bf16.msra.mxu0 %v5734
        %5757 = vmatprep.subr.bf16.mxu0 0
        %5758 = vmatpush1.bf16.msra.mxu0 %v5735
        %5759 = vmatprep.subr.bf16.mxu0 0
        %5760 = vmatpush1.bf16.msra.mxu0 %v5736
        %5761 = vmatprep.subr.bf16.mxu0 0
        %5762 = vmatpush1.bf16.msra.mxu0 0
        %5763 = vmatprep.subr.bf16.mxu0 0
        %5764 = vmatpush1.bf16.msra.mxu0 0
        %5765 = vmatprep.subr.bf16.mxu0 0
        %5766 = vmatpush1.bf16.msra.mxu0 0
        %5767 = vmatprep.subr.bf16.mxu0 0
        %5768 = vmatpush1.bf16.msra.mxu0 0
        %5769 = vmatprep.subr.bf16.mxu0 0
        %5770 = vmatpush1.bf16.msra.mxu0 0
        %5771 = vmatprep.subr.bf16.mxu0 0
        %5772 = vmatpush1.bf16.msra.mxu0 0
        %5773 = vmatprep.subr.bf16.mxu0 0
        %5774 = vmatpush1.bf16.msra.mxu0 0
        %5775 = vmatprep.subr.bf16.mxu0 0
        %5776 = vmatpush1.bf16.msra.mxu0 0
        %5777 = vmatprep.mubr.bf16.mxu0 0
        %5778 = vmatmul.mubr.bf16.gmra.mrb[0].mxu0 %v5679
        %v5779 = vpop.f32.mrb[0].mxu0
        %v5780 = vadd.f32 %v5696, %v5779
        %v5781 = vpop.f32.mrb[0].mxu0
        %v5782 = vpop.f32.mrb[0].mxu0
        %v5783 = vpop.f32.mrb[0].mxu0
        %5784 = vdwg.mxu0
        %5785 = vst [vmem:[%s351] sm:$0x1] %v5780
        %s5786 = sand.u32 %s247, 1
        %s5787 = scalar_lea.sflag [#allocation6], %s5786
        %s5788 = sand.u32 %s247, 1
        %s5789 = scalar_lea.vmem [#allocation5], %s5788
        // Predicated region
        $region61: #{forward.1} parent=59 // pred_check
          %p5790 = pneg %p257
        $region62: #{forward.1} parent=59 // pred_check_branch
          %5792 = sbr.rel (%p5790) target = $region64
        $region63: #{forward.1} parent=59 // pred_region
          %s5794 = ssub.s32 16, 16
          %5795 = vsyncadd %s5787, %s5794
          %s5796 = smul.addr %s24, 16
          %s5797 = scalar_lea.hbm %s10, %s5796
          %s5799 = sshll.u32 %s5789, 4
          %s5800 = int_to_ptr.vmem [resolvable:$true] %s5799
          %5802 = dma.vmem_to_hbm [thread:$0]  %s5800, 16, %s5797, %s5787
        $region64: #{forward.1} parent=59 // pred_fallthru
          _
      $region60: #{forward.1} parent=5 // pred_fallthru
        _
      %p5803 = scmp.le.s32.totalorder 2, %s19
      // Predicated region
      $region65: #{forward.1} parent=5 // pred_check
        %p5804 = pneg %p5803
      $region66: #{forward.1} parent=5 // pred_check_branch
        %5806 = sbr.rel (%p5804) target = $region68
      $region67: #{forward.1} parent=5 // pred_region
        %s5807 = ssub.s32 %s19, 2
        // Predicated region
        $region69: #{forward.1} parent=67 // pred_check
          %p5808 = pneg %p263
        $region70: #{forward.1} parent=67 // pred_check_branch
          %5810 = sbr.rel (%p5808) target = $region72
        $region71: #{forward.1} parent=67 // pred_region
          %s5811 = sand.u32 %s248, 1
          %s5812 = scalar_lea.sflag [#allocation6], %s5811
          %s5813 = sand.u32 %s248, 1
          %s5814 = scalar_lea.vmem [#allocation5], %s5813
          %5815 = dma.done %s5812, 16
        $region72: #{forward.1} parent=67 // pred_fallthru
          _
      $region68: #{forward.1} parent=5 // pred_fallthru
        _
    $region6: #{forward.1} parent=1 // loop_footer
      %s23 = sadd.s32 1, %s19
    $region7: #{forward.1} parent=1 // loop_footer_branch
      %18 = sbr.rel target = $region3
    $region8: #{forward.1} parent=1 // loop_exit
      _
    %5816 = vsyncpa [#allocation6], 1
    %s5817 = scalar_lea.sflag [#allocation6], 1
    %5818 = vsyncpa %s5817, 1

</llo_original>
